<compile_context>
chip_gen: v7x
topology: tpu7x:2x2x1
jax: 0.10.0
libtpu: 0.0.40
codegen_flags: <defaults>
</compile_context>

<pallas_src>
import functools

import jax
import jax.numpy as jnp
from jax.experimental import pallas as pl
from jax.experimental.pallas import tpu as pltpu

# ----------------------------- configuration ------------------------------ #
B = 2            # batch
T_TOTAL = 4      # number of video frames
FEAT = 32        # enc_cfg.hidden_size (feature channels)
SLOT_DIM = 32    # slot_dim
SLOT_HID = 48    # slot_hid_dim (SlotAttention MLP hidden)
DEC_HID = 48     # decoder hidden
H = W = 8
HW = H * W
S = 5            # num_slots
NUM_ITERS = 3    # num_iters == ini_iters
TIME_STEPS = [0, 1, 2]   # time_steps=2 -> list(range(3))
P = len(TIME_STEPS)
LN_EPS = 1e-5
LANES = 128      # parameter slab padded to full lane width


# ------------------------------ parameters -------------------------------- #
def init_params(key):
    def lin(k, din, dout, scale=0.02):
        return scale * jax.random.normal(k, (din, dout), jnp.float32)

    ks = jax.random.split(key, 12)
    p = {}
    # SlotAttention
    p["ln_in_g"] = jnp.ones((1, FEAT), jnp.float32)
    p["ln_in_b"] = jnp.zeros((1, FEAT), jnp.float32)
    p["wk"] = lin(ks[0], FEAT, SLOT_DIM)
    p["bk"] = jnp.zeros((1, SLOT_DIM), jnp.float32)
    p["wv"] = lin(ks[1], FEAT, SLOT_DIM)
    p["bv"] = jnp.zeros((1, SLOT_DIM), jnp.float32)
    p["ln_s_g"] = jnp.ones((1, SLOT_DIM), jnp.float32)
    p["ln_s_b"] = jnp.zeros((1, SLOT_DIM), jnp.float32)
    p["wq"] = lin(ks[2], SLOT_DIM, SLOT_DIM)
    p["bq"] = jnp.zeros((1, SLOT_DIM), jnp.float32)
    # GRUCell (gate order r | z | n)
    p["w_ih"] = lin(ks[3], SLOT_DIM, 3 * SLOT_DIM)
    p["b_ih"] = jnp.zeros((1, 3 * SLOT_DIM), jnp.float32)
    p["w_hh"] = lin(ks[4], SLOT_DIM, 3 * SLOT_DIM)
    p["b_hh"] = jnp.zeros((1, 3 * SLOT_DIM), jnp.float32)
    p["ln_m_g"] = jnp.ones((1, SLOT_DIM), jnp.float32)
    p["ln_m_b"] = jnp.zeros((1, SLOT_DIM), jnp.float32)
    p["w_m1"] = lin(ks[5], SLOT_DIM, SLOT_HID)
    p["b_m1"] = jnp.zeros((1, SLOT_HID), jnp.float32)
    p["w_m2"] = lin(ks[6], SLOT_HID, SLOT_DIM)
    p["b_m2"] = jnp.zeros((1, SLOT_DIM), jnp.float32)
    p["slots_mu"] = 0.02 * jax.random.normal(ks[7], (1, SLOT_DIM), jnp.float32)
    p["slots_logsigma"] = jnp.full((1, SLOT_DIM), -2.0, jnp.float32)
    # SlotDecoder (spatial broadcast)
    p["pos_emb"] = 0.02 * jax.random.normal(ks[8], (HW, SLOT_DIM), jnp.float32)
    p["dec_w1"] = lin(ks[9], SLOT_DIM, DEC_HID)
    p["dec_b1"] = jnp.zeros((1, DEC_HID), jnp.float32)
    p["dec_w2"] = lin(ks[10], DEC_HID, FEAT + 1)
    p["dec_b2"] = jnp.zeros((1, FEAT + 1), jnp.float32)
    # trainer LayerNorm(feat_dim) - PyTorch default init (weight=1, bias=0)
    p["ln_f_g"] = jnp.ones((1, FEAT), jnp.float32)
    p["ln_f_b"] = jnp.zeros((1, FEAT), jnp.float32)
    return p


# ------------------------- parameter slab packing -------------------------- #
def pack_params(p):
    """Pack every parameter into one 128-lane-wide slab (single DMA).

    Returns (slab, offsets) where offsets[name] = (row_start, nrows, ncols)
    is static Python data used by the kernel to slice its parameters out.
    GRU weights are pre-fused: w_gru = [w_ih ; w_hh], b_gru = b_ih + b_hh,
    plus the n-gate hidden weight / bias kept separately.
    """
    D = SLOT_DIM
    entries = [
        # matmul weights (row counts all multiples of 8 -> aligned slices)
        ("wkv", jnp.concatenate([p["wk"], p["wv"]], axis=1)),      # (F, 2D)
        ("wq", p["wq"]),                                           # (D, D)
        ("w_gru", jnp.concatenate([p["w_ih"], p["w_hh"]], axis=0)),  # (2D, 3D)
        ("w_hh_n", p["w_hh"][:, 2 * D:3 * D]),                     # (D, D)
        ("w_m1", p["w_m1"]),                                       # (D, Hd)
        ("w_m2", p["w_m2"]),                                       # (Hd, D)
        ("dec_w1", p["dec_w1"]),                                   # (D, Dh)
        ("dec_w2", p["dec_w2"]),                                   # (Dh, F+1)
        ("pos", p["pos_emb"]),                                     # (hw, D)
        # one-row vectors (biases / LayerNorm params)
        ("ln_in_g", p["ln_in_g"]), ("ln_in_b", p["ln_in_b"]),
        ("bkv", jnp.concatenate([p["bk"], p["bv"]], axis=1)),
        ("ln_s_g", p["ln_s_g"]), ("ln_s_b", p["ln_s_b"]),
        ("bq", p["bq"]),
        ("b_gru", p["b_ih"] + p["b_hh"]),
        ("b_hh_n", p["b_hh"][:, 2 * D:3 * D]),
        ("ln_m_g", p["ln_m_g"]), ("ln_m_b", p["ln_m_b"]),
        ("b_m1", p["b_m1"]), ("b_m2", p["b_m2"]),
        ("dec_b1", p["dec_b1"]), ("dec_b2", p["dec_b2"]),
        ("ln_f_g", p["ln_f_g"]), ("ln_f_b", p["ln_f_b"]),
    ]
    off = {}
    rows = []
    r = 0
    for name, a in entries:
        off[name] = (r, a.shape[0], a.shape[1])
        rows.append(jnp.pad(a, ((0, 0), (0, LANES - a.shape[1]))))
        r += a.shape[0]
    slab = jnp.concatenate(rows, axis=0)
    pad_r = (-r) % 8
    if pad_r:
        slab = jnp.pad(slab, ((0, pad_r), (0, 0)))
    return slab, off


# ------------------------------ kernel utils ------------------------------ #
def _ln(z, g, b, eps=LN_EPS):
    mu = jnp.mean(z, axis=-1, keepdims=True)
    var = jnp.mean(jnp.square(z - mu), axis=-1, keepdims=True)
    return (z - mu) * jax.lax.rsqrt(var + eps) * g + b


# ------------------------ fused SlotTrainer kernel ------------------------- #
def slot_trainer_kernel(pats_ref, s0_ref, slab_ref, attn_out, sse_out, *,
                        off, items, n_tok, batch, num_iters, slot_dim,
                        slot_hid, feat, num_slots, time_steps):
    D, Hd, F, Sn = slot_dim, slot_hid, feat, num_slots
    hw = n_tok
    rows = items * Sn            # all slots of all (frame, batch) items
    cols = items * hw            # all tokens of all items

    def wget(name):
        r0, nr, nc = off[name]
        return slab_ref[r0:r0 + nr, 0:nc]

    # ---------------- unpack parameters (static ref slices) --------------- #
    wkv, wq = wget("wkv"), wget("wq")
    w_gru, w_hh_n = wget("w_gru"), wget("w_hh_n")
    w_m1, w_m2 = wget("w_m1"), wget("w_m2")
    dec_w1, dec_w2, pos = wget("dec_w1"), wget("dec_w2"), wget("pos")
    ln_in_g, ln_in_b = wget("ln_in_g"), wget("ln_in_b")
    bkv, bq = wget("bkv"), wget("bq")
    ln_s_g, ln_s_b = wget("ln_s_g"), wget("ln_s_b")
    b_gru, b_hh_n = wget("b_gru"), wget("b_hh_n")
    ln_m_g, ln_m_b = wget("ln_m_g"), wget("ln_m_b")
    b_m1, b_m2 = wget("b_m1"), wget("b_m2")
    dec_b1, dec_b2 = wget("dec_b1"), wget("dec_b2")
    ln_f_g, ln_f_b = wget("ln_f_g"), wget("ln_f_b")

    # ---------------- slot attention (all items batched) ------------------ #
    x = pats_ref[0:cols, :]                               # first items*hw rows
    xn = _ln(x, ln_in_g, ln_in_b)
    kv = jnp.dot(xn, wkv, preferred_element_type=jnp.float32) + bkv   # k|v fused
    k = kv[:, 0:D]
    v = kv[:, D:2 * D]
    scale = D ** -0.5

    # block-diagonal mask: slots of item g attend only to tokens of item g
    ri = jax.lax.broadcasted_iota(jnp.int32, (rows, cols), 0)
    ci = jax.lax.broadcasted_iota(jnp.int32, (rows, cols), 1)
    valid = jnp.zeros((rows, cols), jnp.bool_)
    for g in range(items):
        blk = ((ri >= g * Sn) & (ri < (g + 1) * Sn) &
               (ci >= g * hw) & (ci < (g + 1) * hw))
        valid = jnp.logical_or(valid, blk)

    slots = s0_ref[...]                                   # (rows, D)
    attn = jnp.zeros((rows, cols), jnp.float32)
    for _ in range(num_iters):
        slots_prev = slots
        q = jnp.dot(_ln(slots, ln_s_g, ln_s_b), wq,
                    preferred_element_type=jnp.float32) + bq          # (rows, D)

        # contract the last dims of q and k (no explicit k transpose)
        logits = jax.lax.dot_general(
            q, k, (((1,), (1,)), ((), ())),
            preferred_element_type=jnp.float32) * scale               # (rows, cols)
        logits = jnp.where(valid, logits, -1e30)
        logits = logits - jnp.max(logits, axis=0, keepdims=True)
        e = jnp.exp(logits)
        attn = e / jnp.sum(e, axis=0, keepdims=True)      # softmax over slots
        wts = attn / (jnp.sum(attn, axis=1, keepdims=True) + 1e-8)
        upd = jnp.dot(wts, v, preferred_element_type=jnp.float32)     # (rows, D)

        # fused GRUCell: one (rows, 2D) @ (2D, 3D) matmul gives gi+gh.
        lhs = jnp.concatenate([upd, slots_prev], axis=1)              # (rows, 2D)
        g_all = jnp.dot(lhs, w_gru, preferred_element_type=jnp.float32) + b_gru
        gh_n = jnp.dot(slots_prev, w_hh_n,
                       preferred_element_type=jnp.float32) + b_hh_n   # (rows, D)
        r = jax.nn.sigmoid(g_all[:, 0:D])
        z = jax.nn.sigmoid(g_all[:, D:2 * D])
        n = jnp.tanh(g_all[:, 2 * D:3 * D] + (r - 1.0) * gh_n)
        slots = (1.0 - z) * n + z * slots_prev

        # MLP residual
        mn = _ln(slots, ln_m_g, ln_m_b)
        hmid = jnp.maximum(
            jnp.dot(mn, w_m1, preferred_element_type=jnp.float32) + b_m1, 0.0)
        slots = slots + jnp.dot(hmid, w_m2,
                                preferred_element_type=jnp.float32) + b_m2

    # write only the per-item diagonal attention blocks: (items, Sn, hw)
    attn_out[...] = jnp.stack(
        [attn[g * Sn:(g + 1) * Sn, g * hw:(g + 1) * hw] for g in range(items)],
        axis=0)

    # --------------- spatial-broadcast decoder + alpha combine ------------ #
    z0 = slots[:, None, :] + pos[None, :, :]              # (rows, hw, D)
    z2 = z0.reshape(rows * hw, D)
    h1 = jnp.maximum(
        jnp.dot(z2, dec_w1, preferred_element_type=jnp.float32) + dec_b1, 0.0)
    o = jnp.dot(h1, dec_w2, preferred_element_type=jnp.float32) + dec_b2
    o4 = o.reshape(items, Sn, hw, F + 1)
    feats = o4[:, :, :, 0:F]                              # (items, Sn, hw, F)
    logit = o4[:, :, :, F:F + 1]                          # (items, Sn, hw, 1)
    m = jnp.max(logit, axis=1, keepdims=True)
    ea = jnp.exp(logit - m)
    alpha = ea / jnp.sum(ea, axis=1, keepdims=True)       # softmax over slots
    xrec = jnp.sum(alpha * feats, axis=1)                 # (items, hw, F)

    # --------- trainer LayerNorm + SSE against the P shifted targets ------ #
    # time_decoder = Identity -> the decoded features are identical for every
    # prediction step, so decode/LN once and compare against P targets.
    xn_rec = _ln(xrec.reshape(items * hw, F), ln_f_g, ln_f_b)
    sse_rows = []
    for ts in time_steps:
        # target for item (t, b), step ts = frame t+ts: a contiguous slice of
        # the t-major pats slab (no duplicated y tensor materialized).
        y = pats_ref[ts * batch * hw: ts * batch * hw + items * hw, :]
        d = xn_rec - y
        sse_rows.append(jnp.sum((d * d).reshape(items, hw, F), axis=1))  # (items, F)
    sse_out[...] = jnp.concatenate(sse_rows, axis=0)      # (P*items, F), one store


def run_slot_trainer(pats, s0, slab, off, *, items, n_tok, batch):
    kern = functools.partial(
        slot_trainer_kernel, off=off, items=items, n_tok=n_tok, batch=batch,
        num_iters=NUM_ITERS, slot_dim=SLOT_DIM, slot_hid=SLOT_HID, feat=FEAT,
        num_slots=S, time_steps=TIME_STEPS)
    return pl.pallas_call(
        kern,
        out_shape=(jax.ShapeDtypeStruct((items, S, n_tok), jnp.float32),
                   jax.ShapeDtypeStruct((P * items, FEAT), jnp.float32)),
        grid=(1,),
        in_specs=[pl.BlockSpec(pats.shape, lambda i: (0, 0)),
                  pl.BlockSpec(s0.shape, lambda i: (0, 0)),
                  pl.BlockSpec(slab.shape, lambda i: (0, 0))],
        out_specs=(pl.BlockSpec((items, S, n_tok), lambda i: (0, 0, 0)),
                   pl.BlockSpec((P * items, FEAT), lambda i: (0, 0))),
        compiler_params=pltpu.CompilerParams(
            dimension_semantics=("arbitrary",)),
    )(pats, s0, slab)


# ------------------------------ full forward ------------------------------- #
def slot_trainer_forward(vid, params, noise_key):
    """vid: (B, T, C, H, W) float32. Returns (loss, debug, attn)."""
    B_, Tt, C, Hh, Ww = vid.shape
    hw = Hh * Ww
    # b t c h w -> (t b h w) c  (t-major slab; attention input AND targets
    # are contiguous static slices of this single array)
    pats = jnp.transpose(vid, (1, 0, 3, 4, 2)).reshape(Tt * B_ * hw, C)

    Tp = Tt - max(TIME_STEPS)          # frames used for slot propagation
    G = Tp * B_                        # total (frame, batch) items

    slab, off = pack_params(params)

    # _prop_slots: slot_predictor=None -> slots re-initialized each frame
    noise = jax.random.normal(noise_key, (G * S, SLOT_DIM), jnp.float32)
    s0 = params["slots_mu"] + jnp.exp(params["slots_logsigma"]) * noise

    attn, sse = run_slot_trainer(pats, s0, slab, off,
                                 items=G, n_tok=hw, batch=B_)

    sse = sse.reshape(P, G, FEAT)       # per (step, item, channel) sums
    denom = P * G * hw * C
    loss = jnp.sum(sse) / denom
    debug = {"mse": loss}
    per_step = jnp.sum(sse, axis=(1, 2)) / (G * hw * C)
    for pi, ts in enumerate(TIME_STEPS):
        debug[f"mse_t+{ts}"] = per_step[pi]

    attn = attn.reshape(Tp, B_, S, hw)  # (T, B, S, N) like torch.stack(attn_t)
    return loss, debug, attn


# ---------------------------------- main ----------------------------------- #
if __name__ == "__main__":
    key = jax.random.PRNGKey(0)
    k_vid, k_par, k_noise = jax.random.split(key, 3)

    vid = jax.random.normal(k_vid, (B, T_TOTAL, FEAT, H, W), jnp.float32)
    params = init_params(k_par)

    fwd = jax.jit(slot_trainer_forward)
    loss, debug, attn = fwd(vid, params, k_noise)
    jax.block_until_ready(loss)
    jax.block_until_ready(attn)
    for v_ in debug.values():
        jax.block_until_ready(v_)
    print("KERNEL_OK")
</pallas_src>

<mosaic_0001>
module attributes {stable_mosaic.version = 11 : i64} {
  func.func @slot_trainer_kernel(%arg0: i32, %arg1: memref<512x32xf32, #tpu.memory_space<vmem>>, %arg2: memref<20x32xf32, #tpu.memory_space<vmem>>, %arg3: memref<400x128xf32, #tpu.memory_space<vmem>>, %arg4: memref<4x5x64xf32, #tpu.memory_space<vmem>>, %arg5: memref<12x32xf32, #tpu.memory_space<vmem>>) attributes {dimension_semantics = [#tpu.dimension_semantics<arbitrary>], iteration_bounds = array<i64: 1>, scalar_prefetch = 0 : i64, scratch_operands = 0 : i64, tpu.core_type = #tpu.core_type<tc>, window_params = [{pipeline_mode = #tpu.pipeline_mode<synchronous>, transform_indices = @transform_0, window_bounds = array<i64: 512, 32>}, {pipeline_mode = #tpu.pipeline_mode<synchronous>, transform_indices = @transform_1, window_bounds = array<i64: 20, 32>}, {pipeline_mode = #tpu.pipeline_mode<synchronous>, transform_indices = @transform_2, window_bounds = array<i64: 400, 128>}, {pipeline_mode = #tpu.pipeline_mode<synchronous>, transform_indices = @transform_3, window_bounds = array<i64: 4, 5, 64>}, {pipeline_mode = #tpu.pipeline_mode<synchronous>, transform_indices = @transform_4, window_bounds = array<i64: 12, 32>}]} {
    %c0 = arith.constant 0 : index
    %c0_0 = arith.constant 0 : index
    %0 = vector.load %arg3[%c0, %c0_0] : memref<400x128xf32, #tpu.memory_space<vmem>>, vector<32x64xf32>
    %c32 = arith.constant 32 : index
    %c0_1 = arith.constant 0 : index
    %1 = vector.load %arg3[%c32, %c0_1] : memref<400x128xf32, #tpu.memory_space<vmem>>, vector<32x32xf32>
    %c64 = arith.constant 64 : index
    %c0_2 = arith.constant 0 : index
    %2 = vector.load %arg3[%c64, %c0_2] : memref<400x128xf32, #tpu.memory_space<vmem>>, vector<64x96xf32>
    %c128 = arith.constant 128 : index
    %c0_3 = arith.constant 0 : index
    %3 = vector.load %arg3[%c128, %c0_3] : memref<400x128xf32, #tpu.memory_space<vmem>>, vector<32x32xf32>
    %c160 = arith.constant 160 : index
    %c0_4 = arith.constant 0 : index
    %4 = vector.load %arg3[%c160, %c0_4] : memref<400x128xf32, #tpu.memory_space<vmem>>, vector<32x48xf32>
    %c192 = arith.constant 192 : index
    %c0_5 = arith.constant 0 : index
    %5 = vector.load %arg3[%c192, %c0_5] : memref<400x128xf32, #tpu.memory_space<vmem>>, vector<48x32xf32>
    %c240 = arith.constant 240 : index
    %c0_6 = arith.constant 0 : index
    %6 = vector.load %arg3[%c240, %c0_6] : memref<400x128xf32, #tpu.memory_space<vmem>>, vector<32x48xf32>
    %c272 = arith.constant 272 : index
    %c0_7 = arith.constant 0 : index
    %7 = vector.load %arg3[%c272, %c0_7] : memref<400x128xf32, #tpu.memory_space<vmem>>, vector<48x33xf32>
    %c320 = arith.constant 320 : index
    %c0_8 = arith.constant 0 : index
    %8 = vector.load %arg3[%c320, %c0_8] : memref<400x128xf32, #tpu.memory_space<vmem>>, vector<64x32xf32>
    %c384 = arith.constant 384 : index
    %c0_9 = arith.constant 0 : index
    %9 = vector.load %arg3[%c384, %c0_9] : memref<400x128xf32, #tpu.memory_space<vmem>>, vector<1x32xf32>
    %c385 = arith.constant 385 : index
    %c0_10 = arith.constant 0 : index
    %10 = vector.load %arg3[%c385, %c0_10] : memref<400x128xf32, #tpu.memory_space<vmem>>, vector<1x32xf32>
    %c386 = arith.constant 386 : index
    %c0_11 = arith.constant 0 : index
    %11 = vector.load %arg3[%c386, %c0_11] : memref<400x128xf32, #tpu.memory_space<vmem>>, vector<1x64xf32>
    %c389 = arith.constant 389 : index
    %c0_12 = arith.constant 0 : index
    %12 = vector.load %arg3[%c389, %c0_12] : memref<400x128xf32, #tpu.memory_space<vmem>>, vector<1x32xf32>
    %c387 = arith.constant 387 : index
    %c0_13 = arith.constant 0 : index
    %13 = vector.load %arg3[%c387, %c0_13] : memref<400x128xf32, #tpu.memory_space<vmem>>, vector<1x32xf32>
    %c388 = arith.constant 388 : index
    %c0_14 = arith.constant 0 : index
    %14 = vector.load %arg3[%c388, %c0_14] : memref<400x128xf32, #tpu.memory_space<vmem>>, vector<1x32xf32>
    %c390 = arith.constant 390 : index
    %c0_15 = arith.constant 0 : index
    %15 = vector.load %arg3[%c390, %c0_15] : memref<400x128xf32, #tpu.memory_space<vmem>>, vector<1x96xf32>
    %c391 = arith.constant 391 : index
    %c0_16 = arith.constant 0 : index
    %16 = vector.load %arg3[%c391, %c0_16] : memref<400x128xf32, #tpu.memory_space<vmem>>, vector<1x32xf32>
    %c392 = arith.constant 392 : index
    %c0_17 = arith.constant 0 : index
    %17 = vector.load %arg3[%c392, %c0_17] : memref<400x128xf32, #tpu.memory_space<vmem>>, vector<1x32xf32>
    %c393 = arith.constant 393 : index
    %c0_18 = arith.constant 0 : index
    %18 = vector.load %arg3[%c393, %c0_18] : memref<400x128xf32, #tpu.memory_space<vmem>>, vector<1x32xf32>
    %c394 = arith.constant 394 : index
    %c0_19 = arith.constant 0 : index
    %19 = vector.load %arg3[%c394, %c0_19] : memref<400x128xf32, #tpu.memory_space<vmem>>, vector<1x48xf32>
    %c395 = arith.constant 395 : index
    %c0_20 = arith.constant 0 : index
    %20 = vector.load %arg3[%c395, %c0_20] : memref<400x128xf32, #tpu.memory_space<vmem>>, vector<1x32xf32>
    %c396 = arith.constant 396 : index
    %c0_21 = arith.constant 0 : index
    %21 = vector.load %arg3[%c396, %c0_21] : memref<400x128xf32, #tpu.memory_space<vmem>>, vector<1x48xf32>
    %c397 = arith.constant 397 : index
    %c0_22 = arith.constant 0 : index
    %22 = vector.load %arg3[%c397, %c0_22] : memref<400x128xf32, #tpu.memory_space<vmem>>, vector<1x33xf32>
    %c398 = arith.constant 398 : index
    %c0_23 = arith.constant 0 : index
    %23 = vector.load %arg3[%c398, %c0_23] : memref<400x128xf32, #tpu.memory_space<vmem>>, vector<1x32xf32>
    %c399 = arith.constant 399 : index
    %c0_24 = arith.constant 0 : index
    %24 = vector.load %arg3[%c399, %c0_24] : memref<400x128xf32, #tpu.memory_space<vmem>>, vector<1x32xf32>
    %c0_25 = arith.constant 0 : index
    %c0_26 = arith.constant 0 : index
    %25 = vector.load %arg1[%c0_25, %c0_26] : memref<512x32xf32, #tpu.memory_space<vmem>>, vector<256x32xf32>
    %cst = arith.constant dense<0.000000e+00> : vector<256xf32>
    %26 = vector.multi_reduction <add>, %25, %cst [1] : vector<256x32xf32> to vector<256xf32>
    %27 = vector.shape_cast %26 : vector<256xf32> to vector<256x1xf32>
    %cst_27 = arith.constant 3.200000e+01 : f32
    %28 = vector.broadcast %cst_27 : f32 to vector<256x1xf32>
    %29 = arith.divf %27, %28 : vector<256x1xf32>
    %30 = vector.broadcast %29 : vector<256x1xf32> to vector<256x32xf32>
    %31 = arith.subf %25, %30 : vector<256x32xf32>
    %32 = arith.mulf %31, %31 : vector<256x32xf32>
    %cst_28 = arith.constant dense<0.000000e+00> : vector<256xf32>
    %33 = vector.multi_reduction <add>, %32, %cst_28 [1] : vector<256x32xf32> to vector<256xf32>
    %34 = vector.shape_cast %33 : vector<256xf32> to vector<256x1xf32>
    %cst_29 = arith.constant 3.200000e+01 : f32
    %35 = vector.broadcast %cst_29 : f32 to vector<256x1xf32>
    %36 = arith.divf %34, %35 : vector<256x1xf32>
    %37 = vector.broadcast %29 : vector<256x1xf32> to vector<256x32xf32>
    %38 = arith.subf %25, %37 : vector<256x32xf32>
    %cst_30 = arith.constant 9.99999974E-6 : f32
    %39 = vector.broadcast %cst_30 : f32 to vector<256x1xf32>
    %40 = arith.addf %36, %39 : vector<256x1xf32>
    %41 = math.rsqrt %40 : vector<256x1xf32>
    %42 = vector.broadcast %41 : vector<256x1xf32> to vector<256x32xf32>
    %43 = arith.mulf %38, %42 : vector<256x32xf32>
    %44 = vector.broadcast %9 : vector<1x32xf32> to vector<256x32xf32>
    %45 = arith.mulf %43, %44 : vector<256x32xf32>
    %46 = vector.broadcast %10 : vector<1x32xf32> to vector<256x32xf32>
    %47 = arith.addf %45, %46 : vector<256x32xf32>
    %cst_31 = arith.constant dense<0.000000e+00> : vector<256x64xf32>
    %48 = tpu.matmul %47, %0, %cst_31 {dimension_numbers = #tpu.dot_dimension_numbers<[1], [0], [0], [1], [0, 0, 1, 1], [], []>} : vector<256x32xf32>, vector<32x64xf32>, vector<256x64xf32> -> vector<256x64xf32>
    %49 = vector.broadcast %11 : vector<1x64xf32> to vector<256x64xf32>
    %50 = arith.addf %48, %49 : vector<256x64xf32>
    %51 = vector.extract_strided_slice %50 {offsets = [0, 0], sizes = [256, 32], strides = [1, 1]} : vector<256x64xf32> to vector<256x32xf32>
    %52 = vector.extract_strided_slice %50 {offsets = [0, 32], sizes = [256, 32], strides = [1, 1]} : vector<256x64xf32> to vector<256x32xf32>
    %53 = tpu.iota {dimensions = array<i32: 0>} : vector<20x256xi32>
    %54 = tpu.iota {dimensions = array<i32: 1>} : vector<20x256xi32>
    %false = arith.constant false
    %55 = vector.broadcast %false : i1 to vector<20x256xi1>
    %c0_i32 = arith.constant 0 : i32
    %56 = vector.broadcast %c0_i32 : i32 to vector<20x256xi32>
    %57 = arith.cmpi sge, %53, %56 : vector<20x256xi32>
    %c5_i32 = arith.constant 5 : i32
    %58 = vector.broadcast %c5_i32 : i32 to vector<20x256xi32>
    %59 = arith.cmpi slt, %53, %58 : vector<20x256xi32>
    %60 = arith.andi %57, %59 : vector<20x256xi1>
    %c0_i32_32 = arith.constant 0 : i32
    %61 = vector.broadcast %c0_i32_32 : i32 to vector<20x256xi32>
    %62 = arith.cmpi sge, %54, %61 : vector<20x256xi32>
    %63 = arith.andi %60, %62 : vector<20x256xi1>
    %c64_i32 = arith.constant 64 : i32
    %64 = vector.broadcast %c64_i32 : i32 to vector<20x256xi32>
    %65 = arith.cmpi slt, %54, %64 : vector<20x256xi32>
    %66 = arith.andi %63, %65 : vector<20x256xi1>
    %67 = arith.ori %55, %66 : vector<20x256xi1>
    %c5_i32_33 = arith.constant 5 : i32
    %68 = vector.broadcast %c5_i32_33 : i32 to vector<20x256xi32>
    %69 = arith.cmpi sge, %53, %68 : vector<20x256xi32>
    %c10_i32 = arith.constant 10 : i32
    %70 = vector.broadcast %c10_i32 : i32 to vector<20x256xi32>
    %71 = arith.cmpi slt, %53, %70 : vector<20x256xi32>
    %72 = arith.andi %69, %71 : vector<20x256xi1>
    %c64_i32_34 = arith.constant 64 : i32
    %73 = vector.broadcast %c64_i32_34 : i32 to vector<20x256xi32>
    %74 = arith.cmpi sge, %54, %73 : vector<20x256xi32>
    %75 = arith.andi %72, %74 : vector<20x256xi1>
    %c128_i32 = arith.constant 128 : i32
    %76 = vector.broadcast %c128_i32 : i32 to vector<20x256xi32>
    %77 = arith.cmpi slt, %54, %76 : vector<20x256xi32>
    %78 = arith.andi %75, %77 : vector<20x256xi1>
    %79 = arith.ori %67, %78 : vector<20x256xi1>
    %c10_i32_35 = arith.constant 10 : i32
    %80 = vector.broadcast %c10_i32_35 : i32 to vector<20x256xi32>
    %81 = arith.cmpi sge, %53, %80 : vector<20x256xi32>
    %c15_i32 = arith.constant 15 : i32
    %82 = vector.broadcast %c15_i32 : i32 to vector<20x256xi32>
    %83 = arith.cmpi slt, %53, %82 : vector<20x256xi32>
    %84 = arith.andi %81, %83 : vector<20x256xi1>
    %c128_i32_36 = arith.constant 128 : i32
    %85 = vector.broadcast %c128_i32_36 : i32 to vector<20x256xi32>
    %86 = arith.cmpi sge, %54, %85 : vector<20x256xi32>
    %87 = arith.andi %84, %86 : vector<20x256xi1>
    %c192_i32 = arith.constant 192 : i32
    %88 = vector.broadcast %c192_i32 : i32 to vector<20x256xi32>
    %89 = arith.cmpi slt, %54, %88 : vector<20x256xi32>
    %90 = arith.andi %87, %89 : vector<20x256xi1>
    %91 = arith.ori %79, %90 : vector<20x256xi1>
    %c15_i32_37 = arith.constant 15 : i32
    %92 = vector.broadcast %c15_i32_37 : i32 to vector<20x256xi32>
    %93 = arith.cmpi sge, %53, %92 : vector<20x256xi32>
    %c20_i32 = arith.constant 20 : i32
    %94 = vector.broadcast %c20_i32 : i32 to vector<20x256xi32>
    %95 = arith.cmpi slt, %53, %94 : vector<20x256xi32>
    %96 = arith.andi %93, %95 : vector<20x256xi1>
    %c192_i32_38 = arith.constant 192 : i32
    %97 = vector.broadcast %c192_i32_38 : i32 to vector<20x256xi32>
    %98 = arith.cmpi sge, %54, %97 : vector<20x256xi32>
    %99 = arith.andi %96, %98 : vector<20x256xi1>
    %c256_i32 = arith.constant 256 : i32
    %100 = vector.broadcast %c256_i32 : i32 to vector<20x256xi32>
    %101 = arith.cmpi slt, %54, %100 : vector<20x256xi32>
    %102 = arith.andi %99, %101 : vector<20x256xi1>
    %103 = arith.ori %91, %102 : vector<20x256xi1>
    %c0_39 = arith.constant 0 : index
    %c0_40 = arith.constant 0 : index
    %104 = vector.load %arg2[%c0_39, %c0_40] : memref<20x32xf32, #tpu.memory_space<vmem>>, vector<20x32xf32>
    %cst_41 = arith.constant dense<0.000000e+00> : vector<20xf32>
    %105 = vector.multi_reduction <add>, %104, %cst_41 [1] : vector<20x32xf32> to vector<20xf32>
    %106 = vector.shape_cast %105 : vector<20xf32> to vector<20x1xf32>
    %cst_42 = arith.constant 3.200000e+01 : f32
    %107 = vector.broadcast %cst_42 : f32 to vector<20x1xf32>
    %108 = arith.divf %106, %107 : vector<20x1xf32>
    %109 = vector.broadcast %108 : vector<20x1xf32> to vector<20x32xf32>
    %110 = arith.subf %104, %109 : vector<20x32xf32>
    %111 = arith.mulf %110, %110 : vector<20x32xf32>
    %cst_43 = arith.constant dense<0.000000e+00> : vector<20xf32>
    %112 = vector.multi_reduction <add>, %111, %cst_43 [1] : vector<20x32xf32> to vector<20xf32>
    %113 = vector.shape_cast %112 : vector<20xf32> to vector<20x1xf32>
    %cst_44 = arith.constant 3.200000e+01 : f32
    %114 = vector.broadcast %cst_44 : f32 to vector<20x1xf32>
    %115 = arith.divf %113, %114 : vector<20x1xf32>
    %116 = vector.broadcast %108 : vector<20x1xf32> to vector<20x32xf32>
    %117 = arith.subf %104, %116 : vector<20x32xf32>
    %cst_45 = arith.constant 9.99999974E-6 : f32
    %118 = vector.broadcast %cst_45 : f32 to vector<20x1xf32>
    %119 = arith.addf %115, %118 : vector<20x1xf32>
    %120 = math.rsqrt %119 : vector<20x1xf32>
    %121 = vector.broadcast %120 : vector<20x1xf32> to vector<20x32xf32>
    %122 = arith.mulf %117, %121 : vector<20x32xf32>
    %123 = vector.broadcast %13 : vector<1x32xf32> to vector<20x32xf32>
    %124 = arith.mulf %122, %123 : vector<20x32xf32>
    %125 = vector.broadcast %14 : vector<1x32xf32> to vector<20x32xf32>
    %126 = arith.addf %124, %125 : vector<20x32xf32>
    %cst_46 = arith.constant dense<0.000000e+00> : vector<20x32xf32>
    %127 = tpu.matmul %126, %1, %cst_46 {dimension_numbers = #tpu.dot_dimension_numbers<[1], [0], [0], [1], [0, 0, 1, 1], [], []>} : vector<20x32xf32>, vector<32x32xf32>, vector<20x32xf32> -> vector<20x32xf32>
    %128 = vector.broadcast %12 : vector<1x32xf32> to vector<20x32xf32>
    %129 = arith.addf %127, %128 : vector<20x32xf32>
    %cst_47 = arith.constant dense<0.000000e+00> : vector<20x256xf32>
    %130 = tpu.matmul %129, %51, %cst_47 {dimension_numbers = #tpu.dot_dimension_numbers<[1], [1], [0], [0], [0, 0, 1, 0], [], []>} : vector<20x32xf32>, vector<256x32xf32>, vector<20x256xf32> -> vector<20x256xf32>
    %cst_48 = arith.constant 0.176776692 : f32
    %131 = vector.broadcast %cst_48 : f32 to vector<20x256xf32>
    %132 = arith.mulf %130, %131 : vector<20x256xf32>
    %cst_49 = arith.constant -1.000000e+30 : f32
    %133 = vector.broadcast %cst_49 : f32 to vector<20x256xf32>
    %134 = arith.select %103, %132, %133 : vector<20x256xi1>, vector<20x256xf32>
    %cst_50 = arith.constant dense<0xFF800000> : vector<256xf32>
    %135 = vector.multi_reduction <maximumf>, %134, %cst_50 [0] : vector<20x256xf32> to vector<256xf32>
    %136 = vector.shape_cast %135 : vector<256xf32> to vector<1x256xf32>
    %137 = vector.broadcast %136 : vector<1x256xf32> to vector<20x256xf32>
    %138 = arith.subf %134, %137 : vector<20x256xf32>
    %139 = math.exp %138 : vector<20x256xf32>
    %cst_51 = arith.constant dense<0.000000e+00> : vector<256xf32>
    %140 = vector.multi_reduction <add>, %139, %cst_51 [0] : vector<20x256xf32> to vector<256xf32>
    %141 = vector.shape_cast %140 : vector<256xf32> to vector<1x256xf32>
    %142 = vector.broadcast %141 : vector<1x256xf32> to vector<20x256xf32>
    %143 = arith.divf %139, %142 : vector<20x256xf32>
    %cst_52 = arith.constant dense<0.000000e+00> : vector<20xf32>
    %144 = vector.multi_reduction <add>, %143, %cst_52 [1] : vector<20x256xf32> to vector<20xf32>
    %145 = vector.shape_cast %144 : vector<20xf32> to vector<20x1xf32>
    %cst_53 = arith.constant 9.99999993E-9 : f32
    %146 = vector.broadcast %cst_53 : f32 to vector<20x1xf32>
    %147 = arith.addf %145, %146 : vector<20x1xf32>
    %148 = vector.broadcast %147 : vector<20x1xf32> to vector<20x256xf32>
    %149 = arith.divf %143, %148 : vector<20x256xf32>
    %cst_54 = arith.constant dense<0.000000e+00> : vector<20x32xf32>
    %150 = tpu.matmul %149, %52, %cst_54 {dimension_numbers = #tpu.dot_dimension_numbers<[1], [0], [0], [1], [0, 0, 1, 1], [], []>} : vector<20x256xf32>, vector<256x32xf32>, vector<20x32xf32> -> vector<20x32xf32>
    %151 = tpu.concatenate %150, %104 in 1 : vector<20x32xf32>, vector<20x32xf32> -> vector<20x64xf32>
    %cst_55 = arith.constant dense<0.000000e+00> : vector<20x96xf32>
    %152 = tpu.matmul %151, %2, %cst_55 {dimension_numbers = #tpu.dot_dimension_numbers<[1], [0], [0], [1], [0, 0, 1, 1], [], []>} : vector<20x64xf32>, vector<64x96xf32>, vector<20x96xf32> -> vector<20x96xf32>
    %153 = vector.broadcast %15 : vector<1x96xf32> to vector<20x96xf32>
    %154 = arith.addf %152, %153 : vector<20x96xf32>
    %cst_56 = arith.constant dense<0.000000e+00> : vector<20x32xf32>
    %155 = tpu.matmul %104, %3, %cst_56 {dimension_numbers = #tpu.dot_dimension_numbers<[1], [0], [0], [1], [0, 0, 1, 1], [], []>} : vector<20x32xf32>, vector<32x32xf32>, vector<20x32xf32> -> vector<20x32xf32>
    %156 = vector.broadcast %16 : vector<1x32xf32> to vector<20x32xf32>
    %157 = arith.addf %155, %156 : vector<20x32xf32>
    %158 = vector.extract_strided_slice %154 {offsets = [0, 0], sizes = [20, 32], strides = [1, 1]} : vector<20x96xf32> to vector<20x32xf32>
    %159 = arith.negf %158 : vector<20x32xf32>
    %160 = math.exp %159 : vector<20x32xf32>
    %cst_57 = arith.constant 1.000000e+00 : f32
    %161 = vector.broadcast %cst_57 : f32 to vector<20x32xf32>
    %162 = arith.addf %161, %160 : vector<20x32xf32>
    %163 = arith.divf %161, %162 : vector<20x32xf32>
    %164 = vector.extract_strided_slice %154 {offsets = [0, 32], sizes = [20, 32], strides = [1, 1]} : vector<20x96xf32> to vector<20x32xf32>
    %165 = arith.negf %164 : vector<20x32xf32>
    %166 = math.exp %165 : vector<20x32xf32>
    %cst_58 = arith.constant 1.000000e+00 : f32
    %167 = vector.broadcast %cst_58 : f32 to vector<20x32xf32>
    %168 = arith.addf %167, %166 : vector<20x32xf32>
    %169 = arith.divf %167, %168 : vector<20x32xf32>
    %170 = vector.extract_strided_slice %154 {offsets = [0, 64], sizes = [20, 32], strides = [1, 1]} : vector<20x96xf32> to vector<20x32xf32>
    %cst_59 = arith.constant 1.000000e+00 : f32
    %171 = vector.broadcast %cst_59 : f32 to vector<20x32xf32>
    %172 = arith.subf %163, %171 : vector<20x32xf32>
    %173 = arith.mulf %172, %157 : vector<20x32xf32>
    %174 = arith.addf %170, %173 : vector<20x32xf32>
    %175 = math.tanh %174 : vector<20x32xf32>
    %cst_60 = arith.constant 1.000000e+00 : f32
    %176 = vector.broadcast %cst_60 : f32 to vector<20x32xf32>
    %177 = arith.subf %176, %169 : vector<20x32xf32>
    %178 = arith.mulf %177, %175 : vector<20x32xf32>
    %179 = arith.mulf %169, %104 : vector<20x32xf32>
    %180 = arith.addf %178, %179 : vector<20x32xf32>
    %cst_61 = arith.constant dense<0.000000e+00> : vector<20xf32>
    %181 = vector.multi_reduction <add>, %180, %cst_61 [1] : vector<20x32xf32> to vector<20xf32>
    %182 = vector.shape_cast %181 : vector<20xf32> to vector<20x1xf32>
    %cst_62 = arith.constant 3.200000e+01 : f32
    %183 = vector.broadcast %cst_62 : f32 to vector<20x1xf32>
    %184 = arith.divf %182, %183 : vector<20x1xf32>
    %185 = vector.broadcast %184 : vector<20x1xf32> to vector<20x32xf32>
    %186 = arith.subf %180, %185 : vector<20x32xf32>
    %187 = arith.mulf %186, %186 : vector<20x32xf32>
    %cst_63 = arith.constant dense<0.000000e+00> : vector<20xf32>
    %188 = vector.multi_reduction <add>, %187, %cst_63 [1] : vector<20x32xf32> to vector<20xf32>
    %189 = vector.shape_cast %188 : vector<20xf32> to vector<20x1xf32>
    %cst_64 = arith.constant 3.200000e+01 : f32
    %190 = vector.broadcast %cst_64 : f32 to vector<20x1xf32>
    %191 = arith.divf %189, %190 : vector<20x1xf32>
    %192 = vector.broadcast %184 : vector<20x1xf32> to vector<20x32xf32>
    %193 = arith.subf %180, %192 : vector<20x32xf32>
    %cst_65 = arith.constant 9.99999974E-6 : f32
    %194 = vector.broadcast %cst_65 : f32 to vector<20x1xf32>
    %195 = arith.addf %191, %194 : vector<20x1xf32>
    %196 = math.rsqrt %195 : vector<20x1xf32>
    %197 = vector.broadcast %196 : vector<20x1xf32> to vector<20x32xf32>
    %198 = arith.mulf %193, %197 : vector<20x32xf32>
    %199 = vector.broadcast %17 : vector<1x32xf32> to vector<20x32xf32>
    %200 = arith.mulf %198, %199 : vector<20x32xf32>
    %201 = vector.broadcast %18 : vector<1x32xf32> to vector<20x32xf32>
    %202 = arith.addf %200, %201 : vector<20x32xf32>
    %cst_66 = arith.constant dense<0.000000e+00> : vector<20x48xf32>
    %203 = tpu.matmul %202, %4, %cst_66 {dimension_numbers = #tpu.dot_dimension_numbers<[1], [0], [0], [1], [0, 0, 1, 1], [], []>} : vector<20x32xf32>, vector<32x48xf32>, vector<20x48xf32> -> vector<20x48xf32>
    %204 = vector.broadcast %19 : vector<1x48xf32> to vector<20x48xf32>
    %205 = arith.addf %203, %204 : vector<20x48xf32>
    %cst_67 = arith.constant 0.000000e+00 : f32
    %206 = vector.broadcast %cst_67 : f32 to vector<20x48xf32>
    %207 = arith.maximumf %205, %206 : vector<20x48xf32>
    %cst_68 = arith.constant dense<0.000000e+00> : vector<20x32xf32>
    %208 = tpu.matmul %207, %5, %cst_68 {dimension_numbers = #tpu.dot_dimension_numbers<[1], [0], [0], [1], [0, 0, 1, 1], [], []>} : vector<20x48xf32>, vector<48x32xf32>, vector<20x32xf32> -> vector<20x32xf32>
    %209 = arith.addf %180, %208 : vector<20x32xf32>
    %210 = vector.broadcast %20 : vector<1x32xf32> to vector<20x32xf32>
    %211 = arith.addf %209, %210 : vector<20x32xf32>
    %cst_69 = arith.constant dense<0.000000e+00> : vector<20xf32>
    %212 = vector.multi_reduction <add>, %211, %cst_69 [1] : vector<20x32xf32> to vector<20xf32>
    %213 = vector.shape_cast %212 : vector<20xf32> to vector<20x1xf32>
    %cst_70 = arith.constant 3.200000e+01 : f32
    %214 = vector.broadcast %cst_70 : f32 to vector<20x1xf32>
    %215 = arith.divf %213, %214 : vector<20x1xf32>
    %216 = vector.broadcast %215 : vector<20x1xf32> to vector<20x32xf32>
    %217 = arith.subf %211, %216 : vector<20x32xf32>
    %218 = arith.mulf %217, %217 : vector<20x32xf32>
    %cst_71 = arith.constant dense<0.000000e+00> : vector<20xf32>
    %219 = vector.multi_reduction <add>, %218, %cst_71 [1] : vector<20x32xf32> to vector<20xf32>
    %220 = vector.shape_cast %219 : vector<20xf32> to vector<20x1xf32>
    %cst_72 = arith.constant 3.200000e+01 : f32
    %221 = vector.broadcast %cst_72 : f32 to vector<20x1xf32>
    %222 = arith.divf %220, %221 : vector<20x1xf32>
    %223 = vector.broadcast %215 : vector<20x1xf32> to vector<20x32xf32>
    %224 = arith.subf %211, %223 : vector<20x32xf32>
    %cst_73 = arith.constant 9.99999974E-6 : f32
    %225 = vector.broadcast %cst_73 : f32 to vector<20x1xf32>
    %226 = arith.addf %222, %225 : vector<20x1xf32>
    %227 = math.rsqrt %226 : vector<20x1xf32>
    %228 = vector.broadcast %227 : vector<20x1xf32> to vector<20x32xf32>
    %229 = arith.mulf %224, %228 : vector<20x32xf32>
    %230 = vector.broadcast %13 : vector<1x32xf32> to vector<20x32xf32>
    %231 = arith.mulf %229, %230 : vector<20x32xf32>
    %232 = vector.broadcast %14 : vector<1x32xf32> to vector<20x32xf32>
    %233 = arith.addf %231, %232 : vector<20x32xf32>
    %cst_74 = arith.constant dense<0.000000e+00> : vector<20x32xf32>
    %234 = tpu.matmul %233, %1, %cst_74 {dimension_numbers = #tpu.dot_dimension_numbers<[1], [0], [0], [1], [0, 0, 1, 1], [], []>} : vector<20x32xf32>, vector<32x32xf32>, vector<20x32xf32> -> vector<20x32xf32>
    %235 = vector.broadcast %12 : vector<1x32xf32> to vector<20x32xf32>
    %236 = arith.addf %234, %235 : vector<20x32xf32>
    %cst_75 = arith.constant dense<0.000000e+00> : vector<20x256xf32>
    %237 = tpu.matmul %236, %51, %cst_75 {dimension_numbers = #tpu.dot_dimension_numbers<[1], [1], [0], [0], [0, 0, 1, 0], [], []>} : vector<20x32xf32>, vector<256x32xf32>, vector<20x256xf32> -> vector<20x256xf32>
    %cst_76 = arith.constant 0.176776692 : f32
    %238 = vector.broadcast %cst_76 : f32 to vector<20x256xf32>
    %239 = arith.mulf %237, %238 : vector<20x256xf32>
    %cst_77 = arith.constant -1.000000e+30 : f32
    %240 = vector.broadcast %cst_77 : f32 to vector<20x256xf32>
    %241 = arith.select %103, %239, %240 : vector<20x256xi1>, vector<20x256xf32>
    %cst_78 = arith.constant dense<0xFF800000> : vector<256xf32>
    %242 = vector.multi_reduction <maximumf>, %241, %cst_78 [0] : vector<20x256xf32> to vector<256xf32>
    %243 = vector.shape_cast %242 : vector<256xf32> to vector<1x256xf32>
    %244 = vector.broadcast %243 : vector<1x256xf32> to vector<20x256xf32>
    %245 = arith.subf %241, %244 : vector<20x256xf32>
    %246 = math.exp %245 : vector<20x256xf32>
    %cst_79 = arith.constant dense<0.000000e+00> : vector<256xf32>
    %247 = vector.multi_reduction <add>, %246, %cst_79 [0] : vector<20x256xf32> to vector<256xf32>
    %248 = vector.shape_cast %247 : vector<256xf32> to vector<1x256xf32>
    %249 = vector.broadcast %248 : vector<1x256xf32> to vector<20x256xf32>
    %250 = arith.divf %246, %249 : vector<20x256xf32>
    %cst_80 = arith.constant dense<0.000000e+00> : vector<20xf32>
    %251 = vector.multi_reduction <add>, %250, %cst_80 [1] : vector<20x256xf32> to vector<20xf32>
    %252 = vector.shape_cast %251 : vector<20xf32> to vector<20x1xf32>
    %cst_81 = arith.constant 9.99999993E-9 : f32
    %253 = vector.broadcast %cst_81 : f32 to vector<20x1xf32>
    %254 = arith.addf %252, %253 : vector<20x1xf32>
    %255 = vector.broadcast %254 : vector<20x1xf32> to vector<20x256xf32>
    %256 = arith.divf %250, %255 : vector<20x256xf32>
    %cst_82 = arith.constant dense<0.000000e+00> : vector<20x32xf32>
    %257 = tpu.matmul %256, %52, %cst_82 {dimension_numbers = #tpu.dot_dimension_numbers<[1], [0], [0], [1], [0, 0, 1, 1], [], []>} : vector<20x256xf32>, vector<256x32xf32>, vector<20x32xf32> -> vector<20x32xf32>
    %258 = tpu.concatenate %257, %211 in 1 : vector<20x32xf32>, vector<20x32xf32> -> vector<20x64xf32>
    %cst_83 = arith.constant dense<0.000000e+00> : vector<20x96xf32>
    %259 = tpu.matmul %258, %2, %cst_83 {dimension_numbers = #tpu.dot_dimension_numbers<[1], [0], [0], [1], [0, 0, 1, 1], [], []>} : vector<20x64xf32>, vector<64x96xf32>, vector<20x96xf32> -> vector<20x96xf32>
    %260 = vector.broadcast %15 : vector<1x96xf32> to vector<20x96xf32>
    %261 = arith.addf %259, %260 : vector<20x96xf32>
    %cst_84 = arith.constant dense<0.000000e+00> : vector<20x32xf32>
    %262 = tpu.matmul %211, %3, %cst_84 {dimension_numbers = #tpu.dot_dimension_numbers<[1], [0], [0], [1], [0, 0, 1, 1], [], []>} : vector<20x32xf32>, vector<32x32xf32>, vector<20x32xf32> -> vector<20x32xf32>
    %263 = vector.broadcast %16 : vector<1x32xf32> to vector<20x32xf32>
    %264 = arith.addf %262, %263 : vector<20x32xf32>
    %265 = vector.extract_strided_slice %261 {offsets = [0, 0], sizes = [20, 32], strides = [1, 1]} : vector<20x96xf32> to vector<20x32xf32>
    %266 = arith.negf %265 : vector<20x32xf32>
    %267 = math.exp %266 : vector<20x32xf32>
    %cst_85 = arith.constant 1.000000e+00 : f32
    %268 = vector.broadcast %cst_85 : f32 to vector<20x32xf32>
    %269 = arith.addf %268, %267 : vector<20x32xf32>
    %270 = arith.divf %268, %269 : vector<20x32xf32>
    %271 = vector.extract_strided_slice %261 {offsets = [0, 32], sizes = [20, 32], strides = [1, 1]} : vector<20x96xf32> to vector<20x32xf32>
    %272 = arith.negf %271 : vector<20x32xf32>
    %273 = math.exp %272 : vector<20x32xf32>
    %cst_86 = arith.constant 1.000000e+00 : f32
    %274 = vector.broadcast %cst_86 : f32 to vector<20x32xf32>
    %275 = arith.addf %274, %273 : vector<20x32xf32>
    %276 = arith.divf %274, %275 : vector<20x32xf32>
    %277 = vector.extract_strided_slice %261 {offsets = [0, 64], sizes = [20, 32], strides = [1, 1]} : vector<20x96xf32> to vector<20x32xf32>
    %cst_87 = arith.constant 1.000000e+00 : f32
    %278 = vector.broadcast %cst_87 : f32 to vector<20x32xf32>
    %279 = arith.subf %270, %278 : vector<20x32xf32>
    %280 = arith.mulf %279, %264 : vector<20x32xf32>
    %281 = arith.addf %277, %280 : vector<20x32xf32>
    %282 = math.tanh %281 : vector<20x32xf32>
    %cst_88 = arith.constant 1.000000e+00 : f32
    %283 = vector.broadcast %cst_88 : f32 to vector<20x32xf32>
    %284 = arith.subf %283, %276 : vector<20x32xf32>
    %285 = arith.mulf %284, %282 : vector<20x32xf32>
    %286 = arith.mulf %276, %211 : vector<20x32xf32>
    %287 = arith.addf %285, %286 : vector<20x32xf32>
    %cst_89 = arith.constant dense<0.000000e+00> : vector<20xf32>
    %288 = vector.multi_reduction <add>, %287, %cst_89 [1] : vector<20x32xf32> to vector<20xf32>
    %289 = vector.shape_cast %288 : vector<20xf32> to vector<20x1xf32>
    %cst_90 = arith.constant 3.200000e+01 : f32
    %290 = vector.broadcast %cst_90 : f32 to vector<20x1xf32>
    %291 = arith.divf %289, %290 : vector<20x1xf32>
    %292 = vector.broadcast %291 : vector<20x1xf32> to vector<20x32xf32>
    %293 = arith.subf %287, %292 : vector<20x32xf32>
    %294 = arith.mulf %293, %293 : vector<20x32xf32>
    %cst_91 = arith.constant dense<0.000000e+00> : vector<20xf32>
    %295 = vector.multi_reduction <add>, %294, %cst_91 [1] : vector<20x32xf32> to vector<20xf32>
    %296 = vector.shape_cast %295 : vector<20xf32> to vector<20x1xf32>
    %cst_92 = arith.constant 3.200000e+01 : f32
    %297 = vector.broadcast %cst_92 : f32 to vector<20x1xf32>
    %298 = arith.divf %296, %297 : vector<20x1xf32>
    %299 = vector.broadcast %291 : vector<20x1xf32> to vector<20x32xf32>
    %300 = arith.subf %287, %299 : vector<20x32xf32>
    %cst_93 = arith.constant 9.99999974E-6 : f32
    %301 = vector.broadcast %cst_93 : f32 to vector<20x1xf32>
    %302 = arith.addf %298, %301 : vector<20x1xf32>
    %303 = math.rsqrt %302 : vector<20x1xf32>
    %304 = vector.broadcast %303 : vector<20x1xf32> to vector<20x32xf32>
    %305 = arith.mulf %300, %304 : vector<20x32xf32>
    %306 = vector.broadcast %17 : vector<1x32xf32> to vector<20x32xf32>
    %307 = arith.mulf %305, %306 : vector<20x32xf32>
    %308 = vector.broadcast %18 : vector<1x32xf32> to vector<20x32xf32>
    %309 = arith.addf %307, %308 : vector<20x32xf32>
    %cst_94 = arith.constant dense<0.000000e+00> : vector<20x48xf32>
    %310 = tpu.matmul %309, %4, %cst_94 {dimension_numbers = #tpu.dot_dimension_numbers<[1], [0], [0], [1], [0, 0, 1, 1], [], []>} : vector<20x32xf32>, vector<32x48xf32>, vector<20x48xf32> -> vector<20x48xf32>
    %311 = vector.broadcast %19 : vector<1x48xf32> to vector<20x48xf32>
    %312 = arith.addf %310, %311 : vector<20x48xf32>
    %cst_95 = arith.constant 0.000000e+00 : f32
    %313 = vector.broadcast %cst_95 : f32 to vector<20x48xf32>
    %314 = arith.maximumf %312, %313 : vector<20x48xf32>
    %cst_96 = arith.constant dense<0.000000e+00> : vector<20x32xf32>
    %315 = tpu.matmul %314, %5, %cst_96 {dimension_numbers = #tpu.dot_dimension_numbers<[1], [0], [0], [1], [0, 0, 1, 1], [], []>} : vector<20x48xf32>, vector<48x32xf32>, vector<20x32xf32> -> vector<20x32xf32>
    %316 = arith.addf %287, %315 : vector<20x32xf32>
    %317 = vector.broadcast %20 : vector<1x32xf32> to vector<20x32xf32>
    %318 = arith.addf %316, %317 : vector<20x32xf32>
    %cst_97 = arith.constant dense<0.000000e+00> : vector<20xf32>
    %319 = vector.multi_reduction <add>, %318, %cst_97 [1] : vector<20x32xf32> to vector<20xf32>
    %320 = vector.shape_cast %319 : vector<20xf32> to vector<20x1xf32>
    %cst_98 = arith.constant 3.200000e+01 : f32
    %321 = vector.broadcast %cst_98 : f32 to vector<20x1xf32>
    %322 = arith.divf %320, %321 : vector<20x1xf32>
    %323 = vector.broadcast %322 : vector<20x1xf32> to vector<20x32xf32>
    %324 = arith.subf %318, %323 : vector<20x32xf32>
    %325 = arith.mulf %324, %324 : vector<20x32xf32>
    %cst_99 = arith.constant dense<0.000000e+00> : vector<20xf32>
    %326 = vector.multi_reduction <add>, %325, %cst_99 [1] : vector<20x32xf32> to vector<20xf32>
    %327 = vector.shape_cast %326 : vector<20xf32> to vector<20x1xf32>
    %cst_100 = arith.constant 3.200000e+01 : f32
    %328 = vector.broadcast %cst_100 : f32 to vector<20x1xf32>
    %329 = arith.divf %327, %328 : vector<20x1xf32>
    %330 = vector.broadcast %322 : vector<20x1xf32> to vector<20x32xf32>
    %331 = arith.subf %318, %330 : vector<20x32xf32>
    %cst_101 = arith.constant 9.99999974E-6 : f32
    %332 = vector.broadcast %cst_101 : f32 to vector<20x1xf32>
    %333 = arith.addf %329, %332 : vector<20x1xf32>
    %334 = math.rsqrt %333 : vector<20x1xf32>
    %335 = vector.broadcast %334 : vector<20x1xf32> to vector<20x32xf32>
    %336 = arith.mulf %331, %335 : vector<20x32xf32>
    %337 = vector.broadcast %13 : vector<1x32xf32> to vector<20x32xf32>
    %338 = arith.mulf %336, %337 : vector<20x32xf32>
    %339 = vector.broadcast %14 : vector<1x32xf32> to vector<20x32xf32>
    %340 = arith.addf %338, %339 : vector<20x32xf32>
    %cst_102 = arith.constant dense<0.000000e+00> : vector<20x32xf32>
    %341 = tpu.matmul %340, %1, %cst_102 {dimension_numbers = #tpu.dot_dimension_numbers<[1], [0], [0], [1], [0, 0, 1, 1], [], []>} : vector<20x32xf32>, vector<32x32xf32>, vector<20x32xf32> -> vector<20x32xf32>
    %342 = vector.broadcast %12 : vector<1x32xf32> to vector<20x32xf32>
    %343 = arith.addf %341, %342 : vector<20x32xf32>
    %cst_103 = arith.constant dense<0.000000e+00> : vector<20x256xf32>
    %344 = tpu.matmul %343, %51, %cst_103 {dimension_numbers = #tpu.dot_dimension_numbers<[1], [1], [0], [0], [0, 0, 1, 0], [], []>} : vector<20x32xf32>, vector<256x32xf32>, vector<20x256xf32> -> vector<20x256xf32>
    %cst_104 = arith.constant 0.176776692 : f32
    %345 = vector.broadcast %cst_104 : f32 to vector<20x256xf32>
    %346 = arith.mulf %344, %345 : vector<20x256xf32>
    %cst_105 = arith.constant -1.000000e+30 : f32
    %347 = vector.broadcast %cst_105 : f32 to vector<20x256xf32>
    %348 = arith.select %103, %346, %347 : vector<20x256xi1>, vector<20x256xf32>
    %cst_106 = arith.constant dense<0xFF800000> : vector<256xf32>
    %349 = vector.multi_reduction <maximumf>, %348, %cst_106 [0] : vector<20x256xf32> to vector<256xf32>
    %350 = vector.shape_cast %349 : vector<256xf32> to vector<1x256xf32>
    %351 = vector.broadcast %350 : vector<1x256xf32> to vector<20x256xf32>
    %352 = arith.subf %348, %351 : vector<20x256xf32>
    %353 = math.exp %352 : vector<20x256xf32>
    %cst_107 = arith.constant dense<0.000000e+00> : vector<256xf32>
    %354 = vector.multi_reduction <add>, %353, %cst_107 [0] : vector<20x256xf32> to vector<256xf32>
    %355 = vector.shape_cast %354 : vector<256xf32> to vector<1x256xf32>
    %356 = vector.broadcast %355 : vector<1x256xf32> to vector<20x256xf32>
    %357 = arith.divf %353, %356 : vector<20x256xf32>
    %cst_108 = arith.constant dense<0.000000e+00> : vector<20xf32>
    %358 = vector.multi_reduction <add>, %357, %cst_108 [1] : vector<20x256xf32> to vector<20xf32>
    %359 = vector.shape_cast %358 : vector<20xf32> to vector<20x1xf32>
    %cst_109 = arith.constant 9.99999993E-9 : f32
    %360 = vector.broadcast %cst_109 : f32 to vector<20x1xf32>
    %361 = arith.addf %359, %360 : vector<20x1xf32>
    %362 = vector.broadcast %361 : vector<20x1xf32> to vector<20x256xf32>
    %363 = arith.divf %357, %362 : vector<20x256xf32>
    %cst_110 = arith.constant dense<0.000000e+00> : vector<20x32xf32>
    %364 = tpu.matmul %363, %52, %cst_110 {dimension_numbers = #tpu.dot_dimension_numbers<[1], [0], [0], [1], [0, 0, 1, 1], [], []>} : vector<20x256xf32>, vector<256x32xf32>, vector<20x32xf32> -> vector<20x32xf32>
    %365 = tpu.concatenate %364, %318 in 1 : vector<20x32xf32>, vector<20x32xf32> -> vector<20x64xf32>
    %cst_111 = arith.constant dense<0.000000e+00> : vector<20x96xf32>
    %366 = tpu.matmul %365, %2, %cst_111 {dimension_numbers = #tpu.dot_dimension_numbers<[1], [0], [0], [1], [0, 0, 1, 1], [], []>} : vector<20x64xf32>, vector<64x96xf32>, vector<20x96xf32> -> vector<20x96xf32>
    %367 = vector.broadcast %15 : vector<1x96xf32> to vector<20x96xf32>
    %368 = arith.addf %366, %367 : vector<20x96xf32>
    %cst_112 = arith.constant dense<0.000000e+00> : vector<20x32xf32>
    %369 = tpu.matmul %318, %3, %cst_112 {dimension_numbers = #tpu.dot_dimension_numbers<[1], [0], [0], [1], [0, 0, 1, 1], [], []>} : vector<20x32xf32>, vector<32x32xf32>, vector<20x32xf32> -> vector<20x32xf32>
    %370 = vector.broadcast %16 : vector<1x32xf32> to vector<20x32xf32>
    %371 = arith.addf %369, %370 : vector<20x32xf32>
    %372 = vector.extract_strided_slice %368 {offsets = [0, 0], sizes = [20, 32], strides = [1, 1]} : vector<20x96xf32> to vector<20x32xf32>
    %373 = arith.negf %372 : vector<20x32xf32>
    %374 = math.exp %373 : vector<20x32xf32>
    %cst_113 = arith.constant 1.000000e+00 : f32
    %375 = vector.broadcast %cst_113 : f32 to vector<20x32xf32>
    %376 = arith.addf %375, %374 : vector<20x32xf32>
    %377 = arith.divf %375, %376 : vector<20x32xf32>
    %378 = vector.extract_strided_slice %368 {offsets = [0, 32], sizes = [20, 32], strides = [1, 1]} : vector<20x96xf32> to vector<20x32xf32>
    %379 = arith.negf %378 : vector<20x32xf32>
    %380 = math.exp %379 : vector<20x32xf32>
    %cst_114 = arith.constant 1.000000e+00 : f32
    %381 = vector.broadcast %cst_114 : f32 to vector<20x32xf32>
    %382 = arith.addf %381, %380 : vector<20x32xf32>
    %383 = arith.divf %381, %382 : vector<20x32xf32>
    %384 = vector.extract_strided_slice %368 {offsets = [0, 64], sizes = [20, 32], strides = [1, 1]} : vector<20x96xf32> to vector<20x32xf32>
    %cst_115 = arith.constant 1.000000e+00 : f32
    %385 = vector.broadcast %cst_115 : f32 to vector<20x32xf32>
    %386 = arith.subf %377, %385 : vector<20x32xf32>
    %387 = arith.mulf %386, %371 : vector<20x32xf32>
    %388 = arith.addf %384, %387 : vector<20x32xf32>
    %389 = math.tanh %388 : vector<20x32xf32>
    %cst_116 = arith.constant 1.000000e+00 : f32
    %390 = vector.broadcast %cst_116 : f32 to vector<20x32xf32>
    %391 = arith.subf %390, %383 : vector<20x32xf32>
    %392 = arith.mulf %391, %389 : vector<20x32xf32>
    %393 = arith.mulf %383, %318 : vector<20x32xf32>
    %394 = arith.addf %392, %393 : vector<20x32xf32>
    %cst_117 = arith.constant dense<0.000000e+00> : vector<20xf32>
    %395 = vector.multi_reduction <add>, %394, %cst_117 [1] : vector<20x32xf32> to vector<20xf32>
    %396 = vector.shape_cast %395 : vector<20xf32> to vector<20x1xf32>
    %cst_118 = arith.constant 3.200000e+01 : f32
    %397 = vector.broadcast %cst_118 : f32 to vector<20x1xf32>
    %398 = arith.divf %396, %397 : vector<20x1xf32>
    %399 = vector.broadcast %398 : vector<20x1xf32> to vector<20x32xf32>
    %400 = arith.subf %394, %399 : vector<20x32xf32>
    %401 = arith.mulf %400, %400 : vector<20x32xf32>
    %cst_119 = arith.constant dense<0.000000e+00> : vector<20xf32>
    %402 = vector.multi_reduction <add>, %401, %cst_119 [1] : vector<20x32xf32> to vector<20xf32>
    %403 = vector.shape_cast %402 : vector<20xf32> to vector<20x1xf32>
    %cst_120 = arith.constant 3.200000e+01 : f32
    %404 = vector.broadcast %cst_120 : f32 to vector<20x1xf32>
    %405 = arith.divf %403, %404 : vector<20x1xf32>
    %406 = vector.broadcast %398 : vector<20x1xf32> to vector<20x32xf32>
    %407 = arith.subf %394, %406 : vector<20x32xf32>
    %cst_121 = arith.constant 9.99999974E-6 : f32
    %408 = vector.broadcast %cst_121 : f32 to vector<20x1xf32>
    %409 = arith.addf %405, %408 : vector<20x1xf32>
    %410 = math.rsqrt %409 : vector<20x1xf32>
    %411 = vector.broadcast %410 : vector<20x1xf32> to vector<20x32xf32>
    %412 = arith.mulf %407, %411 : vector<20x32xf32>
    %413 = vector.broadcast %17 : vector<1x32xf32> to vector<20x32xf32>
    %414 = arith.mulf %412, %413 : vector<20x32xf32>
    %415 = vector.broadcast %18 : vector<1x32xf32> to vector<20x32xf32>
    %416 = arith.addf %414, %415 : vector<20x32xf32>
    %cst_122 = arith.constant dense<0.000000e+00> : vector<20x48xf32>
    %417 = tpu.matmul %416, %4, %cst_122 {dimension_numbers = #tpu.dot_dimension_numbers<[1], [0], [0], [1], [0, 0, 1, 1], [], []>} : vector<20x32xf32>, vector<32x48xf32>, vector<20x48xf32> -> vector<20x48xf32>
    %418 = vector.broadcast %19 : vector<1x48xf32> to vector<20x48xf32>
    %419 = arith.addf %417, %418 : vector<20x48xf32>
    %cst_123 = arith.constant 0.000000e+00 : f32
    %420 = vector.broadcast %cst_123 : f32 to vector<20x48xf32>
    %421 = arith.maximumf %419, %420 : vector<20x48xf32>
    %cst_124 = arith.constant dense<0.000000e+00> : vector<20x32xf32>
    %422 = tpu.matmul %421, %5, %cst_124 {dimension_numbers = #tpu.dot_dimension_numbers<[1], [0], [0], [1], [0, 0, 1, 1], [], []>} : vector<20x48xf32>, vector<48x32xf32>, vector<20x32xf32> -> vector<20x32xf32>
    %423 = arith.addf %394, %422 : vector<20x32xf32>
    %424 = vector.broadcast %20 : vector<1x32xf32> to vector<20x32xf32>
    %425 = arith.addf %423, %424 : vector<20x32xf32>
    %426 = vector.extract_strided_slice %357 {offsets = [0, 0], sizes = [5, 64], strides = [1, 1]} : vector<20x256xf32> to vector<5x64xf32>
    %427 = vector.extract_strided_slice %357 {offsets = [5, 64], sizes = [5, 64], strides = [1, 1]} : vector<20x256xf32> to vector<5x64xf32>
    %428 = vector.extract_strided_slice %357 {offsets = [10, 128], sizes = [5, 64], strides = [1, 1]} : vector<20x256xf32> to vector<5x64xf32>
    %429 = vector.extract_strided_slice %357 {offsets = [15, 192], sizes = [5, 64], strides = [1, 1]} : vector<20x256xf32> to vector<5x64xf32>
    %430 = vector.shape_cast %426 : vector<5x64xf32> to vector<1x5x64xf32>
    %431 = vector.shape_cast %427 : vector<5x64xf32> to vector<1x5x64xf32>
    %432 = vector.shape_cast %428 : vector<5x64xf32> to vector<1x5x64xf32>
    %433 = vector.shape_cast %429 : vector<5x64xf32> to vector<1x5x64xf32>
    %434 = tpu.concatenate %430, %431, %432, %433 in 0 : vector<1x5x64xf32>, vector<1x5x64xf32>, vector<1x5x64xf32>, vector<1x5x64xf32> -> vector<4x5x64xf32>
    %c0_125 = arith.constant 0 : index
    %c0_126 = arith.constant 0 : index
    %c0_127 = arith.constant 0 : index
    %435 = vector.load %arg4[%c0_125, %c0_126, %c0_127] : memref<4x5x64xf32, #tpu.memory_space<vmem>>, vector<4x5x64xf32>
    tpu.vector_store %arg4[%c0_125, %c0_126, %c0_127], %434 {strides = array<i32>} : memref<4x5x64xf32, #tpu.memory_space<vmem>>, vector<4x5x64xf32>,
    %436 = vector.shape_cast %425 : vector<20x32xf32> to vector<20x1x32xf32>
    %437 = vector.shape_cast %8 : vector<64x32xf32> to vector<1x64x32xf32>
    %438 = vector.broadcast %436 : vector<20x1x32xf32> to vector<20x64x32xf32>
    %439 = vector.broadcast %437 : vector<1x64x32xf32> to vector<20x64x32xf32>
    %440 = arith.addf %438, %439 : vector<20x64x32xf32>
    %441 = vector.shape_cast %440 : vector<20x64x32xf32> to vector<1280x32xf32>
    %cst_128 = arith.constant dense<0.000000e+00> : vector<1280x48xf32>
    %442 = tpu.matmul %441, %6, %cst_128 {dimension_numbers = #tpu.dot_dimension_numbers<[1], [0], [0], [1], [0, 0, 1, 1], [], []>} : vector<1280x32xf32>, vector<32x48xf32>, vector<1280x48xf32> -> vector<1280x48xf32>
    %443 = vector.broadcast %21 : vector<1x48xf32> to vector<1280x48xf32>
    %444 = arith.addf %442, %443 : vector<1280x48xf32>
    %cst_129 = arith.constant 0.000000e+00 : f32
    %445 = vector.broadcast %cst_129 : f32 to vector<1280x48xf32>
    %446 = arith.maximumf %444, %445 : vector<1280x48xf32>
    %cst_130 = arith.constant dense<0.000000e+00> : vector<1280x33xf32>
    %447 = tpu.matmul %446, %7, %cst_130 {dimension_numbers = #tpu.dot_dimension_numbers<[1], [0], [0], [1], [0, 0, 1, 1], [], []>} : vector<1280x48xf32>, vector<48x33xf32>, vector<1280x33xf32> -> vector<1280x33xf32>
    %448 = vector.broadcast %22 : vector<1x33xf32> to vector<1280x33xf32>
    %449 = arith.addf %447, %448 : vector<1280x33xf32>
    %450 = vector.shape_cast %449 : vector<1280x33xf32> to vector<4x5x64x33xf32>
    %451 = vector.extract_strided_slice %450 {offsets = [0, 0, 0, 0], sizes = [4, 5, 64, 32], strides = [1, 1, 1, 1]} : vector<4x5x64x33xf32> to vector<4x5x64x32xf32>
    %452 = vector.extract_strided_slice %450 {offsets = [0, 0, 0, 32], sizes = [4, 5, 64, 1], strides = [1, 1, 1, 1]} : vector<4x5x64x33xf32> to vector<4x5x64x1xf32>
    %cst_131 = arith.constant dense<0xFF800000> : vector<4x64x1xf32>
    %453 = vector.multi_reduction <maximumf>, %452, %cst_131 [1] : vector<4x5x64x1xf32> to vector<4x64x1xf32>
    %454 = vector.shape_cast %453 : vector<4x64x1xf32> to vector<4x1x64x1xf32>
    %455 = vector.broadcast %454 : vector<4x1x64x1xf32> to vector<4x5x64x1xf32>
    %456 = arith.subf %452, %455 : vector<4x5x64x1xf32>
    %457 = math.exp %456 : vector<4x5x64x1xf32>
    %cst_132 = arith.constant dense<0.000000e+00> : vector<4x64x1xf32>
    %458 = vector.multi_reduction <add>, %457, %cst_132 [1] : vector<4x5x64x1xf32> to vector<4x64x1xf32>
    %459 = vector.shape_cast %458 : vector<4x64x1xf32> to vector<4x1x64x1xf32>
    %460 = vector.broadcast %459 : vector<4x1x64x1xf32> to vector<4x5x64x1xf32>
    %461 = arith.divf %457, %460 : vector<4x5x64x1xf32>
    %462 = vector.broadcast %461 : vector<4x5x64x1xf32> to vector<4x5x64x32xf32>
    %463 = arith.mulf %462, %451 : vector<4x5x64x32xf32>
    %cst_133 = arith.constant dense<0.000000e+00> : vector<4x64x32xf32>
    %464 = vector.multi_reduction <add>, %463, %cst_133 [1] : vector<4x5x64x32xf32> to vector<4x64x32xf32>
    %465 = vector.shape_cast %464 : vector<4x64x32xf32> to vector<256x32xf32>
    %cst_134 = arith.constant dense<0.000000e+00> : vector<256xf32>
    %466 = vector.multi_reduction <add>, %465, %cst_134 [1] : vector<256x32xf32> to vector<256xf32>
    %467 = vector.shape_cast %466 : vector<256xf32> to vector<256x1xf32>
    %cst_135 = arith.constant 3.200000e+01 : f32
    %468 = vector.broadcast %cst_135 : f32 to vector<256x1xf32>
    %469 = arith.divf %467, %468 : vector<256x1xf32>
    %470 = vector.broadcast %469 : vector<256x1xf32> to vector<256x32xf32>
    %471 = arith.subf %465, %470 : vector<256x32xf32>
    %472 = arith.mulf %471, %471 : vector<256x32xf32>
    %cst_136 = arith.constant dense<0.000000e+00> : vector<256xf32>
    %473 = vector.multi_reduction <add>, %472, %cst_136 [1] : vector<256x32xf32> to vector<256xf32>
    %474 = vector.shape_cast %473 : vector<256xf32> to vector<256x1xf32>
    %cst_137 = arith.constant 3.200000e+01 : f32
    %475 = vector.broadcast %cst_137 : f32 to vector<256x1xf32>
    %476 = arith.divf %474, %475 : vector<256x1xf32>
    %477 = vector.broadcast %469 : vector<256x1xf32> to vector<256x32xf32>
    %478 = arith.subf %465, %477 : vector<256x32xf32>
    %cst_138 = arith.constant 9.99999974E-6 : f32
    %479 = vector.broadcast %cst_138 : f32 to vector<256x1xf32>
    %480 = arith.addf %476, %479 : vector<256x1xf32>
    %481 = math.rsqrt %480 : vector<256x1xf32>
    %482 = vector.broadcast %481 : vector<256x1xf32> to vector<256x32xf32>
    %483 = arith.mulf %478, %482 : vector<256x32xf32>
    %484 = vector.broadcast %23 : vector<1x32xf32> to vector<256x32xf32>
    %485 = arith.mulf %483, %484 : vector<256x32xf32>
    %486 = vector.broadcast %24 : vector<1x32xf32> to vector<256x32xf32>
    %487 = arith.addf %485, %486 : vector<256x32xf32>
    %c0_139 = arith.constant 0 : index
    %c0_140 = arith.constant 0 : index
    %488 = vector.load %arg1[%c0_139, %c0_140] : memref<512x32xf32, #tpu.memory_space<vmem>>, vector<256x32xf32>
    %489 = arith.subf %487, %488 : vector<256x32xf32>
    %490 = arith.mulf %489, %489 : vector<256x32xf32>
    %491 = vector.shape_cast %490 : vector<256x32xf32> to vector<4x64x32xf32>
    %cst_141 = arith.constant dense<0.000000e+00> : vector<4x32xf32>
    %492 = vector.multi_reduction <add>, %491, %cst_141 [1] : vector<4x64x32xf32> to vector<4x32xf32>
    %c128_142 = arith.constant 128 : index
    %c0_143 = arith.constant 0 : index
    %493 = vector.load %arg1[%c128_142, %c0_143] : memref<512x32xf32, #tpu.memory_space<vmem>>, vector<256x32xf32>
    %494 = arith.subf %487, %493 : vector<256x32xf32>
    %495 = arith.mulf %494, %494 : vector<256x32xf32>
    %496 = vector.shape_cast %495 : vector<256x32xf32> to vector<4x64x32xf32>
    %cst_144 = arith.constant dense<0.000000e+00> : vector<4x32xf32>
    %497 = vector.multi_reduction <add>, %496, %cst_144 [1] : vector<4x64x32xf32> to vector<4x32xf32>
    %c256 = arith.constant 256 : index
    %c0_145 = arith.constant 0 : index
    %498 = vector.load %arg1[%c256, %c0_145] : memref<512x32xf32, #tpu.memory_space<vmem>>, vector<256x32xf32>
    %499 = arith.subf %487, %498 : vector<256x32xf32>
    %500 = arith.mulf %499, %499 : vector<256x32xf32>
    %501 = vector.shape_cast %500 : vector<256x32xf32> to vector<4x64x32xf32>
    %cst_146 = arith.constant dense<0.000000e+00> : vector<4x32xf32>
    %502 = vector.multi_reduction <add>, %501, %cst_146 [1] : vector<4x64x32xf32> to vector<4x32xf32>
    %503 = tpu.concatenate %492, %497, %502 in 0 : vector<4x32xf32>, vector<4x32xf32>, vector<4x32xf32> -> vector<12x32xf32>
    %c0_147 = arith.constant 0 : index
    %c0_148 = arith.constant 0 : index
    %504 = vector.load %arg5[%c0_147, %c0_148] : memref<12x32xf32, #tpu.memory_space<vmem>>, vector<12x32xf32>
    tpu.vector_store %arg5[%c0_147, %c0_148], %503 {strides = array<i32>} : memref<12x32xf32, #tpu.memory_space<vmem>>, vector<12x32xf32>,
    return
  }
  func.func @transform_0(%arg0: i32) -> (i32, i32) {
    %c0_i32 = arith.constant 0 : i32
    %c0_i32_0 = arith.constant 0 : i32
    %c0_i32_1 = arith.constant 0 : i32
    return %c0_i32, %c0_i32_0 : i32, i32
  }
  func.func @transform_1(%arg0: i32) -> (i32, i32) {
    %c0_i32 = arith.constant 0 : i32
    %c0_i32_0 = arith.constant 0 : i32
    %c0_i32_1 = arith.constant 0 : i32
    return %c0_i32, %c0_i32_0 : i32, i32
  }
  func.func @transform_2(%arg0: i32) -> (i32, i32) {
    %c0_i32 = arith.constant 0 : i32
    %c0_i32_0 = arith.constant 0 : i32
    %c0_i32_1 = arith.constant 0 : i32
    return %c0_i32, %c0_i32_0 : i32, i32
  }
  func.func @transform_3(%arg0: i32) -> (i32, i32, i32) {
    %c0_i32 = arith.constant 0 : i32
    %c0_i32_0 = arith.constant 0 : i32
    %c0_i32_1 = arith.constant 0 : i32
    %c0_i32_2 = arith.constant 0 : i32
    return %c0_i32, %c0_i32_0, %c0_i32_1 : i32, i32, i32
  }
  func.func @transform_4(%arg0: i32) -> (i32, i32) {
    %c0_i32 = arith.constant 0 : i32
    %c0_i32_0 = arith.constant 0 : i32
    %c0_i32_1 = arith.constant 0 : i32
    return %c0_i32, %c0_i32_0 : i32, i32
  }
}

</mosaic_0001>

<llo_original>
// kernel: slot_trainer_forward.1
$region0: #{slot_trainer_forward.1}
  #allocation0 [shape = 'u32[]', space=smem, size = 0x4, offset = 0x4, fixed_abs, tag = 'smem constant byte address 0x4 - core index']
  #allocation1 [shape = 'u32[144,128]{1,0:T(1,128)}', space=vmem, size = 0x12000, scoped, tag = 'internal scratch']
  %s0 = inlined_call_operand.vmem [shape: f32[512,32], index: 0, kind: input, shape index: {}]
  %s1 = inlined_call_operand.vmem [shape: f32[20,32], index: 1, kind: input, shape index: {}]
  %s2 = inlined_call_operand.vmem [shape: f32[400,128], index: 2, kind: input, shape index: {}]
  %s3 = inlined_call_operand.vmem [shape: f32[4,5,64], index: 3, kind: output, shape index: {0}]
  %s4 = inlined_call_operand.vmem [shape: f32[12,32], index: 4, kind: output, shape index: {1}]
  %5 = xla_tuple %s3, %s4
  %s6 = sld [smem:[#allocation0]]
  $region30: #{slot_trainer_forward.1} parent=0
    _
  %s8 = ssub.s32 1, %s6
  %s9 = scalar_select 0, %s8, %s6
  // Predicated region
  $region2: #{slot_trainer_forward.1} parent=0 // pred_check
    _
  $region3: #{slot_trainer_forward.1} parent=0 // pred_check_branch
    %11 = sbr.rel (0) target = $region5
  $region4: #{slot_trainer_forward.1} parent=0 // pred_region
    _
  $region5: #{slot_trainer_forward.1} parent=0 // pred_fallthru
    _
  // Predicated region
  $region6: #{slot_trainer_forward.1} parent=0 // pred_check
    _
  $region7: #{slot_trainer_forward.1} parent=0 // pred_check_branch
    %13 = sbr.rel (0) target = $region9
  $region8: #{slot_trainer_forward.1} parent=0 // pred_region
    _
  $region9: #{slot_trainer_forward.1} parent=0 // pred_fallthru
    _
  // Predicated region
  $region10: #{slot_trainer_forward.1} parent=0 // pred_check
    _
  $region11: #{slot_trainer_forward.1} parent=0 // pred_check_branch
    %15 = sbr.rel (0) target = $region13
  $region12: #{slot_trainer_forward.1} parent=0 // pred_region
    _
  $region13: #{slot_trainer_forward.1} parent=0 // pred_fallthru
    _
  %v16 = vld [vmem:[%s2] sm:$0xff]
  %v17 = vld [vmem:[%s2 + $0x8] sm:$0xff]
  %v18 = vld [vmem:[%s2 + $0x10] sm:$0xff]
  %v19 = vld [vmem:[%s2 + $0x18] sm:$0xff]
  %v20 = vld [vmem:[%s2 + $0x20] sm:$0xff]
  %v21 = vld [vmem:[%s2 + $0x28] sm:$0xff]
  %v22 = vld [vmem:[%s2 + $0x30] sm:$0xff]
  %v23 = vld [vmem:[%s2 + $0x38] sm:$0xff]
  %v24 = vld [vmem:[%s2 + $0x40] sm:$0xff]
  %v25 = vld [vmem:[%s2 + $0x48] sm:$0xff]
  %v26 = vld [vmem:[%s2 + $0x50] sm:$0xff]
  %v27 = vld [vmem:[%s2 + $0x58] sm:$0xff]
  %v28 = vld [vmem:[%s2 + $0x60] sm:$0xff]
  %v29 = vld [vmem:[%s2 + $0x68] sm:$0xff]
  %v30 = vld [vmem:[%s2 + $0x70] sm:$0xff]
  %v31 = vld [vmem:[%s2 + $0x78] sm:$0xff]
  %v32 = vld [vmem:[%s2 + $0x80] sm:$0xff]
  %v33 = vld [vmem:[%s2 + $0x88] sm:$0xff]
  %v34 = vld [vmem:[%s2 + $0x90] sm:$0xff]
  %v35 = vld [vmem:[%s2 + $0x98] sm:$0xff]
  %v36 = vld [vmem:[%s2 + $0xa0] sm:$0xff]
  %v37 = vld [vmem:[%s2 + $0xa8] sm:$0xff]
  %v38 = vld [vmem:[%s2 + $0xb0] sm:$0xff]
  %v39 = vld [vmem:[%s2 + $0xb8] sm:$0xff]
  %v40 = vld [vmem:[%s2 + $0xc0] sm:$0xff]
  %v41 = vld [vmem:[%s2 + $0xc8] sm:$0xff]
  %v42 = vld [vmem:[%s2 + $0xd0] sm:$0xff]
  %v43 = vld [vmem:[%s2 + $0xd8] sm:$0xff]
  %v44 = vld [vmem:[%s2 + $0xe0] sm:$0xff]
  %v45 = vld [vmem:[%s2 + $0xe8] sm:$0xff]
  %v46 = vld [vmem:[%s2 + $0xf0] sm:$0xff]
  %v47 = vld [vmem:[%s2 + $0xf8] sm:$0xff]
  %v48 = vld [vmem:[%s2 + $0x100] sm:$0xff]
  %v49 = vld [vmem:[%s2 + $0x108] sm:$0xff]
  %v50 = vld [vmem:[%s2 + $0x110] sm:$0xff]
  %v51 = vld [vmem:[%s2 + $0x118] sm:$0xff]
  %v52 = vld [vmem:[%s2 + $0x120] sm:$0xff]
  %v53 = vld [vmem:[%s2 + $0x128] sm:$0xff]
  %v54 = vld [vmem:[%s2 + $0x130] sm:$0xff]
  %v55 = vld [vmem:[%s2 + $0x138] sm:$0xff]
  %v56 = vld [vmem:[%s2 + $0x140] sm:$0xff]
  %v57 = vld [vmem:[%s2 + $0x148] sm:$0xff]
  %v58 = vld [vmem:[%s2 + $0x150] sm:$0xff]
  %v59 = vld [vmem:[%s2 + $0x158] sm:$0xff]
  %v60 = vld [vmem:[%s2 + $0x160] sm:$0xff]
  %v61 = vld [vmem:[%s2 + $0x168] sm:$0xff]
  %v62 = vld [vmem:[%s2 + $0x170] sm:$0xff]
  %v63 = vld [vmem:[%s2 + $0x178] sm:$0xff]
  %v64 = vld [vmem:[%s2 + $0x180] sm:$0x1]
  %v65 = vld [vmem:[%s2 + $0x181] sm:$0x1]
  %v66 = vld [vmem:[%s2 + $0x182] sm:$0x1]
  %v67 = vld [vmem:[%s2 + $0x185] sm:$0x1]
  %v68 = vld [vmem:[%s2 + $0x183] sm:$0x1]
  %v69 = vld [vmem:[%s2 + $0x184] sm:$0x1]
  %v70 = vld [vmem:[%s2 + $0x186] sm:$0x1]
  %v71 = vld [vmem:[%s2 + $0x187] sm:$0x1]
  %v72 = vld [vmem:[%s2 + $0x188] sm:$0x1]
  %v73 = vld [vmem:[%s2 + $0x189] sm:$0x1]
  %v74 = vld [vmem:[%s2 + $0x18a] sm:$0x1]
  %v75 = vld [vmem:[%s2 + $0x18b] sm:$0x1]
  %v76 = vld [vmem:[%s2 + $0x18c] sm:$0x1]
  %v77 = vld [vmem:[%s2 + $0x18d] sm:$0x1]
  %v78 = vld [vmem:[%s2 + $0x18e] sm:$0x1]
  %v79 = vld [vmem:[%s2 + $0x18f] sm:$0x1]
  %v80 = vld [vmem:[%s0] sm:$0xff]
  %v81 = vld [vmem:[%s0 + $0x8] sm:$0xff]
  %v82 = vld [vmem:[%s0 + $0x10] sm:$0xff]
  %v83 = vld [vmem:[%s0 + $0x18] sm:$0xff]
  %v84 = vld [vmem:[%s0 + $0x20] sm:$0xff]
  %v85 = vld [vmem:[%s0 + $0x28] sm:$0xff]
  %v86 = vld [vmem:[%s0 + $0x30] sm:$0xff]
  %v87 = vld [vmem:[%s0 + $0x38] sm:$0xff]
  %v88 = vld [vmem:[%s0 + $0x40] sm:$0xff]
  %v89 = vld [vmem:[%s0 + $0x48] sm:$0xff]
  %v90 = vld [vmem:[%s0 + $0x50] sm:$0xff]
  %v91 = vld [vmem:[%s0 + $0x58] sm:$0xff]
  %v92 = vld [vmem:[%s0 + $0x60] sm:$0xff]
  %v93 = vld [vmem:[%s0 + $0x68] sm:$0xff]
  %v94 = vld [vmem:[%s0 + $0x70] sm:$0xff]
  %v95 = vld [vmem:[%s0 + $0x78] sm:$0xff]
  %v96 = vld [vmem:[%s0 + $0x80] sm:$0xff]
  %v97 = vld [vmem:[%s0 + $0x88] sm:$0xff]
  %v98 = vld [vmem:[%s0 + $0x90] sm:$0xff]
  %v99 = vld [vmem:[%s0 + $0x98] sm:$0xff]
  %v100 = vld [vmem:[%s0 + $0xa0] sm:$0xff]
  %v101 = vld [vmem:[%s0 + $0xa8] sm:$0xff]
  %v102 = vld [vmem:[%s0 + $0xb0] sm:$0xff]
  %v103 = vld [vmem:[%s0 + $0xb8] sm:$0xff]
  %v104 = vld [vmem:[%s0 + $0xc0] sm:$0xff]
  %v105 = vld [vmem:[%s0 + $0xc8] sm:$0xff]
  %v106 = vld [vmem:[%s0 + $0xd0] sm:$0xff]
  %v107 = vld [vmem:[%s0 + $0xd8] sm:$0xff]
  %v108 = vld [vmem:[%s0 + $0xe0] sm:$0xff]
  %v109 = vld [vmem:[%s0 + $0xe8] sm:$0xff]
  %v110 = vld [vmem:[%s0 + $0xf0] sm:$0xff]
  %v111 = vld [vmem:[%s0 + $0xf8] sm:$0xff]
  %vm112 = vcmask 261120
  %v113 = vsel %vm112, %v80, 0.0
  %114 = vadd.xlane.f32.xlu0 %v113
  %v115 = vpop.xlane.xlu0 %114
  %v116 = vsel %vm112, %v81, 0.0
  %117 = vadd.xlane.f32.xlu0 %v116
  %v118 = vpop.xlane.xlu0 %117
  %v119 = vsel %vm112, %v82, 0.0
  %120 = vadd.xlane.f32.xlu0 %v119
  %v121 = vpop.xlane.xlu0 %120
  %v122 = vsel %vm112, %v83, 0.0
  %123 = vadd.xlane.f32.xlu0 %v122
  %v124 = vpop.xlane.xlu0 %123
  %v125 = vsel %vm112, %v84, 0.0
  %126 = vadd.xlane.f32.xlu0 %v125
  %v127 = vpop.xlane.xlu0 %126
  %v128 = vsel %vm112, %v85, 0.0
  %129 = vadd.xlane.f32.xlu0 %v128
  %v130 = vpop.xlane.xlu0 %129
  %v131 = vsel %vm112, %v86, 0.0
  %132 = vadd.xlane.f32.xlu0 %v131
  %v133 = vpop.xlane.xlu0 %132
  %v134 = vsel %vm112, %v87, 0.0
  %135 = vadd.xlane.f32.xlu0 %v134
  %v136 = vpop.xlane.xlu0 %135
  %v137 = vsel %vm112, %v88, 0.0
  %138 = vadd.xlane.f32.xlu0 %v137
  %v139 = vpop.xlane.xlu0 %138
  %v140 = vsel %vm112, %v89, 0.0
  %141 = vadd.xlane.f32.xlu0 %v140
  %v142 = vpop.xlane.xlu0 %141
  %v143 = vsel %vm112, %v90, 0.0
  %144 = vadd.xlane.f32.xlu0 %v143
  %v145 = vpop.xlane.xlu0 %144
  %v146 = vsel %vm112, %v91, 0.0
  %147 = vadd.xlane.f32.xlu0 %v146
  %v148 = vpop.xlane.xlu0 %147
  %v149 = vsel %vm112, %v92, 0.0
  %150 = vadd.xlane.f32.xlu0 %v149
  %v151 = vpop.xlane.xlu0 %150
  %v152 = vsel %vm112, %v93, 0.0
  %153 = vadd.xlane.f32.xlu0 %v152
  %v154 = vpop.xlane.xlu0 %153
  %v155 = vsel %vm112, %v94, 0.0
  %156 = vadd.xlane.f32.xlu0 %v155
  %v157 = vpop.xlane.xlu0 %156
  %v158 = vsel %vm112, %v95, 0.0
  %159 = vadd.xlane.f32.xlu0 %v158
  %v160 = vpop.xlane.xlu0 %159
  %v161 = vsel %vm112, %v96, 0.0
  %162 = vadd.xlane.f32.xlu0 %v161
  %v163 = vpop.xlane.xlu0 %162
  %v164 = vsel %vm112, %v97, 0.0
  %165 = vadd.xlane.f32.xlu0 %v164
  %v166 = vpop.xlane.xlu0 %165
  %v167 = vsel %vm112, %v98, 0.0
  %168 = vadd.xlane.f32.xlu0 %v167
  %v169 = vpop.xlane.xlu0 %168
  %v170 = vsel %vm112, %v99, 0.0
  %171 = vadd.xlane.f32.xlu0 %v170
  %v172 = vpop.xlane.xlu0 %171
  %v173 = vsel %vm112, %v100, 0.0
  %174 = vadd.xlane.f32.xlu0 %v173
  %v175 = vpop.xlane.xlu0 %174
  %v176 = vsel %vm112, %v101, 0.0
  %177 = vadd.xlane.f32.xlu0 %v176
  %v178 = vpop.xlane.xlu0 %177
  %v179 = vsel %vm112, %v102, 0.0
  %180 = vadd.xlane.f32.xlu0 %v179
  %v181 = vpop.xlane.xlu0 %180
  %v182 = vsel %vm112, %v103, 0.0
  %183 = vadd.xlane.f32.xlu0 %v182
  %v184 = vpop.xlane.xlu0 %183
  %v185 = vsel %vm112, %v104, 0.0
  %186 = vadd.xlane.f32.xlu0 %v185
  %v187 = vpop.xlane.xlu0 %186
  %v188 = vsel %vm112, %v105, 0.0
  %189 = vadd.xlane.f32.xlu0 %v188
  %v190 = vpop.xlane.xlu0 %189
  %v191 = vsel %vm112, %v106, 0.0
  %192 = vadd.xlane.f32.xlu0 %v191
  %v193 = vpop.xlane.xlu0 %192
  %v194 = vsel %vm112, %v107, 0.0
  %195 = vadd.xlane.f32.xlu0 %v194
  %v196 = vpop.xlane.xlu0 %195
  %v197 = vsel %vm112, %v108, 0.0
  %198 = vadd.xlane.f32.xlu0 %v197
  %v199 = vpop.xlane.xlu0 %198
  %v200 = vsel %vm112, %v109, 0.0
  %201 = vadd.xlane.f32.xlu0 %v200
  %v202 = vpop.xlane.xlu0 %201
  %v203 = vsel %vm112, %v110, 0.0
  %204 = vadd.xlane.f32.xlu0 %v203
  %v205 = vpop.xlane.xlu0 %204
  %v206 = vsel %vm112, %v111, 0.0
  %207 = vadd.xlane.f32.xlu0 %v206
  %v208 = vpop.xlane.xlu0 %207
  %v209 = vrcp.pop 32.0
  %v210 = vmul.f32 %v115, %v209
  %v211 = vmul.f32 %v118, %v209
  %v212 = vmul.f32 %v121, %v209
  %v213 = vmul.f32 %v124, %v209
  %v214 = vmul.f32 %v127, %v209
  %v215 = vmul.f32 %v130, %v209
  %v216 = vmul.f32 %v133, %v209
  %v217 = vmul.f32 %v136, %v209
  %v218 = vmul.f32 %v139, %v209
  %v219 = vmul.f32 %v142, %v209
  %v220 = vmul.f32 %v145, %v209
  %v221 = vmul.f32 %v148, %v209
  %v222 = vmul.f32 %v151, %v209
  %v223 = vmul.f32 %v154, %v209
  %v224 = vmul.f32 %v157, %v209
  %v225 = vmul.f32 %v160, %v209
  %v226 = vmul.f32 %v163, %v209
  %v227 = vmul.f32 %v166, %v209
  %v228 = vmul.f32 %v169, %v209
  %v229 = vmul.f32 %v172, %v209
  %v230 = vmul.f32 %v175, %v209
  %v231 = vmul.f32 %v178, %v209
  %v232 = vmul.f32 %v181, %v209
  %v233 = vmul.f32 %v184, %v209
  %v234 = vmul.f32 %v187, %v209
  %v235 = vmul.f32 %v190, %v209
  %v236 = vmul.f32 %v193, %v209
  %v237 = vmul.f32 %v196, %v209
  %v238 = vmul.f32 %v199, %v209
  %v239 = vmul.f32 %v202, %v209
  %v240 = vmul.f32 %v205, %v209
  %v241 = vmul.f32 %v208, %v209
  %v242 = vsub.f32 %v80, %v210
  %v243 = vsub.f32 %v81, %v211
  %v244 = vsub.f32 %v82, %v212
  %v245 = vsub.f32 %v83, %v213
  %v246 = vsub.f32 %v84, %v214
  %v247 = vsub.f32 %v85, %v215
  %v248 = vsub.f32 %v86, %v216
  %v249 = vsub.f32 %v87, %v217
  %v250 = vsub.f32 %v88, %v218
  %v251 = vsub.f32 %v89, %v219
  %v252 = vsub.f32 %v90, %v220
  %v253 = vsub.f32 %v91, %v221
  %v254 = vsub.f32 %v92, %v222
  %v255 = vsub.f32 %v93, %v223
  %v256 = vsub.f32 %v94, %v224
  %v257 = vsub.f32 %v95, %v225
  %v258 = vsub.f32 %v96, %v226
  %v259 = vsub.f32 %v97, %v227
  %v260 = vsub.f32 %v98, %v228
  %v261 = vsub.f32 %v99, %v229
  %v262 = vsub.f32 %v100, %v230
  %v263 = vsub.f32 %v101, %v231
  %v264 = vsub.f32 %v102, %v232
  %v265 = vsub.f32 %v103, %v233
  %v266 = vsub.f32 %v104, %v234
  %v267 = vsub.f32 %v105, %v235
  %v268 = vsub.f32 %v106, %v236
  %v269 = vsub.f32 %v107, %v237
  %v270 = vsub.f32 %v108, %v238
  %v271 = vsub.f32 %v109, %v239
  %v272 = vsub.f32 %v110, %v240
  %v273 = vsub.f32 %v111, %v241
  %v274 = vmul.f32 %v242, %v242
  %v275 = vmul.f32 %v243, %v243
  %v276 = vmul.f32 %v244, %v244
  %v277 = vmul.f32 %v245, %v245
  %v278 = vmul.f32 %v246, %v246
  %v279 = vmul.f32 %v247, %v247
  %v280 = vmul.f32 %v248, %v248
  %v281 = vmul.f32 %v249, %v249
  %v282 = vmul.f32 %v250, %v250
  %v283 = vmul.f32 %v251, %v251
  %v284 = vmul.f32 %v252, %v252
  %v285 = vmul.f32 %v253, %v253
  %v286 = vmul.f32 %v254, %v254
  %v287 = vmul.f32 %v255, %v255
  %v288 = vmul.f32 %v256, %v256
  %v289 = vmul.f32 %v257, %v257
  %v290 = vmul.f32 %v258, %v258
  %v291 = vmul.f32 %v259, %v259
  %v292 = vmul.f32 %v260, %v260
  %v293 = vmul.f32 %v261, %v261
  %v294 = vmul.f32 %v262, %v262
  %v295 = vmul.f32 %v263, %v263
  %v296 = vmul.f32 %v264, %v264
  %v297 = vmul.f32 %v265, %v265
  %v298 = vmul.f32 %v266, %v266
  %v299 = vmul.f32 %v267, %v267
  %v300 = vmul.f32 %v268, %v268
  %v301 = vmul.f32 %v269, %v269
  %v302 = vmul.f32 %v270, %v270
  %v303 = vmul.f32 %v271, %v271
  %v304 = vmul.f32 %v272, %v272
  %v305 = vmul.f32 %v273, %v273
  %v306 = vsel %vm112, %v274, 0.0
  %307 = vadd.xlane.f32.xlu0 %v306
  %v308 = vpop.xlane.xlu0 %307
  %v309 = vsel %vm112, %v275, 0.0
  %310 = vadd.xlane.f32.xlu0 %v309
  %v311 = vpop.xlane.xlu0 %310
  %v312 = vsel %vm112, %v276, 0.0
  %313 = vadd.xlane.f32.xlu0 %v312
  %v314 = vpop.xlane.xlu0 %313
  %v315 = vsel %vm112, %v277, 0.0
  %316 = vadd.xlane.f32.xlu0 %v315
  %v317 = vpop.xlane.xlu0 %316
  %v318 = vsel %vm112, %v278, 0.0
  %319 = vadd.xlane.f32.xlu0 %v318
  %v320 = vpop.xlane.xlu0 %319
  %v321 = vsel %vm112, %v279, 0.0
  %322 = vadd.xlane.f32.xlu0 %v321
  %v323 = vpop.xlane.xlu0 %322
  %v324 = vsel %vm112, %v280, 0.0
  %325 = vadd.xlane.f32.xlu0 %v324
  %v326 = vpop.xlane.xlu0 %325
  %v327 = vsel %vm112, %v281, 0.0
  %328 = vadd.xlane.f32.xlu0 %v327
  %v329 = vpop.xlane.xlu0 %328
  %v330 = vsel %vm112, %v282, 0.0
  %331 = vadd.xlane.f32.xlu0 %v330
  %v332 = vpop.xlane.xlu0 %331
  %v333 = vsel %vm112, %v283, 0.0
  %334 = vadd.xlane.f32.xlu0 %v333
  %v335 = vpop.xlane.xlu0 %334
  %v336 = vsel %vm112, %v284, 0.0
  %337 = vadd.xlane.f32.xlu0 %v336
  %v338 = vpop.xlane.xlu0 %337
  %v339 = vsel %vm112, %v285, 0.0
  %340 = vadd.xlane.f32.xlu0 %v339
  %v341 = vpop.xlane.xlu0 %340
  %v342 = vsel %vm112, %v286, 0.0
  %343 = vadd.xlane.f32.xlu0 %v342
  %v344 = vpop.xlane.xlu0 %343
  %v345 = vsel %vm112, %v287, 0.0
  %346 = vadd.xlane.f32.xlu0 %v345
  %v347 = vpop.xlane.xlu0 %346
  %v348 = vsel %vm112, %v288, 0.0
  %349 = vadd.xlane.f32.xlu0 %v348
  %v350 = vpop.xlane.xlu0 %349
  %v351 = vsel %vm112, %v289, 0.0
  %352 = vadd.xlane.f32.xlu0 %v351
  %v353 = vpop.xlane.xlu0 %352
  %v354 = vsel %vm112, %v290, 0.0
  %355 = vadd.xlane.f32.xlu0 %v354
  %v356 = vpop.xlane.xlu0 %355
  %v357 = vsel %vm112, %v291, 0.0
  %358 = vadd.xlane.f32.xlu0 %v357
  %v359 = vpop.xlane.xlu0 %358
  %v360 = vsel %vm112, %v292, 0.0
  %361 = vadd.xlane.f32.xlu0 %v360
  %v362 = vpop.xlane.xlu0 %361
  %v363 = vsel %vm112, %v293, 0.0
  %364 = vadd.xlane.f32.xlu0 %v363
  %v365 = vpop.xlane.xlu0 %364
  %v366 = vsel %vm112, %v294, 0.0
  %367 = vadd.xlane.f32.xlu0 %v366
  %v368 = vpop.xlane.xlu0 %367
  %v369 = vsel %vm112, %v295, 0.0
  %370 = vadd.xlane.f32.xlu0 %v369
  %v371 = vpop.xlane.xlu0 %370
  %v372 = vsel %vm112, %v296, 0.0
  %373 = vadd.xlane.f32.xlu0 %v372
  %v374 = vpop.xlane.xlu0 %373
  %v375 = vsel %vm112, %v297, 0.0
  %376 = vadd.xlane.f32.xlu0 %v375
  %v377 = vpop.xlane.xlu0 %376
  %v378 = vsel %vm112, %v298, 0.0
  %379 = vadd.xlane.f32.xlu0 %v378
  %v380 = vpop.xlane.xlu0 %379
  %v381 = vsel %vm112, %v299, 0.0
  %382 = vadd.xlane.f32.xlu0 %v381
  %v383 = vpop.xlane.xlu0 %382
  %v384 = vsel %vm112, %v300, 0.0
  %385 = vadd.xlane.f32.xlu0 %v384
  %v386 = vpop.xlane.xlu0 %385
  %v387 = vsel %vm112, %v301, 0.0
  %388 = vadd.xlane.f32.xlu0 %v387
  %v389 = vpop.xlane.xlu0 %388
  %v390 = vsel %vm112, %v302, 0.0
  %391 = vadd.xlane.f32.xlu0 %v390
  %v392 = vpop.xlane.xlu0 %391
  %v393 = vsel %vm112, %v303, 0.0
  %394 = vadd.xlane.f32.xlu0 %v393
  %v395 = vpop.xlane.xlu0 %394
  %v396 = vsel %vm112, %v304, 0.0
  %397 = vadd.xlane.f32.xlu0 %v396
  %v398 = vpop.xlane.xlu0 %397
  %v399 = vsel %vm112, %v305, 0.0
  %400 = vadd.xlane.f32.xlu0 %v399
  %v401 = vpop.xlane.xlu0 %400
  %v402 = vmul.f32 %v308, %v209
  %v403 = vmul.f32 %v311, %v209
  %v404 = vmul.f32 %v314, %v209
  %v405 = vmul.f32 %v317, %v209
  %v406 = vmul.f32 %v320, %v209
  %v407 = vmul.f32 %v323, %v209
  %v408 = vmul.f32 %v326, %v209
  %v409 = vmul.f32 %v329, %v209
  %v410 = vmul.f32 %v332, %v209
  %v411 = vmul.f32 %v335, %v209
  %v412 = vmul.f32 %v338, %v209
  %v413 = vmul.f32 %v341, %v209
  %v414 = vmul.f32 %v344, %v209
  %v415 = vmul.f32 %v347, %v209
  %v416 = vmul.f32 %v350, %v209
  %v417 = vmul.f32 %v353, %v209
  %v418 = vmul.f32 %v356, %v209
  %v419 = vmul.f32 %v359, %v209
  %v420 = vmul.f32 %v362, %v209
  %v421 = vmul.f32 %v365, %v209
  %v422 = vmul.f32 %v368, %v209
  %v423 = vmul.f32 %v371, %v209
  %v424 = vmul.f32 %v374, %v209
  %v425 = vmul.f32 %v377, %v209
  %v426 = vmul.f32 %v380, %v209
  %v427 = vmul.f32 %v383, %v209
  %v428 = vmul.f32 %v386, %v209
  %v429 = vmul.f32 %v389, %v209
  %v430 = vmul.f32 %v392, %v209
  %v431 = vmul.f32 %v395, %v209
  %v432 = vmul.f32 %v398, %v209
  %v433 = vmul.f32 %v401, %v209
  %v434 = vadd.f32 %v402, 1e-05
  %v435 = vadd.f32 %v403, 1e-05
  %v436 = vadd.f32 %v404, 1e-05
  %v437 = vadd.f32 %v405, 1e-05
  %v438 = vadd.f32 %v406, 1e-05
  %v439 = vadd.f32 %v407, 1e-05
  %v440 = vadd.f32 %v408, 1e-05
  %v441 = vadd.f32 %v409, 1e-05
  %v442 = vadd.f32 %v410, 1e-05
  %v443 = vadd.f32 %v411, 1e-05
  %v444 = vadd.f32 %v412, 1e-05
  %v445 = vadd.f32 %v413, 1e-05
  %v446 = vadd.f32 %v414, 1e-05
  %v447 = vadd.f32 %v415, 1e-05
  %v448 = vadd.f32 %v416, 1e-05
  %v449 = vadd.f32 %v417, 1e-05
  %v450 = vadd.f32 %v418, 1e-05
  %v451 = vadd.f32 %v419, 1e-05
  %v452 = vadd.f32 %v420, 1e-05
  %v453 = vadd.f32 %v421, 1e-05
  %v454 = vadd.f32 %v422, 1e-05
  %v455 = vadd.f32 %v423, 1e-05
  %v456 = vadd.f32 %v424, 1e-05
  %v457 = vadd.f32 %v425, 1e-05
  %v458 = vadd.f32 %v426, 1e-05
  %v459 = vadd.f32 %v427, 1e-05
  %v460 = vadd.f32 %v428, 1e-05
  %v461 = vadd.f32 %v429, 1e-05
  %v462 = vadd.f32 %v430, 1e-05
  %v463 = vadd.f32 %v431, 1e-05
  %v464 = vadd.f32 %v432, 1e-05
  %v465 = vadd.f32 %v433, 1e-05
  %v466 = vrsqrt.pop %v434
  %v467 = vrsqrt.pop %v435
  %v468 = vrsqrt.pop %v436
  %v469 = vrsqrt.pop %v437
  %v470 = vrsqrt.pop %v438
  %v471 = vrsqrt.pop %v439
  %v472 = vrsqrt.pop %v440
  %v473 = vrsqrt.pop %v441
  %v474 = vrsqrt.pop %v442
  %v475 = vrsqrt.pop %v443
  %v476 = vrsqrt.pop %v444
  %v477 = vrsqrt.pop %v445
  %v478 = vrsqrt.pop %v446
  %v479 = vrsqrt.pop %v447
  %v480 = vrsqrt.pop %v448
  %v481 = vrsqrt.pop %v449
  %v482 = vrsqrt.pop %v450
  %v483 = vrsqrt.pop %v451
  %v484 = vrsqrt.pop %v452
  %v485 = vrsqrt.pop %v453
  %v486 = vrsqrt.pop %v454
  %v487 = vrsqrt.pop %v455
  %v488 = vrsqrt.pop %v456
  %v489 = vrsqrt.pop %v457
  %v490 = vrsqrt.pop %v458
  %v491 = vrsqrt.pop %v459
  %v492 = vrsqrt.pop %v460
  %v493 = vrsqrt.pop %v461
  %v494 = vrsqrt.pop %v462
  %v495 = vrsqrt.pop %v463
  %v496 = vrsqrt.pop %v464
  %v497 = vrsqrt.pop %v465
  %v498 = vmul.f32 %v242, %v466
  %v499 = vmul.f32 %v243, %v467
  %v500 = vmul.f32 %v244, %v468
  %v501 = vmul.f32 %v245, %v469
  %v502 = vmul.f32 %v246, %v470
  %v503 = vmul.f32 %v247, %v471
  %v504 = vmul.f32 %v248, %v472
  %v505 = vmul.f32 %v249, %v473
  %v506 = vmul.f32 %v250, %v474
  %v507 = vmul.f32 %v251, %v475
  %v508 = vmul.f32 %v252, %v476
  %v509 = vmul.f32 %v253, %v477
  %v510 = vmul.f32 %v254, %v478
  %v511 = vmul.f32 %v255, %v479
  %v512 = vmul.f32 %v256, %v480
  %v513 = vmul.f32 %v257, %v481
  %v514 = vmul.f32 %v258, %v482
  %v515 = vmul.f32 %v259, %v483
  %v516 = vmul.f32 %v260, %v484
  %v517 = vmul.f32 %v261, %v485
  %v518 = vmul.f32 %v262, %v486
  %v519 = vmul.f32 %v263, %v487
  %v520 = vmul.f32 %v264, %v488
  %v521 = vmul.f32 %v265, %v489
  %v522 = vmul.f32 %v266, %v490
  %v523 = vmul.f32 %v267, %v491
  %v524 = vmul.f32 %v268, %v492
  %v525 = vmul.f32 %v269, %v493
  %v526 = vmul.f32 %v270, %v494
  %v527 = vmul.f32 %v271, %v495
  %v528 = vmul.f32 %v272, %v496
  %v529 = vmul.f32 %v273, %v497
  %v530 = vlaneseq
  %v531 = vshrl.u32 %v530, 7
  %v532 = vsub.s32 0, %v531
  %v533 = vrot.slane %v64, %v532
  %v534 = vmul.f32 %v498, %v533
  %v535 = vmul.f32 %v499, %v533
  %v536 = vmul.f32 %v500, %v533
  %v537 = vmul.f32 %v501, %v533
  %v538 = vmul.f32 %v502, %v533
  %v539 = vmul.f32 %v503, %v533
  %v540 = vmul.f32 %v504, %v533
  %v541 = vmul.f32 %v505, %v533
  %v542 = vmul.f32 %v506, %v533
  %v543 = vmul.f32 %v507, %v533
  %v544 = vmul.f32 %v508, %v533
  %v545 = vmul.f32 %v509, %v533
  %v546 = vmul.f32 %v510, %v533
  %v547 = vmul.f32 %v511, %v533
  %v548 = vmul.f32 %v512, %v533
  %v549 = vmul.f32 %v513, %v533
  %v550 = vmul.f32 %v514, %v533
  %v551 = vmul.f32 %v515, %v533
  %v552 = vmul.f32 %v516, %v533
  %v553 = vmul.f32 %v517, %v533
  %v554 = vmul.f32 %v518, %v533
  %v555 = vmul.f32 %v519, %v533
  %v556 = vmul.f32 %v520, %v533
  %v557 = vmul.f32 %v521, %v533
  %v558 = vmul.f32 %v522, %v533
  %v559 = vmul.f32 %v523, %v533
  %v560 = vmul.f32 %v524, %v533
  %v561 = vmul.f32 %v525, %v533
  %v562 = vmul.f32 %v526, %v533
  %v563 = vmul.f32 %v527, %v533
  %v564 = vmul.f32 %v528, %v533
  %v565 = vmul.f32 %v529, %v533
  %v566 = vlaneseq
  %v567 = vshrl.u32 %v566, 7
  %v568 = vsub.s32 0, %v567
  %v569 = vrot.slane %v65, %v568
  %v570 = vadd.f32 %v534, %v569
  %v571 = vadd.f32 %v535, %v569
  %v572 = vadd.f32 %v536, %v569
  %v573 = vadd.f32 %v537, %v569
  %v574 = vadd.f32 %v538, %v569
  %v575 = vadd.f32 %v539, %v569
  %v576 = vadd.f32 %v540, %v569
  %v577 = vadd.f32 %v541, %v569
  %v578 = vadd.f32 %v542, %v569
  %v579 = vadd.f32 %v543, %v569
  %v580 = vadd.f32 %v544, %v569
  %v581 = vadd.f32 %v545, %v569
  %v582 = vadd.f32 %v546, %v569
  %v583 = vadd.f32 %v547, %v569
  %v584 = vadd.f32 %v548, %v569
  %v585 = vadd.f32 %v549, %v569
  %v586 = vadd.f32 %v550, %v569
  %v587 = vadd.f32 %v551, %v569
  %v588 = vadd.f32 %v552, %v569
  %v589 = vadd.f32 %v553, %v569
  %v590 = vadd.f32 %v554, %v569
  %v591 = vadd.f32 %v555, %v569
  %v592 = vadd.f32 %v556, %v569
  %v593 = vadd.f32 %v557, %v569
  %v594 = vadd.f32 %v558, %v569
  %v595 = vadd.f32 %v559, %v569
  %v596 = vadd.f32 %v560, %v569
  %v597 = vadd.f32 %v561, %v569
  %v598 = vadd.f32 %v562, %v569
  %v599 = vadd.f32 %v563, %v569
  %v600 = vadd.f32 %v564, %v569
  %v601 = vadd.f32 %v565, %v569
  %v602 = vlaneseq
  %v603 = vshrl.u32 %v602, 7
  %v604 = vsub.s32 0, %v603
  %v605 = vrot.slane %v66, %v604
  %v607 = vsel %vm112, %v570, 0
  %v610 = vsel %vm112, %v571, 0
  %v613 = vsel %vm112, %v572, 0
  %v616 = vsel %vm112, %v573, 0
  %v619 = vsel %vm112, %v574, 0
  %v622 = vsel %vm112, %v575, 0
  %v625 = vsel %vm112, %v576, 0
  %v628 = vsel %vm112, %v577, 0
  %v631 = vsel %vm112, %v578, 0
  %v634 = vsel %vm112, %v579, 0
  %v637 = vsel %vm112, %v580, 0
  %v640 = vsel %vm112, %v581, 0
  %v643 = vsel %vm112, %v582, 0
  %v646 = vsel %vm112, %v583, 0
  %v649 = vsel %vm112, %v584, 0
  %v652 = vsel %vm112, %v585, 0
  %v655 = vsel %vm112, %v586, 0
  %v658 = vsel %vm112, %v587, 0
  %v661 = vsel %vm112, %v588, 0
  %v664 = vsel %vm112, %v589, 0
  %v667 = vsel %vm112, %v590, 0
  %v670 = vsel %vm112, %v591, 0
  %v673 = vsel %vm112, %v592, 0
  %v676 = vsel %vm112, %v593, 0
  %v679 = vsel %vm112, %v594, 0
  %v682 = vsel %vm112, %v595, 0
  %v685 = vsel %vm112, %v596, 0
  %v688 = vsel %vm112, %v597, 0
  %v691 = vsel %vm112, %v598, 0
  %v694 = vsel %vm112, %v599, 0
  %v697 = vsel %vm112, %v600, 0
  %v700 = vsel %vm112, %v601, 0
  %702 = vmatprep.subr.mxu0 0.0
  %703 = vmatpush1.msra.mxu0 %v16
  %704 = vmatprep.subr.mxu0 0.0
  %705 = vmatpush1.msra.mxu0 %v17
  %706 = vmatprep.subr.mxu0 0.0
  %707 = vmatpush1.msra.mxu0 %v18
  %708 = vmatprep.subr.mxu0 0.0
  %709 = vmatpush1.msra.mxu0 %v19
  %710 = vmatprep.subr.mxu0 0.0
  %711 = vmatpush1.msra.mxu0 0.0
  %712 = vmatprep.subr.mxu0 0.0
  %713 = vmatpush1.msra.mxu0 0.0
  %714 = vmatprep.subr.mxu0 0.0
  %715 = vmatpush1.msra.mxu0 0.0
  %716 = vmatprep.subr.mxu0 0.0
  %717 = vmatpush1.msra.mxu0 0.0
  %718 = vmatprep.subr.mxu0 0.0
  %719 = vmatpush1.msra.mxu0 0.0
  %720 = vmatprep.subr.mxu0 0.0
  %721 = vmatpush1.msra.mxu0 0.0
  %722 = vmatprep.subr.mxu0 0.0
  %723 = vmatpush1.msra.mxu0 0.0
  %724 = vmatprep.subr.mxu0 0.0
  %725 = vmatpush1.msra.mxu0 0.0
  %726 = vmatprep.subr.mxu0 0.0
  %727 = vmatpush1.msra.mxu0 0.0
  %728 = vmatprep.subr.mxu0 0.0
  %729 = vmatpush1.msra.mxu0 0.0
  %730 = vmatprep.subr.mxu0 0.0
  %731 = vmatpush1.msra.mxu0 0.0
  %732 = vmatprep.subr.mxu0 0.0
  %733 = vmatpush1.msra.mxu0 0.0
  %734 = vmatprep.subr.mxu0 0.0
  %735 = vmatpush1.msra.mxu0 0.0
  %736 = vmatprep.subr.mxu0 0.0
  %737 = vmatpush1.msra.mxu0 0.0
  %738 = vmatprep.subr.mxu0 0.0
  %739 = vmatpush1.msra.mxu0 0.0
  %740 = vmatprep.subr.mxu0 0.0
  %741 = vmatpush1.msra.mxu0 0.0
  %742 = vmatprep.subr.mxu0 0.0
  %743 = vmatpush1.msra.mxu0 0.0
  %744 = vmatprep.subr.mxu0 0.0
  %745 = vmatpush1.msra.mxu0 0.0
  %746 = vmatprep.subr.mxu0 0.0
  %747 = vmatpush1.msra.mxu0 0.0
  %748 = vmatprep.subr.mxu0 0.0
  %749 = vmatpush1.msra.mxu0 0.0
  %750 = vmatprep.subr.mxu0 0.0
  %751 = vmatpush1.msra.mxu0 0.0
  %752 = vmatprep.subr.mxu0 0.0
  %753 = vmatpush1.msra.mxu0 0.0
  %754 = vmatprep.subr.mxu0 0.0
  %755 = vmatpush1.msra.mxu0 0.0
  %756 = vmatprep.subr.mxu0 0.0
  %757 = vmatpush1.msra.mxu0 0.0
  %758 = vmatprep.subr.mxu0 0.0
  %759 = vmatpush1.msra.mxu0 0.0
  %760 = vmatprep.subr.mxu0 0.0
  %761 = vmatpush1.msra.mxu0 0.0
  %762 = vmatprep.subr.mxu0 0.0
  %763 = vmatpush1.msra.mxu0 0.0
  %764 = vmatprep.subr.mxu0 0.0
  %765 = vmatpush1.msra.mxu0 0.0
  %766 = vmatprep.mubr.f32.mxu0 0.0
  %767 = vmatmul.mubr.f32.gmra.mrb[0].mxu0 %v607
  %v768 = vpop.f32.mrb[0].mxu0
  %v769 = vadd.f32 %v605, %v768
  %v770 = vpop.f32.mrb[0].mxu0
  %771 = vmatprep.mubr.f32.mxu0 0.0
  %772 = vmatmul.mubr.f32.gmra.mrb[0].mxu0 %v610
  %v773 = vpop.f32.mrb[0].mxu0
  %v774 = vadd.f32 %v605, %v773
  %v775 = vpop.f32.mrb[0].mxu0
  %776 = vmatprep.mubr.f32.mxu0 0.0
  %777 = vmatmul.mubr.f32.gmra.mrb[0].mxu0 %v613
  %v778 = vpop.f32.mrb[0].mxu0
  %v779 = vadd.f32 %v605, %v778
  %v780 = vpop.f32.mrb[0].mxu0
  %781 = vmatprep.mubr.f32.mxu0 0.0
  %782 = vmatmul.mubr.f32.gmra.mrb[0].mxu0 %v616
  %v783 = vpop.f32.mrb[0].mxu0
  %v784 = vadd.f32 %v605, %v783
  %v785 = vpop.f32.mrb[0].mxu0
  %786 = vmatprep.mubr.f32.mxu0 0.0
  %787 = vmatmul.mubr.f32.gmra.mrb[0].mxu0 %v619
  %v788 = vpop.f32.mrb[0].mxu0
  %v789 = vadd.f32 %v605, %v788
  %v790 = vpop.f32.mrb[0].mxu0
  %791 = vmatprep.mubr.f32.mxu0 0.0
  %792 = vmatmul.mubr.f32.gmra.mrb[0].mxu0 %v622
  %v793 = vpop.f32.mrb[0].mxu0
  %v794 = vadd.f32 %v605, %v793
  %v795 = vpop.f32.mrb[0].mxu0
  %796 = vmatprep.mubr.f32.mxu0 0.0
  %797 = vmatmul.mubr.f32.gmra.mrb[0].mxu0 %v625
  %v798 = vpop.f32.mrb[0].mxu0
  %v799 = vadd.f32 %v605, %v798
  %v800 = vpop.f32.mrb[0].mxu0
  %801 = vmatprep.mubr.f32.mxu0 0.0
  %802 = vmatmul.mubr.f32.gmra.mrb[0].mxu0 %v628
  %v803 = vpop.f32.mrb[0].mxu0
  %v804 = vadd.f32 %v605, %v803
  %v805 = vpop.f32.mrb[0].mxu0
  %806 = vmatprep.mubr.f32.mxu0 0.0
  %807 = vmatmul.mubr.f32.gmra.mrb[0].mxu0 %v631
  %v808 = vpop.f32.mrb[0].mxu0
  %v809 = vadd.f32 %v605, %v808
  %v810 = vpop.f32.mrb[0].mxu0
  %811 = vmatprep.mubr.f32.mxu0 0.0
  %812 = vmatmul.mubr.f32.gmra.mrb[0].mxu0 %v634
  %v813 = vpop.f32.mrb[0].mxu0
  %v814 = vadd.f32 %v605, %v813
  %v815 = vpop.f32.mrb[0].mxu0
  %816 = vmatprep.mubr.f32.mxu0 0.0
  %817 = vmatmul.mubr.f32.gmra.mrb[0].mxu0 %v637
  %v818 = vpop.f32.mrb[0].mxu0
  %v819 = vadd.f32 %v605, %v818
  %v820 = vpop.f32.mrb[0].mxu0
  %821 = vmatprep.mubr.f32.mxu0 0.0
  %822 = vmatmul.mubr.f32.gmra.mrb[0].mxu0 %v640
  %v823 = vpop.f32.mrb[0].mxu0
  %v824 = vadd.f32 %v605, %v823
  %v825 = vpop.f32.mrb[0].mxu0
  %826 = vmatprep.mubr.f32.mxu0 0.0
  %827 = vmatmul.mubr.f32.gmra.mrb[0].mxu0 %v643
  %v828 = vpop.f32.mrb[0].mxu0
  %v829 = vadd.f32 %v605, %v828
  %v830 = vpop.f32.mrb[0].mxu0
  %831 = vmatprep.mubr.f32.mxu0 0.0
  %832 = vmatmul.mubr.f32.gmra.mrb[0].mxu0 %v646
  %v833 = vpop.f32.mrb[0].mxu0
  %v834 = vadd.f32 %v605, %v833
  %v835 = vpop.f32.mrb[0].mxu0
  %836 = vmatprep.mubr.f32.mxu0 0.0
  %837 = vmatmul.mubr.f32.gmra.mrb[0].mxu0 %v649
  %v838 = vpop.f32.mrb[0].mxu0
  %v839 = vadd.f32 %v605, %v838
  %v840 = vpop.f32.mrb[0].mxu0
  %841 = vmatprep.mubr.f32.mxu0 0.0
  %842 = vmatmul.mubr.f32.gmra.mrb[0].mxu0 %v652
  %v843 = vpop.f32.mrb[0].mxu0
  %v844 = vadd.f32 %v605, %v843
  %v845 = vpop.f32.mrb[0].mxu0
  %846 = vmatprep.mubr.f32.mxu0 0.0
  %847 = vmatmul.mubr.f32.gmra.mrb[0].mxu0 %v655
  %v848 = vpop.f32.mrb[0].mxu0
  %v849 = vadd.f32 %v605, %v848
  %v850 = vpop.f32.mrb[0].mxu0
  %851 = vmatprep.mubr.f32.mxu0 0.0
  %852 = vmatmul.mubr.f32.gmra.mrb[0].mxu0 %v658
  %v853 = vpop.f32.mrb[0].mxu0
  %v854 = vadd.f32 %v605, %v853
  %v855 = vpop.f32.mrb[0].mxu0
  %856 = vmatprep.mubr.f32.mxu0 0.0
  %857 = vmatmul.mubr.f32.gmra.mrb[0].mxu0 %v661
  %v858 = vpop.f32.mrb[0].mxu0
  %v859 = vadd.f32 %v605, %v858
  %v860 = vpop.f32.mrb[0].mxu0
  %861 = vmatprep.mubr.f32.mxu0 0.0
  %862 = vmatmul.mubr.f32.gmra.mrb[0].mxu0 %v664
  %v863 = vpop.f32.mrb[0].mxu0
  %v864 = vadd.f32 %v605, %v863
  %v865 = vpop.f32.mrb[0].mxu0
  %866 = vmatprep.mubr.f32.mxu0 0.0
  %867 = vmatmul.mubr.f32.gmra.mrb[0].mxu0 %v667
  %v868 = vpop.f32.mrb[0].mxu0
  %v869 = vadd.f32 %v605, %v868
  %v870 = vpop.f32.mrb[0].mxu0
  %871 = vmatprep.mubr.f32.mxu0 0.0
  %872 = vmatmul.mubr.f32.gmra.mrb[0].mxu0 %v670
  %v873 = vpop.f32.mrb[0].mxu0
  %v874 = vadd.f32 %v605, %v873
  %v875 = vpop.f32.mrb[0].mxu0
  %876 = vmatprep.mubr.f32.mxu0 0.0
  %877 = vmatmul.mubr.f32.gmra.mrb[0].mxu0 %v673
  %v878 = vpop.f32.mrb[0].mxu0
  %v879 = vadd.f32 %v605, %v878
  %v880 = vpop.f32.mrb[0].mxu0
  %881 = vmatprep.mubr.f32.mxu0 0.0
  %882 = vmatmul.mubr.f32.gmra.mrb[0].mxu0 %v676
  %v883 = vpop.f32.mrb[0].mxu0
  %v884 = vadd.f32 %v605, %v883
  %v885 = vpop.f32.mrb[0].mxu0
  %886 = vmatprep.mubr.f32.mxu0 0.0
  %887 = vmatmul.mubr.f32.gmra.mrb[0].mxu0 %v679
  %v888 = vpop.f32.mrb[0].mxu0
  %v889 = vadd.f32 %v605, %v888
  %v890 = vpop.f32.mrb[0].mxu0
  %891 = vmatprep.mubr.f32.mxu0 0.0
  %892 = vmatmul.mubr.f32.gmra.mrb[0].mxu0 %v682
  %v893 = vpop.f32.mrb[0].mxu0
  %v894 = vadd.f32 %v605, %v893
  %v895 = vpop.f32.mrb[0].mxu0
  %896 = vmatprep.mubr.f32.mxu0 0.0
  %897 = vmatmul.mubr.f32.gmra.mrb[0].mxu0 %v685
  %v898 = vpop.f32.mrb[0].mxu0
  %v899 = vadd.f32 %v605, %v898
  %v900 = vpop.f32.mrb[0].mxu0
  %901 = vmatprep.mubr.f32.mxu0 0.0
  %902 = vmatmul.mubr.f32.gmra.mrb[0].mxu0 %v688
  %v903 = vpop.f32.mrb[0].mxu0
  %v904 = vadd.f32 %v605, %v903
  %v905 = vpop.f32.mrb[0].mxu0
  %906 = vmatprep.mubr.f32.mxu0 0.0
  %907 = vmatmul.mubr.f32.gmra.mrb[0].mxu0 %v691
  %v908 = vpop.f32.mrb[0].mxu0
  %v909 = vadd.f32 %v605, %v908
  %v910 = vpop.f32.mrb[0].mxu0
  %911 = vmatprep.mubr.f32.mxu0 0.0
  %912 = vmatmul.mubr.f32.gmra.mrb[0].mxu0 %v694
  %v913 = vpop.f32.mrb[0].mxu0
  %v914 = vadd.f32 %v605, %v913
  %v915 = vpop.f32.mrb[0].mxu0
  %916 = vmatprep.mubr.f32.mxu0 0.0
  %917 = vmatmul.mubr.f32.gmra.mrb[0].mxu0 %v697
  %v918 = vpop.f32.mrb[0].mxu0
  %v919 = vadd.f32 %v605, %v918
  %v920 = vpop.f32.mrb[0].mxu0
  %921 = vmatprep.mubr.f32.mxu0 0.0
  %922 = vmatmul.mubr.f32.gmra.mrb[0].mxu0 %v700
  %v923 = vpop.f32.mrb[0].mxu0
  %v924 = vadd.f32 %v605, %v923
  %v925 = vpop.f32.mrb[0].mxu0
  %926 = vdwg.mxu0
  %v927 = vlaneseq
  %v928 = vshrl.u32 %v927, 7
  %v929 = vadd.s32 %v928, 8
  %v930 = vadd.s32 %v928, 16
  %v931 = vlaneseq
  %v932 = vand.u32 %v931, 127
  %v933 = vadd.s32 %v932, 128
  %vm934 = vcmp.ge.s32.totalorder %v928, 0
  %vm935 = vcmp.ge.s32.totalorder %v929, 0
  %vm936 = vcmp.ge.s32.totalorder %v930, 0
  %vm937 = vcmp.lt.s32.totalorder %v928, 5
  %vm938 = vcmp.lt.s32.totalorder %v929, 5
  %vm939 = vcmp.lt.s32.totalorder %v930, 5
  %vm940 = vmand %vm934, %vm937
  %vm941 = vmand %vm935, %vm938
  %vm942 = vmand %vm936, %vm939
  %vm943 = vcmp.ge.s32.totalorder %v932, 0
  %vm944 = vcmp.ge.s32.totalorder %v933, 0
  %vm945 = vmand %vm940, %vm943
  %vm946 = vmand %vm940, %vm944
  %vm947 = vmand %vm941, %vm943
  %vm948 = vmand %vm941, %vm944
  %vm949 = vmand %vm942, %vm943
  %vm950 = vmand %vm942, %vm944
  %vm951 = vcmp.lt.s32.totalorder %v932, 64
  %vm952 = vcmp.lt.s32.totalorder %v933, 64
  %vm953 = vmand %vm945, %vm951
  %vm954 = vmand %vm946, %vm952
  %vm955 = vmand %vm947, %vm951
  %vm956 = vmand %vm948, %vm952
  %vm957 = vmand %vm949, %vm951
  %vm958 = vmand %vm950, %vm952
  %vm959 = vcmp.ge.s32.totalorder %v928, 5
  %vm960 = vcmp.ge.s32.totalorder %v929, 5
  %vm961 = vcmp.ge.s32.totalorder %v930, 5
  %vm962 = vcmp.lt.s32.totalorder %v928, 10
  %vm963 = vcmp.lt.s32.totalorder %v929, 10
  %vm964 = vcmp.lt.s32.totalorder %v930, 10
  %vm965 = vmand %vm959, %vm962
  %vm966 = vmand %vm960, %vm963
  %vm967 = vmand %vm961, %vm964
  %vm968 = vcmp.ge.s32.totalorder %v932, 64
  %vm969 = vcmp.ge.s32.totalorder %v933, 64
  %vm970 = vmand %vm965, %vm968
  %vm971 = vmand %vm965, %vm969
  %vm972 = vmand %vm966, %vm968
  %vm973 = vmand %vm966, %vm969
  %vm974 = vmand %vm967, %vm968
  %vm975 = vmand %vm967, %vm969
  %vm976 = vcmp.lt.s32.totalorder %v932, 128
  %vm977 = vcmp.lt.s32.totalorder %v933, 128
  %vm978 = vmand %vm970, %vm976
  %vm979 = vmand %vm971, %vm977
  %vm980 = vmand %vm972, %vm976
  %vm981 = vmand %vm973, %vm977
  %vm982 = vmand %vm974, %vm976
  %vm983 = vmand %vm975, %vm977
  %vm984 = vmor %vm953, %vm978
  %vm985 = vmor %vm954, %vm979
  %vm986 = vmor %vm955, %vm980
  %vm987 = vmor %vm956, %vm981
  %vm988 = vmor %vm957, %vm982
  %vm989 = vmor %vm958, %vm983
  %vm990 = vcmp.ge.s32.totalorder %v928, 10
  %vm991 = vcmp.ge.s32.totalorder %v929, 10
  %vm992 = vcmp.ge.s32.totalorder %v930, 10
  %vm993 = vcmp.lt.s32.totalorder %v928, 15
  %vm994 = vcmp.lt.s32.totalorder %v929, 15
  %vm995 = vcmp.lt.s32.totalorder %v930, 15
  %vm996 = vmand %vm990, %vm993
  %vm997 = vmand %vm991, %vm994
  %vm998 = vmand %vm992, %vm995
  %vm999 = vcmp.ge.s32.totalorder %v932, 128
  %vm1000 = vcmp.ge.s32.totalorder %v933, 128
  %vm1001 = vmand %vm996, %vm999
  %vm1002 = vmand %vm996, %vm1000
  %vm1003 = vmand %vm997, %vm999
  %vm1004 = vmand %vm997, %vm1000
  %vm1005 = vmand %vm998, %vm999
  %vm1006 = vmand %vm998, %vm1000
  %vm1007 = vcmp.lt.s32.totalorder %v932, 192
  %vm1008 = vcmp.lt.s32.totalorder %v933, 192
  %vm1009 = vmand %vm1001, %vm1007
  %vm1010 = vmand %vm1002, %vm1008
  %vm1011 = vmand %vm1003, %vm1007
  %vm1012 = vmand %vm1004, %vm1008
  %vm1013 = vmand %vm1005, %vm1007
  %vm1014 = vmand %vm1006, %vm1008
  %vm1015 = vmor %vm984, %vm1009
  %vm1016 = vmor %vm985, %vm1010
  %vm1017 = vmor %vm986, %vm1011
  %vm1018 = vmor %vm987, %vm1012
  %vm1019 = vmor %vm988, %vm1013
  %vm1020 = vmor %vm989, %vm1014
  %vm1021 = vcmp.ge.s32.totalorder %v928, 15
  %vm1022 = vcmp.ge.s32.totalorder %v929, 15
  %vm1023 = vcmp.ge.s32.totalorder %v930, 15
  %vm1024 = vcmp.lt.s32.totalorder %v928, 20
  %vm1025 = vcmp.lt.s32.totalorder %v929, 20
  %vm1026 = vcmp.lt.s32.totalorder %v930, 20
  %vm1027 = vmand %vm1021, %vm1024
  %vm1028 = vmand %vm1022, %vm1025
  %vm1029 = vmand %vm1023, %vm1026
  %vm1030 = vcmp.ge.s32.totalorder %v932, 192
  %vm1031 = vcmp.ge.s32.totalorder %v933, 192
  %vm1032 = vmand %vm1027, %vm1030
  %vm1033 = vmand %vm1027, %vm1031
  %vm1034 = vmand %vm1028, %vm1030
  %vm1035 = vmand %vm1028, %vm1031
  %vm1036 = vmand %vm1029, %vm1030
  %vm1037 = vmand %vm1029, %vm1031
  %vm1038 = vcmp.lt.s32.totalorder %v932, 256
  %vm1039 = vcmp.lt.s32.totalorder %v933, 256
  %vm1040 = vmand %vm1032, %vm1038
  %vm1041 = vmand %vm1033, %vm1039
  %vm1042 = vmand %vm1034, %vm1038
  %vm1043 = vmand %vm1035, %vm1039
  %vm1044 = vmand %vm1036, %vm1038
  %vm1045 = vmand %vm1037, %vm1039
  %vm1046 = vmor %vm1015, %vm1040
  %vm1047 = vmor %vm1016, %vm1041
  %vm1048 = vmor %vm1017, %vm1042
  %vm1049 = vmor %vm1018, %vm1043
  %vm1050 = vmor %vm1019, %vm1044
  %vm1051 = vmor %vm1020, %vm1045
  %v1052 = vld [vmem:[%s1] sm:$0xff]
  %v1053 = vld [vmem:[%s1 + $0x8] sm:$0xff]
  %v1054 = vld [vmem:[%s1 + $0x10] sm:$0xf]
  %v1055 = vsel %vm112, %v1052, 0.0
  %1056 = vadd.xlane.f32.xlu0 %v1055
  %v1057 = vpop.xlane.xlu0 %1056
  %v1058 = vsel %vm112, %v1053, 0.0
  %1059 = vadd.xlane.f32.xlu0 %v1058
  %v1060 = vpop.xlane.xlu0 %1059
  %vm1061 = vcmask 257024
  %v1062 = vsel %vm1061, %v1054, 0.0
  %1063 = vadd.xlane.f32.xlu0 %v1062
  %v1064 = vpop.xlane.xlu0 %1063
  %v1065 = vmul.f32 %v1057, %v209
  %v1066 = vmul.f32 %v1060, %v209
  %v1067 = vmul.f32 %v1064, %v209
  %v1068 = vsub.f32 %v1052, %v1065
  %v1069 = vsub.f32 %v1053, %v1066
  %v1070 = vsub.f32 %v1054, %v1067
  %v1071 = vmul.f32 %v1068, %v1068
  %v1072 = vmul.f32 %v1069, %v1069
  %v1073 = vmul.f32 %v1070, %v1070
  %v1074 = vsel %vm112, %v1071, 0.0
  %1075 = vadd.xlane.f32.xlu0 %v1074
  %v1076 = vpop.xlane.xlu0 %1075
  %v1077 = vsel %vm112, %v1072, 0.0
  %1078 = vadd.xlane.f32.xlu0 %v1077
  %v1079 = vpop.xlane.xlu0 %1078
  %v1080 = vsel %vm1061, %v1073, 0.0
  %1081 = vadd.xlane.f32.xlu0 %v1080
  %v1082 = vpop.xlane.xlu0 %1081
  %v1083 = vmul.f32 %v1076, %v209
  %v1084 = vmul.f32 %v1079, %v209
  %v1085 = vmul.f32 %v1082, %v209
  %v1086 = vadd.f32 %v1083, 1e-05
  %v1087 = vadd.f32 %v1084, 1e-05
  %v1088 = vadd.f32 %v1085, 1e-05
  %v1089 = vrsqrt.pop %v1086
  %v1090 = vrsqrt.pop %v1087
  %v1091 = vrsqrt.pop %v1088
  %v1092 = vmul.f32 %v1068, %v1089
  %v1093 = vmul.f32 %v1069, %v1090
  %v1094 = vmul.f32 %v1070, %v1091
  %v1095 = vlaneseq
  %v1096 = vshrl.u32 %v1095, 7
  %v1097 = vsub.s32 0, %v1096
  %v1098 = vrot.slane %v68, %v1097
  %v1099 = vmul.f32 %v1092, %v1098
  %v1100 = vmul.f32 %v1093, %v1098
  %v1101 = vmul.f32 %v1094, %v1098
  %v1102 = vlaneseq
  %v1103 = vshrl.u32 %v1102, 7
  %v1104 = vsub.s32 0, %v1103
  %v1105 = vrot.slane %v69, %v1104
  %v1106 = vadd.f32 %v1099, %v1105
  %v1107 = vadd.f32 %v1100, %v1105
  %v1108 = vadd.f32 %v1101, %v1105
  %v1109 = vlaneseq
  %v1110 = vshrl.u32 %v1109, 7
  %v1111 = vsub.s32 0, %v1110
  %v1112 = vrot.slane %v67, %v1111
  %v1114 = vsel %vm112, %v1106, 0
  %v1117 = vsel %vm112, %v1107, 0
  %v1120 = vsel %vm112, %v1108, 0
  %1122 = vmatprep.subr.mxu0 0.0
  %1123 = vmatpush1.msra.mxu0 %v20
  %1124 = vmatprep.subr.mxu0 0.0
  %1125 = vmatpush1.msra.mxu0 %v21
  %1126 = vmatprep.subr.mxu0 0.0
  %1127 = vmatpush1.msra.mxu0 %v22
  %1128 = vmatprep.subr.mxu0 0.0
  %1129 = vmatpush1.msra.mxu0 %v23
  %1130 = vmatprep.subr.mxu0 0.0
  %1131 = vmatpush1.msra.mxu0 0.0
  %1132 = vmatprep.subr.mxu0 0.0
  %1133 = vmatpush1.msra.mxu0 0.0
  %1134 = vmatprep.subr.mxu0 0.0
  %1135 = vmatpush1.msra.mxu0 0.0
  %1136 = vmatprep.subr.mxu0 0.0
  %1137 = vmatpush1.msra.mxu0 0.0
  %1138 = vmatprep.subr.mxu0 0.0
  %1139 = vmatpush1.msra.mxu0 0.0
  %1140 = vmatprep.subr.mxu0 0.0
  %1141 = vmatpush1.msra.mxu0 0.0
  %1142 = vmatprep.subr.mxu0 0.0
  %1143 = vmatpush1.msra.mxu0 0.0
  %1144 = vmatprep.subr.mxu0 0.0
  %1145 = vmatpush1.msra.mxu0 0.0
  %1146 = vmatprep.subr.mxu0 0.0
  %1147 = vmatpush1.msra.mxu0 0.0
  %1148 = vmatprep.subr.mxu0 0.0
  %1149 = vmatpush1.msra.mxu0 0.0
  %1150 = vmatprep.subr.mxu0 0.0
  %1151 = vmatpush1.msra.mxu0 0.0
  %1152 = vmatprep.subr.mxu0 0.0
  %1153 = vmatpush1.msra.mxu0 0.0
  %1154 = vmatprep.subr.mxu0 0.0
  %1155 = vmatpush1.msra.mxu0 0.0
  %1156 = vmatprep.subr.mxu0 0.0
  %1157 = vmatpush1.msra.mxu0 0.0
  %1158 = vmatprep.subr.mxu0 0.0
  %1159 = vmatpush1.msra.mxu0 0.0
  %1160 = vmatprep.subr.mxu0 0.0
  %1161 = vmatpush1.msra.mxu0 0.0
  %1162 = vmatprep.subr.mxu0 0.0
  %1163 = vmatpush1.msra.mxu0 0.0
  %1164 = vmatprep.subr.mxu0 0.0
  %1165 = vmatpush1.msra.mxu0 0.0
  %1166 = vmatprep.subr.mxu0 0.0
  %1167 = vmatpush1.msra.mxu0 0.0
  %1168 = vmatprep.subr.mxu0 0.0
  %1169 = vmatpush1.msra.mxu0 0.0
  %1170 = vmatprep.subr.mxu0 0.0
  %1171 = vmatpush1.msra.mxu0 0.0
  %1172 = vmatprep.subr.mxu0 0.0
  %1173 = vmatpush1.msra.mxu0 0.0
  %1174 = vmatprep.subr.mxu0 0.0
  %1175 = vmatpush1.msra.mxu0 0.0
  %1176 = vmatprep.subr.mxu0 0.0
  %1177 = vmatpush1.msra.mxu0 0.0
  %1178 = vmatprep.subr.mxu0 0.0
  %1179 = vmatpush1.msra.mxu0 0.0
  %1180 = vmatprep.subr.mxu0 0.0
  %1181 = vmatpush1.msra.mxu0 0.0
  %1182 = vmatprep.subr.mxu0 0.0
  %1183 = vmatpush1.msra.mxu0 0.0
  %1184 = vmatprep.subr.mxu0 0.0
  %1185 = vmatpush1.msra.mxu0 0.0
  %1186 = vmatprep.mubr.f32.mxu0 0.0
  %1187 = vmatmul.mubr.f32.gmra.mrb[0].mxu0 %v1114
  %v1188 = vpop.f32.mrb[0].mxu0
  %v1189 = vadd.f32 %v1112, %v1188
  %v1190 = vpop.f32.mrb[0].mxu0
  %1191 = vmatprep.mubr.f32.mxu0 0.0
  %1192 = vmatmul.mubr.f32.gmra.mrb[0].mxu0 %v1117
  %v1193 = vpop.f32.mrb[0].mxu0
  %v1194 = vadd.f32 %v1112, %v1193
  %v1195 = vpop.f32.mrb[0].mxu0
  %1196 = vmatprep.mubr.f32.mxu0 0.0
  %1197 = vmatmul.mubr.f32.gmra.mrb[0].mxu0 %v1120
  %v1198 = vpop.f32.mrb[0].mxu0
  %v1199 = vadd.f32 %v1112, %v1198
  %v1200 = vpop.f32.mrb[0].mxu0
  %1201 = vdwg.mxu0
  %v1203 = vsel %vm112, %v1189, 0
  %v1206 = vsel %vm112, %v1194, 0
  %v1209 = vsel %vm112, %v1199, 0
  %v1212 = vsel %vm112, %v769, 0
  %v1215 = vsel %vm112, %v774, 0
  %v1218 = vsel %vm112, %v779, 0
  %v1221 = vsel %vm112, %v784, 0
  %v1224 = vsel %vm112, %v789, 0
  %v1227 = vsel %vm112, %v794, 0
  %v1230 = vsel %vm112, %v799, 0
  %v1233 = vsel %vm112, %v804, 0
  %v1236 = vsel %vm112, %v809, 0
  %v1239 = vsel %vm112, %v814, 0
  %v1242 = vsel %vm112, %v819, 0
  %v1245 = vsel %vm112, %v824, 0
  %v1248 = vsel %vm112, %v829, 0
  %v1251 = vsel %vm112, %v834, 0
  %v1254 = vsel %vm112, %v839, 0
  %v1257 = vsel %vm112, %v844, 0
  %v1260 = vsel %vm112, %v849, 0
  %v1263 = vsel %vm112, %v854, 0
  %v1266 = vsel %vm112, %v859, 0
  %v1269 = vsel %vm112, %v864, 0
  %v1272 = vsel %vm112, %v869, 0
  %v1275 = vsel %vm112, %v874, 0
  %v1278 = vsel %vm112, %v879, 0
  %v1281 = vsel %vm112, %v884, 0
  %v1284 = vsel %vm112, %v889, 0
  %v1287 = vsel %vm112, %v894, 0
  %v1290 = vsel %vm112, %v899, 0
  %v1293 = vsel %vm112, %v904, 0
  %v1296 = vsel %vm112, %v909, 0
  %v1299 = vsel %vm112, %v914, 0
  %v1302 = vsel %vm112, %v919, 0
  %v1305 = vsel %vm112, %v924, 0
  %1307 = vmatprep.subr.mxu0 0.0
  %1308 = vmatpush1.xpose.msra.mxu0 %v1212
  %1309 = vmatprep.subr.mxu0 0.0
  %1310 = vmatpush1.xpose.msra.mxu0 %v1215
  %1311 = vmatprep.subr.mxu0 0.0
  %1312 = vmatpush1.xpose.msra.mxu0 %v1218
  %1313 = vmatprep.subr.mxu0 0.0
  %1314 = vmatpush1.xpose.msra.mxu0 %v1221
  %1315 = vmatprep.subr.mxu0 0.0
  %1316 = vmatpush1.xpose.msra.mxu0 %v1224
  %1317 = vmatprep.subr.mxu0 0.0
  %1318 = vmatpush1.xpose.msra.mxu0 %v1227
  %1319 = vmatprep.subr.mxu0 0.0
  %1320 = vmatpush1.xpose.msra.mxu0 %v1230
  %1321 = vmatprep.subr.mxu0 0.0
  %1322 = vmatpush1.xpose.msra.mxu0 %v1233
  %1323 = vmatprep.subr.mxu0 0.0
  %1324 = vmatpush1.xpose.msra.mxu0 %v1236
  %1325 = vmatprep.subr.mxu0 0.0
  %1326 = vmatpush1.xpose.msra.mxu0 %v1239
  %1327 = vmatprep.subr.mxu0 0.0
  %1328 = vmatpush1.xpose.msra.mxu0 %v1242
  %1329 = vmatprep.subr.mxu0 0.0
  %1330 = vmatpush1.xpose.msra.mxu0 %v1245
  %1331 = vmatprep.subr.mxu0 0.0
  %1332 = vmatpush1.xpose.msra.mxu0 %v1248
  %1333 = vmatprep.subr.mxu0 0.0
  %1334 = vmatpush1.xpose.msra.mxu0 %v1251
  %1335 = vmatprep.subr.mxu0 0.0
  %1336 = vmatpush1.xpose.msra.mxu0 %v1254
  %1337 = vmatprep.subr.mxu0 0.0
  %1338 = vmatpush1.xpose.msra.mxu0 %v1257
  %1339 = vmatprep.subr.mxu0 0.0
  %1340 = vmatpush1.xpose.msra.mxu0 %v1260
  %1341 = vmatprep.subr.mxu0 0.0
  %1342 = vmatpush1.xpose.msra.mxu0 %v1263
  %1343 = vmatprep.subr.mxu0 0.0
  %1344 = vmatpush1.xpose.msra.mxu0 %v1266
  %1345 = vmatprep.subr.mxu0 0.0
  %1346 = vmatpush1.xpose.msra.mxu0 %v1269
  %1347 = vmatprep.subr.mxu0 0.0
  %1348 = vmatpush1.xpose.msra.mxu0 %v1272
  %1349 = vmatprep.subr.mxu0 0.0
  %1350 = vmatpush1.xpose.msra.mxu0 %v1275
  %1351 = vmatprep.subr.mxu0 0.0
  %1352 = vmatpush1.xpose.msra.mxu0 %v1278
  %1353 = vmatprep.subr.mxu0 0.0
  %1354 = vmatpush1.xpose.msra.mxu0 %v1281
  %1355 = vmatprep.subr.mxu0 0.0
  %1356 = vmatpush1.xpose.msra.mxu0 %v1284
  %1357 = vmatprep.subr.mxu0 0.0
  %1358 = vmatpush1.xpose.msra.mxu0 %v1287
  %1359 = vmatprep.subr.mxu0 0.0
  %1360 = vmatpush1.xpose.msra.mxu0 %v1290
  %1361 = vmatprep.subr.mxu0 0.0
  %1362 = vmatpush1.xpose.msra.mxu0 %v1293
  %1363 = vmatprep.subr.mxu0 0.0
  %1364 = vmatpush1.xpose.msra.mxu0 %v1296
  %1365 = vmatprep.subr.mxu0 0.0
  %1366 = vmatpush1.xpose.msra.mxu0 %v1299
  %1367 = vmatprep.subr.mxu0 0.0
  %1368 = vmatpush1.xpose.msra.mxu0 %v1302
  %1369 = vmatprep.subr.mxu0 0.0
  %1370 = vmatpush1.xpose.msra.mxu0 %v1305
  %1371 = vmatprep.mubr.f32.mxu0 0.0
  %1372 = vmatmul.mubr.f32.gmra.mrb[0].mxu0 %v1203
  %v1373 = vpop.f32.mrb[0].mxu0
  %v1374 = vadd.f32 0.0, %v1373
  %v1375 = vpop.f32.mrb[0].mxu0
  %v1376 = vadd.f32 0.0, %v1375
  %1377 = vmatprep.mubr.f32.mxu0 0.0
  %1378 = vmatmul.mubr.f32.gmra.mrb[0].mxu0 %v1206
  %v1379 = vpop.f32.mrb[0].mxu0
  %v1380 = vadd.f32 0.0, %v1379
  %v1381 = vpop.f32.mrb[0].mxu0
  %v1382 = vadd.f32 0.0, %v1381
  %1383 = vmatprep.mubr.f32.mxu0 0.0
  %1384 = vmatmul.mubr.f32.gmra.mrb[0].mxu0 %v1209
  %v1385 = vpop.f32.mrb[0].mxu0
  %v1386 = vadd.f32 0.0, %v1385
  %v1387 = vpop.f32.mrb[0].mxu0
  %v1388 = vadd.f32 0.0, %v1387
  %1389 = vdwg.mxu0
  %v1390 = vmul.f32 %v1374, 0.17677669
  %v1391 = vmul.f32 %v1376, 0.17677669
  %v1392 = vmul.f32 %v1380, 0.17677669
  %v1393 = vmul.f32 %v1382, 0.17677669
  %v1394 = vmul.f32 %v1386, 0.17677669
  %v1395 = vmul.f32 %v1388, 0.17677669
  %v1396 = vsel %vm1046, %v1390, -1e+30
  %v1397 = vsel %vm1047, %v1391, -1e+30
  %v1398 = vsel %vm1048, %v1392, -1e+30
  %v1399 = vsel %vm1049, %v1393, -1e+30
  %v1400 = vsel %vm1050, %v1394, -1e+30
  %v1401 = vsel %vm1051, %v1395, -1e+30
  %vm1402 = vcmask 1043456
  %v1403 = vsel %vm1402, %v1400, -inf
  %v1404 = vmax.f32 %v1396, %v1403
  %v1405 = vmax.f32 %v1404, %v1398
  %v1406 = vrot.slane %v1405, 4
  %v1407 = vmax.f32 %v1405, %v1406
  %v1408 = vrot.slane %v1407, 2
  %v1409 = vmax.f32 %v1407, %v1408
  %v1410 = vrot.slane %v1409, 1
  %v1411 = vmax.f32 %v1409, %v1410
  %v1412 = vsel %vm1402, %v1401, -inf
  %v1413 = vmax.f32 %v1397, %v1412
  %v1414 = vmax.f32 %v1413, %v1399
  %v1415 = vrot.slane %v1414, 4
  %v1416 = vmax.f32 %v1414, %v1415
  %v1417 = vrot.slane %v1416, 2
  %v1418 = vmax.f32 %v1416, %v1417
  %v1419 = vrot.slane %v1418, 1
  %v1420 = vmax.f32 %v1418, %v1419
  %v1421 = vsub.f32 %v1396, %v1411
  %v1422 = vsub.f32 %v1397, %v1420
  %v1423 = vsub.f32 %v1398, %v1411
  %v1424 = vsub.f32 %v1399, %v1420
  %v1425 = vsub.f32 %v1400, %v1411
  %v1426 = vsub.f32 %v1401, %v1420
  %v1427 = vmul.f32 %v1421, 1.442695
  %v1428 = vpow.pop %v1427
  %v1429 = vmul.f32 %v1422, 1.442695
  %v1430 = vpow.pop %v1429
  %v1431 = vmul.f32 %v1423, 1.442695
  %v1432 = vpow.pop %v1431
  %v1433 = vmul.f32 %v1424, 1.442695
  %v1434 = vpow.pop %v1433
  %v1435 = vmul.f32 %v1425, 1.442695
  %v1436 = vpow.pop %v1435
  %v1437 = vmul.f32 %v1426, 1.442695
  %v1438 = vpow.pop %v1437
  %v1439 = vadd.f32 %v1428, %v1432
  %v1440 = vsel %vm1402, %v1436, 0.0
  %v1441 = vadd.f32 %v1439, %v1440
  %v1442 = vrot.slane %v1441, 4
  %v1443 = vadd.f32 %v1441, %v1442
  %v1444 = vrot.slane %v1443, 2
  %v1445 = vadd.f32 %v1443, %v1444
  %v1446 = vrot.slane %v1445, 1
  %v1447 = vadd.f32 %v1445, %v1446
  %v1448 = vadd.f32 %v1430, %v1434
  %v1449 = vsel %vm1402, %v1438, 0.0
  %v1450 = vadd.f32 %v1448, %v1449
  %v1451 = vrot.slane %v1450, 4
  %v1452 = vadd.f32 %v1450, %v1451
  %v1453 = vrot.slane %v1452, 2
  %v1454 = vadd.f32 %v1452, %v1453
  %v1455 = vrot.slane %v1454, 1
  %v1456 = vadd.f32 %v1454, %v1455
  %v1457 = vrcp.pop %v1447
  %v1458 = vmul.f32 %v1428, %v1457
  %v1459 = vrcp.pop %v1456
  %v1460 = vmul.f32 %v1430, %v1459
  %v1461 = vmul.f32 %v1432, %v1457
  %v1462 = vmul.f32 %v1434, %v1459
  %v1463 = vmul.f32 %v1436, %v1457
  %v1464 = vmul.f32 %v1438, %v1459
  %v1465 = vadd.f32 %v1458, %v1460
  %1466 = vadd.xlane.f32.xlu0 %v1465
  %v1467 = vpop.xlane.xlu0 %1466
  %v1468 = vadd.f32 %v1461, %v1462
  %1469 = vadd.xlane.f32.xlu0 %v1468
  %v1470 = vpop.xlane.xlu0 %1469
  %v1471 = vsel %vm1402, %v1463, 0.0
  %v1472 = vsel %vm1402, %v1464, 0.0
  %v1473 = vadd.f32 %v1471, %v1472
  %1474 = vadd.xlane.f32.xlu0 %v1473
  %v1475 = vpop.xlane.xlu0 %1474
  %v1476 = vadd.f32 %v1467, 1e-08
  %v1477 = vadd.f32 %v1470, 1e-08
  %v1478 = vadd.f32 %v1475, 1e-08
  %v1479 = vrcp.pop %v1476
  %v1480 = vmul.f32 %v1458, %v1479
  %v1481 = vmul.f32 %v1460, %v1479
  %v1482 = vrcp.pop %v1477
  %v1483 = vmul.f32 %v1461, %v1482
  %v1484 = vmul.f32 %v1462, %v1482
  %v1485 = vrcp.pop %v1478
  %v1486 = vmul.f32 %v1463, %v1485
  %v1487 = vmul.f32 %v1464, %v1485
  %1488 = vrot.lane.b32.xlu0 %v769, 96
  %v1489 = vpop.permute.xlu0 %1488
  %1490 = vrot.lane.b32.xlu0 %v774, 96
  %v1491 = vpop.permute.xlu0 %1490
  %1492 = vrot.lane.b32.xlu0 %v779, 96
  %v1493 = vpop.permute.xlu0 %1492
  %1494 = vrot.lane.b32.xlu0 %v784, 96
  %v1495 = vpop.permute.xlu0 %1494
  %1496 = vrot.lane.b32.xlu0 %v789, 96
  %v1497 = vpop.permute.xlu0 %1496
  %1498 = vrot.lane.b32.xlu0 %v794, 96
  %v1499 = vpop.permute.xlu0 %1498
  %1500 = vrot.lane.b32.xlu0 %v799, 96
  %v1501 = vpop.permute.xlu0 %1500
  %1502 = vrot.lane.b32.xlu0 %v804, 96
  %v1503 = vpop.permute.xlu0 %1502
  %1504 = vrot.lane.b32.xlu0 %v809, 96
  %v1505 = vpop.permute.xlu0 %1504
  %1506 = vrot.lane.b32.xlu0 %v814, 96
  %v1507 = vpop.permute.xlu0 %1506
  %1508 = vrot.lane.b32.xlu0 %v819, 96
  %v1509 = vpop.permute.xlu0 %1508
  %1510 = vrot.lane.b32.xlu0 %v824, 96
  %v1511 = vpop.permute.xlu0 %1510
  %1512 = vrot.lane.b32.xlu0 %v829, 96
  %v1513 = vpop.permute.xlu0 %1512
  %1514 = vrot.lane.b32.xlu0 %v834, 96
  %v1515 = vpop.permute.xlu0 %1514
  %1516 = vrot.lane.b32.xlu0 %v839, 96
  %v1517 = vpop.permute.xlu0 %1516
  %1518 = vrot.lane.b32.xlu0 %v844, 96
  %v1519 = vpop.permute.xlu0 %1518
  %1520 = vrot.lane.b32.xlu0 %v849, 96
  %v1521 = vpop.permute.xlu0 %1520
  %1522 = vrot.lane.b32.xlu0 %v854, 96
  %v1523 = vpop.permute.xlu0 %1522
  %1524 = vrot.lane.b32.xlu0 %v859, 96
  %v1525 = vpop.permute.xlu0 %1524
  %1526 = vrot.lane.b32.xlu0 %v864, 96
  %v1527 = vpop.permute.xlu0 %1526
  %1528 = vrot.lane.b32.xlu0 %v869, 96
  %v1529 = vpop.permute.xlu0 %1528
  %1530 = vrot.lane.b32.xlu0 %v874, 96
  %v1531 = vpop.permute.xlu0 %1530
  %1532 = vrot.lane.b32.xlu0 %v879, 96
  %v1533 = vpop.permute.xlu0 %1532
  %1534 = vrot.lane.b32.xlu0 %v884, 96
  %v1535 = vpop.permute.xlu0 %1534
  %1536 = vrot.lane.b32.xlu0 %v889, 96
  %v1537 = vpop.permute.xlu0 %1536
  %1538 = vrot.lane.b32.xlu0 %v894, 96
  %v1539 = vpop.permute.xlu0 %1538
  %1540 = vrot.lane.b32.xlu0 %v899, 96
  %v1541 = vpop.permute.xlu0 %1540
  %1542 = vrot.lane.b32.xlu0 %v904, 96
  %v1543 = vpop.permute.xlu0 %1542
  %1544 = vrot.lane.b32.xlu0 %v909, 96
  %v1545 = vpop.permute.xlu0 %1544
  %1546 = vrot.lane.b32.xlu0 %v914, 96
  %v1547 = vpop.permute.xlu0 %1546
  %1548 = vrot.lane.b32.xlu0 %v919, 96
  %v1549 = vpop.permute.xlu0 %1548
  %1550 = vrot.lane.b32.xlu0 %v924, 96
  %v1551 = vpop.permute.xlu0 %1550
  %1584 = vmatprep.subr.mxu0 0.0
  %1585 = vmatpush1.msra.mxu0 %v1489
  %1586 = vmatprep.subr.mxu0 0.0
  %1587 = vmatpush1.msra.mxu0 %v1491
  %1588 = vmatprep.subr.mxu0 0.0
  %1589 = vmatpush1.msra.mxu0 %v1493
  %1590 = vmatprep.subr.mxu0 0.0
  %1591 = vmatpush1.msra.mxu0 %v1495
  %1592 = vmatprep.subr.mxu0 0.0
  %1593 = vmatpush1.msra.mxu0 %v1497
  %1594 = vmatprep.subr.mxu0 0.0
  %1595 = vmatpush1.msra.mxu0 %v1499
  %1596 = vmatprep.subr.mxu0 0.0
  %1597 = vmatpush1.msra.mxu0 %v1501
  %1598 = vmatprep.subr.mxu0 0.0
  %1599 = vmatpush1.msra.mxu0 %v1503
  %1600 = vmatprep.subr.mxu0 0.0
  %1601 = vmatpush1.msra.mxu0 %v1505
  %1602 = vmatprep.subr.mxu0 0.0
  %1603 = vmatpush1.msra.mxu0 %v1507
  %1604 = vmatprep.subr.mxu0 0.0
  %1605 = vmatpush1.msra.mxu0 %v1509
  %1606 = vmatprep.subr.mxu0 0.0
  %1607 = vmatpush1.msra.mxu0 %v1511
  %1608 = vmatprep.subr.mxu0 0.0
  %1609 = vmatpush1.msra.mxu0 %v1513
  %1610 = vmatprep.subr.mxu0 0.0
  %1611 = vmatpush1.msra.mxu0 %v1515
  %1612 = vmatprep.subr.mxu0 0.0
  %1613 = vmatpush1.msra.mxu0 %v1517
  %1614 = vmatprep.subr.mxu0 0.0
  %1615 = vmatpush1.msra.mxu0 %v1519
  %1616 = vmatprep.subr.mxu0 0.0
  %1617 = vmatpush1.msra.mxu0 %v1521
  %1618 = vmatprep.subr.mxu0 0.0
  %1619 = vmatpush1.msra.mxu0 %v1523
  %1620 = vmatprep.subr.mxu0 0.0
  %1621 = vmatpush1.msra.mxu0 %v1525
  %1622 = vmatprep.subr.mxu0 0.0
  %1623 = vmatpush1.msra.mxu0 %v1527
  %1624 = vmatprep.subr.mxu0 0.0
  %1625 = vmatpush1.msra.mxu0 %v1529
  %1626 = vmatprep.subr.mxu0 0.0
  %1627 = vmatpush1.msra.mxu0 %v1531
  %1628 = vmatprep.subr.mxu0 0.0
  %1629 = vmatpush1.msra.mxu0 %v1533
  %1630 = vmatprep.subr.mxu0 0.0
  %1631 = vmatpush1.msra.mxu0 %v1535
  %1632 = vmatprep.subr.mxu0 0.0
  %1633 = vmatpush1.msra.mxu0 %v1537
  %1634 = vmatprep.subr.mxu0 0.0
  %1635 = vmatpush1.msra.mxu0 %v1539
  %1636 = vmatprep.subr.mxu0 0.0
  %1637 = vmatpush1.msra.mxu0 %v1541
  %1638 = vmatprep.subr.mxu0 0.0
  %1639 = vmatpush1.msra.mxu0 %v1543
  %1640 = vmatprep.subr.mxu0 0.0
  %1641 = vmatpush1.msra.mxu0 %v1545
  %1642 = vmatprep.subr.mxu0 0.0
  %1643 = vmatpush1.msra.mxu0 %v1547
  %1644 = vmatprep.subr.mxu0 0.0
  %1645 = vmatpush1.msra.mxu0 %v1549
  %1646 = vmatprep.subr.mxu0 0.0
  %1647 = vmatpush1.msra.mxu0 %v1551
  %1648 = vmatprep.mubr.f32.mxu0 %v1481
  %1649 = vmatmul.mubr.f32.gmra.mrb[0].mxu0 %v1480
  %v1650 = vpop.f32.mrb[0].mxu0
  %v1651 = vadd.f32 0.0, %v1650
  %v1652 = vpop.f32.mrb[0].mxu0
  %1653 = vmatprep.mubr.f32.mxu0 %v1484
  %1654 = vmatmul.mubr.f32.gmra.mrb[0].mxu0 %v1483
  %v1655 = vpop.f32.mrb[0].mxu0
  %v1656 = vadd.f32 0.0, %v1655
  %v1657 = vpop.f32.mrb[0].mxu0
  %1658 = vmatprep.mubr.f32.mxu0 %v1487
  %1659 = vmatmul.mubr.f32.gmra.mrb[0].mxu0 %v1486
  %v1660 = vpop.f32.mrb[0].mxu0
  %v1661 = vadd.f32 0.0, %v1660
  %v1662 = vpop.f32.mrb[0].mxu0
  %1663 = vdwg.mxu0
  %1667 = vrot.lane.b32.xlu0 %v1052, 32
  %v1668 = vpop.permute.xlu0 %1667
  %1669 = vrot.lane.b32.xlu0 %v1053, 32
  %v1670 = vpop.permute.xlu0 %1669
  %1671 = vrot.lane.b32.xlu0 %v1054, 32
  %v1672 = vpop.permute.xlu0 %1671
  %v1676 = vsel %vm112, %v1651, %v1668
  %v1677 = vsel %vm112, %v1656, %v1670
  %v1678 = vsel %vm112, %v1661, %v1672
  %v1679 = vlaneseq
  %v1680 = vshrl.u32 %v1679, 7
  %v1681 = vsub.s32 0, %v1680
  %v1682 = vrot.slane %v70, %v1681
  %vm1683 = vcmask 523264
  %v1685 = vsel %vm1683, %v1676, 0
  %v1688 = vsel %vm1683, %v1677, 0
  %v1691 = vsel %vm1683, %v1678, 0
  %1693 = vmatprep.subr.mxu0 0.0
  %1694 = vmatpush1.msra.mxu0 %v24
  %1695 = vmatprep.subr.mxu0 0.0
  %1696 = vmatpush1.msra.mxu0 %v25
  %1697 = vmatprep.subr.mxu0 0.0
  %1698 = vmatpush1.msra.mxu0 %v26
  %1699 = vmatprep.subr.mxu0 0.0
  %1700 = vmatpush1.msra.mxu0 %v27
  %1701 = vmatprep.subr.mxu0 0.0
  %1702 = vmatpush1.msra.mxu0 %v28
  %1703 = vmatprep.subr.mxu0 0.0
  %1704 = vmatpush1.msra.mxu0 %v29
  %1705 = vmatprep.subr.mxu0 0.0
  %1706 = vmatpush1.msra.mxu0 %v30
  %1707 = vmatprep.subr.mxu0 0.0
  %1708 = vmatpush1.msra.mxu0 %v31
  %1709 = vmatprep.subr.mxu0 0.0
  %1710 = vmatpush1.msra.mxu0 0.0
  %1711 = vmatprep.subr.mxu0 0.0
  %1712 = vmatpush1.msra.mxu0 0.0
  %1713 = vmatprep.subr.mxu0 0.0
  %1714 = vmatpush1.msra.mxu0 0.0
  %1715 = vmatprep.subr.mxu0 0.0
  %1716 = vmatpush1.msra.mxu0 0.0
  %1717 = vmatprep.subr.mxu0 0.0
  %1718 = vmatpush1.msra.mxu0 0.0
  %1719 = vmatprep.subr.mxu0 0.0
  %1720 = vmatpush1.msra.mxu0 0.0
  %1721 = vmatprep.subr.mxu0 0.0
  %1722 = vmatpush1.msra.mxu0 0.0
  %1723 = vmatprep.subr.mxu0 0.0
  %1724 = vmatpush1.msra.mxu0 0.0
  %1725 = vmatprep.subr.mxu0 0.0
  %1726 = vmatpush1.msra.mxu0 0.0
  %1727 = vmatprep.subr.mxu0 0.0
  %1728 = vmatpush1.msra.mxu0 0.0
  %1729 = vmatprep.subr.mxu0 0.0
  %1730 = vmatpush1.msra.mxu0 0.0
  %1731 = vmatprep.subr.mxu0 0.0
  %1732 = vmatpush1.msra.mxu0 0.0
  %1733 = vmatprep.subr.mxu0 0.0
  %1734 = vmatpush1.msra.mxu0 0.0
  %1735 = vmatprep.subr.mxu0 0.0
  %1736 = vmatpush1.msra.mxu0 0.0
  %1737 = vmatprep.subr.mxu0 0.0
  %1738 = vmatpush1.msra.mxu0 0.0
  %1739 = vmatprep.subr.mxu0 0.0
  %1740 = vmatpush1.msra.mxu0 0.0
  %1741 = vmatprep.subr.mxu0 0.0
  %1742 = vmatpush1.msra.mxu0 0.0
  %1743 = vmatprep.subr.mxu0 0.0
  %1744 = vmatpush1.msra.mxu0 0.0
  %1745 = vmatprep.subr.mxu0 0.0
  %1746 = vmatpush1.msra.mxu0 0.0
  %1747 = vmatprep.subr.mxu0 0.0
  %1748 = vmatpush1.msra.mxu0 0.0
  %1749 = vmatprep.subr.mxu0 0.0
  %1750 = vmatpush1.msra.mxu0 0.0
  %1751 = vmatprep.subr.mxu0 0.0
  %1752 = vmatpush1.msra.mxu0 0.0
  %1753 = vmatprep.subr.mxu0 0.0
  %1754 = vmatpush1.msra.mxu0 0.0
  %1755 = vmatprep.subr.mxu0 0.0
  %1756 = vmatpush1.msra.mxu0 0.0
  %1757 = vmatprep.mubr.f32.mxu0 0.0
  %1758 = vmatmul.mubr.f32.gmra.mrb[0].mxu0 %v1685
  %v1759 = vpop.f32.mrb[0].mxu0
  %v1760 = vadd.f32 %v1682, %v1759
  %v1761 = vpop.f32.mrb[0].mxu0
  %1762 = vmatprep.mubr.f32.mxu0 0.0
  %1763 = vmatmul.mubr.f32.gmra.mrb[0].mxu0 %v1688
  %v1764 = vpop.f32.mrb[0].mxu0
  %v1765 = vadd.f32 %v1682, %v1764
  %v1766 = vpop.f32.mrb[0].mxu0
  %1767 = vmatprep.mubr.f32.mxu0 0.0
  %1768 = vmatmul.mubr.f32.gmra.mrb[0].mxu0 %v1691
  %v1769 = vpop.f32.mrb[0].mxu0
  %v1770 = vadd.f32 %v1682, %v1769
  %v1771 = vpop.f32.mrb[0].mxu0
  %1772 = vdwg.mxu0
  %v1773 = vlaneseq
  %v1774 = vshrl.u32 %v1773, 7
  %v1775 = vsub.s32 0, %v1774
  %v1776 = vrot.slane %v71, %v1775
  %v1777 = vsel %vm112, %v1052, 0
  %v1779 = vsel %vm112, %v1053, 0
  %v1781 = vsel %vm112, %v1054, 0
  %1783 = vmatprep.subr.mxu0 0.0
  %1784 = vmatpush1.msra.mxu0 %v32
  %1785 = vmatprep.subr.mxu0 0.0
  %1786 = vmatpush1.msra.mxu0 %v33
  %1787 = vmatprep.subr.mxu0 0.0
  %1788 = vmatpush1.msra.mxu0 %v34
  %1789 = vmatprep.subr.mxu0 0.0
  %1790 = vmatpush1.msra.mxu0 %v35
  %1791 = vmatprep.subr.mxu0 0.0
  %1792 = vmatpush1.msra.mxu0 0.0
  %1793 = vmatprep.subr.mxu0 0.0
  %1794 = vmatpush1.msra.mxu0 0.0
  %1795 = vmatprep.subr.mxu0 0.0
  %1796 = vmatpush1.msra.mxu0 0.0
  %1797 = vmatprep.subr.mxu0 0.0
  %1798 = vmatpush1.msra.mxu0 0.0
  %1799 = vmatprep.subr.mxu0 0.0
  %1800 = vmatpush1.msra.mxu0 0.0
  %1801 = vmatprep.subr.mxu0 0.0
  %1802 = vmatpush1.msra.mxu0 0.0
  %1803 = vmatprep.subr.mxu0 0.0
  %1804 = vmatpush1.msra.mxu0 0.0
  %1805 = vmatprep.subr.mxu0 0.0
  %1806 = vmatpush1.msra.mxu0 0.0
  %1807 = vmatprep.subr.mxu0 0.0
  %1808 = vmatpush1.msra.mxu0 0.0
  %1809 = vmatprep.subr.mxu0 0.0
  %1810 = vmatpush1.msra.mxu0 0.0
  %1811 = vmatprep.subr.mxu0 0.0
  %1812 = vmatpush1.msra.mxu0 0.0
  %1813 = vmatprep.subr.mxu0 0.0
  %1814 = vmatpush1.msra.mxu0 0.0
  %1815 = vmatprep.subr.mxu0 0.0
  %1816 = vmatpush1.msra.mxu0 0.0
  %1817 = vmatprep.subr.mxu0 0.0
  %1818 = vmatpush1.msra.mxu0 0.0
  %1819 = vmatprep.subr.mxu0 0.0
  %1820 = vmatpush1.msra.mxu0 0.0
  %1821 = vmatprep.subr.mxu0 0.0
  %1822 = vmatpush1.msra.mxu0 0.0
  %1823 = vmatprep.subr.mxu0 0.0
  %1824 = vmatpush1.msra.mxu0 0.0
  %1825 = vmatprep.subr.mxu0 0.0
  %1826 = vmatpush1.msra.mxu0 0.0
  %1827 = vmatprep.subr.mxu0 0.0
  %1828 = vmatpush1.msra.mxu0 0.0
  %1829 = vmatprep.subr.mxu0 0.0
  %1830 = vmatpush1.msra.mxu0 0.0
  %1831 = vmatprep.subr.mxu0 0.0
  %1832 = vmatpush1.msra.mxu0 0.0
  %1833 = vmatprep.subr.mxu0 0.0
  %1834 = vmatpush1.msra.mxu0 0.0
  %1835 = vmatprep.subr.mxu0 0.0
  %1836 = vmatpush1.msra.mxu0 0.0
  %1837 = vmatprep.subr.mxu0 0.0
  %1838 = vmatpush1.msra.mxu0 0.0
  %1839 = vmatprep.subr.mxu0 0.0
  %1840 = vmatpush1.msra.mxu0 0.0
  %1841 = vmatprep.subr.mxu0 0.0
  %1842 = vmatpush1.msra.mxu0 0.0
  %1843 = vmatprep.subr.mxu0 0.0
  %1844 = vmatpush1.msra.mxu0 0.0
  %1845 = vmatprep.subr.mxu0 0.0
  %1846 = vmatpush1.msra.mxu0 0.0
  %1847 = vmatprep.mubr.f32.mxu0 0.0
  %1848 = vmatmul.mubr.f32.gmra.mrb[0].mxu0 %v1777
  %v1849 = vpop.f32.mrb[0].mxu0
  %v1850 = vadd.f32 %v1776, %v1849
  %v1851 = vpop.f32.mrb[0].mxu0
  %1852 = vmatprep.mubr.f32.mxu0 0.0
  %1853 = vmatmul.mubr.f32.gmra.mrb[0].mxu0 %v1779
  %v1854 = vpop.f32.mrb[0].mxu0
  %v1855 = vadd.f32 %v1776, %v1854
  %v1856 = vpop.f32.mrb[0].mxu0
  %1857 = vmatprep.mubr.f32.mxu0 0.0
  %1858 = vmatmul.mubr.f32.gmra.mrb[0].mxu0 %v1781
  %v1859 = vpop.f32.mrb[0].mxu0
  %v1860 = vadd.f32 %v1776, %v1859
  %v1861 = vpop.f32.mrb[0].mxu0
  %1862 = vdwg.mxu0
  %v1863 = vxor.u32 %v1760, 2147483648
  %v1864 = vxor.u32 %v1765, 2147483648
  %v1865 = vxor.u32 %v1770, 2147483648
  %v1866 = vmul.f32 %v1863, 1.442695
  %v1867 = vpow.pop %v1866
  %v1868 = vmul.f32 %v1864, 1.442695
  %v1869 = vpow.pop %v1868
  %v1870 = vmul.f32 %v1865, 1.442695
  %v1871 = vpow.pop %v1870
  %v1872 = vadd.f32 %v1867, 1.0
  %v1873 = vadd.f32 %v1869, 1.0
  %v1874 = vadd.f32 %v1871, 1.0
  %v1875 = vrcp.pop %v1872
  %v1876 = vmul.f32 1.0, %v1875
  %v1877 = vrcp.pop %v1873
  %v1878 = vmul.f32 1.0, %v1877
  %v1879 = vrcp.pop %v1874
  %v1880 = vmul.f32 1.0, %v1879
  %v1881 = vsub.f32 %v1876, 1.0
  %v1882 = vsub.f32 %v1878, 1.0
  %v1883 = vsub.f32 %v1880, 1.0
  %v1884 = vmul.f32 %v1881, %v1850
  %v1885 = vmul.f32 %v1882, %v1855
  %v1886 = vmul.f32 %v1883, %v1860
  %1890 = vrot.lane.b32.xlu0 %v1884, 64
  %v1891 = vpop.permute.xlu0 %1890
  %1892 = vrot.lane.b32.xlu0 %v1885, 64
  %v1893 = vpop.permute.xlu0 %1892
  %1894 = vrot.lane.b32.xlu0 %v1886, 64
  %v1895 = vpop.permute.xlu0 %1894
  %v1899 = vadd.f32 %v1760, %v1891
  %v1900 = vadd.f32 %v1765, %v1893
  %v1901 = vadd.f32 %v1770, %v1895
  %v1902 = vtanh.pop %v1899
  %v1903 = vtanh.pop %v1900
  %v1904 = vtanh.pop %v1901
  %v1905 = vsub.f32 1.0, %v1876
  %v1906 = vsub.f32 1.0, %v1878
  %v1907 = vsub.f32 1.0, %v1880
  %1911 = vrot.lane.b32.xlu0 %v1902, 96
  %v1912 = vpop.permute.xlu0 %1911
  %1913 = vrot.lane.b32.xlu0 %v1903, 96
  %v1914 = vpop.permute.xlu0 %1913
  %1915 = vrot.lane.b32.xlu0 %v1904, 96
  %v1916 = vpop.permute.xlu0 %1915
  %v1920 = vmul.f32 %v1905, %v1912
  %v1921 = vmul.f32 %v1906, %v1914
  %v1922 = vmul.f32 %v1907, %v1916
  %v1923 = vmul.f32 %v1876, %v1668
  %v1924 = vmul.f32 %v1878, %v1670
  %v1925 = vmul.f32 %v1880, %v1672
  %v1926 = vadd.f32 %v1920, %v1923
  %v1927 = vadd.f32 %v1921, %v1924
  %v1928 = vadd.f32 %v1922, %v1925
  %1932 = vrot.lane.b32.xlu0 %v1926, 96
  %v1933 = vpop.permute.xlu0 %1932
  %1934 = vrot.lane.b32.xlu0 %v1927, 96
  %v1935 = vpop.permute.xlu0 %1934
  %1936 = vrot.lane.b32.xlu0 %v1928, 96
  %v1937 = vpop.permute.xlu0 %1936
  %v1941 = vsel %vm112, %v1933, 0.0
  %1942 = vadd.xlane.f32.xlu0 %v1941
  %v1943 = vpop.xlane.xlu0 %1942
  %v1944 = vsel %vm112, %v1935, 0.0
  %1945 = vadd.xlane.f32.xlu0 %v1944
  %v1946 = vpop.xlane.xlu0 %1945
  %v1947 = vsel %vm1061, %v1937, 0.0
  %1948 = vadd.xlane.f32.xlu0 %v1947
  %v1949 = vpop.xlane.xlu0 %1948
  %v1950 = vmul.f32 %v1943, %v209
  %v1951 = vmul.f32 %v1946, %v209
  %v1952 = vmul.f32 %v1949, %v209
  %v1953 = vsub.f32 %v1926, %v1950
  %v1954 = vsub.f32 %v1927, %v1951
  %v1955 = vsub.f32 %v1928, %v1952
  %v1956 = vmul.f32 %v1953, %v1953
  %v1957 = vmul.f32 %v1954, %v1954
  %v1958 = vmul.f32 %v1955, %v1955
  %1962 = vrot.lane.b32.xlu0 %v1956, 96
  %v1963 = vpop.permute.xlu0 %1962
  %1964 = vrot.lane.b32.xlu0 %v1957, 96
  %v1965 = vpop.permute.xlu0 %1964
  %1966 = vrot.lane.b32.xlu0 %v1958, 96
  %v1967 = vpop.permute.xlu0 %1966
  %v1971 = vsel %vm112, %v1963, 0.0
  %1972 = vadd.xlane.f32.xlu0 %v1971
  %v1973 = vpop.xlane.xlu0 %1972
  %v1974 = vsel %vm112, %v1965, 0.0
  %1975 = vadd.xlane.f32.xlu0 %v1974
  %v1976 = vpop.xlane.xlu0 %1975
  %v1977 = vsel %vm1061, %v1967, 0.0
  %1978 = vadd.xlane.f32.xlu0 %v1977
  %v1979 = vpop.xlane.xlu0 %1978
  %v1980 = vmul.f32 %v1973, %v209
  %v1981 = vmul.f32 %v1976, %v209
  %v1982 = vmul.f32 %v1979, %v209
  %v1983 = vadd.f32 %v1980, 1e-05
  %v1984 = vadd.f32 %v1981, 1e-05
  %v1985 = vadd.f32 %v1982, 1e-05
  %v1986 = vrsqrt.pop %v1983
  %v1987 = vrsqrt.pop %v1984
  %v1988 = vrsqrt.pop %v1985
  %v1989 = vmul.f32 %v1953, %v1986
  %v1990 = vmul.f32 %v1954, %v1987
  %v1991 = vmul.f32 %v1955, %v1988
  %v1992 = vlaneseq
  %v1993 = vshrl.u32 %v1992, 7
  %v1994 = vsub.s32 0, %v1993
  %v1995 = vrot.slane %v72, %v1994
  %1997 = vrot.lane.b32.xlu0 %v1995, 32
  %v1998 = vpop.permute.xlu0 %1997
  %v2000 = vmul.f32 %v1989, %v1998
  %v2001 = vmul.f32 %v1990, %v1998
  %v2002 = vmul.f32 %v1991, %v1998
  %v2003 = vlaneseq
  %v2004 = vshrl.u32 %v2003, 7
  %v2005 = vsub.s32 0, %v2004
  %v2006 = vrot.slane %v73, %v2005
  %2008 = vrot.lane.b32.xlu0 %v2006, 32
  %v2009 = vpop.permute.xlu0 %2008
  %v2011 = vadd.f32 %v2000, %v2009
  %v2012 = vadd.f32 %v2001, %v2009
  %v2013 = vadd.f32 %v2002, %v2009
  %v2014 = vlaneseq
  %v2015 = vshrl.u32 %v2014, 7
  %v2016 = vsub.s32 0, %v2015
  %v2017 = vrot.slane %v74, %v2016
  %2021 = vrot.lane.b32.xlu0 %v2011, 96
  %v2022 = vpop.permute.xlu0 %2021
  %2023 = vrot.lane.b32.xlu0 %v2012, 96
  %v2024 = vpop.permute.xlu0 %2023
  %2025 = vrot.lane.b32.xlu0 %v2013, 96
  %v2026 = vpop.permute.xlu0 %2025
  %v2027 = vsel %vm112, %v2022, 0
  %v2029 = vsel %vm112, %v2024, 0
  %v2031 = vsel %vm112, %v2026, 0
  %2033 = vmatprep.subr.mxu0 0.0
  %2034 = vmatpush1.msra.mxu0 %v36
  %2035 = vmatprep.subr.mxu0 0.0
  %2036 = vmatpush1.msra.mxu0 %v37
  %2037 = vmatprep.subr.mxu0 0.0
  %2038 = vmatpush1.msra.mxu0 %v38
  %2039 = vmatprep.subr.mxu0 0.0
  %2040 = vmatpush1.msra.mxu0 %v39
  %2041 = vmatprep.subr.mxu0 0.0
  %2042 = vmatpush1.msra.mxu0 0.0
  %2043 = vmatprep.subr.mxu0 0.0
  %2044 = vmatpush1.msra.mxu0 0.0
  %2045 = vmatprep.subr.mxu0 0.0
  %2046 = vmatpush1.msra.mxu0 0.0
  %2047 = vmatprep.subr.mxu0 0.0
  %2048 = vmatpush1.msra.mxu0 0.0
  %2049 = vmatprep.subr.mxu0 0.0
  %2050 = vmatpush1.msra.mxu0 0.0
  %2051 = vmatprep.subr.mxu0 0.0
  %2052 = vmatpush1.msra.mxu0 0.0
  %2053 = vmatprep.subr.mxu0 0.0
  %2054 = vmatpush1.msra.mxu0 0.0
  %2055 = vmatprep.subr.mxu0 0.0
  %2056 = vmatpush1.msra.mxu0 0.0
  %2057 = vmatprep.subr.mxu0 0.0
  %2058 = vmatpush1.msra.mxu0 0.0
  %2059 = vmatprep.subr.mxu0 0.0
  %2060 = vmatpush1.msra.mxu0 0.0
  %2061 = vmatprep.subr.mxu0 0.0
  %2062 = vmatpush1.msra.mxu0 0.0
  %2063 = vmatprep.subr.mxu0 0.0
  %2064 = vmatpush1.msra.mxu0 0.0
  %2065 = vmatprep.subr.mxu0 0.0
  %2066 = vmatpush1.msra.mxu0 0.0
  %2067 = vmatprep.subr.mxu0 0.0
  %2068 = vmatpush1.msra.mxu0 0.0
  %2069 = vmatprep.subr.mxu0 0.0
  %2070 = vmatpush1.msra.mxu0 0.0
  %2071 = vmatprep.subr.mxu0 0.0
  %2072 = vmatpush1.msra.mxu0 0.0
  %2073 = vmatprep.subr.mxu0 0.0
  %2074 = vmatpush1.msra.mxu0 0.0
  %2075 = vmatprep.subr.mxu0 0.0
  %2076 = vmatpush1.msra.mxu0 0.0
  %2077 = vmatprep.subr.mxu0 0.0
  %2078 = vmatpush1.msra.mxu0 0.0
  %2079 = vmatprep.subr.mxu0 0.0
  %2080 = vmatpush1.msra.mxu0 0.0
  %2081 = vmatprep.subr.mxu0 0.0
  %2082 = vmatpush1.msra.mxu0 0.0
  %2083 = vmatprep.subr.mxu0 0.0
  %2084 = vmatpush1.msra.mxu0 0.0
  %2085 = vmatprep.subr.mxu0 0.0
  %2086 = vmatpush1.msra.mxu0 0.0
  %2087 = vmatprep.subr.mxu0 0.0
  %2088 = vmatpush1.msra.mxu0 0.0
  %2089 = vmatprep.subr.mxu0 0.0
  %2090 = vmatpush1.msra.mxu0 0.0
  %2091 = vmatprep.subr.mxu0 0.0
  %2092 = vmatpush1.msra.mxu0 0.0
  %2093 = vmatprep.subr.mxu0 0.0
  %2094 = vmatpush1.msra.mxu0 0.0
  %2095 = vmatprep.subr.mxu0 0.0
  %2096 = vmatpush1.msra.mxu0 0.0
  %2097 = vmatprep.mubr.f32.mxu0 0.0
  %2098 = vmatmul.mubr.f32.gmra.mrb[0].mxu0 %v2027
  %v2099 = vpop.f32.mrb[0].mxu0
  %v2100 = vadd.f32 %v2017, %v2099
  %v2101 = vpop.f32.mrb[0].mxu0
  %2102 = vmatprep.mubr.f32.mxu0 0.0
  %2103 = vmatmul.mubr.f32.gmra.mrb[0].mxu0 %v2029
  %v2104 = vpop.f32.mrb[0].mxu0
  %v2105 = vadd.f32 %v2017, %v2104
  %v2106 = vpop.f32.mrb[0].mxu0
  %2107 = vmatprep.mubr.f32.mxu0 0.0
  %2108 = vmatmul.mubr.f32.gmra.mrb[0].mxu0 %v2031
  %v2109 = vpop.f32.mrb[0].mxu0
  %v2110 = vadd.f32 %v2017, %v2109
  %v2111 = vpop.f32.mrb[0].mxu0
  %2112 = vdwg.mxu0
  %v2113 = vmax.f32 %v2100, 0.0
  %v2114 = vmax.f32 %v2105, 0.0
  %v2115 = vmax.f32 %v2110, 0.0
  %vm2116 = vcmask 392192
  %v2118 = vsel %vm2116, %v2113, 0
  %v2121 = vsel %vm2116, %v2114, 0
  %v2124 = vsel %vm2116, %v2115, 0
  %2126 = vmatprep.subr.mxu0 0.0
  %2127 = vmatpush1.msra.mxu0 %v40
  %2128 = vmatprep.subr.mxu0 0.0
  %2129 = vmatpush1.msra.mxu0 %v41
  %2130 = vmatprep.subr.mxu0 0.0
  %2131 = vmatpush1.msra.mxu0 %v42
  %2132 = vmatprep.subr.mxu0 0.0
  %2133 = vmatpush1.msra.mxu0 %v43
  %2134 = vmatprep.subr.mxu0 0.0
  %2135 = vmatpush1.msra.mxu0 %v44
  %2136 = vmatprep.subr.mxu0 0.0
  %2137 = vmatpush1.msra.mxu0 %v45
  %2138 = vmatprep.subr.mxu0 0.0
  %2139 = vmatpush1.msra.mxu0 0.0
  %2140 = vmatprep.subr.mxu0 0.0
  %2141 = vmatpush1.msra.mxu0 0.0
  %2142 = vmatprep.subr.mxu0 0.0
  %2143 = vmatpush1.msra.mxu0 0.0
  %2144 = vmatprep.subr.mxu0 0.0
  %2145 = vmatpush1.msra.mxu0 0.0
  %2146 = vmatprep.subr.mxu0 0.0
  %2147 = vmatpush1.msra.mxu0 0.0
  %2148 = vmatprep.subr.mxu0 0.0
  %2149 = vmatpush1.msra.mxu0 0.0
  %2150 = vmatprep.subr.mxu0 0.0
  %2151 = vmatpush1.msra.mxu0 0.0
  %2152 = vmatprep.subr.mxu0 0.0
  %2153 = vmatpush1.msra.mxu0 0.0
  %2154 = vmatprep.subr.mxu0 0.0
  %2155 = vmatpush1.msra.mxu0 0.0
  %2156 = vmatprep.subr.mxu0 0.0
  %2157 = vmatpush1.msra.mxu0 0.0
  %2158 = vmatprep.subr.mxu0 0.0
  %2159 = vmatpush1.msra.mxu0 0.0
  %2160 = vmatprep.subr.mxu0 0.0
  %2161 = vmatpush1.msra.mxu0 0.0
  %2162 = vmatprep.subr.mxu0 0.0
  %2163 = vmatpush1.msra.mxu0 0.0
  %2164 = vmatprep.subr.mxu0 0.0
  %2165 = vmatpush1.msra.mxu0 0.0
  %2166 = vmatprep.subr.mxu0 0.0
  %2167 = vmatpush1.msra.mxu0 0.0
  %2168 = vmatprep.subr.mxu0 0.0
  %2169 = vmatpush1.msra.mxu0 0.0
  %2170 = vmatprep.subr.mxu0 0.0
  %2171 = vmatpush1.msra.mxu0 0.0
  %2172 = vmatprep.subr.mxu0 0.0
  %2173 = vmatpush1.msra.mxu0 0.0
  %2174 = vmatprep.subr.mxu0 0.0
  %2175 = vmatpush1.msra.mxu0 0.0
  %2176 = vmatprep.subr.mxu0 0.0
  %2177 = vmatpush1.msra.mxu0 0.0
  %2178 = vmatprep.subr.mxu0 0.0
  %2179 = vmatpush1.msra.mxu0 0.0
  %2180 = vmatprep.subr.mxu0 0.0
  %2181 = vmatpush1.msra.mxu0 0.0
  %2182 = vmatprep.subr.mxu0 0.0
  %2183 = vmatpush1.msra.mxu0 0.0
  %2184 = vmatprep.subr.mxu0 0.0
  %2185 = vmatpush1.msra.mxu0 0.0
  %2186 = vmatprep.subr.mxu0 0.0
  %2187 = vmatpush1.msra.mxu0 0.0
  %2188 = vmatprep.subr.mxu0 0.0
  %2189 = vmatpush1.msra.mxu0 0.0
  %2190 = vmatprep.mubr.f32.mxu0 0.0
  %2191 = vmatmul.mubr.f32.gmra.mrb[0].mxu0 %v2118
  %v2192 = vpop.f32.mrb[0].mxu0
  %v2193 = vadd.f32 0.0, %v2192
  %v2194 = vpop.f32.mrb[0].mxu0
  %2195 = vmatprep.mubr.f32.mxu0 0.0
  %2196 = vmatmul.mubr.f32.gmra.mrb[0].mxu0 %v2121
  %v2197 = vpop.f32.mrb[0].mxu0
  %v2198 = vadd.f32 0.0, %v2197
  %v2199 = vpop.f32.mrb[0].mxu0
  %2200 = vmatprep.mubr.f32.mxu0 0.0
  %2201 = vmatmul.mubr.f32.gmra.mrb[0].mxu0 %v2124
  %v2202 = vpop.f32.mrb[0].mxu0
  %v2203 = vadd.f32 0.0, %v2202
  %v2204 = vpop.f32.mrb[0].mxu0
  %2205 = vdwg.mxu0
  %2209 = vrot.lane.b32.xlu0 %v2193, 32
  %v2210 = vpop.permute.xlu0 %2209
  %2211 = vrot.lane.b32.xlu0 %v2198, 32
  %v2212 = vpop.permute.xlu0 %2211
  %2213 = vrot.lane.b32.xlu0 %v2203, 32
  %v2214 = vpop.permute.xlu0 %2213
  %v2218 = vadd.f32 %v1926, %v2210
  %v2219 = vadd.f32 %v1927, %v2212
  %v2220 = vadd.f32 %v1928, %v2214
  %v2221 = vlaneseq
  %v2222 = vshrl.u32 %v2221, 7
  %v2223 = vsub.s32 0, %v2222
  %v2224 = vrot.slane %v75, %v2223
  %2226 = vrot.lane.b32.xlu0 %v2224, 32
  %v2227 = vpop.permute.xlu0 %2226
  %v2229 = vadd.f32 %v2218, %v2227
  %v2230 = vadd.f32 %v2219, %v2227
  %v2231 = vadd.f32 %v2220, %v2227
  %2235 = vrot.lane.b32.xlu0 %v2229, 96
  %v2236 = vpop.permute.xlu0 %2235
  %2237 = vrot.lane.b32.xlu0 %v2230, 96
  %v2238 = vpop.permute.xlu0 %2237
  %2239 = vrot.lane.b32.xlu0 %v2231, 96
  %v2240 = vpop.permute.xlu0 %2239
  %v2244 = vsel %vm112, %v2236, 0.0
  %2245 = vadd.xlane.f32.xlu0 %v2244
  %v2246 = vpop.xlane.xlu0 %2245
  %v2247 = vsel %vm112, %v2238, 0.0
  %2248 = vadd.xlane.f32.xlu0 %v2247
  %v2249 = vpop.xlane.xlu0 %2248
  %v2250 = vsel %vm1061, %v2240, 0.0
  %2251 = vadd.xlane.f32.xlu0 %v2250
  %v2252 = vpop.xlane.xlu0 %2251
  %v2253 = vmul.f32 %v2246, %v209
  %v2254 = vmul.f32 %v2249, %v209
  %v2255 = vmul.f32 %v2252, %v209
  %v2256 = vsub.f32 %v2229, %v2253
  %v2257 = vsub.f32 %v2230, %v2254
  %v2258 = vsub.f32 %v2231, %v2255
  %v2259 = vmul.f32 %v2256, %v2256
  %v2260 = vmul.f32 %v2257, %v2257
  %v2261 = vmul.f32 %v2258, %v2258
  %2265 = vrot.lane.b32.xlu0 %v2259, 96
  %v2266 = vpop.permute.xlu0 %2265
  %2267 = vrot.lane.b32.xlu0 %v2260, 96
  %v2268 = vpop.permute.xlu0 %2267
  %2269 = vrot.lane.b32.xlu0 %v2261, 96
  %v2270 = vpop.permute.xlu0 %2269
  %v2274 = vsel %vm112, %v2266, 0.0
  %2275 = vadd.xlane.f32.xlu0 %v2274
  %v2276 = vpop.xlane.xlu0 %2275
  %v2277 = vsel %vm112, %v2268, 0.0
  %2278 = vadd.xlane.f32.xlu0 %v2277
  %v2279 = vpop.xlane.xlu0 %2278
  %v2280 = vsel %vm1061, %v2270, 0.0
  %2281 = vadd.xlane.f32.xlu0 %v2280
  %v2282 = vpop.xlane.xlu0 %2281
  %v2283 = vmul.f32 %v2276, %v209
  %v2284 = vmul.f32 %v2279, %v209
  %v2285 = vmul.f32 %v2282, %v209
  %v2286 = vadd.f32 %v2283, 1e-05
  %v2287 = vadd.f32 %v2284, 1e-05
  %v2288 = vadd.f32 %v2285, 1e-05
  %v2289 = vrsqrt.pop %v2286
  %v2290 = vrsqrt.pop %v2287
  %v2291 = vrsqrt.pop %v2288
  %v2292 = vmul.f32 %v2256, %v2289
  %v2293 = vmul.f32 %v2257, %v2290
  %v2294 = vmul.f32 %v2258, %v2291
  %2296 = vrot.lane.b32.xlu0 %v1098, 32
  %v2297 = vpop.permute.xlu0 %2296
  %v2299 = vmul.f32 %v2292, %v2297
  %v2300 = vmul.f32 %v2293, %v2297
  %v2301 = vmul.f32 %v2294, %v2297
  %2303 = vrot.lane.b32.xlu0 %v1105, 32
  %v2304 = vpop.permute.xlu0 %2303
  %v2306 = vadd.f32 %v2299, %v2304
  %v2307 = vadd.f32 %v2300, %v2304
  %v2308 = vadd.f32 %v2301, %v2304
  %2312 = vrot.lane.b32.xlu0 %v2306, 96
  %v2313 = vpop.permute.xlu0 %2312
  %2314 = vrot.lane.b32.xlu0 %v2307, 96
  %v2315 = vpop.permute.xlu0 %2314
  %2316 = vrot.lane.b32.xlu0 %v2308, 96
  %v2317 = vpop.permute.xlu0 %2316
  %v2318 = vsel %vm112, %v2313, 0
  %v2320 = vsel %vm112, %v2315, 0
  %v2322 = vsel %vm112, %v2317, 0
  %2324 = vmatprep.subr.mxu0 0.0
  %2325 = vmatpush1.msra.mxu0 %v20
  %2326 = vmatprep.subr.mxu0 0.0
  %2327 = vmatpush1.msra.mxu0 %v21
  %2328 = vmatprep.subr.mxu0 0.0
  %2329 = vmatpush1.msra.mxu0 %v22
  %2330 = vmatprep.subr.mxu0 0.0
  %2331 = vmatpush1.msra.mxu0 %v23
  %2332 = vmatprep.subr.mxu0 0.0
  %2333 = vmatpush1.msra.mxu0 0.0
  %2334 = vmatprep.subr.mxu0 0.0
  %2335 = vmatpush1.msra.mxu0 0.0
  %2336 = vmatprep.subr.mxu0 0.0
  %2337 = vmatpush1.msra.mxu0 0.0
  %2338 = vmatprep.subr.mxu0 0.0
  %2339 = vmatpush1.msra.mxu0 0.0
  %2340 = vmatprep.subr.mxu0 0.0
  %2341 = vmatpush1.msra.mxu0 0.0
  %2342 = vmatprep.subr.mxu0 0.0
  %2343 = vmatpush1.msra.mxu0 0.0
  %2344 = vmatprep.subr.mxu0 0.0
  %2345 = vmatpush1.msra.mxu0 0.0
  %2346 = vmatprep.subr.mxu0 0.0
  %2347 = vmatpush1.msra.mxu0 0.0
  %2348 = vmatprep.subr.mxu0 0.0
  %2349 = vmatpush1.msra.mxu0 0.0
  %2350 = vmatprep.subr.mxu0 0.0
  %2351 = vmatpush1.msra.mxu0 0.0
  %2352 = vmatprep.subr.mxu0 0.0
  %2353 = vmatpush1.msra.mxu0 0.0
  %2354 = vmatprep.subr.mxu0 0.0
  %2355 = vmatpush1.msra.mxu0 0.0
  %2356 = vmatprep.subr.mxu0 0.0
  %2357 = vmatpush1.msra.mxu0 0.0
  %2358 = vmatprep.subr.mxu0 0.0
  %2359 = vmatpush1.msra.mxu0 0.0
  %2360 = vmatprep.subr.mxu0 0.0
  %2361 = vmatpush1.msra.mxu0 0.0
  %2362 = vmatprep.subr.mxu0 0.0
  %2363 = vmatpush1.msra.mxu0 0.0
  %2364 = vmatprep.subr.mxu0 0.0
  %2365 = vmatpush1.msra.mxu0 0.0
  %2366 = vmatprep.subr.mxu0 0.0
  %2367 = vmatpush1.msra.mxu0 0.0
  %2368 = vmatprep.subr.mxu0 0.0
  %2369 = vmatpush1.msra.mxu0 0.0
  %2370 = vmatprep.subr.mxu0 0.0
  %2371 = vmatpush1.msra.mxu0 0.0
  %2372 = vmatprep.subr.mxu0 0.0
  %2373 = vmatpush1.msra.mxu0 0.0
  %2374 = vmatprep.subr.mxu0 0.0
  %2375 = vmatpush1.msra.mxu0 0.0
  %2376 = vmatprep.subr.mxu0 0.0
  %2377 = vmatpush1.msra.mxu0 0.0
  %2378 = vmatprep.subr.mxu0 0.0
  %2379 = vmatpush1.msra.mxu0 0.0
  %2380 = vmatprep.subr.mxu0 0.0
  %2381 = vmatpush1.msra.mxu0 0.0
  %2382 = vmatprep.subr.mxu0 0.0
  %2383 = vmatpush1.msra.mxu0 0.0
  %2384 = vmatprep.subr.mxu0 0.0
  %2385 = vmatpush1.msra.mxu0 0.0
  %2386 = vmatprep.subr.mxu0 0.0
  %2387 = vmatpush1.msra.mxu0 0.0
  %2388 = vmatprep.mubr.f32.mxu0 0.0
  %2389 = vmatmul.mubr.f32.gmra.mrb[0].mxu0 %v2318
  %v2390 = vpop.f32.mrb[0].mxu0
  %v2391 = vadd.f32 %v1112, %v2390
  %v2392 = vpop.f32.mrb[0].mxu0
  %2393 = vmatprep.mubr.f32.mxu0 0.0
  %2394 = vmatmul.mubr.f32.gmra.mrb[0].mxu0 %v2320
  %v2395 = vpop.f32.mrb[0].mxu0
  %v2396 = vadd.f32 %v1112, %v2395
  %v2397 = vpop.f32.mrb[0].mxu0
  %2398 = vmatprep.mubr.f32.mxu0 0.0
  %2399 = vmatmul.mubr.f32.gmra.mrb[0].mxu0 %v2322
  %v2400 = vpop.f32.mrb[0].mxu0
  %v2401 = vadd.f32 %v1112, %v2400
  %v2402 = vpop.f32.mrb[0].mxu0
  %2403 = vdwg.mxu0
  %v2405 = vsel %vm112, %v2391, 0
  %v2408 = vsel %vm112, %v2396, 0
  %v2411 = vsel %vm112, %v2401, 0
  %2413 = vmatprep.subr.mxu0 0.0
  %2414 = vmatpush1.xpose.msra.mxu0 %v1212
  %2415 = vmatprep.subr.mxu0 0.0
  %2416 = vmatpush1.xpose.msra.mxu0 %v1215
  %2417 = vmatprep.subr.mxu0 0.0
  %2418 = vmatpush1.xpose.msra.mxu0 %v1218
  %2419 = vmatprep.subr.mxu0 0.0
  %2420 = vmatpush1.xpose.msra.mxu0 %v1221
  %2421 = vmatprep.subr.mxu0 0.0
  %2422 = vmatpush1.xpose.msra.mxu0 %v1224
  %2423 = vmatprep.subr.mxu0 0.0
  %2424 = vmatpush1.xpose.msra.mxu0 %v1227
  %2425 = vmatprep.subr.mxu0 0.0
  %2426 = vmatpush1.xpose.msra.mxu0 %v1230
  %2427 = vmatprep.subr.mxu0 0.0
  %2428 = vmatpush1.xpose.msra.mxu0 %v1233
  %2429 = vmatprep.subr.mxu0 0.0
  %2430 = vmatpush1.xpose.msra.mxu0 %v1236
  %2431 = vmatprep.subr.mxu0 0.0
  %2432 = vmatpush1.xpose.msra.mxu0 %v1239
  %2433 = vmatprep.subr.mxu0 0.0
  %2434 = vmatpush1.xpose.msra.mxu0 %v1242
  %2435 = vmatprep.subr.mxu0 0.0
  %2436 = vmatpush1.xpose.msra.mxu0 %v1245
  %2437 = vmatprep.subr.mxu0 0.0
  %2438 = vmatpush1.xpose.msra.mxu0 %v1248
  %2439 = vmatprep.subr.mxu0 0.0
  %2440 = vmatpush1.xpose.msra.mxu0 %v1251
  %2441 = vmatprep.subr.mxu0 0.0
  %2442 = vmatpush1.xpose.msra.mxu0 %v1254
  %2443 = vmatprep.subr.mxu0 0.0
  %2444 = vmatpush1.xpose.msra.mxu0 %v1257
  %2445 = vmatprep.subr.mxu0 0.0
  %2446 = vmatpush1.xpose.msra.mxu0 %v1260
  %2447 = vmatprep.subr.mxu0 0.0
  %2448 = vmatpush1.xpose.msra.mxu0 %v1263
  %2449 = vmatprep.subr.mxu0 0.0
  %2450 = vmatpush1.xpose.msra.mxu0 %v1266
  %2451 = vmatprep.subr.mxu0 0.0
  %2452 = vmatpush1.xpose.msra.mxu0 %v1269
  %2453 = vmatprep.subr.mxu0 0.0
  %2454 = vmatpush1.xpose.msra.mxu0 %v1272
  %2455 = vmatprep.subr.mxu0 0.0
  %2456 = vmatpush1.xpose.msra.mxu0 %v1275
  %2457 = vmatprep.subr.mxu0 0.0
  %2458 = vmatpush1.xpose.msra.mxu0 %v1278
  %2459 = vmatprep.subr.mxu0 0.0
  %2460 = vmatpush1.xpose.msra.mxu0 %v1281
  %2461 = vmatprep.subr.mxu0 0.0
  %2462 = vmatpush1.xpose.msra.mxu0 %v1284
  %2463 = vmatprep.subr.mxu0 0.0
  %2464 = vmatpush1.xpose.msra.mxu0 %v1287
  %2465 = vmatprep.subr.mxu0 0.0
  %2466 = vmatpush1.xpose.msra.mxu0 %v1290
  %2467 = vmatprep.subr.mxu0 0.0
  %2468 = vmatpush1.xpose.msra.mxu0 %v1293
  %2469 = vmatprep.subr.mxu0 0.0
  %2470 = vmatpush1.xpose.msra.mxu0 %v1296
  %2471 = vmatprep.subr.mxu0 0.0
  %2472 = vmatpush1.xpose.msra.mxu0 %v1299
  %2473 = vmatprep.subr.mxu0 0.0
  %2474 = vmatpush1.xpose.msra.mxu0 %v1302
  %2475 = vmatprep.subr.mxu0 0.0
  %2476 = vmatpush1.xpose.msra.mxu0 %v1305
  %2477 = vmatprep.mubr.f32.mxu0 0.0
  %2478 = vmatmul.mubr.f32.gmra.mrb[0].mxu0 %v2405
  %v2479 = vpop.f32.mrb[0].mxu0
  %v2480 = vadd.f32 0.0, %v2479
  %v2481 = vpop.f32.mrb[0].mxu0
  %v2482 = vadd.f32 0.0, %v2481
  %2483 = vmatprep.mubr.f32.mxu0 0.0
  %2484 = vmatmul.mubr.f32.gmra.mrb[0].mxu0 %v2408
  %v2485 = vpop.f32.mrb[0].mxu0
  %v2486 = vadd.f32 0.0, %v2485
  %v2487 = vpop.f32.mrb[0].mxu0
  %v2488 = vadd.f32 0.0, %v2487
  %2489 = vmatprep.mubr.f32.mxu0 0.0
  %2490 = vmatmul.mubr.f32.gmra.mrb[0].mxu0 %v2411
  %v2491 = vpop.f32.mrb[0].mxu0
  %v2492 = vadd.f32 0.0, %v2491
  %v2493 = vpop.f32.mrb[0].mxu0
  %v2494 = vadd.f32 0.0, %v2493
  %2495 = vdwg.mxu0
  %v2496 = vmul.f32 %v2480, 0.17677669
  %v2497 = vmul.f32 %v2482, 0.17677669
  %v2498 = vmul.f32 %v2486, 0.17677669
  %v2499 = vmul.f32 %v2488, 0.17677669
  %v2500 = vmul.f32 %v2492, 0.17677669
  %v2501 = vmul.f32 %v2494, 0.17677669
  %v2502 = vsel %vm1046, %v2496, -1e+30
  %v2503 = vsel %vm1047, %v2497, -1e+30
  %v2504 = vsel %vm1048, %v2498, -1e+30
  %v2505 = vsel %vm1049, %v2499, -1e+30
  %v2506 = vsel %vm1050, %v2500, -1e+30
  %v2507 = vsel %vm1051, %v2501, -1e+30
  %v2508 = vsel %vm1402, %v2506, -inf
  %v2509 = vmax.f32 %v2502, %v2508
  %v2510 = vmax.f32 %v2509, %v2504
  %v2511 = vrot.slane %v2510, 4
  %v2512 = vmax.f32 %v2510, %v2511
  %v2513 = vrot.slane %v2512, 2
  %v2514 = vmax.f32 %v2512, %v2513
  %v2515 = vrot.slane %v2514, 1
  %v2516 = vmax.f32 %v2514, %v2515
  %v2517 = vsel %vm1402, %v2507, -inf
  %v2518 = vmax.f32 %v2503, %v2517
  %v2519 = vmax.f32 %v2518, %v2505
  %v2520 = vrot.slane %v2519, 4
  %v2521 = vmax.f32 %v2519, %v2520
  %v2522 = vrot.slane %v2521, 2
  %v2523 = vmax.f32 %v2521, %v2522
  %v2524 = vrot.slane %v2523, 1
  %v2525 = vmax.f32 %v2523, %v2524
  %v2526 = vsub.f32 %v2502, %v2516
  %v2527 = vsub.f32 %v2503, %v2525
  %v2528 = vsub.f32 %v2504, %v2516
  %v2529 = vsub.f32 %v2505, %v2525
  %v2530 = vsub.f32 %v2506, %v2516
  %v2531 = vsub.f32 %v2507, %v2525
  %v2532 = vmul.f32 %v2526, 1.442695
  %v2533 = vpow.pop %v2532
  %v2534 = vmul.f32 %v2527, 1.442695
  %v2535 = vpow.pop %v2534
  %v2536 = vmul.f32 %v2528, 1.442695
  %v2537 = vpow.pop %v2536
  %v2538 = vmul.f32 %v2529, 1.442695
  %v2539 = vpow.pop %v2538
  %v2540 = vmul.f32 %v2530, 1.442695
  %v2541 = vpow.pop %v2540
  %v2542 = vmul.f32 %v2531, 1.442695
  %v2543 = vpow.pop %v2542
  %v2544 = vadd.f32 %v2533, %v2537
  %v2545 = vsel %vm1402, %v2541, 0.0
  %v2546 = vadd.f32 %v2544, %v2545
  %v2547 = vrot.slane %v2546, 4
  %v2548 = vadd.f32 %v2546, %v2547
  %v2549 = vrot.slane %v2548, 2
  %v2550 = vadd.f32 %v2548, %v2549
  %v2551 = vrot.slane %v2550, 1
  %v2552 = vadd.f32 %v2550, %v2551
  %v2553 = vadd.f32 %v2535, %v2539
  %v2554 = vsel %vm1402, %v2543, 0.0
  %v2555 = vadd.f32 %v2553, %v2554
  %v2556 = vrot.slane %v2555, 4
  %v2557 = vadd.f32 %v2555, %v2556
  %v2558 = vrot.slane %v2557, 2
  %v2559 = vadd.f32 %v2557, %v2558
  %v2560 = vrot.slane %v2559, 1
  %v2561 = vadd.f32 %v2559, %v2560
  %v2562 = vrcp.pop %v2552
  %v2563 = vmul.f32 %v2533, %v2562
  %v2564 = vrcp.pop %v2561
  %v2565 = vmul.f32 %v2535, %v2564
  %v2566 = vmul.f32 %v2537, %v2562
  %v2567 = vmul.f32 %v2539, %v2564
  %v2568 = vmul.f32 %v2541, %v2562
  %v2569 = vmul.f32 %v2543, %v2564
  %v2570 = vadd.f32 %v2563, %v2565
  %2571 = vadd.xlane.f32.xlu0 %v2570
  %v2572 = vpop.xlane.xlu0 %2571
  %v2573 = vadd.f32 %v2566, %v2567
  %2574 = vadd.xlane.f32.xlu0 %v2573
  %v2575 = vpop.xlane.xlu0 %2574
  %v2576 = vsel %vm1402, %v2568, 0.0
  %v2577 = vsel %vm1402, %v2569, 0.0
  %v2578 = vadd.f32 %v2576, %v2577
  %2579 = vadd.xlane.f32.xlu0 %v2578
  %v2580 = vpop.xlane.xlu0 %2579
  %v2581 = vadd.f32 %v2572, 1e-08
  %v2582 = vadd.f32 %v2575, 1e-08
  %v2583 = vadd.f32 %v2580, 1e-08
  %v2584 = vrcp.pop %v2581
  %v2585 = vmul.f32 %v2563, %v2584
  %v2586 = vmul.f32 %v2565, %v2584
  %v2587 = vrcp.pop %v2582
  %v2588 = vmul.f32 %v2566, %v2587
  %v2589 = vmul.f32 %v2567, %v2587
  %v2590 = vrcp.pop %v2583
  %v2591 = vmul.f32 %v2568, %v2590
  %v2592 = vmul.f32 %v2569, %v2590
  %2593 = vmatprep.subr.mxu0 0.0
  %2594 = vmatpush1.msra.mxu0 %v1489
  %2595 = vmatprep.subr.mxu0 0.0
  %2596 = vmatpush1.msra.mxu0 %v1491
  %2597 = vmatprep.subr.mxu0 0.0
  %2598 = vmatpush1.msra.mxu0 %v1493
  %2599 = vmatprep.subr.mxu0 0.0
  %2600 = vmatpush1.msra.mxu0 %v1495
  %2601 = vmatprep.subr.mxu0 0.0
  %2602 = vmatpush1.msra.mxu0 %v1497
  %2603 = vmatprep.subr.mxu0 0.0
  %2604 = vmatpush1.msra.mxu0 %v1499
  %2605 = vmatprep.subr.mxu0 0.0
  %2606 = vmatpush1.msra.mxu0 %v1501
  %2607 = vmatprep.subr.mxu0 0.0
  %2608 = vmatpush1.msra.mxu0 %v1503
  %2609 = vmatprep.subr.mxu0 0.0
  %2610 = vmatpush1.msra.mxu0 %v1505
  %2611 = vmatprep.subr.mxu0 0.0
  %2612 = vmatpush1.msra.mxu0 %v1507
  %2613 = vmatprep.subr.mxu0 0.0
  %2614 = vmatpush1.msra.mxu0 %v1509
  %2615 = vmatprep.subr.mxu0 0.0
  %2616 = vmatpush1.msra.mxu0 %v1511
  %2617 = vmatprep.subr.mxu0 0.0
  %2618 = vmatpush1.msra.mxu0 %v1513
  %2619 = vmatprep.subr.mxu0 0.0
  %2620 = vmatpush1.msra.mxu0 %v1515
  %2621 = vmatprep.subr.mxu0 0.0
  %2622 = vmatpush1.msra.mxu0 %v1517
  %2623 = vmatprep.subr.mxu0 0.0
  %2624 = vmatpush1.msra.mxu0 %v1519
  %2625 = vmatprep.subr.mxu0 0.0
  %2626 = vmatpush1.msra.mxu0 %v1521
  %2627 = vmatprep.subr.mxu0 0.0
  %2628 = vmatpush1.msra.mxu0 %v1523
  %2629 = vmatprep.subr.mxu0 0.0
  %2630 = vmatpush1.msra.mxu0 %v1525
  %2631 = vmatprep.subr.mxu0 0.0
  %2632 = vmatpush1.msra.mxu0 %v1527
  %2633 = vmatprep.subr.mxu0 0.0
  %2634 = vmatpush1.msra.mxu0 %v1529
  %2635 = vmatprep.subr.mxu0 0.0
  %2636 = vmatpush1.msra.mxu0 %v1531
  %2637 = vmatprep.subr.mxu0 0.0
  %2638 = vmatpush1.msra.mxu0 %v1533
  %2639 = vmatprep.subr.mxu0 0.0
  %2640 = vmatpush1.msra.mxu0 %v1535
  %2641 = vmatprep.subr.mxu0 0.0
  %2642 = vmatpush1.msra.mxu0 %v1537
  %2643 = vmatprep.subr.mxu0 0.0
  %2644 = vmatpush1.msra.mxu0 %v1539
  %2645 = vmatprep.subr.mxu0 0.0
  %2646 = vmatpush1.msra.mxu0 %v1541
  %2647 = vmatprep.subr.mxu0 0.0
  %2648 = vmatpush1.msra.mxu0 %v1543
  %2649 = vmatprep.subr.mxu0 0.0
  %2650 = vmatpush1.msra.mxu0 %v1545
  %2651 = vmatprep.subr.mxu0 0.0
  %2652 = vmatpush1.msra.mxu0 %v1547
  %2653 = vmatprep.subr.mxu0 0.0
  %2654 = vmatpush1.msra.mxu0 %v1549
  %2655 = vmatprep.subr.mxu0 0.0
  %2656 = vmatpush1.msra.mxu0 %v1551
  %2657 = vmatprep.mubr.f32.mxu0 %v2586
  %2658 = vmatmul.mubr.f32.gmra.mrb[0].mxu0 %v2585
  %v2659 = vpop.f32.mrb[0].mxu0
  %v2660 = vadd.f32 0.0, %v2659
  %v2661 = vpop.f32.mrb[0].mxu0
  %2662 = vmatprep.mubr.f32.mxu0 %v2589
  %2663 = vmatmul.mubr.f32.gmra.mrb[0].mxu0 %v2588
  %v2664 = vpop.f32.mrb[0].mxu0
  %v2665 = vadd.f32 0.0, %v2664
  %v2666 = vpop.f32.mrb[0].mxu0
  %2667 = vmatprep.mubr.f32.mxu0 %v2592
  %2668 = vmatmul.mubr.f32.gmra.mrb[0].mxu0 %v2591
  %v2669 = vpop.f32.mrb[0].mxu0
  %v2670 = vadd.f32 0.0, %v2669
  %v2671 = vpop.f32.mrb[0].mxu0
  %2672 = vdwg.mxu0
  %v2673 = vsel %vm112, %v2660, %v2229
  %v2674 = vsel %vm112, %v2665, %v2230
  %v2675 = vsel %vm112, %v2670, %v2231
  %v2677 = vsel %vm1683, %v2673, 0
  %v2680 = vsel %vm1683, %v2674, 0
  %v2683 = vsel %vm1683, %v2675, 0
  %2685 = vmatprep.subr.mxu0 0.0
  %2686 = vmatpush1.msra.mxu0 %v24
  %2687 = vmatprep.subr.mxu0 0.0
  %2688 = vmatpush1.msra.mxu0 %v25
  %2689 = vmatprep.subr.mxu0 0.0
  %2690 = vmatpush1.msra.mxu0 %v26
  %2691 = vmatprep.subr.mxu0 0.0
  %2692 = vmatpush1.msra.mxu0 %v27
  %2693 = vmatprep.subr.mxu0 0.0
  %2694 = vmatpush1.msra.mxu0 %v28
  %2695 = vmatprep.subr.mxu0 0.0
  %2696 = vmatpush1.msra.mxu0 %v29
  %2697 = vmatprep.subr.mxu0 0.0
  %2698 = vmatpush1.msra.mxu0 %v30
  %2699 = vmatprep.subr.mxu0 0.0
  %2700 = vmatpush1.msra.mxu0 %v31
  %2701 = vmatprep.subr.mxu0 0.0
  %2702 = vmatpush1.msra.mxu0 0.0
  %2703 = vmatprep.subr.mxu0 0.0
  %2704 = vmatpush1.msra.mxu0 0.0
  %2705 = vmatprep.subr.mxu0 0.0
  %2706 = vmatpush1.msra.mxu0 0.0
  %2707 = vmatprep.subr.mxu0 0.0
  %2708 = vmatpush1.msra.mxu0 0.0
  %2709 = vmatprep.subr.mxu0 0.0
  %2710 = vmatpush1.msra.mxu0 0.0
  %2711 = vmatprep.subr.mxu0 0.0
  %2712 = vmatpush1.msra.mxu0 0.0
  %2713 = vmatprep.subr.mxu0 0.0
  %2714 = vmatpush1.msra.mxu0 0.0
  %2715 = vmatprep.subr.mxu0 0.0
  %2716 = vmatpush1.msra.mxu0 0.0
  %2717 = vmatprep.subr.mxu0 0.0
  %2718 = vmatpush1.msra.mxu0 0.0
  %2719 = vmatprep.subr.mxu0 0.0
  %2720 = vmatpush1.msra.mxu0 0.0
  %2721 = vmatprep.subr.mxu0 0.0
  %2722 = vmatpush1.msra.mxu0 0.0
  %2723 = vmatprep.subr.mxu0 0.0
  %2724 = vmatpush1.msra.mxu0 0.0
  %2725 = vmatprep.subr.mxu0 0.0
  %2726 = vmatpush1.msra.mxu0 0.0
  %2727 = vmatprep.subr.mxu0 0.0
  %2728 = vmatpush1.msra.mxu0 0.0
  %2729 = vmatprep.subr.mxu0 0.0
  %2730 = vmatpush1.msra.mxu0 0.0
  %2731 = vmatprep.subr.mxu0 0.0
  %2732 = vmatpush1.msra.mxu0 0.0
  %2733 = vmatprep.subr.mxu0 0.0
  %2734 = vmatpush1.msra.mxu0 0.0
  %2735 = vmatprep.subr.mxu0 0.0
  %2736 = vmatpush1.msra.mxu0 0.0
  %2737 = vmatprep.subr.mxu0 0.0
  %2738 = vmatpush1.msra.mxu0 0.0
  %2739 = vmatprep.subr.mxu0 0.0
  %2740 = vmatpush1.msra.mxu0 0.0
  %2741 = vmatprep.subr.mxu0 0.0
  %2742 = vmatpush1.msra.mxu0 0.0
  %2743 = vmatprep.subr.mxu0 0.0
  %2744 = vmatpush1.msra.mxu0 0.0
  %2745 = vmatprep.subr.mxu0 0.0
  %2746 = vmatpush1.msra.mxu0 0.0
  %2747 = vmatprep.subr.mxu0 0.0
  %2748 = vmatpush1.msra.mxu0 0.0
  %2749 = vmatprep.mubr.f32.mxu0 0.0
  %2750 = vmatmul.mubr.f32.gmra.mrb[0].mxu0 %v2677
  %v2751 = vpop.f32.mrb[0].mxu0
  %v2752 = vadd.f32 %v1682, %v2751
  %v2753 = vpop.f32.mrb[0].mxu0
  %2754 = vmatprep.mubr.f32.mxu0 0.0
  %2755 = vmatmul.mubr.f32.gmra.mrb[0].mxu0 %v2680
  %v2756 = vpop.f32.mrb[0].mxu0
  %v2757 = vadd.f32 %v1682, %v2756
  %v2758 = vpop.f32.mrb[0].mxu0
  %2759 = vmatprep.mubr.f32.mxu0 0.0
  %2760 = vmatmul.mubr.f32.gmra.mrb[0].mxu0 %v2683
  %v2761 = vpop.f32.mrb[0].mxu0
  %v2762 = vadd.f32 %v1682, %v2761
  %v2763 = vpop.f32.mrb[0].mxu0
  %2764 = vdwg.mxu0
  %v2765 = vsel %vm112, %v2236, 0
  %v2767 = vsel %vm112, %v2238, 0
  %v2769 = vsel %vm112, %v2240, 0
  %2771 = vmatprep.subr.mxu0 0.0
  %2772 = vmatpush1.msra.mxu0 %v32
  %2773 = vmatprep.subr.mxu0 0.0
  %2774 = vmatpush1.msra.mxu0 %v33
  %2775 = vmatprep.subr.mxu0 0.0
  %2776 = vmatpush1.msra.mxu0 %v34
  %2777 = vmatprep.subr.mxu0 0.0
  %2778 = vmatpush1.msra.mxu0 %v35
  %2779 = vmatprep.subr.mxu0 0.0
  %2780 = vmatpush1.msra.mxu0 0.0
  %2781 = vmatprep.subr.mxu0 0.0
  %2782 = vmatpush1.msra.mxu0 0.0
  %2783 = vmatprep.subr.mxu0 0.0
  %2784 = vmatpush1.msra.mxu0 0.0
  %2785 = vmatprep.subr.mxu0 0.0
  %2786 = vmatpush1.msra.mxu0 0.0
  %2787 = vmatprep.subr.mxu0 0.0
  %2788 = vmatpush1.msra.mxu0 0.0
  %2789 = vmatprep.subr.mxu0 0.0
  %2790 = vmatpush1.msra.mxu0 0.0
  %2791 = vmatprep.subr.mxu0 0.0
  %2792 = vmatpush1.msra.mxu0 0.0
  %2793 = vmatprep.subr.mxu0 0.0
  %2794 = vmatpush1.msra.mxu0 0.0
  %2795 = vmatprep.subr.mxu0 0.0
  %2796 = vmatpush1.msra.mxu0 0.0
  %2797 = vmatprep.subr.mxu0 0.0
  %2798 = vmatpush1.msra.mxu0 0.0
  %2799 = vmatprep.subr.mxu0 0.0
  %2800 = vmatpush1.msra.mxu0 0.0
  %2801 = vmatprep.subr.mxu0 0.0
  %2802 = vmatpush1.msra.mxu0 0.0
  %2803 = vmatprep.subr.mxu0 0.0
  %2804 = vmatpush1.msra.mxu0 0.0
  %2805 = vmatprep.subr.mxu0 0.0
  %2806 = vmatpush1.msra.mxu0 0.0
  %2807 = vmatprep.subr.mxu0 0.0
  %2808 = vmatpush1.msra.mxu0 0.0
  %2809 = vmatprep.subr.mxu0 0.0
  %2810 = vmatpush1.msra.mxu0 0.0
  %2811 = vmatprep.subr.mxu0 0.0
  %2812 = vmatpush1.msra.mxu0 0.0
  %2813 = vmatprep.subr.mxu0 0.0
  %2814 = vmatpush1.msra.mxu0 0.0
  %2815 = vmatprep.subr.mxu0 0.0
  %2816 = vmatpush1.msra.mxu0 0.0
  %2817 = vmatprep.subr.mxu0 0.0
  %2818 = vmatpush1.msra.mxu0 0.0
  %2819 = vmatprep.subr.mxu0 0.0
  %2820 = vmatpush1.msra.mxu0 0.0
  %2821 = vmatprep.subr.mxu0 0.0
  %2822 = vmatpush1.msra.mxu0 0.0
  %2823 = vmatprep.subr.mxu0 0.0
  %2824 = vmatpush1.msra.mxu0 0.0
  %2825 = vmatprep.subr.mxu0 0.0
  %2826 = vmatpush1.msra.mxu0 0.0
  %2827 = vmatprep.subr.mxu0 0.0
  %2828 = vmatpush1.msra.mxu0 0.0
  %2829 = vmatprep.subr.mxu0 0.0
  %2830 = vmatpush1.msra.mxu0 0.0
  %2831 = vmatprep.subr.mxu0 0.0
  %2832 = vmatpush1.msra.mxu0 0.0
  %2833 = vmatprep.subr.mxu0 0.0
  %2834 = vmatpush1.msra.mxu0 0.0
  %2835 = vmatprep.mubr.f32.mxu0 0.0
  %2836 = vmatmul.mubr.f32.gmra.mrb[0].mxu0 %v2765
  %v2837 = vpop.f32.mrb[0].mxu0
  %v2838 = vadd.f32 %v1776, %v2837
  %v2839 = vpop.f32.mrb[0].mxu0
  %2840 = vmatprep.mubr.f32.mxu0 0.0
  %2841 = vmatmul.mubr.f32.gmra.mrb[0].mxu0 %v2767
  %v2842 = vpop.f32.mrb[0].mxu0
  %v2843 = vadd.f32 %v1776, %v2842
  %v2844 = vpop.f32.mrb[0].mxu0
  %2845 = vmatprep.mubr.f32.mxu0 0.0
  %2846 = vmatmul.mubr.f32.gmra.mrb[0].mxu0 %v2769
  %v2847 = vpop.f32.mrb[0].mxu0
  %v2848 = vadd.f32 %v1776, %v2847
  %v2849 = vpop.f32.mrb[0].mxu0
  %2850 = vdwg.mxu0
  %v2851 = vxor.u32 %v2752, 2147483648
  %v2852 = vxor.u32 %v2757, 2147483648
  %v2853 = vxor.u32 %v2762, 2147483648
  %v2854 = vmul.f32 %v2851, 1.442695
  %v2855 = vpow.pop %v2854
  %v2856 = vmul.f32 %v2852, 1.442695
  %v2857 = vpow.pop %v2856
  %v2858 = vmul.f32 %v2853, 1.442695
  %v2859 = vpow.pop %v2858
  %v2860 = vadd.f32 %v2855, 1.0
  %v2861 = vadd.f32 %v2857, 1.0
  %v2862 = vadd.f32 %v2859, 1.0
  %v2863 = vrcp.pop %v2860
  %v2864 = vmul.f32 1.0, %v2863
  %v2865 = vrcp.pop %v2861
  %v2866 = vmul.f32 1.0, %v2865
  %v2867 = vrcp.pop %v2862
  %v2868 = vmul.f32 1.0, %v2867
  %v2869 = vsub.f32 %v2864, 1.0
  %v2870 = vsub.f32 %v2866, 1.0
  %v2871 = vsub.f32 %v2868, 1.0
  %v2872 = vmul.f32 %v2869, %v2838
  %v2873 = vmul.f32 %v2870, %v2843
  %v2874 = vmul.f32 %v2871, %v2848
  %2878 = vrot.lane.b32.xlu0 %v2872, 64
  %v2879 = vpop.permute.xlu0 %2878
  %2880 = vrot.lane.b32.xlu0 %v2873, 64
  %v2881 = vpop.permute.xlu0 %2880
  %2882 = vrot.lane.b32.xlu0 %v2874, 64
  %v2883 = vpop.permute.xlu0 %2882
  %v2887 = vadd.f32 %v2752, %v2879
  %v2888 = vadd.f32 %v2757, %v2881
  %v2889 = vadd.f32 %v2762, %v2883
  %v2890 = vtanh.pop %v2887
  %v2891 = vtanh.pop %v2888
  %v2892 = vtanh.pop %v2889
  %v2893 = vsub.f32 1.0, %v2864
  %v2894 = vsub.f32 1.0, %v2866
  %v2895 = vsub.f32 1.0, %v2868
  %2899 = vrot.lane.b32.xlu0 %v2890, 96
  %v2900 = vpop.permute.xlu0 %2899
  %2901 = vrot.lane.b32.xlu0 %v2891, 96
  %v2902 = vpop.permute.xlu0 %2901
  %2903 = vrot.lane.b32.xlu0 %v2892, 96
  %v2904 = vpop.permute.xlu0 %2903
  %v2908 = vmul.f32 %v2893, %v2900
  %v2909 = vmul.f32 %v2894, %v2902
  %v2910 = vmul.f32 %v2895, %v2904
  %v2911 = vmul.f32 %v2864, %v2229
  %v2912 = vmul.f32 %v2866, %v2230
  %v2913 = vmul.f32 %v2868, %v2231
  %v2914 = vadd.f32 %v2908, %v2911
  %v2915 = vadd.f32 %v2909, %v2912
  %v2916 = vadd.f32 %v2910, %v2913
  %2920 = vrot.lane.b32.xlu0 %v2914, 96
  %v2921 = vpop.permute.xlu0 %2920
  %2922 = vrot.lane.b32.xlu0 %v2915, 96
  %v2923 = vpop.permute.xlu0 %2922
  %2924 = vrot.lane.b32.xlu0 %v2916, 96
  %v2925 = vpop.permute.xlu0 %2924
  %v2929 = vsel %vm112, %v2921, 0.0
  %2930 = vadd.xlane.f32.xlu0 %v2929
  %v2931 = vpop.xlane.xlu0 %2930
  %v2932 = vsel %vm112, %v2923, 0.0
  %2933 = vadd.xlane.f32.xlu0 %v2932
  %v2934 = vpop.xlane.xlu0 %2933
  %v2935 = vsel %vm1061, %v2925, 0.0
  %2936 = vadd.xlane.f32.xlu0 %v2935
  %v2937 = vpop.xlane.xlu0 %2936
  %v2938 = vmul.f32 %v2931, %v209
  %v2939 = vmul.f32 %v2934, %v209
  %v2940 = vmul.f32 %v2937, %v209
  %v2941 = vsub.f32 %v2914, %v2938
  %v2942 = vsub.f32 %v2915, %v2939
  %v2943 = vsub.f32 %v2916, %v2940
  %v2944 = vmul.f32 %v2941, %v2941
  %v2945 = vmul.f32 %v2942, %v2942
  %v2946 = vmul.f32 %v2943, %v2943
  %2950 = vrot.lane.b32.xlu0 %v2944, 96
  %v2951 = vpop.permute.xlu0 %2950
  %2952 = vrot.lane.b32.xlu0 %v2945, 96
  %v2953 = vpop.permute.xlu0 %2952
  %2954 = vrot.lane.b32.xlu0 %v2946, 96
  %v2955 = vpop.permute.xlu0 %2954
  %v2959 = vsel %vm112, %v2951, 0.0
  %2960 = vadd.xlane.f32.xlu0 %v2959
  %v2961 = vpop.xlane.xlu0 %2960
  %v2962 = vsel %vm112, %v2953, 0.0
  %2963 = vadd.xlane.f32.xlu0 %v2962
  %v2964 = vpop.xlane.xlu0 %2963
  %v2965 = vsel %vm1061, %v2955, 0.0
  %2966 = vadd.xlane.f32.xlu0 %v2965
  %v2967 = vpop.xlane.xlu0 %2966
  %v2968 = vmul.f32 %v2961, %v209
  %v2969 = vmul.f32 %v2964, %v209
  %v2970 = vmul.f32 %v2967, %v209
  %v2971 = vadd.f32 %v2968, 1e-05
  %v2972 = vadd.f32 %v2969, 1e-05
  %v2973 = vadd.f32 %v2970, 1e-05
  %v2974 = vrsqrt.pop %v2971
  %v2975 = vrsqrt.pop %v2972
  %v2976 = vrsqrt.pop %v2973
  %v2977 = vmul.f32 %v2941, %v2974
  %v2978 = vmul.f32 %v2942, %v2975
  %v2979 = vmul.f32 %v2943, %v2976
  %v2980 = vmul.f32 %v2977, %v1998
  %v2981 = vmul.f32 %v2978, %v1998
  %v2982 = vmul.f32 %v2979, %v1998
  %v2983 = vadd.f32 %v2980, %v2009
  %v2984 = vadd.f32 %v2981, %v2009
  %v2985 = vadd.f32 %v2982, %v2009
  %2989 = vrot.lane.b32.xlu0 %v2983, 96
  %v2990 = vpop.permute.xlu0 %2989
  %2991 = vrot.lane.b32.xlu0 %v2984, 96
  %v2992 = vpop.permute.xlu0 %2991
  %2993 = vrot.lane.b32.xlu0 %v2985, 96
  %v2994 = vpop.permute.xlu0 %2993
  %v2995 = vsel %vm112, %v2990, 0
  %v2997 = vsel %vm112, %v2992, 0
  %v2999 = vsel %vm112, %v2994, 0
  %3001 = vmatprep.subr.mxu0 0.0
  %3002 = vmatpush1.msra.mxu0 %v36
  %3003 = vmatprep.subr.mxu0 0.0
  %3004 = vmatpush1.msra.mxu0 %v37
  %3005 = vmatprep.subr.mxu0 0.0
  %3006 = vmatpush1.msra.mxu0 %v38
  %3007 = vmatprep.subr.mxu0 0.0
  %3008 = vmatpush1.msra.mxu0 %v39
  %3009 = vmatprep.subr.mxu0 0.0
  %3010 = vmatpush1.msra.mxu0 0.0
  %3011 = vmatprep.subr.mxu0 0.0
  %3012 = vmatpush1.msra.mxu0 0.0
  %3013 = vmatprep.subr.mxu0 0.0
  %3014 = vmatpush1.msra.mxu0 0.0
  %3015 = vmatprep.subr.mxu0 0.0
  %3016 = vmatpush1.msra.mxu0 0.0
  %3017 = vmatprep.subr.mxu0 0.0
  %3018 = vmatpush1.msra.mxu0 0.0
  %3019 = vmatprep.subr.mxu0 0.0
  %3020 = vmatpush1.msra.mxu0 0.0
  %3021 = vmatprep.subr.mxu0 0.0
  %3022 = vmatpush1.msra.mxu0 0.0
  %3023 = vmatprep.subr.mxu0 0.0
  %3024 = vmatpush1.msra.mxu0 0.0
  %3025 = vmatprep.subr.mxu0 0.0
  %3026 = vmatpush1.msra.mxu0 0.0
  %3027 = vmatprep.subr.mxu0 0.0
  %3028 = vmatpush1.msra.mxu0 0.0
  %3029 = vmatprep.subr.mxu0 0.0
  %3030 = vmatpush1.msra.mxu0 0.0
  %3031 = vmatprep.subr.mxu0 0.0
  %3032 = vmatpush1.msra.mxu0 0.0
  %3033 = vmatprep.subr.mxu0 0.0
  %3034 = vmatpush1.msra.mxu0 0.0
  %3035 = vmatprep.subr.mxu0 0.0
  %3036 = vmatpush1.msra.mxu0 0.0
  %3037 = vmatprep.subr.mxu0 0.0
  %3038 = vmatpush1.msra.mxu0 0.0
  %3039 = vmatprep.subr.mxu0 0.0
  %3040 = vmatpush1.msra.mxu0 0.0
  %3041 = vmatprep.subr.mxu0 0.0
  %3042 = vmatpush1.msra.mxu0 0.0
  %3043 = vmatprep.subr.mxu0 0.0
  %3044 = vmatpush1.msra.mxu0 0.0
  %3045 = vmatprep.subr.mxu0 0.0
  %3046 = vmatpush1.msra.mxu0 0.0
  %3047 = vmatprep.subr.mxu0 0.0
  %3048 = vmatpush1.msra.mxu0 0.0
  %3049 = vmatprep.subr.mxu0 0.0
  %3050 = vmatpush1.msra.mxu0 0.0
  %3051 = vmatprep.subr.mxu0 0.0
  %3052 = vmatpush1.msra.mxu0 0.0
  %3053 = vmatprep.subr.mxu0 0.0
  %3054 = vmatpush1.msra.mxu0 0.0
  %3055 = vmatprep.subr.mxu0 0.0
  %3056 = vmatpush1.msra.mxu0 0.0
  %3057 = vmatprep.subr.mxu0 0.0
  %3058 = vmatpush1.msra.mxu0 0.0
  %3059 = vmatprep.subr.mxu0 0.0
  %3060 = vmatpush1.msra.mxu0 0.0
  %3061 = vmatprep.subr.mxu0 0.0
  %3062 = vmatpush1.msra.mxu0 0.0
  %3063 = vmatprep.subr.mxu0 0.0
  %3064 = vmatpush1.msra.mxu0 0.0
  %3065 = vmatprep.mubr.f32.mxu0 0.0
  %3066 = vmatmul.mubr.f32.gmra.mrb[0].mxu0 %v2995
  %v3067 = vpop.f32.mrb[0].mxu0
  %v3068 = vadd.f32 %v2017, %v3067
  %v3069 = vpop.f32.mrb[0].mxu0
  %3070 = vmatprep.mubr.f32.mxu0 0.0
  %3071 = vmatmul.mubr.f32.gmra.mrb[0].mxu0 %v2997
  %v3072 = vpop.f32.mrb[0].mxu0
  %v3073 = vadd.f32 %v2017, %v3072
  %v3074 = vpop.f32.mrb[0].mxu0
  %3075 = vmatprep.mubr.f32.mxu0 0.0
  %3076 = vmatmul.mubr.f32.gmra.mrb[0].mxu0 %v2999
  %v3077 = vpop.f32.mrb[0].mxu0
  %v3078 = vadd.f32 %v2017, %v3077
  %v3079 = vpop.f32.mrb[0].mxu0
  %3080 = vdwg.mxu0
  %v3081 = vmax.f32 %v3068, 0.0
  %v3082 = vmax.f32 %v3073, 0.0
  %v3083 = vmax.f32 %v3078, 0.0
  %v3085 = vsel %vm2116, %v3081, 0
  %v3088 = vsel %vm2116, %v3082, 0
  %v3091 = vsel %vm2116, %v3083, 0
  %3093 = vmatprep.subr.mxu0 0.0
  %3094 = vmatpush1.msra.mxu0 %v40
  %3095 = vmatprep.subr.mxu0 0.0
  %3096 = vmatpush1.msra.mxu0 %v41
  %3097 = vmatprep.subr.mxu0 0.0
  %3098 = vmatpush1.msra.mxu0 %v42
  %3099 = vmatprep.subr.mxu0 0.0
  %3100 = vmatpush1.msra.mxu0 %v43
  %3101 = vmatprep.subr.mxu0 0.0
  %3102 = vmatpush1.msra.mxu0 %v44
  %3103 = vmatprep.subr.mxu0 0.0
  %3104 = vmatpush1.msra.mxu0 %v45
  %3105 = vmatprep.subr.mxu0 0.0
  %3106 = vmatpush1.msra.mxu0 0.0
  %3107 = vmatprep.subr.mxu0 0.0
  %3108 = vmatpush1.msra.mxu0 0.0
  %3109 = vmatprep.subr.mxu0 0.0
  %3110 = vmatpush1.msra.mxu0 0.0
  %3111 = vmatprep.subr.mxu0 0.0
  %3112 = vmatpush1.msra.mxu0 0.0
  %3113 = vmatprep.subr.mxu0 0.0
  %3114 = vmatpush1.msra.mxu0 0.0
  %3115 = vmatprep.subr.mxu0 0.0
  %3116 = vmatpush1.msra.mxu0 0.0
  %3117 = vmatprep.subr.mxu0 0.0
  %3118 = vmatpush1.msra.mxu0 0.0
  %3119 = vmatprep.subr.mxu0 0.0
  %3120 = vmatpush1.msra.mxu0 0.0
  %3121 = vmatprep.subr.mxu0 0.0
  %3122 = vmatpush1.msra.mxu0 0.0
  %3123 = vmatprep.subr.mxu0 0.0
  %3124 = vmatpush1.msra.mxu0 0.0
  %3125 = vmatprep.subr.mxu0 0.0
  %3126 = vmatpush1.msra.mxu0 0.0
  %3127 = vmatprep.subr.mxu0 0.0
  %3128 = vmatpush1.msra.mxu0 0.0
  %3129 = vmatprep.subr.mxu0 0.0
  %3130 = vmatpush1.msra.mxu0 0.0
  %3131 = vmatprep.subr.mxu0 0.0
  %3132 = vmatpush1.msra.mxu0 0.0
  %3133 = vmatprep.subr.mxu0 0.0
  %3134 = vmatpush1.msra.mxu0 0.0
  %3135 = vmatprep.subr.mxu0 0.0
  %3136 = vmatpush1.msra.mxu0 0.0
  %3137 = vmatprep.subr.mxu0 0.0
  %3138 = vmatpush1.msra.mxu0 0.0
  %3139 = vmatprep.subr.mxu0 0.0
  %3140 = vmatpush1.msra.mxu0 0.0
  %3141 = vmatprep.subr.mxu0 0.0
  %3142 = vmatpush1.msra.mxu0 0.0
  %3143 = vmatprep.subr.mxu0 0.0
  %3144 = vmatpush1.msra.mxu0 0.0
  %3145 = vmatprep.subr.mxu0 0.0
  %3146 = vmatpush1.msra.mxu0 0.0
  %3147 = vmatprep.subr.mxu0 0.0
  %3148 = vmatpush1.msra.mxu0 0.0
  %3149 = vmatprep.subr.mxu0 0.0
  %3150 = vmatpush1.msra.mxu0 0.0
  %3151 = vmatprep.subr.mxu0 0.0
  %3152 = vmatpush1.msra.mxu0 0.0
  %3153 = vmatprep.subr.mxu0 0.0
  %3154 = vmatpush1.msra.mxu0 0.0
  %3155 = vmatprep.subr.mxu0 0.0
  %3156 = vmatpush1.msra.mxu0 0.0
  %3157 = vmatprep.mubr.f32.mxu0 0.0
  %3158 = vmatmul.mubr.f32.gmra.mrb[0].mxu0 %v3085
  %v3159 = vpop.f32.mrb[0].mxu0
  %v3160 = vadd.f32 0.0, %v3159
  %v3161 = vpop.f32.mrb[0].mxu0
  %3162 = vmatprep.mubr.f32.mxu0 0.0
  %3163 = vmatmul.mubr.f32.gmra.mrb[0].mxu0 %v3088
  %v3164 = vpop.f32.mrb[0].mxu0
  %v3165 = vadd.f32 0.0, %v3164
  %v3166 = vpop.f32.mrb[0].mxu0
  %3167 = vmatprep.mubr.f32.mxu0 0.0
  %3168 = vmatmul.mubr.f32.gmra.mrb[0].mxu0 %v3091
  %v3169 = vpop.f32.mrb[0].mxu0
  %v3170 = vadd.f32 0.0, %v3169
  %v3171 = vpop.f32.mrb[0].mxu0
  %3172 = vdwg.mxu0
  %3176 = vrot.lane.b32.xlu0 %v3160, 32
  %v3177 = vpop.permute.xlu0 %3176
  %3178 = vrot.lane.b32.xlu0 %v3165, 32
  %v3179 = vpop.permute.xlu0 %3178
  %3180 = vrot.lane.b32.xlu0 %v3170, 32
  %v3181 = vpop.permute.xlu0 %3180
  %v3185 = vadd.f32 %v2914, %v3177
  %v3186 = vadd.f32 %v2915, %v3179
  %v3187 = vadd.f32 %v2916, %v3181
  %v3188 = vadd.f32 %v3185, %v2227
  %v3189 = vadd.f32 %v3186, %v2227
  %v3190 = vadd.f32 %v3187, %v2227
  %3194 = vrot.lane.b32.xlu0 %v3188, 96
  %v3195 = vpop.permute.xlu0 %3194
  %3196 = vrot.lane.b32.xlu0 %v3189, 96
  %v3197 = vpop.permute.xlu0 %3196
  %3198 = vrot.lane.b32.xlu0 %v3190, 96
  %v3199 = vpop.permute.xlu0 %3198
  %v3203 = vsel %vm112, %v3195, 0.0
  %3204 = vadd.xlane.f32.xlu0 %v3203
  %v3205 = vpop.xlane.xlu0 %3204
  %v3206 = vsel %vm112, %v3197, 0.0
  %3207 = vadd.xlane.f32.xlu0 %v3206
  %v3208 = vpop.xlane.xlu0 %3207
  %v3209 = vsel %vm1061, %v3199, 0.0
  %3210 = vadd.xlane.f32.xlu0 %v3209
  %v3211 = vpop.xlane.xlu0 %3210
  %v3212 = vmul.f32 %v3205, %v209
  %v3213 = vmul.f32 %v3208, %v209
  %v3214 = vmul.f32 %v3211, %v209
  %v3215 = vsub.f32 %v3188, %v3212
  %v3216 = vsub.f32 %v3189, %v3213
  %v3217 = vsub.f32 %v3190, %v3214
  %v3218 = vmul.f32 %v3215, %v3215
  %v3219 = vmul.f32 %v3216, %v3216
  %v3220 = vmul.f32 %v3217, %v3217
  %3224 = vrot.lane.b32.xlu0 %v3218, 96
  %v3225 = vpop.permute.xlu0 %3224
  %3226 = vrot.lane.b32.xlu0 %v3219, 96
  %v3227 = vpop.permute.xlu0 %3226
  %3228 = vrot.lane.b32.xlu0 %v3220, 96
  %v3229 = vpop.permute.xlu0 %3228
  %v3233 = vsel %vm112, %v3225, 0.0
  %3234 = vadd.xlane.f32.xlu0 %v3233
  %v3235 = vpop.xlane.xlu0 %3234
  %v3236 = vsel %vm112, %v3227, 0.0
  %3237 = vadd.xlane.f32.xlu0 %v3236
  %v3238 = vpop.xlane.xlu0 %3237
  %v3239 = vsel %vm1061, %v3229, 0.0
  %3240 = vadd.xlane.f32.xlu0 %v3239
  %v3241 = vpop.xlane.xlu0 %3240
  %v3242 = vmul.f32 %v3235, %v209
  %v3243 = vmul.f32 %v3238, %v209
  %v3244 = vmul.f32 %v3241, %v209
  %v3245 = vadd.f32 %v3242, 1e-05
  %v3246 = vadd.f32 %v3243, 1e-05
  %v3247 = vadd.f32 %v3244, 1e-05
  %v3248 = vrsqrt.pop %v3245
  %v3249 = vrsqrt.pop %v3246
  %v3250 = vrsqrt.pop %v3247
  %v3251 = vmul.f32 %v3215, %v3248
  %v3252 = vmul.f32 %v3216, %v3249
  %v3253 = vmul.f32 %v3217, %v3250
  %v3254 = vmul.f32 %v3251, %v2297
  %v3255 = vmul.f32 %v3252, %v2297
  %v3256 = vmul.f32 %v3253, %v2297
  %v3257 = vadd.f32 %v3254, %v2304
  %v3258 = vadd.f32 %v3255, %v2304
  %v3259 = vadd.f32 %v3256, %v2304
  %3263 = vrot.lane.b32.xlu0 %v3257, 96
  %v3264 = vpop.permute.xlu0 %3263
  %3265 = vrot.lane.b32.xlu0 %v3258, 96
  %v3266 = vpop.permute.xlu0 %3265
  %3267 = vrot.lane.b32.xlu0 %v3259, 96
  %v3268 = vpop.permute.xlu0 %3267
  %v3269 = vsel %vm112, %v3264, 0
  %v3271 = vsel %vm112, %v3266, 0
  %v3273 = vsel %vm112, %v3268, 0
  %3275 = vmatprep.subr.mxu0 0.0
  %3276 = vmatpush1.msra.mxu0 %v20
  %3277 = vmatprep.subr.mxu0 0.0
  %3278 = vmatpush1.msra.mxu0 %v21
  %3279 = vmatprep.subr.mxu0 0.0
  %3280 = vmatpush1.msra.mxu0 %v22
  %3281 = vmatprep.subr.mxu0 0.0
  %3282 = vmatpush1.msra.mxu0 %v23
  %3283 = vmatprep.subr.mxu0 0.0
  %3284 = vmatpush1.msra.mxu0 0.0
  %3285 = vmatprep.subr.mxu0 0.0
  %3286 = vmatpush1.msra.mxu0 0.0
  %3287 = vmatprep.subr.mxu0 0.0
  %3288 = vmatpush1.msra.mxu0 0.0
  %3289 = vmatprep.subr.mxu0 0.0
  %3290 = vmatpush1.msra.mxu0 0.0
  %3291 = vmatprep.subr.mxu0 0.0
  %3292 = vmatpush1.msra.mxu0 0.0
  %3293 = vmatprep.subr.mxu0 0.0
  %3294 = vmatpush1.msra.mxu0 0.0
  %3295 = vmatprep.subr.mxu0 0.0
  %3296 = vmatpush1.msra.mxu0 0.0
  %3297 = vmatprep.subr.mxu0 0.0
  %3298 = vmatpush1.msra.mxu0 0.0
  %3299 = vmatprep.subr.mxu0 0.0
  %3300 = vmatpush1.msra.mxu0 0.0
  %3301 = vmatprep.subr.mxu0 0.0
  %3302 = vmatpush1.msra.mxu0 0.0
  %3303 = vmatprep.subr.mxu0 0.0
  %3304 = vmatpush1.msra.mxu0 0.0
  %3305 = vmatprep.subr.mxu0 0.0
  %3306 = vmatpush1.msra.mxu0 0.0
  %3307 = vmatprep.subr.mxu0 0.0
  %3308 = vmatpush1.msra.mxu0 0.0
  %3309 = vmatprep.subr.mxu0 0.0
  %3310 = vmatpush1.msra.mxu0 0.0
  %3311 = vmatprep.subr.mxu0 0.0
  %3312 = vmatpush1.msra.mxu0 0.0
  %3313 = vmatprep.subr.mxu0 0.0
  %3314 = vmatpush1.msra.mxu0 0.0
  %3315 = vmatprep.subr.mxu0 0.0
  %3316 = vmatpush1.msra.mxu0 0.0
  %3317 = vmatprep.subr.mxu0 0.0
  %3318 = vmatpush1.msra.mxu0 0.0
  %3319 = vmatprep.subr.mxu0 0.0
  %3320 = vmatpush1.msra.mxu0 0.0
  %3321 = vmatprep.subr.mxu0 0.0
  %3322 = vmatpush1.msra.mxu0 0.0
  %3323 = vmatprep.subr.mxu0 0.0
  %3324 = vmatpush1.msra.mxu0 0.0
  %3325 = vmatprep.subr.mxu0 0.0
  %3326 = vmatpush1.msra.mxu0 0.0
  %3327 = vmatprep.subr.mxu0 0.0
  %3328 = vmatpush1.msra.mxu0 0.0
  %3329 = vmatprep.subr.mxu0 0.0
  %3330 = vmatpush1.msra.mxu0 0.0
  %3331 = vmatprep.subr.mxu0 0.0
  %3332 = vmatpush1.msra.mxu0 0.0
  %3333 = vmatprep.subr.mxu0 0.0
  %3334 = vmatpush1.msra.mxu0 0.0
  %3335 = vmatprep.subr.mxu0 0.0
  %3336 = vmatpush1.msra.mxu0 0.0
  %3337 = vmatprep.subr.mxu0 0.0
  %3338 = vmatpush1.msra.mxu0 0.0
  %3339 = vmatprep.mubr.f32.mxu0 0.0
  %3340 = vmatmul.mubr.f32.gmra.mrb[0].mxu0 %v3269
  %v3341 = vpop.f32.mrb[0].mxu0
  %v3342 = vadd.f32 %v1112, %v3341
  %v3343 = vpop.f32.mrb[0].mxu0
  %3344 = vmatprep.mubr.f32.mxu0 0.0
  %3345 = vmatmul.mubr.f32.gmra.mrb[0].mxu0 %v3271
  %v3346 = vpop.f32.mrb[0].mxu0
  %v3347 = vadd.f32 %v1112, %v3346
  %v3348 = vpop.f32.mrb[0].mxu0
  %3349 = vmatprep.mubr.f32.mxu0 0.0
  %3350 = vmatmul.mubr.f32.gmra.mrb[0].mxu0 %v3273
  %v3351 = vpop.f32.mrb[0].mxu0
  %v3352 = vadd.f32 %v1112, %v3351
  %v3353 = vpop.f32.mrb[0].mxu0
  %3354 = vdwg.mxu0
  %v3356 = vsel %vm112, %v3342, 0
  %v3359 = vsel %vm112, %v3347, 0
  %v3362 = vsel %vm112, %v3352, 0
  %3364 = vmatprep.subr.mxu0 0.0
  %3365 = vmatpush1.xpose.msra.mxu0 %v1212
  %3366 = vmatprep.subr.mxu0 0.0
  %3367 = vmatpush1.xpose.msra.mxu0 %v1215
  %3368 = vmatprep.subr.mxu0 0.0
  %3369 = vmatpush1.xpose.msra.mxu0 %v1218
  %3370 = vmatprep.subr.mxu0 0.0
  %3371 = vmatpush1.xpose.msra.mxu0 %v1221
  %3372 = vmatprep.subr.mxu0 0.0
  %3373 = vmatpush1.xpose.msra.mxu0 %v1224
  %3374 = vmatprep.subr.mxu0 0.0
  %3375 = vmatpush1.xpose.msra.mxu0 %v1227
  %3376 = vmatprep.subr.mxu0 0.0
  %3377 = vmatpush1.xpose.msra.mxu0 %v1230
  %3378 = vmatprep.subr.mxu0 0.0
  %3379 = vmatpush1.xpose.msra.mxu0 %v1233
  %3380 = vmatprep.subr.mxu0 0.0
  %3381 = vmatpush1.xpose.msra.mxu0 %v1236
  %3382 = vmatprep.subr.mxu0 0.0
  %3383 = vmatpush1.xpose.msra.mxu0 %v1239
  %3384 = vmatprep.subr.mxu0 0.0
  %3385 = vmatpush1.xpose.msra.mxu0 %v1242
  %3386 = vmatprep.subr.mxu0 0.0
  %3387 = vmatpush1.xpose.msra.mxu0 %v1245
  %3388 = vmatprep.subr.mxu0 0.0
  %3389 = vmatpush1.xpose.msra.mxu0 %v1248
  %3390 = vmatprep.subr.mxu0 0.0
  %3391 = vmatpush1.xpose.msra.mxu0 %v1251
  %3392 = vmatprep.subr.mxu0 0.0
  %3393 = vmatpush1.xpose.msra.mxu0 %v1254
  %3394 = vmatprep.subr.mxu0 0.0
  %3395 = vmatpush1.xpose.msra.mxu0 %v1257
  %3396 = vmatprep.subr.mxu0 0.0
  %3397 = vmatpush1.xpose.msra.mxu0 %v1260
  %3398 = vmatprep.subr.mxu0 0.0
  %3399 = vmatpush1.xpose.msra.mxu0 %v1263
  %3400 = vmatprep.subr.mxu0 0.0
  %3401 = vmatpush1.xpose.msra.mxu0 %v1266
  %3402 = vmatprep.subr.mxu0 0.0
  %3403 = vmatpush1.xpose.msra.mxu0 %v1269
  %3404 = vmatprep.subr.mxu0 0.0
  %3405 = vmatpush1.xpose.msra.mxu0 %v1272
  %3406 = vmatprep.subr.mxu0 0.0
  %3407 = vmatpush1.xpose.msra.mxu0 %v1275
  %3408 = vmatprep.subr.mxu0 0.0
  %3409 = vmatpush1.xpose.msra.mxu0 %v1278
  %3410 = vmatprep.subr.mxu0 0.0
  %3411 = vmatpush1.xpose.msra.mxu0 %v1281
  %3412 = vmatprep.subr.mxu0 0.0
  %3413 = vmatpush1.xpose.msra.mxu0 %v1284
  %3414 = vmatprep.subr.mxu0 0.0
  %3415 = vmatpush1.xpose.msra.mxu0 %v1287
  %3416 = vmatprep.subr.mxu0 0.0
  %3417 = vmatpush1.xpose.msra.mxu0 %v1290
  %3418 = vmatprep.subr.mxu0 0.0
  %3419 = vmatpush1.xpose.msra.mxu0 %v1293
  %3420 = vmatprep.subr.mxu0 0.0
  %3421 = vmatpush1.xpose.msra.mxu0 %v1296
  %3422 = vmatprep.subr.mxu0 0.0
  %3423 = vmatpush1.xpose.msra.mxu0 %v1299
  %3424 = vmatprep.subr.mxu0 0.0
  %3425 = vmatpush1.xpose.msra.mxu0 %v1302
  %3426 = vmatprep.subr.mxu0 0.0
  %3427 = vmatpush1.xpose.msra.mxu0 %v1305
  %3428 = vmatprep.mubr.f32.mxu0 0.0
  %3429 = vmatmul.mubr.f32.gmra.mrb[0].mxu0 %v3356
  %v3430 = vpop.f32.mrb[0].mxu0
  %v3431 = vadd.f32 0.0, %v3430
  %v3432 = vpop.f32.mrb[0].mxu0
  %v3433 = vadd.f32 0.0, %v3432
  %3434 = vmatprep.mubr.f32.mxu0 0.0
  %3435 = vmatmul.mubr.f32.gmra.mrb[0].mxu0 %v3359
  %v3436 = vpop.f32.mrb[0].mxu0
  %v3437 = vadd.f32 0.0, %v3436
  %v3438 = vpop.f32.mrb[0].mxu0
  %v3439 = vadd.f32 0.0, %v3438
  %3440 = vmatprep.mubr.f32.mxu0 0.0
  %3441 = vmatmul.mubr.f32.gmra.mrb[0].mxu0 %v3362
  %v3442 = vpop.f32.mrb[0].mxu0
  %v3443 = vadd.f32 0.0, %v3442
  %v3444 = vpop.f32.mrb[0].mxu0
  %v3445 = vadd.f32 0.0, %v3444
  %3446 = vdwg.mxu0
  %v3447 = vmul.f32 %v3431, 0.17677669
  %v3448 = vmul.f32 %v3433, 0.17677669
  %v3449 = vmul.f32 %v3437, 0.17677669
  %v3450 = vmul.f32 %v3439, 0.17677669
  %v3451 = vmul.f32 %v3443, 0.17677669
  %v3452 = vmul.f32 %v3445, 0.17677669
  %v3453 = vsel %vm1046, %v3447, -1e+30
  %v3454 = vsel %vm1047, %v3448, -1e+30
  %v3455 = vsel %vm1048, %v3449, -1e+30
  %v3456 = vsel %vm1049, %v3450, -1e+30
  %v3457 = vsel %vm1050, %v3451, -1e+30
  %v3458 = vsel %vm1051, %v3452, -1e+30
  %v3459 = vsel %vm1402, %v3457, -inf
  %v3460 = vmax.f32 %v3453, %v3459
  %v3461 = vmax.f32 %v3460, %v3455
  %v3462 = vrot.slane %v3461, 4
  %v3463 = vmax.f32 %v3461, %v3462
  %v3464 = vrot.slane %v3463, 2
  %v3465 = vmax.f32 %v3463, %v3464
  %v3466 = vrot.slane %v3465, 1
  %v3467 = vmax.f32 %v3465, %v3466
  %v3468 = vsel %vm1402, %v3458, -inf
  %v3469 = vmax.f32 %v3454, %v3468
  %v3470 = vmax.f32 %v3469, %v3456
  %v3471 = vrot.slane %v3470, 4
  %v3472 = vmax.f32 %v3470, %v3471
  %v3473 = vrot.slane %v3472, 2
  %v3474 = vmax.f32 %v3472, %v3473
  %v3475 = vrot.slane %v3474, 1
  %v3476 = vmax.f32 %v3474, %v3475
  %v3477 = vsub.f32 %v3453, %v3467
  %v3478 = vsub.f32 %v3454, %v3476
  %v3479 = vsub.f32 %v3455, %v3467
  %v3480 = vsub.f32 %v3456, %v3476
  %v3481 = vsub.f32 %v3457, %v3467
  %v3482 = vsub.f32 %v3458, %v3476
  %v3483 = vmul.f32 %v3477, 1.442695
  %v3484 = vpow.pop %v3483
  %v3485 = vmul.f32 %v3478, 1.442695
  %v3486 = vpow.pop %v3485
  %v3487 = vmul.f32 %v3479, 1.442695
  %v3488 = vpow.pop %v3487
  %v3489 = vmul.f32 %v3480, 1.442695
  %v3490 = vpow.pop %v3489
  %v3491 = vmul.f32 %v3481, 1.442695
  %v3492 = vpow.pop %v3491
  %v3493 = vmul.f32 %v3482, 1.442695
  %v3494 = vpow.pop %v3493
  %v3495 = vadd.f32 %v3484, %v3488
  %v3496 = vsel %vm1402, %v3492, 0.0
  %v3497 = vadd.f32 %v3495, %v3496
  %v3498 = vrot.slane %v3497, 4
  %v3499 = vadd.f32 %v3497, %v3498
  %v3500 = vrot.slane %v3499, 2
  %v3501 = vadd.f32 %v3499, %v3500
  %v3502 = vrot.slane %v3501, 1
  %v3503 = vadd.f32 %v3501, %v3502
  %v3504 = vadd.f32 %v3486, %v3490
  %v3505 = vsel %vm1402, %v3494, 0.0
  %v3506 = vadd.f32 %v3504, %v3505
  %v3507 = vrot.slane %v3506, 4
  %v3508 = vadd.f32 %v3506, %v3507
  %v3509 = vrot.slane %v3508, 2
  %v3510 = vadd.f32 %v3508, %v3509
  %v3511 = vrot.slane %v3510, 1
  %v3512 = vadd.f32 %v3510, %v3511
  %v3513 = vrcp.pop %v3503
  %v3514 = vmul.f32 %v3484, %v3513
  %v3515 = vrcp.pop %v3512
  %v3516 = vmul.f32 %v3486, %v3515
  %v3517 = vmul.f32 %v3488, %v3513
  %v3518 = vmul.f32 %v3490, %v3515
  %v3519 = vmul.f32 %v3492, %v3513
  %v3520 = vmul.f32 %v3494, %v3515
  %v3521 = vadd.f32 %v3514, %v3516
  %3522 = vadd.xlane.f32.xlu0 %v3521
  %v3523 = vpop.xlane.xlu0 %3522
  %v3524 = vadd.f32 %v3517, %v3518
  %3525 = vadd.xlane.f32.xlu0 %v3524
  %v3526 = vpop.xlane.xlu0 %3525
  %v3527 = vsel %vm1402, %v3519, 0.0
  %v3528 = vsel %vm1402, %v3520, 0.0
  %v3529 = vadd.f32 %v3527, %v3528
  %3530 = vadd.xlane.f32.xlu0 %v3529
  %v3531 = vpop.xlane.xlu0 %3530
  %v3532 = vadd.f32 %v3523, 1e-08
  %v3533 = vadd.f32 %v3526, 1e-08
  %v3534 = vadd.f32 %v3531, 1e-08
  %v3535 = vrcp.pop %v3532
  %v3536 = vmul.f32 %v3514, %v3535
  %v3537 = vmul.f32 %v3516, %v3535
  %v3538 = vrcp.pop %v3533
  %v3539 = vmul.f32 %v3517, %v3538
  %v3540 = vmul.f32 %v3518, %v3538
  %v3541 = vrcp.pop %v3534
  %v3542 = vmul.f32 %v3519, %v3541
  %v3543 = vmul.f32 %v3520, %v3541
  %3544 = vmatprep.subr.mxu0 0.0
  %3545 = vmatpush1.msra.mxu0 %v1489
  %3546 = vmatprep.subr.mxu0 0.0
  %3547 = vmatpush1.msra.mxu0 %v1491
  %3548 = vmatprep.subr.mxu0 0.0
  %3549 = vmatpush1.msra.mxu0 %v1493
  %3550 = vmatprep.subr.mxu0 0.0
  %3551 = vmatpush1.msra.mxu0 %v1495
  %3552 = vmatprep.subr.mxu0 0.0
  %3553 = vmatpush1.msra.mxu0 %v1497
  %3554 = vmatprep.subr.mxu0 0.0
  %3555 = vmatpush1.msra.mxu0 %v1499
  %3556 = vmatprep.subr.mxu0 0.0
  %3557 = vmatpush1.msra.mxu0 %v1501
  %3558 = vmatprep.subr.mxu0 0.0
  %3559 = vmatpush1.msra.mxu0 %v1503
  %3560 = vmatprep.subr.mxu0 0.0
  %3561 = vmatpush1.msra.mxu0 %v1505
  %3562 = vmatprep.subr.mxu0 0.0
  %3563 = vmatpush1.msra.mxu0 %v1507
  %3564 = vmatprep.subr.mxu0 0.0
  %3565 = vmatpush1.msra.mxu0 %v1509
  %3566 = vmatprep.subr.mxu0 0.0
  %3567 = vmatpush1.msra.mxu0 %v1511
  %3568 = vmatprep.subr.mxu0 0.0
  %3569 = vmatpush1.msra.mxu0 %v1513
  %3570 = vmatprep.subr.mxu0 0.0
  %3571 = vmatpush1.msra.mxu0 %v1515
  %3572 = vmatprep.subr.mxu0 0.0
  %3573 = vmatpush1.msra.mxu0 %v1517
  %3574 = vmatprep.subr.mxu0 0.0
  %3575 = vmatpush1.msra.mxu0 %v1519
  %3576 = vmatprep.subr.mxu0 0.0
  %3577 = vmatpush1.msra.mxu0 %v1521
  %3578 = vmatprep.subr.mxu0 0.0
  %3579 = vmatpush1.msra.mxu0 %v1523
  %3580 = vmatprep.subr.mxu0 0.0
  %3581 = vmatpush1.msra.mxu0 %v1525
  %3582 = vmatprep.subr.mxu0 0.0
  %3583 = vmatpush1.msra.mxu0 %v1527
  %3584 = vmatprep.subr.mxu0 0.0
  %3585 = vmatpush1.msra.mxu0 %v1529
  %3586 = vmatprep.subr.mxu0 0.0
  %3587 = vmatpush1.msra.mxu0 %v1531
  %3588 = vmatprep.subr.mxu0 0.0
  %3589 = vmatpush1.msra.mxu0 %v1533
  %3590 = vmatprep.subr.mxu0 0.0
  %3591 = vmatpush1.msra.mxu0 %v1535
  %3592 = vmatprep.subr.mxu0 0.0
  %3593 = vmatpush1.msra.mxu0 %v1537
  %3594 = vmatprep.subr.mxu0 0.0
  %3595 = vmatpush1.msra.mxu0 %v1539
  %3596 = vmatprep.subr.mxu0 0.0
  %3597 = vmatpush1.msra.mxu0 %v1541
  %3598 = vmatprep.subr.mxu0 0.0
  %3599 = vmatpush1.msra.mxu0 %v1543
  %3600 = vmatprep.subr.mxu0 0.0
  %3601 = vmatpush1.msra.mxu0 %v1545
  %3602 = vmatprep.subr.mxu0 0.0
  %3603 = vmatpush1.msra.mxu0 %v1547
  %3604 = vmatprep.subr.mxu0 0.0
  %3605 = vmatpush1.msra.mxu0 %v1549
  %3606 = vmatprep.subr.mxu0 0.0
  %3607 = vmatpush1.msra.mxu0 %v1551
  %3608 = vmatprep.mubr.f32.mxu0 %v3537
  %3609 = vmatmul.mubr.f32.gmra.mrb[0].mxu0 %v3536
  %v3610 = vpop.f32.mrb[0].mxu0
  %v3611 = vadd.f32 0.0, %v3610
  %v3612 = vpop.f32.mrb[0].mxu0
  %3613 = vmatprep.mubr.f32.mxu0 %v3540
  %3614 = vmatmul.mubr.f32.gmra.mrb[0].mxu0 %v3539
  %v3615 = vpop.f32.mrb[0].mxu0
  %v3616 = vadd.f32 0.0, %v3615
  %v3617 = vpop.f32.mrb[0].mxu0
  %3618 = vmatprep.mubr.f32.mxu0 %v3543
  %3619 = vmatmul.mubr.f32.gmra.mrb[0].mxu0 %v3542
  %v3620 = vpop.f32.mrb[0].mxu0
  %v3621 = vadd.f32 0.0, %v3620
  %v3622 = vpop.f32.mrb[0].mxu0
  %3623 = vdwg.mxu0
  %v3624 = vsel %vm112, %v3611, %v3188
  %v3625 = vsel %vm112, %v3616, %v3189
  %v3626 = vsel %vm112, %v3621, %v3190
  %v3628 = vsel %vm1683, %v3624, 0
  %v3631 = vsel %vm1683, %v3625, 0
  %v3634 = vsel %vm1683, %v3626, 0
  %3636 = vmatprep.subr.mxu0 0.0
  %3637 = vmatpush1.msra.mxu0 %v24
  %3638 = vmatprep.subr.mxu0 0.0
  %3639 = vmatpush1.msra.mxu0 %v25
  %3640 = vmatprep.subr.mxu0 0.0
  %3641 = vmatpush1.msra.mxu0 %v26
  %3642 = vmatprep.subr.mxu0 0.0
  %3643 = vmatpush1.msra.mxu0 %v27
  %3644 = vmatprep.subr.mxu0 0.0
  %3645 = vmatpush1.msra.mxu0 %v28
  %3646 = vmatprep.subr.mxu0 0.0
  %3647 = vmatpush1.msra.mxu0 %v29
  %3648 = vmatprep.subr.mxu0 0.0
  %3649 = vmatpush1.msra.mxu0 %v30
  %3650 = vmatprep.subr.mxu0 0.0
  %3651 = vmatpush1.msra.mxu0 %v31
  %3652 = vmatprep.subr.mxu0 0.0
  %3653 = vmatpush1.msra.mxu0 0.0
  %3654 = vmatprep.subr.mxu0 0.0
  %3655 = vmatpush1.msra.mxu0 0.0
  %3656 = vmatprep.subr.mxu0 0.0
  %3657 = vmatpush1.msra.mxu0 0.0
  %3658 = vmatprep.subr.mxu0 0.0
  %3659 = vmatpush1.msra.mxu0 0.0
  %3660 = vmatprep.subr.mxu0 0.0
  %3661 = vmatpush1.msra.mxu0 0.0
  %3662 = vmatprep.subr.mxu0 0.0
  %3663 = vmatpush1.msra.mxu0 0.0
  %3664 = vmatprep.subr.mxu0 0.0
  %3665 = vmatpush1.msra.mxu0 0.0
  %3666 = vmatprep.subr.mxu0 0.0
  %3667 = vmatpush1.msra.mxu0 0.0
  %3668 = vmatprep.subr.mxu0 0.0
  %3669 = vmatpush1.msra.mxu0 0.0
  %3670 = vmatprep.subr.mxu0 0.0
  %3671 = vmatpush1.msra.mxu0 0.0
  %3672 = vmatprep.subr.mxu0 0.0
  %3673 = vmatpush1.msra.mxu0 0.0
  %3674 = vmatprep.subr.mxu0 0.0
  %3675 = vmatpush1.msra.mxu0 0.0
  %3676 = vmatprep.subr.mxu0 0.0
  %3677 = vmatpush1.msra.mxu0 0.0
  %3678 = vmatprep.subr.mxu0 0.0
  %3679 = vmatpush1.msra.mxu0 0.0
  %3680 = vmatprep.subr.mxu0 0.0
  %3681 = vmatpush1.msra.mxu0 0.0
  %3682 = vmatprep.subr.mxu0 0.0
  %3683 = vmatpush1.msra.mxu0 0.0
  %3684 = vmatprep.subr.mxu0 0.0
  %3685 = vmatpush1.msra.mxu0 0.0
  %3686 = vmatprep.subr.mxu0 0.0
  %3687 = vmatpush1.msra.mxu0 0.0
  %3688 = vmatprep.subr.mxu0 0.0
  %3689 = vmatpush1.msra.mxu0 0.0
  %3690 = vmatprep.subr.mxu0 0.0
  %3691 = vmatpush1.msra.mxu0 0.0
  %3692 = vmatprep.subr.mxu0 0.0
  %3693 = vmatpush1.msra.mxu0 0.0
  %3694 = vmatprep.subr.mxu0 0.0
  %3695 = vmatpush1.msra.mxu0 0.0
  %3696 = vmatprep.subr.mxu0 0.0
  %3697 = vmatpush1.msra.mxu0 0.0
  %3698 = vmatprep.subr.mxu0 0.0
  %3699 = vmatpush1.msra.mxu0 0.0
  %3700 = vmatprep.mubr.f32.mxu0 0.0
  %3701 = vmatmul.mubr.f32.gmra.mrb[0].mxu0 %v3628
  %v3702 = vpop.f32.mrb[0].mxu0
  %v3703 = vadd.f32 %v1682, %v3702
  %v3704 = vpop.f32.mrb[0].mxu0
  %3705 = vmatprep.mubr.f32.mxu0 0.0
  %3706 = vmatmul.mubr.f32.gmra.mrb[0].mxu0 %v3631
  %v3707 = vpop.f32.mrb[0].mxu0
  %v3708 = vadd.f32 %v1682, %v3707
  %v3709 = vpop.f32.mrb[0].mxu0
  %3710 = vmatprep.mubr.f32.mxu0 0.0
  %3711 = vmatmul.mubr.f32.gmra.mrb[0].mxu0 %v3634
  %v3712 = vpop.f32.mrb[0].mxu0
  %v3713 = vadd.f32 %v1682, %v3712
  %v3714 = vpop.f32.mrb[0].mxu0
  %3715 = vdwg.mxu0
  %v3716 = vsel %vm112, %v3195, 0
  %v3718 = vsel %vm112, %v3197, 0
  %v3720 = vsel %vm112, %v3199, 0
  %3722 = vmatprep.subr.mxu0 0.0
  %3723 = vmatpush1.msra.mxu0 %v32
  %3724 = vmatprep.subr.mxu0 0.0
  %3725 = vmatpush1.msra.mxu0 %v33
  %3726 = vmatprep.subr.mxu0 0.0
  %3727 = vmatpush1.msra.mxu0 %v34
  %3728 = vmatprep.subr.mxu0 0.0
  %3729 = vmatpush1.msra.mxu0 %v35
  %3730 = vmatprep.subr.mxu0 0.0
  %3731 = vmatpush1.msra.mxu0 0.0
  %3732 = vmatprep.subr.mxu0 0.0
  %3733 = vmatpush1.msra.mxu0 0.0
  %3734 = vmatprep.subr.mxu0 0.0
  %3735 = vmatpush1.msra.mxu0 0.0
  %3736 = vmatprep.subr.mxu0 0.0
  %3737 = vmatpush1.msra.mxu0 0.0
  %3738 = vmatprep.subr.mxu0 0.0
  %3739 = vmatpush1.msra.mxu0 0.0
  %3740 = vmatprep.subr.mxu0 0.0
  %3741 = vmatpush1.msra.mxu0 0.0
  %3742 = vmatprep.subr.mxu0 0.0
  %3743 = vmatpush1.msra.mxu0 0.0
  %3744 = vmatprep.subr.mxu0 0.0
  %3745 = vmatpush1.msra.mxu0 0.0
  %3746 = vmatprep.subr.mxu0 0.0
  %3747 = vmatpush1.msra.mxu0 0.0
  %3748 = vmatprep.subr.mxu0 0.0
  %3749 = vmatpush1.msra.mxu0 0.0
  %3750 = vmatprep.subr.mxu0 0.0
  %3751 = vmatpush1.msra.mxu0 0.0
  %3752 = vmatprep.subr.mxu0 0.0
  %3753 = vmatpush1.msra.mxu0 0.0
  %3754 = vmatprep.subr.mxu0 0.0
  %3755 = vmatpush1.msra.mxu0 0.0
  %3756 = vmatprep.subr.mxu0 0.0
  %3757 = vmatpush1.msra.mxu0 0.0
  %3758 = vmatprep.subr.mxu0 0.0
  %3759 = vmatpush1.msra.mxu0 0.0
  %3760 = vmatprep.subr.mxu0 0.0
  %3761 = vmatpush1.msra.mxu0 0.0
  %3762 = vmatprep.subr.mxu0 0.0
  %3763 = vmatpush1.msra.mxu0 0.0
  %3764 = vmatprep.subr.mxu0 0.0
  %3765 = vmatpush1.msra.mxu0 0.0
  %3766 = vmatprep.subr.mxu0 0.0
  %3767 = vmatpush1.msra.mxu0 0.0
  %3768 = vmatprep.subr.mxu0 0.0
  %3769 = vmatpush1.msra.mxu0 0.0
  %3770 = vmatprep.subr.mxu0 0.0
  %3771 = vmatpush1.msra.mxu0 0.0
  %3772 = vmatprep.subr.mxu0 0.0
  %3773 = vmatpush1.msra.mxu0 0.0
  %3774 = vmatprep.subr.mxu0 0.0
  %3775 = vmatpush1.msra.mxu0 0.0
  %3776 = vmatprep.subr.mxu0 0.0
  %3777 = vmatpush1.msra.mxu0 0.0
  %3778 = vmatprep.subr.mxu0 0.0
  %3779 = vmatpush1.msra.mxu0 0.0
  %3780 = vmatprep.subr.mxu0 0.0
  %3781 = vmatpush1.msra.mxu0 0.0
  %3782 = vmatprep.subr.mxu0 0.0
  %3783 = vmatpush1.msra.mxu0 0.0
  %3784 = vmatprep.subr.mxu0 0.0
  %3785 = vmatpush1.msra.mxu0 0.0
  %3786 = vmatprep.mubr.f32.mxu0 0.0
  %3787 = vmatmul.mubr.f32.gmra.mrb[0].mxu0 %v3716
  %v3788 = vpop.f32.mrb[0].mxu0
  %v3789 = vadd.f32 %v1776, %v3788
  %v3790 = vpop.f32.mrb[0].mxu0
  %3791 = vmatprep.mubr.f32.mxu0 0.0
  %3792 = vmatmul.mubr.f32.gmra.mrb[0].mxu0 %v3718
  %v3793 = vpop.f32.mrb[0].mxu0
  %v3794 = vadd.f32 %v1776, %v3793
  %v3795 = vpop.f32.mrb[0].mxu0
  %3796 = vmatprep.mubr.f32.mxu0 0.0
  %3797 = vmatmul.mubr.f32.gmra.mrb[0].mxu0 %v3720
  %v3798 = vpop.f32.mrb[0].mxu0
  %v3799 = vadd.f32 %v1776, %v3798
  %v3800 = vpop.f32.mrb[0].mxu0
  %3801 = vdwg.mxu0
  %v3802 = vxor.u32 %v3703, 2147483648
  %v3803 = vxor.u32 %v3708, 2147483648
  %v3804 = vxor.u32 %v3713, 2147483648
  %v3805 = vmul.f32 %v3802, 1.442695
  %v3806 = vpow.pop %v3805
  %v3807 = vmul.f32 %v3803, 1.442695
  %v3808 = vpow.pop %v3807
  %v3809 = vmul.f32 %v3804, 1.442695
  %v3810 = vpow.pop %v3809
  %v3811 = vadd.f32 %v3806, 1.0
  %v3812 = vadd.f32 %v3808, 1.0
  %v3813 = vadd.f32 %v3810, 1.0
  %v3814 = vrcp.pop %v3811
  %v3815 = vmul.f32 1.0, %v3814
  %v3816 = vrcp.pop %v3812
  %v3817 = vmul.f32 1.0, %v3816
  %v3818 = vrcp.pop %v3813
  %v3819 = vmul.f32 1.0, %v3818
  %v3820 = vsub.f32 %v3815, 1.0
  %v3821 = vsub.f32 %v3817, 1.0
  %v3822 = vsub.f32 %v3819, 1.0
  %v3823 = vmul.f32 %v3820, %v3789
  %v3824 = vmul.f32 %v3821, %v3794
  %v3825 = vmul.f32 %v3822, %v3799
  %3829 = vrot.lane.b32.xlu0 %v3823, 64
  %v3830 = vpop.permute.xlu0 %3829
  %3831 = vrot.lane.b32.xlu0 %v3824, 64
  %v3832 = vpop.permute.xlu0 %3831
  %3833 = vrot.lane.b32.xlu0 %v3825, 64
  %v3834 = vpop.permute.xlu0 %3833
  %v3838 = vadd.f32 %v3703, %v3830
  %v3839 = vadd.f32 %v3708, %v3832
  %v3840 = vadd.f32 %v3713, %v3834
  %v3841 = vtanh.pop %v3838
  %v3842 = vtanh.pop %v3839
  %v3843 = vtanh.pop %v3840
  %v3844 = vsub.f32 1.0, %v3815
  %v3845 = vsub.f32 1.0, %v3817
  %v3846 = vsub.f32 1.0, %v3819
  %3850 = vrot.lane.b32.xlu0 %v3841, 96
  %v3851 = vpop.permute.xlu0 %3850
  %3852 = vrot.lane.b32.xlu0 %v3842, 96
  %v3853 = vpop.permute.xlu0 %3852
  %3854 = vrot.lane.b32.xlu0 %v3843, 96
  %v3855 = vpop.permute.xlu0 %3854
  %v3859 = vmul.f32 %v3844, %v3851
  %v3860 = vmul.f32 %v3845, %v3853
  %v3861 = vmul.f32 %v3846, %v3855
  %v3862 = vmul.f32 %v3815, %v3188
  %v3863 = vmul.f32 %v3817, %v3189
  %v3864 = vmul.f32 %v3819, %v3190
  %v3865 = vadd.f32 %v3859, %v3862
  %v3866 = vadd.f32 %v3860, %v3863
  %v3867 = vadd.f32 %v3861, %v3864
  %3871 = vrot.lane.b32.xlu0 %v3865, 96
  %v3872 = vpop.permute.xlu0 %3871
  %3873 = vrot.lane.b32.xlu0 %v3866, 96
  %v3874 = vpop.permute.xlu0 %3873
  %3875 = vrot.lane.b32.xlu0 %v3867, 96
  %v3876 = vpop.permute.xlu0 %3875
  %v3880 = vsel %vm112, %v3872, 0.0
  %3881 = vadd.xlane.f32.xlu0 %v3880
  %v3882 = vpop.xlane.xlu0 %3881
  %v3883 = vsel %vm112, %v3874, 0.0
  %3884 = vadd.xlane.f32.xlu0 %v3883
  %v3885 = vpop.xlane.xlu0 %3884
  %v3886 = vsel %vm1061, %v3876, 0.0
  %3887 = vadd.xlane.f32.xlu0 %v3886
  %v3888 = vpop.xlane.xlu0 %3887
  %v3889 = vmul.f32 %v3882, %v209
  %v3890 = vmul.f32 %v3885, %v209
  %v3891 = vmul.f32 %v3888, %v209
  %v3892 = vsub.f32 %v3865, %v3889
  %v3893 = vsub.f32 %v3866, %v3890
  %v3894 = vsub.f32 %v3867, %v3891
  %v3895 = vmul.f32 %v3892, %v3892
  %v3896 = vmul.f32 %v3893, %v3893
  %v3897 = vmul.f32 %v3894, %v3894
  %3901 = vrot.lane.b32.xlu0 %v3895, 96
  %v3902 = vpop.permute.xlu0 %3901
  %3903 = vrot.lane.b32.xlu0 %v3896, 96
  %v3904 = vpop.permute.xlu0 %3903
  %3905 = vrot.lane.b32.xlu0 %v3897, 96
  %v3906 = vpop.permute.xlu0 %3905
  %v3910 = vsel %vm112, %v3902, 0.0
  %3911 = vadd.xlane.f32.xlu0 %v3910
  %v3912 = vpop.xlane.xlu0 %3911
  %v3913 = vsel %vm112, %v3904, 0.0
  %3914 = vadd.xlane.f32.xlu0 %v3913
  %v3915 = vpop.xlane.xlu0 %3914
  %v3916 = vsel %vm1061, %v3906, 0.0
  %3917 = vadd.xlane.f32.xlu0 %v3916
  %v3918 = vpop.xlane.xlu0 %3917
  %v3919 = vmul.f32 %v3912, %v209
  %v3920 = vmul.f32 %v3915, %v209
  %v3921 = vmul.f32 %v3918, %v209
  %v3922 = vadd.f32 %v3919, 1e-05
  %v3923 = vadd.f32 %v3920, 1e-05
  %v3924 = vadd.f32 %v3921, 1e-05
  %v3925 = vrsqrt.pop %v3922
  %v3926 = vrsqrt.pop %v3923
  %v3927 = vrsqrt.pop %v3924
  %v3928 = vmul.f32 %v3892, %v3925
  %v3929 = vmul.f32 %v3893, %v3926
  %v3930 = vmul.f32 %v3894, %v3927
  %v3931 = vmul.f32 %v3928, %v1998
  %v3932 = vmul.f32 %v3929, %v1998
  %v3933 = vmul.f32 %v3930, %v1998
  %v3934 = vadd.f32 %v3931, %v2009
  %v3935 = vadd.f32 %v3932, %v2009
  %v3936 = vadd.f32 %v3933, %v2009
  %3940 = vrot.lane.b32.xlu0 %v3934, 96
  %v3941 = vpop.permute.xlu0 %3940
  %3942 = vrot.lane.b32.xlu0 %v3935, 96
  %v3943 = vpop.permute.xlu0 %3942
  %3944 = vrot.lane.b32.xlu0 %v3936, 96
  %v3945 = vpop.permute.xlu0 %3944
  %v3946 = vsel %vm112, %v3941, 0
  %v3948 = vsel %vm112, %v3943, 0
  %v3950 = vsel %vm112, %v3945, 0
  %3952 = vmatprep.subr.mxu0 0.0
  %3953 = vmatpush1.msra.mxu0 %v36
  %3954 = vmatprep.subr.mxu0 0.0
  %3955 = vmatpush1.msra.mxu0 %v37
  %3956 = vmatprep.subr.mxu0 0.0
  %3957 = vmatpush1.msra.mxu0 %v38
  %3958 = vmatprep.subr.mxu0 0.0
  %3959 = vmatpush1.msra.mxu0 %v39
  %3960 = vmatprep.subr.mxu0 0.0
  %3961 = vmatpush1.msra.mxu0 0.0
  %3962 = vmatprep.subr.mxu0 0.0
  %3963 = vmatpush1.msra.mxu0 0.0
  %3964 = vmatprep.subr.mxu0 0.0
  %3965 = vmatpush1.msra.mxu0 0.0
  %3966 = vmatprep.subr.mxu0 0.0
  %3967 = vmatpush1.msra.mxu0 0.0
  %3968 = vmatprep.subr.mxu0 0.0
  %3969 = vmatpush1.msra.mxu0 0.0
  %3970 = vmatprep.subr.mxu0 0.0
  %3971 = vmatpush1.msra.mxu0 0.0
  %3972 = vmatprep.subr.mxu0 0.0
  %3973 = vmatpush1.msra.mxu0 0.0
  %3974 = vmatprep.subr.mxu0 0.0
  %3975 = vmatpush1.msra.mxu0 0.0
  %3976 = vmatprep.subr.mxu0 0.0
  %3977 = vmatpush1.msra.mxu0 0.0
  %3978 = vmatprep.subr.mxu0 0.0
  %3979 = vmatpush1.msra.mxu0 0.0
  %3980 = vmatprep.subr.mxu0 0.0
  %3981 = vmatpush1.msra.mxu0 0.0
  %3982 = vmatprep.subr.mxu0 0.0
  %3983 = vmatpush1.msra.mxu0 0.0
  %3984 = vmatprep.subr.mxu0 0.0
  %3985 = vmatpush1.msra.mxu0 0.0
  %3986 = vmatprep.subr.mxu0 0.0
  %3987 = vmatpush1.msra.mxu0 0.0
  %3988 = vmatprep.subr.mxu0 0.0
  %3989 = vmatpush1.msra.mxu0 0.0
  %3990 = vmatprep.subr.mxu0 0.0
  %3991 = vmatpush1.msra.mxu0 0.0
  %3992 = vmatprep.subr.mxu0 0.0
  %3993 = vmatpush1.msra.mxu0 0.0
  %3994 = vmatprep.subr.mxu0 0.0
  %3995 = vmatpush1.msra.mxu0 0.0
  %3996 = vmatprep.subr.mxu0 0.0
  %3997 = vmatpush1.msra.mxu0 0.0
  %3998 = vmatprep.subr.mxu0 0.0
  %3999 = vmatpush1.msra.mxu0 0.0
  %4000 = vmatprep.subr.mxu0 0.0
  %4001 = vmatpush1.msra.mxu0 0.0
  %4002 = vmatprep.subr.mxu0 0.0
  %4003 = vmatpush1.msra.mxu0 0.0
  %4004 = vmatprep.subr.mxu0 0.0
  %4005 = vmatpush1.msra.mxu0 0.0
  %4006 = vmatprep.subr.mxu0 0.0
  %4007 = vmatpush1.msra.mxu0 0.0
  %4008 = vmatprep.subr.mxu0 0.0
  %4009 = vmatpush1.msra.mxu0 0.0
  %4010 = vmatprep.subr.mxu0 0.0
  %4011 = vmatpush1.msra.mxu0 0.0
  %4012 = vmatprep.subr.mxu0 0.0
  %4013 = vmatpush1.msra.mxu0 0.0
  %4014 = vmatprep.subr.mxu0 0.0
  %4015 = vmatpush1.msra.mxu0 0.0
  %4016 = vmatprep.mubr.f32.mxu0 0.0
  %4017 = vmatmul.mubr.f32.gmra.mrb[0].mxu0 %v3946
  %v4018 = vpop.f32.mrb[0].mxu0
  %v4019 = vadd.f32 %v2017, %v4018
  %v4020 = vpop.f32.mrb[0].mxu0
  %4021 = vmatprep.mubr.f32.mxu0 0.0
  %4022 = vmatmul.mubr.f32.gmra.mrb[0].mxu0 %v3948
  %v4023 = vpop.f32.mrb[0].mxu0
  %v4024 = vadd.f32 %v2017, %v4023
  %v4025 = vpop.f32.mrb[0].mxu0
  %4026 = vmatprep.mubr.f32.mxu0 0.0
  %4027 = vmatmul.mubr.f32.gmra.mrb[0].mxu0 %v3950
  %v4028 = vpop.f32.mrb[0].mxu0
  %v4029 = vadd.f32 %v2017, %v4028
  %v4030 = vpop.f32.mrb[0].mxu0
  %4031 = vdwg.mxu0
  %v4032 = vmax.f32 %v4019, 0.0
  %v4033 = vmax.f32 %v4024, 0.0
  %v4034 = vmax.f32 %v4029, 0.0
  %v4036 = vsel %vm2116, %v4032, 0
  %v4039 = vsel %vm2116, %v4033, 0
  %v4042 = vsel %vm2116, %v4034, 0
  %4044 = vmatprep.subr.mxu0 0.0
  %4045 = vmatpush1.msra.mxu0 %v40
  %4046 = vmatprep.subr.mxu0 0.0
  %4047 = vmatpush1.msra.mxu0 %v41
  %4048 = vmatprep.subr.mxu0 0.0
  %4049 = vmatpush1.msra.mxu0 %v42
  %4050 = vmatprep.subr.mxu0 0.0
  %4051 = vmatpush1.msra.mxu0 %v43
  %4052 = vmatprep.subr.mxu0 0.0
  %4053 = vmatpush1.msra.mxu0 %v44
  %4054 = vmatprep.subr.mxu0 0.0
  %4055 = vmatpush1.msra.mxu0 %v45
  %4056 = vmatprep.subr.mxu0 0.0
  %4057 = vmatpush1.msra.mxu0 0.0
  %4058 = vmatprep.subr.mxu0 0.0
  %4059 = vmatpush1.msra.mxu0 0.0
  %4060 = vmatprep.subr.mxu0 0.0
  %4061 = vmatpush1.msra.mxu0 0.0
  %4062 = vmatprep.subr.mxu0 0.0
  %4063 = vmatpush1.msra.mxu0 0.0
  %4064 = vmatprep.subr.mxu0 0.0
  %4065 = vmatpush1.msra.mxu0 0.0
  %4066 = vmatprep.subr.mxu0 0.0
  %4067 = vmatpush1.msra.mxu0 0.0
  %4068 = vmatprep.subr.mxu0 0.0
  %4069 = vmatpush1.msra.mxu0 0.0
  %4070 = vmatprep.subr.mxu0 0.0
  %4071 = vmatpush1.msra.mxu0 0.0
  %4072 = vmatprep.subr.mxu0 0.0
  %4073 = vmatpush1.msra.mxu0 0.0
  %4074 = vmatprep.subr.mxu0 0.0
  %4075 = vmatpush1.msra.mxu0 0.0
  %4076 = vmatprep.subr.mxu0 0.0
  %4077 = vmatpush1.msra.mxu0 0.0
  %4078 = vmatprep.subr.mxu0 0.0
  %4079 = vmatpush1.msra.mxu0 0.0
  %4080 = vmatprep.subr.mxu0 0.0
  %4081 = vmatpush1.msra.mxu0 0.0
  %4082 = vmatprep.subr.mxu0 0.0
  %4083 = vmatpush1.msra.mxu0 0.0
  %4084 = vmatprep.subr.mxu0 0.0
  %4085 = vmatpush1.msra.mxu0 0.0
  %4086 = vmatprep.subr.mxu0 0.0
  %4087 = vmatpush1.msra.mxu0 0.0
  %4088 = vmatprep.subr.mxu0 0.0
  %4089 = vmatpush1.msra.mxu0 0.0
  %4090 = vmatprep.subr.mxu0 0.0
  %4091 = vmatpush1.msra.mxu0 0.0
  %4092 = vmatprep.subr.mxu0 0.0
  %4093 = vmatpush1.msra.mxu0 0.0
  %4094 = vmatprep.subr.mxu0 0.0
  %4095 = vmatpush1.msra.mxu0 0.0
  %4096 = vmatprep.subr.mxu0 0.0
  %4097 = vmatpush1.msra.mxu0 0.0
  %4098 = vmatprep.subr.mxu0 0.0
  %4099 = vmatpush1.msra.mxu0 0.0
  %4100 = vmatprep.subr.mxu0 0.0
  %4101 = vmatpush1.msra.mxu0 0.0
  %4102 = vmatprep.subr.mxu0 0.0
  %4103 = vmatpush1.msra.mxu0 0.0
  %4104 = vmatprep.subr.mxu0 0.0
  %4105 = vmatpush1.msra.mxu0 0.0
  %4106 = vmatprep.subr.mxu0 0.0
  %4107 = vmatpush1.msra.mxu0 0.0
  %4108 = vmatprep.mubr.f32.mxu0 0.0
  %4109 = vmatmul.mubr.f32.gmra.mrb[0].mxu0 %v4036
  %v4110 = vpop.f32.mrb[0].mxu0
  %v4111 = vadd.f32 0.0, %v4110
  %v4112 = vpop.f32.mrb[0].mxu0
  %4113 = vmatprep.mubr.f32.mxu0 0.0
  %4114 = vmatmul.mubr.f32.gmra.mrb[0].mxu0 %v4039
  %v4115 = vpop.f32.mrb[0].mxu0
  %v4116 = vadd.f32 0.0, %v4115
  %v4117 = vpop.f32.mrb[0].mxu0
  %4118 = vmatprep.mubr.f32.mxu0 0.0
  %4119 = vmatmul.mubr.f32.gmra.mrb[0].mxu0 %v4042
  %v4120 = vpop.f32.mrb[0].mxu0
  %v4121 = vadd.f32 0.0, %v4120
  %v4122 = vpop.f32.mrb[0].mxu0
  %4123 = vdwg.mxu0
  %4127 = vrot.lane.b32.xlu0 %v4111, 32
  %v4128 = vpop.permute.xlu0 %4127
  %4129 = vrot.lane.b32.xlu0 %v4116, 32
  %v4130 = vpop.permute.xlu0 %4129
  %4131 = vrot.lane.b32.xlu0 %v4121, 32
  %v4132 = vpop.permute.xlu0 %4131
  %v4136 = vadd.f32 %v3865, %v4128
  %v4137 = vadd.f32 %v3866, %v4130
  %v4138 = vadd.f32 %v3867, %v4132
  %v4139 = vadd.f32 %v4136, %v2227
  %v4140 = vadd.f32 %v4137, %v2227
  %v4141 = vadd.f32 %v4138, %v2227
  %vm4144 = vcmask 1042432
  %v4145 = vrot.slane %v3514, 5
  %v4146 = vrot.slane %v3517, 5
  %v4147 = vsel %vm4144, %v4145, %v4146
  %4148 = vrot.lane.b32.xlu0 %v4147, 64
  %v4149 = vpop.permute.xlu0 %4148
  %v4152 = vrot.slane %v3518, 2
  %vm4155 = vcmask 1040384
  %v4156 = vrot.slane %v3518, 7
  %v4157 = vrot.slane %v3520, 7
  %v4158 = vsel %vm4155, %v4156, %v4157
  %4159 = vrot.lane.b32.xlu0 %v4158, 64
  %v4160 = vpop.permute.xlu0 %4159
  %vm4162 = vcmask 520192
  %4163 = vst.msk [vmem:[%s3] sm:$0x1f] %vm4162, %v3514
  %4164 = vst.msk [vmem:[%s3 + $0x8] sm:$0x1f] %vm4162, %v4149
  %4165 = vst.msk [vmem:[%s3 + $0x10] sm:$0x1f] %vm4162, %v4152
  %4166 = vst.msk [vmem:[%s3 + $0x18] sm:$0x1f] %vm4162, %v4160
  %v4170 = vcombine.high %v4139, %v4139
  %v4172 = vunpack.c.l.s4 1966171168
  %v4173 = vunpack.c.0.s8 %v4172
  %v4174 = vlaneseq
  %v4175 = vshrl.u32 %v4174, 7
  %v4176 = vsub.s32 %v4173, %v4175
  %v4177 = vrot.slane %v4139, %v4176
  %v4179 = vunpack.c.l.s4 1966171168
  %v4180 = vunpack.c.0.s8 %v4179
  %v4181 = vlaneseq
  %v4182 = vshrl.u32 %v4181, 7
  %v4183 = vsub.s32 %v4180, %v4182
  %v4184 = vrot.slane %v4170, %v4183
  %v4185 = vcombine.high %v4177, %v4177
  %v4186 = vcombine.high %v4184, %v4184
  %v4188 = vunpack.c.l.s4 1966171168
  %v4189 = vunpack.c.0.s8 %v4188
  %v4190 = vlaneseq
  %v4191 = vshrl.u32 %v4190, 7
  %v4192 = vsub.s32 %v4189, %v4191
  %v4193 = vrot.slane %v4177, %v4192
  %v4195 = vunpack.c.l.s4 1966171168
  %v4196 = vunpack.c.0.s8 %v4195
  %v4197 = vlaneseq
  %v4198 = vshrl.u32 %v4197, 7
  %v4199 = vsub.s32 %v4196, %v4198
  %v4200 = vrot.slane %v4184, %v4199
  %v4202 = vunpack.c.l.s4 1966171168
  %v4203 = vunpack.c.0.s8 %v4202
  %v4204 = vlaneseq
  %v4205 = vshrl.u32 %v4204, 7
  %v4206 = vsub.s32 %v4203, %v4205
  %v4207 = vrot.slane %v4185, %v4206
  %v4209 = vunpack.c.l.s4 1966171168
  %v4210 = vunpack.c.0.s8 %v4209
  %v4211 = vlaneseq
  %v4212 = vshrl.u32 %v4211, 7
  %v4213 = vsub.s32 %v4210, %v4212
  %v4214 = vrot.slane %v4186, %v4213
  %v4215 = vcombine.high %v4193, %v4193
  %v4216 = vcombine.high %v4200, %v4200
  %v4217 = vcombine.high %v4207, %v4207
  %v4218 = vcombine.high %v4214, %v4214
  %v4219 = vcombine.high %v4140, %v4140
  %v4221 = vunpack.c.l.s4 1966171168
  %v4222 = vunpack.c.0.s8 %v4221
  %v4223 = vlaneseq
  %v4224 = vshrl.u32 %v4223, 7
  %v4225 = vsub.s32 %v4222, %v4224
  %v4226 = vrot.slane %v4140, %v4225
  %v4228 = vunpack.c.l.s4 1966171168
  %v4229 = vunpack.c.0.s8 %v4228
  %v4230 = vlaneseq
  %v4231 = vshrl.u32 %v4230, 7
  %v4232 = vsub.s32 %v4229, %v4231
  %v4233 = vrot.slane %v4219, %v4232
  %v4234 = vcombine.high %v4226, %v4226
  %v4235 = vcombine.high %v4233, %v4233
  %v4237 = vunpack.c.l.s4 1966171168
  %v4238 = vunpack.c.0.s8 %v4237
  %v4239 = vlaneseq
  %v4240 = vshrl.u32 %v4239, 7
  %v4241 = vsub.s32 %v4238, %v4240
  %v4242 = vrot.slane %v4226, %v4241
  %v4244 = vunpack.c.l.s4 1966171168
  %v4245 = vunpack.c.0.s8 %v4244
  %v4246 = vlaneseq
  %v4247 = vshrl.u32 %v4246, 7
  %v4248 = vsub.s32 %v4245, %v4247
  %v4249 = vrot.slane %v4233, %v4248
  %v4251 = vunpack.c.l.s4 1966171168
  %v4252 = vunpack.c.0.s8 %v4251
  %v4253 = vlaneseq
  %v4254 = vshrl.u32 %v4253, 7
  %v4255 = vsub.s32 %v4252, %v4254
  %v4256 = vrot.slane %v4234, %v4255
  %v4258 = vunpack.c.l.s4 1966171168
  %v4259 = vunpack.c.0.s8 %v4258
  %v4260 = vlaneseq
  %v4261 = vshrl.u32 %v4260, 7
  %v4262 = vsub.s32 %v4259, %v4261
  %v4263 = vrot.slane %v4235, %v4262
  %v4264 = vcombine.high %v4242, %v4242
  %v4265 = vcombine.high %v4249, %v4249
  %v4266 = vcombine.high %v4256, %v4256
  %v4267 = vcombine.high %v4263, %v4263
  %v4269 = vunpack.c.l.s4 1966171168
  %v4270 = vunpack.c.0.s8 %v4269
  %v4271 = vlaneseq
  %v4272 = vshrl.u32 %v4271, 7
  %v4273 = vsub.s32 %v4270, %v4272
  %v4274 = vrot.slane %v4141, %v4273
  %v4275 = vcombine.high %v4274, %v4274
  %v4277 = vunpack.c.l.s4 1966171168
  %v4278 = vunpack.c.0.s8 %v4277
  %v4279 = vlaneseq
  %v4280 = vshrl.u32 %v4279, 7
  %v4281 = vsub.s32 %v4278, %v4280
  %v4282 = vrot.slane %v4274, %v4281
  %v4284 = vunpack.c.l.s4 1966171168
  %v4285 = vunpack.c.0.s8 %v4284
  %v4286 = vlaneseq
  %v4287 = vshrl.u32 %v4286, 7
  %v4288 = vsub.s32 %v4285, %v4287
  %v4289 = vrot.slane %v4275, %v4288
  %v4290 = vcombine.high %v4282, %v4282
  %v4291 = vcombine.high %v4289, %v4289
  %v4292 = vlaneseq
  %v4293 = vshrl.u32 %v4292, 7
  %v4294 = vsub.s32 0, %v4293
  %v4295 = vrot.slane %v4193, %v4294
  %v4296 = vlaneseq
  %v4297 = vshrl.u32 %v4296, 7
  %v4298 = vsub.s32 0, %v4297
  %v4299 = vrot.slane %v4207, %v4298
  %v4300 = vlaneseq
  %v4301 = vshrl.u32 %v4300, 7
  %v4302 = vsub.s32 0, %v4301
  %v4303 = vrot.slane %v4215, %v4302
  %v4304 = vlaneseq
  %v4305 = vshrl.u32 %v4304, 7
  %v4306 = vsub.s32 0, %v4305
  %v4307 = vrot.slane %v4217, %v4306
  %v4308 = vlaneseq
  %v4309 = vshrl.u32 %v4308, 7
  %v4310 = vsub.s32 0, %v4309
  %v4311 = vrot.slane %v4200, %v4310
  %v4312 = vlaneseq
  %v4313 = vshrl.u32 %v4312, 7
  %v4314 = vsub.s32 0, %v4313
  %v4315 = vrot.slane %v4214, %v4314
  %v4316 = vlaneseq
  %v4317 = vshrl.u32 %v4316, 7
  %v4318 = vsub.s32 0, %v4317
  %v4319 = vrot.slane %v4216, %v4318
  %v4320 = vlaneseq
  %v4321 = vshrl.u32 %v4320, 7
  %v4322 = vsub.s32 0, %v4321
  %v4323 = vrot.slane %v4218, %v4322
  %v4324 = vlaneseq
  %v4325 = vshrl.u32 %v4324, 7
  %v4326 = vsub.s32 0, %v4325
  %v4327 = vrot.slane %v4242, %v4326
  %v4328 = vlaneseq
  %v4329 = vshrl.u32 %v4328, 7
  %v4330 = vsub.s32 0, %v4329
  %v4331 = vrot.slane %v4256, %v4330
  %v4332 = vlaneseq
  %v4333 = vshrl.u32 %v4332, 7
  %v4334 = vsub.s32 0, %v4333
  %v4335 = vrot.slane %v4264, %v4334
  %v4336 = vlaneseq
  %v4337 = vshrl.u32 %v4336, 7
  %v4338 = vsub.s32 0, %v4337
  %v4339 = vrot.slane %v4266, %v4338
  %v4340 = vlaneseq
  %v4341 = vshrl.u32 %v4340, 7
  %v4342 = vsub.s32 0, %v4341
  %v4343 = vrot.slane %v4249, %v4342
  %v4344 = vlaneseq
  %v4345 = vshrl.u32 %v4344, 7
  %v4346 = vsub.s32 0, %v4345
  %v4347 = vrot.slane %v4263, %v4346
  %v4348 = vlaneseq
  %v4349 = vshrl.u32 %v4348, 7
  %v4350 = vsub.s32 0, %v4349
  %v4351 = vrot.slane %v4265, %v4350
  %v4352 = vlaneseq
  %v4353 = vshrl.u32 %v4352, 7
  %v4354 = vsub.s32 0, %v4353
  %v4355 = vrot.slane %v4267, %v4354
  %v4356 = vlaneseq
  %v4357 = vshrl.u32 %v4356, 7
  %v4358 = vsub.s32 0, %v4357
  %v4359 = vrot.slane %v4282, %v4358
  %v4360 = vlaneseq
  %v4361 = vshrl.u32 %v4360, 7
  %v4362 = vsub.s32 0, %v4361
  %v4363 = vrot.slane %v4289, %v4362
  %v4364 = vlaneseq
  %v4365 = vshrl.u32 %v4364, 7
  %v4366 = vsub.s32 0, %v4365
  %v4367 = vrot.slane %v4290, %v4366
  %v4368 = vlaneseq
  %v4369 = vshrl.u32 %v4368, 7
  %v4370 = vsub.s32 0, %v4369
  %v4371 = vrot.slane %v4291, %v4370
  %4400 = vrot.lane.b32.xlu0 %v56, 32
  %v4401 = vpop.permute.xlu0 %4400
  %4402 = vrot.lane.b32.xlu0 %v57, 32
  %v4403 = vpop.permute.xlu0 %4402
  %4404 = vrot.lane.b32.xlu0 %v58, 32
  %v4405 = vpop.permute.xlu0 %4404
  %4406 = vrot.lane.b32.xlu0 %v59, 32
  %v4407 = vpop.permute.xlu0 %4406
  %4408 = vrot.lane.b32.xlu0 %v60, 32
  %v4409 = vpop.permute.xlu0 %4408
  %4410 = vrot.lane.b32.xlu0 %v61, 32
  %v4411 = vpop.permute.xlu0 %4410
  %4412 = vrot.lane.b32.xlu0 %v62, 32
  %v4413 = vpop.permute.xlu0 %4412
  %4414 = vrot.lane.b32.xlu0 %v63, 32
  %v4415 = vpop.permute.xlu0 %4414
  %v4424 = vadd.f32 %v4295, %v4401
  %v4425 = vadd.f32 %v4295, %v4403
  %v4426 = vadd.f32 %v4295, %v4405
  %v4427 = vadd.f32 %v4295, %v4407
  %v4428 = vadd.f32 %v4295, %v4409
  %v4429 = vadd.f32 %v4295, %v4411
  %v4430 = vadd.f32 %v4295, %v4413
  %v4431 = vadd.f32 %v4295, %v4415
  %v4432 = vadd.f32 %v4299, %v4401
  %v4433 = vadd.f32 %v4299, %v4403
  %v4434 = vadd.f32 %v4299, %v4405
  %v4435 = vadd.f32 %v4299, %v4407
  %v4436 = vadd.f32 %v4299, %v4409
  %v4437 = vadd.f32 %v4299, %v4411
  %v4438 = vadd.f32 %v4299, %v4413
  %v4439 = vadd.f32 %v4299, %v4415
  %v4440 = vadd.f32 %v4303, %v4401
  %v4441 = vadd.f32 %v4303, %v4403
  %v4442 = vadd.f32 %v4303, %v4405
  %v4443 = vadd.f32 %v4303, %v4407
  %v4444 = vadd.f32 %v4303, %v4409
  %v4445 = vadd.f32 %v4303, %v4411
  %v4446 = vadd.f32 %v4303, %v4413
  %v4447 = vadd.f32 %v4303, %v4415
  %v4448 = vadd.f32 %v4307, %v4401
  %v4449 = vadd.f32 %v4307, %v4403
  %v4450 = vadd.f32 %v4307, %v4405
  %v4451 = vadd.f32 %v4307, %v4407
  %v4452 = vadd.f32 %v4307, %v4409
  %v4453 = vadd.f32 %v4307, %v4411
  %v4454 = vadd.f32 %v4307, %v4413
  %v4455 = vadd.f32 %v4307, %v4415
  %v4456 = vadd.f32 %v4311, %v4401
  %v4457 = vadd.f32 %v4311, %v4403
  %v4458 = vadd.f32 %v4311, %v4405
  %v4459 = vadd.f32 %v4311, %v4407
  %v4460 = vadd.f32 %v4311, %v4409
  %v4461 = vadd.f32 %v4311, %v4411
  %v4462 = vadd.f32 %v4311, %v4413
  %v4463 = vadd.f32 %v4311, %v4415
  %v4464 = vadd.f32 %v4315, %v4401
  %v4465 = vadd.f32 %v4315, %v4403
  %v4466 = vadd.f32 %v4315, %v4405
  %v4467 = vadd.f32 %v4315, %v4407
  %v4468 = vadd.f32 %v4315, %v4409
  %v4469 = vadd.f32 %v4315, %v4411
  %v4470 = vadd.f32 %v4315, %v4413
  %v4471 = vadd.f32 %v4315, %v4415
  %v4472 = vadd.f32 %v4319, %v4401
  %v4473 = vadd.f32 %v4319, %v4403
  %v4474 = vadd.f32 %v4319, %v4405
  %v4475 = vadd.f32 %v4319, %v4407
  %v4476 = vadd.f32 %v4319, %v4409
  %v4477 = vadd.f32 %v4319, %v4411
  %v4478 = vadd.f32 %v4319, %v4413
  %v4479 = vadd.f32 %v4319, %v4415
  %v4480 = vadd.f32 %v4323, %v4401
  %v4481 = vadd.f32 %v4323, %v4403
  %v4482 = vadd.f32 %v4323, %v4405
  %v4483 = vadd.f32 %v4323, %v4407
  %v4484 = vadd.f32 %v4323, %v4409
  %v4485 = vadd.f32 %v4323, %v4411
  %v4486 = vadd.f32 %v4323, %v4413
  %v4487 = vadd.f32 %v4323, %v4415
  %v4488 = vadd.f32 %v4327, %v4401
  %v4489 = vadd.f32 %v4327, %v4403
  %v4490 = vadd.f32 %v4327, %v4405
  %v4491 = vadd.f32 %v4327, %v4407
  %v4492 = vadd.f32 %v4327, %v4409
  %v4493 = vadd.f32 %v4327, %v4411
  %v4494 = vadd.f32 %v4327, %v4413
  %v4495 = vadd.f32 %v4327, %v4415
  %v4496 = vadd.f32 %v4331, %v4401
  %v4497 = vadd.f32 %v4331, %v4403
  %v4498 = vadd.f32 %v4331, %v4405
  %v4499 = vadd.f32 %v4331, %v4407
  %v4500 = vadd.f32 %v4331, %v4409
  %v4501 = vadd.f32 %v4331, %v4411
  %v4502 = vadd.f32 %v4331, %v4413
  %v4503 = vadd.f32 %v4331, %v4415
  %v4504 = vadd.f32 %v4335, %v4401
  %v4505 = vadd.f32 %v4335, %v4403
  %v4506 = vadd.f32 %v4335, %v4405
  %v4507 = vadd.f32 %v4335, %v4407
  %v4508 = vadd.f32 %v4335, %v4409
  %v4509 = vadd.f32 %v4335, %v4411
  %v4510 = vadd.f32 %v4335, %v4413
  %v4511 = vadd.f32 %v4335, %v4415
  %v4512 = vadd.f32 %v4339, %v4401
  %v4513 = vadd.f32 %v4339, %v4403
  %v4514 = vadd.f32 %v4339, %v4405
  %v4515 = vadd.f32 %v4339, %v4407
  %v4516 = vadd.f32 %v4339, %v4409
  %v4517 = vadd.f32 %v4339, %v4411
  %v4518 = vadd.f32 %v4339, %v4413
  %v4519 = vadd.f32 %v4339, %v4415
  %v4520 = vadd.f32 %v4343, %v4401
  %v4521 = vadd.f32 %v4343, %v4403
  %v4522 = vadd.f32 %v4343, %v4405
  %v4523 = vadd.f32 %v4343, %v4407
  %v4524 = vadd.f32 %v4343, %v4409
  %v4525 = vadd.f32 %v4343, %v4411
  %v4526 = vadd.f32 %v4343, %v4413
  %v4527 = vadd.f32 %v4343, %v4415
  %v4528 = vadd.f32 %v4347, %v4401
  %v4529 = vadd.f32 %v4347, %v4403
  %v4530 = vadd.f32 %v4347, %v4405
  %v4531 = vadd.f32 %v4347, %v4407
  %v4532 = vadd.f32 %v4347, %v4409
  %v4533 = vadd.f32 %v4347, %v4411
  %v4534 = vadd.f32 %v4347, %v4413
  %v4535 = vadd.f32 %v4347, %v4415
  %v4536 = vadd.f32 %v4351, %v4401
  %v4537 = vadd.f32 %v4351, %v4403
  %v4538 = vadd.f32 %v4351, %v4405
  %v4539 = vadd.f32 %v4351, %v4407
  %v4540 = vadd.f32 %v4351, %v4409
  %v4541 = vadd.f32 %v4351, %v4411
  %v4542 = vadd.f32 %v4351, %v4413
  %v4543 = vadd.f32 %v4351, %v4415
  %v4544 = vadd.f32 %v4355, %v4401
  %v4545 = vadd.f32 %v4355, %v4403
  %v4546 = vadd.f32 %v4355, %v4405
  %v4547 = vadd.f32 %v4355, %v4407
  %v4548 = vadd.f32 %v4355, %v4409
  %v4549 = vadd.f32 %v4355, %v4411
  %v4550 = vadd.f32 %v4355, %v4413
  %v4551 = vadd.f32 %v4355, %v4415
  %v4552 = vadd.f32 %v4359, %v4401
  %v4553 = vadd.f32 %v4359, %v4403
  %v4554 = vadd.f32 %v4359, %v4405
  %v4555 = vadd.f32 %v4359, %v4407
  %v4556 = vadd.f32 %v4359, %v4409
  %v4557 = vadd.f32 %v4359, %v4411
  %v4558 = vadd.f32 %v4359, %v4413
  %v4559 = vadd.f32 %v4359, %v4415
  %v4560 = vadd.f32 %v4363, %v4401
  %v4561 = vadd.f32 %v4363, %v4403
  %v4562 = vadd.f32 %v4363, %v4405
  %v4563 = vadd.f32 %v4363, %v4407
  %v4564 = vadd.f32 %v4363, %v4409
  %v4565 = vadd.f32 %v4363, %v4411
  %v4566 = vadd.f32 %v4363, %v4413
  %v4567 = vadd.f32 %v4363, %v4415
  %v4568 = vadd.f32 %v4367, %v4401
  %v4569 = vadd.f32 %v4367, %v4403
  %v4570 = vadd.f32 %v4367, %v4405
  %v4571 = vadd.f32 %v4367, %v4407
  %v4572 = vadd.f32 %v4367, %v4409
  %v4573 = vadd.f32 %v4367, %v4411
  %v4574 = vadd.f32 %v4367, %v4413
  %v4575 = vadd.f32 %v4367, %v4415
  %v4576 = vadd.f32 %v4371, %v4401
  %v4577 = vadd.f32 %v4371, %v4403
  %v4578 = vadd.f32 %v4371, %v4405
  %v4579 = vadd.f32 %v4371, %v4407
  %v4580 = vadd.f32 %v4371, %v4409
  %v4581 = vadd.f32 %v4371, %v4411
  %v4582 = vadd.f32 %v4371, %v4413
  %v4583 = vadd.f32 %v4371, %v4415
  %v4584 = vlaneseq
  %v4585 = vshrl.u32 %v4584, 7
  %v4586 = vsub.s32 0, %v4585
  %v4587 = vrot.slane %v76, %v4586
  %4748 = vrot.lane.b32.xlu0 %v4424, 96
  %v4749 = vpop.permute.xlu0 %4748
  %4750 = vrot.lane.b32.xlu0 %v4425, 96
  %v4751 = vpop.permute.xlu0 %4750
  %4752 = vrot.lane.b32.xlu0 %v4426, 96
  %v4753 = vpop.permute.xlu0 %4752
  %4754 = vrot.lane.b32.xlu0 %v4427, 96
  %v4755 = vpop.permute.xlu0 %4754
  %4756 = vrot.lane.b32.xlu0 %v4428, 96
  %v4757 = vpop.permute.xlu0 %4756
  %4758 = vrot.lane.b32.xlu0 %v4429, 96
  %v4759 = vpop.permute.xlu0 %4758
  %4760 = vrot.lane.b32.xlu0 %v4430, 96
  %v4761 = vpop.permute.xlu0 %4760
  %4762 = vrot.lane.b32.xlu0 %v4431, 96
  %v4763 = vpop.permute.xlu0 %4762
  %4764 = vrot.lane.b32.xlu0 %v4432, 96
  %v4765 = vpop.permute.xlu0 %4764
  %4766 = vrot.lane.b32.xlu0 %v4433, 96
  %v4767 = vpop.permute.xlu0 %4766
  %4768 = vrot.lane.b32.xlu0 %v4434, 96
  %v4769 = vpop.permute.xlu0 %4768
  %4770 = vrot.lane.b32.xlu0 %v4435, 96
  %v4771 = vpop.permute.xlu0 %4770
  %4772 = vrot.lane.b32.xlu0 %v4436, 96
  %v4773 = vpop.permute.xlu0 %4772
  %4774 = vrot.lane.b32.xlu0 %v4437, 96
  %v4775 = vpop.permute.xlu0 %4774
  %4776 = vrot.lane.b32.xlu0 %v4438, 96
  %v4777 = vpop.permute.xlu0 %4776
  %4778 = vrot.lane.b32.xlu0 %v4439, 96
  %v4779 = vpop.permute.xlu0 %4778
  %4780 = vrot.lane.b32.xlu0 %v4440, 96
  %v4781 = vpop.permute.xlu0 %4780
  %4782 = vrot.lane.b32.xlu0 %v4441, 96
  %v4783 = vpop.permute.xlu0 %4782
  %4784 = vrot.lane.b32.xlu0 %v4442, 96
  %v4785 = vpop.permute.xlu0 %4784
  %4786 = vrot.lane.b32.xlu0 %v4443, 96
  %v4787 = vpop.permute.xlu0 %4786
  %4788 = vrot.lane.b32.xlu0 %v4444, 96
  %v4789 = vpop.permute.xlu0 %4788
  %4790 = vrot.lane.b32.xlu0 %v4445, 96
  %v4791 = vpop.permute.xlu0 %4790
  %4792 = vrot.lane.b32.xlu0 %v4446, 96
  %v4793 = vpop.permute.xlu0 %4792
  %4794 = vrot.lane.b32.xlu0 %v4447, 96
  %v4795 = vpop.permute.xlu0 %4794
  %4796 = vrot.lane.b32.xlu0 %v4448, 96
  %v4797 = vpop.permute.xlu0 %4796
  %4798 = vrot.lane.b32.xlu0 %v4449, 96
  %v4799 = vpop.permute.xlu0 %4798
  %4800 = vrot.lane.b32.xlu0 %v4450, 96
  %v4801 = vpop.permute.xlu0 %4800
  %4802 = vrot.lane.b32.xlu0 %v4451, 96
  %v4803 = vpop.permute.xlu0 %4802
  %4804 = vrot.lane.b32.xlu0 %v4452, 96
  %v4805 = vpop.permute.xlu0 %4804
  %4806 = vrot.lane.b32.xlu0 %v4453, 96
  %v4807 = vpop.permute.xlu0 %4806
  %4808 = vrot.lane.b32.xlu0 %v4454, 96
  %v4809 = vpop.permute.xlu0 %4808
  %4810 = vrot.lane.b32.xlu0 %v4455, 96
  %v4811 = vpop.permute.xlu0 %4810
  %4812 = vrot.lane.b32.xlu0 %v4456, 96
  %v4813 = vpop.permute.xlu0 %4812
  %4814 = vrot.lane.b32.xlu0 %v4457, 96
  %v4815 = vpop.permute.xlu0 %4814
  %4816 = vrot.lane.b32.xlu0 %v4458, 96
  %v4817 = vpop.permute.xlu0 %4816
  %4818 = vrot.lane.b32.xlu0 %v4459, 96
  %v4819 = vpop.permute.xlu0 %4818
  %4820 = vrot.lane.b32.xlu0 %v4460, 96
  %v4821 = vpop.permute.xlu0 %4820
  %4822 = vrot.lane.b32.xlu0 %v4461, 96
  %v4823 = vpop.permute.xlu0 %4822
  %4824 = vrot.lane.b32.xlu0 %v4462, 96
  %v4825 = vpop.permute.xlu0 %4824
  %4826 = vrot.lane.b32.xlu0 %v4463, 96
  %v4827 = vpop.permute.xlu0 %4826
  %4828 = vrot.lane.b32.xlu0 %v4464, 96
  %v4829 = vpop.permute.xlu0 %4828
  %4830 = vrot.lane.b32.xlu0 %v4465, 96
  %v4831 = vpop.permute.xlu0 %4830
  %4832 = vrot.lane.b32.xlu0 %v4466, 96
  %v4833 = vpop.permute.xlu0 %4832
  %4834 = vrot.lane.b32.xlu0 %v4467, 96
  %v4835 = vpop.permute.xlu0 %4834
  %4836 = vrot.lane.b32.xlu0 %v4468, 96
  %v4837 = vpop.permute.xlu0 %4836
  %4838 = vrot.lane.b32.xlu0 %v4469, 96
  %v4839 = vpop.permute.xlu0 %4838
  %4840 = vrot.lane.b32.xlu0 %v4470, 96
  %v4841 = vpop.permute.xlu0 %4840
  %4842 = vrot.lane.b32.xlu0 %v4471, 96
  %v4843 = vpop.permute.xlu0 %4842
  %4844 = vrot.lane.b32.xlu0 %v4472, 96
  %v4845 = vpop.permute.xlu0 %4844
  %4846 = vrot.lane.b32.xlu0 %v4473, 96
  %v4847 = vpop.permute.xlu0 %4846
  %4848 = vrot.lane.b32.xlu0 %v4474, 96
  %v4849 = vpop.permute.xlu0 %4848
  %4850 = vrot.lane.b32.xlu0 %v4475, 96
  %v4851 = vpop.permute.xlu0 %4850
  %4852 = vrot.lane.b32.xlu0 %v4476, 96
  %v4853 = vpop.permute.xlu0 %4852
  %4854 = vrot.lane.b32.xlu0 %v4477, 96
  %v4855 = vpop.permute.xlu0 %4854
  %4856 = vrot.lane.b32.xlu0 %v4478, 96
  %v4857 = vpop.permute.xlu0 %4856
  %4858 = vrot.lane.b32.xlu0 %v4479, 96
  %v4859 = vpop.permute.xlu0 %4858
  %4860 = vrot.lane.b32.xlu0 %v4480, 96
  %v4861 = vpop.permute.xlu0 %4860
  %4862 = vrot.lane.b32.xlu0 %v4481, 96
  %v4863 = vpop.permute.xlu0 %4862
  %4864 = vrot.lane.b32.xlu0 %v4482, 96
  %v4865 = vpop.permute.xlu0 %4864
  %4866 = vrot.lane.b32.xlu0 %v4483, 96
  %v4867 = vpop.permute.xlu0 %4866
  %4868 = vrot.lane.b32.xlu0 %v4484, 96
  %v4869 = vpop.permute.xlu0 %4868
  %4870 = vrot.lane.b32.xlu0 %v4485, 96
  %v4871 = vpop.permute.xlu0 %4870
  %4872 = vrot.lane.b32.xlu0 %v4486, 96
  %v4873 = vpop.permute.xlu0 %4872
  %4874 = vrot.lane.b32.xlu0 %v4487, 96
  %v4875 = vpop.permute.xlu0 %4874
  %4876 = vrot.lane.b32.xlu0 %v4488, 96
  %v4877 = vpop.permute.xlu0 %4876
  %4878 = vrot.lane.b32.xlu0 %v4489, 96
  %v4879 = vpop.permute.xlu0 %4878
  %4880 = vrot.lane.b32.xlu0 %v4490, 96
  %v4881 = vpop.permute.xlu0 %4880
  %4882 = vrot.lane.b32.xlu0 %v4491, 96
  %v4883 = vpop.permute.xlu0 %4882
  %4884 = vrot.lane.b32.xlu0 %v4492, 96
  %v4885 = vpop.permute.xlu0 %4884
  %4886 = vrot.lane.b32.xlu0 %v4493, 96
  %v4887 = vpop.permute.xlu0 %4886
  %4888 = vrot.lane.b32.xlu0 %v4494, 96
  %v4889 = vpop.permute.xlu0 %4888
  %4890 = vrot.lane.b32.xlu0 %v4495, 96
  %v4891 = vpop.permute.xlu0 %4890
  %4892 = vrot.lane.b32.xlu0 %v4496, 96
  %v4893 = vpop.permute.xlu0 %4892
  %4894 = vrot.lane.b32.xlu0 %v4497, 96
  %v4895 = vpop.permute.xlu0 %4894
  %4896 = vrot.lane.b32.xlu0 %v4498, 96
  %v4897 = vpop.permute.xlu0 %4896
  %4898 = vrot.lane.b32.xlu0 %v4499, 96
  %v4899 = vpop.permute.xlu0 %4898
  %4900 = vrot.lane.b32.xlu0 %v4500, 96
  %v4901 = vpop.permute.xlu0 %4900
  %4902 = vrot.lane.b32.xlu0 %v4501, 96
  %v4903 = vpop.permute.xlu0 %4902
  %4904 = vrot.lane.b32.xlu0 %v4502, 96
  %v4905 = vpop.permute.xlu0 %4904
  %4906 = vrot.lane.b32.xlu0 %v4503, 96
  %v4907 = vpop.permute.xlu0 %4906
  %4908 = vrot.lane.b32.xlu0 %v4504, 96
  %v4909 = vpop.permute.xlu0 %4908
  %4910 = vrot.lane.b32.xlu0 %v4505, 96
  %v4911 = vpop.permute.xlu0 %4910
  %4912 = vrot.lane.b32.xlu0 %v4506, 96
  %v4913 = vpop.permute.xlu0 %4912
  %4914 = vrot.lane.b32.xlu0 %v4507, 96
  %v4915 = vpop.permute.xlu0 %4914
  %4916 = vrot.lane.b32.xlu0 %v4508, 96
  %v4917 = vpop.permute.xlu0 %4916
  %4918 = vrot.lane.b32.xlu0 %v4509, 96
  %v4919 = vpop.permute.xlu0 %4918
  %4920 = vrot.lane.b32.xlu0 %v4510, 96
  %v4921 = vpop.permute.xlu0 %4920
  %4922 = vrot.lane.b32.xlu0 %v4511, 96
  %v4923 = vpop.permute.xlu0 %4922
  %4924 = vrot.lane.b32.xlu0 %v4512, 96
  %v4925 = vpop.permute.xlu0 %4924
  %4926 = vrot.lane.b32.xlu0 %v4513, 96
  %v4927 = vpop.permute.xlu0 %4926
  %4928 = vrot.lane.b32.xlu0 %v4514, 96
  %v4929 = vpop.permute.xlu0 %4928
  %4930 = vrot.lane.b32.xlu0 %v4515, 96
  %v4931 = vpop.permute.xlu0 %4930
  %4932 = vrot.lane.b32.xlu0 %v4516, 96
  %v4933 = vpop.permute.xlu0 %4932
  %4934 = vrot.lane.b32.xlu0 %v4517, 96
  %v4935 = vpop.permute.xlu0 %4934
  %4936 = vrot.lane.b32.xlu0 %v4518, 96
  %v4937 = vpop.permute.xlu0 %4936
  %4938 = vrot.lane.b32.xlu0 %v4519, 96
  %v4939 = vpop.permute.xlu0 %4938
  %4940 = vrot.lane.b32.xlu0 %v4520, 96
  %v4941 = vpop.permute.xlu0 %4940
  %4942 = vrot.lane.b32.xlu0 %v4521, 96
  %v4943 = vpop.permute.xlu0 %4942
  %4944 = vrot.lane.b32.xlu0 %v4522, 96
  %v4945 = vpop.permute.xlu0 %4944
  %4946 = vrot.lane.b32.xlu0 %v4523, 96
  %v4947 = vpop.permute.xlu0 %4946
  %4948 = vrot.lane.b32.xlu0 %v4524, 96
  %v4949 = vpop.permute.xlu0 %4948
  %4950 = vrot.lane.b32.xlu0 %v4525, 96
  %v4951 = vpop.permute.xlu0 %4950
  %4952 = vrot.lane.b32.xlu0 %v4526, 96
  %v4953 = vpop.permute.xlu0 %4952
  %4954 = vrot.lane.b32.xlu0 %v4527, 96
  %v4955 = vpop.permute.xlu0 %4954
  %4956 = vrot.lane.b32.xlu0 %v4528, 96
  %v4957 = vpop.permute.xlu0 %4956
  %4958 = vrot.lane.b32.xlu0 %v4529, 96
  %v4959 = vpop.permute.xlu0 %4958
  %4960 = vrot.lane.b32.xlu0 %v4530, 96
  %v4961 = vpop.permute.xlu0 %4960
  %4962 = vrot.lane.b32.xlu0 %v4531, 96
  %v4963 = vpop.permute.xlu0 %4962
  %4964 = vrot.lane.b32.xlu0 %v4532, 96
  %v4965 = vpop.permute.xlu0 %4964
  %4966 = vrot.lane.b32.xlu0 %v4533, 96
  %v4967 = vpop.permute.xlu0 %4966
  %4968 = vrot.lane.b32.xlu0 %v4534, 96
  %v4969 = vpop.permute.xlu0 %4968
  %4970 = vrot.lane.b32.xlu0 %v4535, 96
  %v4971 = vpop.permute.xlu0 %4970
  %4972 = vrot.lane.b32.xlu0 %v4536, 96
  %v4973 = vpop.permute.xlu0 %4972
  %4974 = vrot.lane.b32.xlu0 %v4537, 96
  %v4975 = vpop.permute.xlu0 %4974
  %4976 = vrot.lane.b32.xlu0 %v4538, 96
  %v4977 = vpop.permute.xlu0 %4976
  %4978 = vrot.lane.b32.xlu0 %v4539, 96
  %v4979 = vpop.permute.xlu0 %4978
  %4980 = vrot.lane.b32.xlu0 %v4540, 96
  %v4981 = vpop.permute.xlu0 %4980
  %4982 = vrot.lane.b32.xlu0 %v4541, 96
  %v4983 = vpop.permute.xlu0 %4982
  %4984 = vrot.lane.b32.xlu0 %v4542, 96
  %v4985 = vpop.permute.xlu0 %4984
  %4986 = vrot.lane.b32.xlu0 %v4543, 96
  %v4987 = vpop.permute.xlu0 %4986
  %4988 = vrot.lane.b32.xlu0 %v4544, 96
  %v4989 = vpop.permute.xlu0 %4988
  %4990 = vrot.lane.b32.xlu0 %v4545, 96
  %v4991 = vpop.permute.xlu0 %4990
  %4992 = vrot.lane.b32.xlu0 %v4546, 96
  %v4993 = vpop.permute.xlu0 %4992
  %4994 = vrot.lane.b32.xlu0 %v4547, 96
  %v4995 = vpop.permute.xlu0 %4994
  %4996 = vrot.lane.b32.xlu0 %v4548, 96
  %v4997 = vpop.permute.xlu0 %4996
  %4998 = vrot.lane.b32.xlu0 %v4549, 96
  %v4999 = vpop.permute.xlu0 %4998
  %5000 = vrot.lane.b32.xlu0 %v4550, 96
  %v5001 = vpop.permute.xlu0 %5000
  %5002 = vrot.lane.b32.xlu0 %v4551, 96
  %v5003 = vpop.permute.xlu0 %5002
  %5004 = vrot.lane.b32.xlu0 %v4552, 96
  %v5005 = vpop.permute.xlu0 %5004
  %5006 = vrot.lane.b32.xlu0 %v4553, 96
  %v5007 = vpop.permute.xlu0 %5006
  %5008 = vrot.lane.b32.xlu0 %v4554, 96
  %v5009 = vpop.permute.xlu0 %5008
  %5010 = vrot.lane.b32.xlu0 %v4555, 96
  %v5011 = vpop.permute.xlu0 %5010
  %5012 = vrot.lane.b32.xlu0 %v4556, 96
  %v5013 = vpop.permute.xlu0 %5012
  %5014 = vrot.lane.b32.xlu0 %v4557, 96
  %v5015 = vpop.permute.xlu0 %5014
  %5016 = vrot.lane.b32.xlu0 %v4558, 96
  %v5017 = vpop.permute.xlu0 %5016
  %5018 = vrot.lane.b32.xlu0 %v4559, 96
  %v5019 = vpop.permute.xlu0 %5018
  %5020 = vrot.lane.b32.xlu0 %v4560, 96
  %v5021 = vpop.permute.xlu0 %5020
  %5022 = vrot.lane.b32.xlu0 %v4561, 96
  %v5023 = vpop.permute.xlu0 %5022
  %5024 = vrot.lane.b32.xlu0 %v4562, 96
  %v5025 = vpop.permute.xlu0 %5024
  %5026 = vrot.lane.b32.xlu0 %v4563, 96
  %v5027 = vpop.permute.xlu0 %5026
  %5028 = vrot.lane.b32.xlu0 %v4564, 96
  %v5029 = vpop.permute.xlu0 %5028
  %5030 = vrot.lane.b32.xlu0 %v4565, 96
  %v5031 = vpop.permute.xlu0 %5030
  %5032 = vrot.lane.b32.xlu0 %v4566, 96
  %v5033 = vpop.permute.xlu0 %5032
  %5034 = vrot.lane.b32.xlu0 %v4567, 96
  %v5035 = vpop.permute.xlu0 %5034
  %5036 = vrot.lane.b32.xlu0 %v4568, 96
  %v5037 = vpop.permute.xlu0 %5036
  %5038 = vrot.lane.b32.xlu0 %v4569, 96
  %v5039 = vpop.permute.xlu0 %5038
  %5040 = vrot.lane.b32.xlu0 %v4570, 96
  %v5041 = vpop.permute.xlu0 %5040
  %5042 = vrot.lane.b32.xlu0 %v4571, 96
  %v5043 = vpop.permute.xlu0 %5042
  %5044 = vrot.lane.b32.xlu0 %v4572, 96
  %v5045 = vpop.permute.xlu0 %5044
  %5046 = vrot.lane.b32.xlu0 %v4573, 96
  %v5047 = vpop.permute.xlu0 %5046
  %5048 = vrot.lane.b32.xlu0 %v4574, 96
  %v5049 = vpop.permute.xlu0 %5048
  %5050 = vrot.lane.b32.xlu0 %v4575, 96
  %v5051 = vpop.permute.xlu0 %5050
  %5052 = vrot.lane.b32.xlu0 %v4576, 96
  %v5053 = vpop.permute.xlu0 %5052
  %5054 = vrot.lane.b32.xlu0 %v4577, 96
  %v5055 = vpop.permute.xlu0 %5054
  %5056 = vrot.lane.b32.xlu0 %v4578, 96
  %v5057 = vpop.permute.xlu0 %5056
  %5058 = vrot.lane.b32.xlu0 %v4579, 96
  %v5059 = vpop.permute.xlu0 %5058
  %5060 = vrot.lane.b32.xlu0 %v4580, 96
  %v5061 = vpop.permute.xlu0 %5060
  %5062 = vrot.lane.b32.xlu0 %v4581, 96
  %v5063 = vpop.permute.xlu0 %5062
  %5064 = vrot.lane.b32.xlu0 %v4582, 96
  %v5065 = vpop.permute.xlu0 %5064
  %5066 = vrot.lane.b32.xlu0 %v4583, 96
  %v5067 = vpop.permute.xlu0 %5066
  %v5068 = vsel %vm112, %v4749, 0
  %v5070 = vsel %vm112, %v4751, 0
  %v5072 = vsel %vm112, %v4753, 0
  %v5074 = vsel %vm112, %v4755, 0
  %v5076 = vsel %vm112, %v4757, 0
  %v5078 = vsel %vm112, %v4759, 0
  %v5080 = vsel %vm112, %v4761, 0
  %v5082 = vsel %vm112, %v4763, 0
  %v5084 = vsel %vm112, %v4765, 0
  %v5086 = vsel %vm112, %v4767, 0
  %v5088 = vsel %vm112, %v4769, 0
  %v5090 = vsel %vm112, %v4771, 0
  %v5092 = vsel %vm112, %v4773, 0
  %v5094 = vsel %vm112, %v4775, 0
  %v5096 = vsel %vm112, %v4777, 0
  %v5098 = vsel %vm112, %v4779, 0
  %v5100 = vsel %vm112, %v4781, 0
  %v5102 = vsel %vm112, %v4783, 0
  %v5104 = vsel %vm112, %v4785, 0
  %v5106 = vsel %vm112, %v4787, 0
  %v5108 = vsel %vm112, %v4789, 0
  %v5110 = vsel %vm112, %v4791, 0
  %v5112 = vsel %vm112, %v4793, 0
  %v5114 = vsel %vm112, %v4795, 0
  %v5116 = vsel %vm112, %v4797, 0
  %v5118 = vsel %vm112, %v4799, 0
  %v5120 = vsel %vm112, %v4801, 0
  %v5122 = vsel %vm112, %v4803, 0
  %v5124 = vsel %vm112, %v4805, 0
  %v5126 = vsel %vm112, %v4807, 0
  %v5128 = vsel %vm112, %v4809, 0
  %v5130 = vsel %vm112, %v4811, 0
  %v5132 = vsel %vm112, %v4813, 0
  %v5134 = vsel %vm112, %v4815, 0
  %v5136 = vsel %vm112, %v4817, 0
  %v5138 = vsel %vm112, %v4819, 0
  %v5140 = vsel %vm112, %v4821, 0
  %v5142 = vsel %vm112, %v4823, 0
  %v5144 = vsel %vm112, %v4825, 0
  %v5146 = vsel %vm112, %v4827, 0
  %v5148 = vsel %vm112, %v4829, 0
  %v5150 = vsel %vm112, %v4831, 0
  %v5152 = vsel %vm112, %v4833, 0
  %v5154 = vsel %vm112, %v4835, 0
  %v5156 = vsel %vm112, %v4837, 0
  %v5158 = vsel %vm112, %v4839, 0
  %v5160 = vsel %vm112, %v4841, 0
  %v5162 = vsel %vm112, %v4843, 0
  %v5164 = vsel %vm112, %v4845, 0
  %v5166 = vsel %vm112, %v4847, 0
  %v5168 = vsel %vm112, %v4849, 0
  %v5170 = vsel %vm112, %v4851, 0
  %v5172 = vsel %vm112, %v4853, 0
  %v5174 = vsel %vm112, %v4855, 0
  %v5176 = vsel %vm112, %v4857, 0
  %v5178 = vsel %vm112, %v4859, 0
  %v5180 = vsel %vm112, %v4861, 0
  %v5182 = vsel %vm112, %v4863, 0
  %v5184 = vsel %vm112, %v4865, 0
  %v5186 = vsel %vm112, %v4867, 0
  %v5188 = vsel %vm112, %v4869, 0
  %v5190 = vsel %vm112, %v4871, 0
  %v5192 = vsel %vm112, %v4873, 0
  %v5194 = vsel %vm112, %v4875, 0
  %v5196 = vsel %vm112, %v4877, 0
  %v5198 = vsel %vm112, %v4879, 0
  %v5200 = vsel %vm112, %v4881, 0
  %v5202 = vsel %vm112, %v4883, 0
  %v5204 = vsel %vm112, %v4885, 0
  %v5206 = vsel %vm112, %v4887, 0
  %v5208 = vsel %vm112, %v4889, 0
  %v5210 = vsel %vm112, %v4891, 0
  %v5212 = vsel %vm112, %v4893, 0
  %v5214 = vsel %vm112, %v4895, 0
  %v5216 = vsel %vm112, %v4897, 0
  %v5218 = vsel %vm112, %v4899, 0
  %v5220 = vsel %vm112, %v4901, 0
  %v5222 = vsel %vm112, %v4903, 0
  %v5224 = vsel %vm112, %v4905, 0
  %v5226 = vsel %vm112, %v4907, 0
  %v5228 = vsel %vm112, %v4909, 0
  %v5230 = vsel %vm112, %v4911, 0
  %v5232 = vsel %vm112, %v4913, 0
  %v5234 = vsel %vm112, %v4915, 0
  %v5236 = vsel %vm112, %v4917, 0
  %v5238 = vsel %vm112, %v4919, 0
  %v5240 = vsel %vm112, %v4921, 0
  %v5242 = vsel %vm112, %v4923, 0
  %v5244 = vsel %vm112, %v4925, 0
  %v5246 = vsel %vm112, %v4927, 0
  %v5248 = vsel %vm112, %v4929, 0
  %v5250 = vsel %vm112, %v4931, 0
  %v5252 = vsel %vm112, %v4933, 0
  %v5254 = vsel %vm112, %v4935, 0
  %v5256 = vsel %vm112, %v4937, 0
  %v5258 = vsel %vm112, %v4939, 0
  %v5260 = vsel %vm112, %v4941, 0
  %v5262 = vsel %vm112, %v4943, 0
  %v5264 = vsel %vm112, %v4945, 0
  %v5266 = vsel %vm112, %v4947, 0
  %v5268 = vsel %vm112, %v4949, 0
  %v5270 = vsel %vm112, %v4951, 0
  %v5272 = vsel %vm112, %v4953, 0
  %v5274 = vsel %vm112, %v4955, 0
  %v5276 = vsel %vm112, %v4957, 0
  %v5278 = vsel %vm112, %v4959, 0
  %v5280 = vsel %vm112, %v4961, 0
  %v5282 = vsel %vm112, %v4963, 0
  %v5284 = vsel %vm112, %v4965, 0
  %v5286 = vsel %vm112, %v4967, 0
  %v5288 = vsel %vm112, %v4969, 0
  %v5290 = vsel %vm112, %v4971, 0
  %v5292 = vsel %vm112, %v4973, 0
  %v5294 = vsel %vm112, %v4975, 0
  %v5296 = vsel %vm112, %v4977, 0
  %v5298 = vsel %vm112, %v4979, 0
  %v5300 = vsel %vm112, %v4981, 0
  %v5302 = vsel %vm112, %v4983, 0
  %v5304 = vsel %vm112, %v4985, 0
  %v5306 = vsel %vm112, %v4987, 0
  %v5308 = vsel %vm112, %v4989, 0
  %v5310 = vsel %vm112, %v4991, 0
  %v5312 = vsel %vm112, %v4993, 0
  %v5314 = vsel %vm112, %v4995, 0
  %v5316 = vsel %vm112, %v4997, 0
  %v5318 = vsel %vm112, %v4999, 0
  %v5320 = vsel %vm112, %v5001, 0
  %v5322 = vsel %vm112, %v5003, 0
  %v5324 = vsel %vm112, %v5005, 0
  %v5326 = vsel %vm112, %v5007, 0
  %v5328 = vsel %vm112, %v5009, 0
  %v5330 = vsel %vm112, %v5011, 0
  %v5332 = vsel %vm112, %v5013, 0
  %v5334 = vsel %vm112, %v5015, 0
  %v5336 = vsel %vm112, %v5017, 0
  %v5338 = vsel %vm112, %v5019, 0
  %v5340 = vsel %vm112, %v5021, 0
  %v5342 = vsel %vm112, %v5023, 0
  %v5344 = vsel %vm112, %v5025, 0
  %v5346 = vsel %vm112, %v5027, 0
  %v5348 = vsel %vm112, %v5029, 0
  %v5350 = vsel %vm112, %v5031, 0
  %v5352 = vsel %vm112, %v5033, 0
  %v5354 = vsel %vm112, %v5035, 0
  %v5356 = vsel %vm112, %v5037, 0
  %v5358 = vsel %vm112, %v5039, 0
  %v5360 = vsel %vm112, %v5041, 0
  %v5362 = vsel %vm112, %v5043, 0
  %v5364 = vsel %vm112, %v5045, 0
  %v5366 = vsel %vm112, %v5047, 0
  %v5368 = vsel %vm112, %v5049, 0
  %v5370 = vsel %vm112, %v5051, 0
  %v5372 = vsel %vm112, %v5053, 0
  %v5374 = vsel %vm112, %v5055, 0
  %v5376 = vsel %vm112, %v5057, 0
  %v5378 = vsel %vm112, %v5059, 0
  %v5380 = vsel %vm112, %v5061, 0
  %v5382 = vsel %vm112, %v5063, 0
  %v5384 = vsel %vm112, %v5065, 0
  %v5386 = vsel %vm112, %v5067, 0
  %5388 = vmatprep.subr.mxu0 0.0
  %5389 = vmatpush1.msra.mxu0 %v46
  %5390 = vmatprep.subr.mxu0 0.0
  %5391 = vmatpush1.msra.mxu0 %v47
  %5392 = vmatprep.subr.mxu0 0.0
  %5393 = vmatpush1.msra.mxu0 %v48
  %5394 = vmatprep.subr.mxu0 0.0
  %5395 = vmatpush1.msra.mxu0 %v49
  %5396 = vmatprep.subr.mxu0 0.0
  %5397 = vmatpush1.msra.mxu0 0.0
  %5398 = vmatprep.subr.mxu0 0.0
  %5399 = vmatpush1.msra.mxu0 0.0
  %5400 = vmatprep.subr.mxu0 0.0
  %5401 = vmatpush1.msra.mxu0 0.0
  %5402 = vmatprep.subr.mxu0 0.0
  %5403 = vmatpush1.msra.mxu0 0.0
  %5404 = vmatprep.subr.mxu0 0.0
  %5405 = vmatpush1.msra.mxu0 0.0
  %5406 = vmatprep.subr.mxu0 0.0
  %5407 = vmatpush1.msra.mxu0 0.0
  %5408 = vmatprep.subr.mxu0 0.0
  %5409 = vmatpush1.msra.mxu0 0.0
  %5410 = vmatprep.subr.mxu0 0.0
  %5411 = vmatpush1.msra.mxu0 0.0
  %5412 = vmatprep.subr.mxu0 0.0
  %5413 = vmatpush1.msra.mxu0 0.0
  %5414 = vmatprep.subr.mxu0 0.0
  %5415 = vmatpush1.msra.mxu0 0.0
  %5416 = vmatprep.subr.mxu0 0.0
  %5417 = vmatpush1.msra.mxu0 0.0
  %5418 = vmatprep.subr.mxu0 0.0
  %5419 = vmatpush1.msra.mxu0 0.0
  %5420 = vmatprep.subr.mxu0 0.0
  %5421 = vmatpush1.msra.mxu0 0.0
  %5422 = vmatprep.subr.mxu0 0.0
  %5423 = vmatpush1.msra.mxu0 0.0
  %5424 = vmatprep.subr.mxu0 0.0
  %5425 = vmatpush1.msra.mxu0 0.0
  %5426 = vmatprep.subr.mxu0 0.0
  %5427 = vmatpush1.msra.mxu0 0.0
  %5428 = vmatprep.subr.mxu0 0.0
  %5429 = vmatpush1.msra.mxu0 0.0
  %5430 = vmatprep.subr.mxu0 0.0
  %5431 = vmatpush1.msra.mxu0 0.0
  %5432 = vmatprep.subr.mxu0 0.0
  %5433 = vmatpush1.msra.mxu0 0.0
  %5434 = vmatprep.subr.mxu0 0.0
  %5435 = vmatpush1.msra.mxu0 0.0
  %5436 = vmatprep.subr.mxu0 0.0
  %5437 = vmatpush1.msra.mxu0 0.0
  %5438 = vmatprep.subr.mxu0 0.0
  %5439 = vmatpush1.msra.mxu0 0.0
  %5440 = vmatprep.subr.mxu0 0.0
  %5441 = vmatpush1.msra.mxu0 0.0
  %5442 = vmatprep.subr.mxu0 0.0
  %5443 = vmatpush1.msra.mxu0 0.0
  %5444 = vmatprep.subr.mxu0 0.0
  %5445 = vmatpush1.msra.mxu0 0.0
  %5446 = vmatprep.subr.mxu0 0.0
  %5447 = vmatpush1.msra.mxu0 0.0
  %5448 = vmatprep.subr.mxu0 0.0
  %5449 = vmatpush1.msra.mxu0 0.0
  %5450 = vmatprep.subr.mxu0 0.0
  %5451 = vmatpush1.msra.mxu0 0.0
  %5452 = vmatprep.mubr.f32.mxu0 0.0
  %5453 = vmatmul.mubr.f32.gmra.mrb[0].mxu0 %v5068
  %v5454 = vpop.f32.mrb[0].mxu0
  %v5455 = vadd.f32 %v4587, %v5454
  %v5456 = vpop.f32.mrb[0].mxu0
  %5457 = vmatprep.mubr.f32.mxu0 0.0
  %5458 = vmatmul.mubr.f32.gmra.mrb[0].mxu0 %v5070
  %v5459 = vpop.f32.mrb[0].mxu0
  %v5460 = vadd.f32 %v4587, %v5459
  %v5461 = vpop.f32.mrb[0].mxu0
  %5462 = vmatprep.mubr.f32.mxu0 0.0
  %5463 = vmatmul.mubr.f32.gmra.mrb[0].mxu0 %v5072
  %v5464 = vpop.f32.mrb[0].mxu0
  %v5465 = vadd.f32 %v4587, %v5464
  %v5466 = vpop.f32.mrb[0].mxu0
  %5467 = vmatprep.mubr.f32.mxu0 0.0
  %5468 = vmatmul.mubr.f32.gmra.mrb[0].mxu0 %v5074
  %v5469 = vpop.f32.mrb[0].mxu0
  %v5470 = vadd.f32 %v4587, %v5469
  %v5471 = vpop.f32.mrb[0].mxu0
  %5472 = vmatprep.mubr.f32.mxu0 0.0
  %5473 = vmatmul.mubr.f32.gmra.mrb[0].mxu0 %v5076
  %v5474 = vpop.f32.mrb[0].mxu0
  %v5475 = vadd.f32 %v4587, %v5474
  %v5476 = vpop.f32.mrb[0].mxu0
  %5477 = vmatprep.mubr.f32.mxu0 0.0
  %5478 = vmatmul.mubr.f32.gmra.mrb[0].mxu0 %v5078
  %v5479 = vpop.f32.mrb[0].mxu0
  %v5480 = vadd.f32 %v4587, %v5479
  %v5481 = vpop.f32.mrb[0].mxu0
  %5482 = vmatprep.mubr.f32.mxu0 0.0
  %5483 = vmatmul.mubr.f32.gmra.mrb[0].mxu0 %v5080
  %v5484 = vpop.f32.mrb[0].mxu0
  %v5485 = vadd.f32 %v4587, %v5484
  %v5486 = vpop.f32.mrb[0].mxu0
  %5487 = vmatprep.mubr.f32.mxu0 0.0
  %5488 = vmatmul.mubr.f32.gmra.mrb[0].mxu0 %v5082
  %v5489 = vpop.f32.mrb[0].mxu0
  %v5490 = vadd.f32 %v4587, %v5489
  %v5491 = vpop.f32.mrb[0].mxu0
  %5492 = vmatprep.mubr.f32.mxu0 0.0
  %5493 = vmatmul.mubr.f32.gmra.mrb[0].mxu0 %v5084
  %v5494 = vpop.f32.mrb[0].mxu0
  %v5495 = vadd.f32 %v4587, %v5494
  %v5496 = vpop.f32.mrb[0].mxu0
  %5497 = vmatprep.mubr.f32.mxu0 0.0
  %5498 = vmatmul.mubr.f32.gmra.mrb[0].mxu0 %v5086
  %v5499 = vpop.f32.mrb[0].mxu0
  %v5500 = vadd.f32 %v4587, %v5499
  %v5501 = vpop.f32.mrb[0].mxu0
  %5502 = vmatprep.mubr.f32.mxu0 0.0
  %5503 = vmatmul.mubr.f32.gmra.mrb[0].mxu0 %v5088
  %v5504 = vpop.f32.mrb[0].mxu0
  %v5505 = vadd.f32 %v4587, %v5504
  %v5506 = vpop.f32.mrb[0].mxu0
  %5507 = vmatprep.mubr.f32.mxu0 0.0
  %5508 = vmatmul.mubr.f32.gmra.mrb[0].mxu0 %v5090
  %v5509 = vpop.f32.mrb[0].mxu0
  %v5510 = vadd.f32 %v4587, %v5509
  %v5511 = vpop.f32.mrb[0].mxu0
  %5512 = vmatprep.mubr.f32.mxu0 0.0
  %5513 = vmatmul.mubr.f32.gmra.mrb[0].mxu0 %v5092
  %v5514 = vpop.f32.mrb[0].mxu0
  %v5515 = vadd.f32 %v4587, %v5514
  %v5516 = vpop.f32.mrb[0].mxu0
  %5517 = vmatprep.mubr.f32.mxu0 0.0
  %5518 = vmatmul.mubr.f32.gmra.mrb[0].mxu0 %v5094
  %v5519 = vpop.f32.mrb[0].mxu0
  %v5520 = vadd.f32 %v4587, %v5519
  %v5521 = vpop.f32.mrb[0].mxu0
  %5522 = vmatprep.mubr.f32.mxu0 0.0
  %5523 = vmatmul.mubr.f32.gmra.mrb[0].mxu0 %v5096
  %v5524 = vpop.f32.mrb[0].mxu0
  %v5525 = vadd.f32 %v4587, %v5524
  %v5526 = vpop.f32.mrb[0].mxu0
  %5527 = vmatprep.mubr.f32.mxu0 0.0
  %5528 = vmatmul.mubr.f32.gmra.mrb[0].mxu0 %v5098
  %v5529 = vpop.f32.mrb[0].mxu0
  %v5530 = vadd.f32 %v4587, %v5529
  %v5531 = vpop.f32.mrb[0].mxu0
  %5532 = vmatprep.mubr.f32.mxu0 0.0
  %5533 = vmatmul.mubr.f32.gmra.mrb[0].mxu0 %v5100
  %v5534 = vpop.f32.mrb[0].mxu0
  %v5535 = vadd.f32 %v4587, %v5534
  %v5536 = vpop.f32.mrb[0].mxu0
  %5537 = vmatprep.mubr.f32.mxu0 0.0
  %5538 = vmatmul.mubr.f32.gmra.mrb[0].mxu0 %v5102
  %v5539 = vpop.f32.mrb[0].mxu0
  %v5540 = vadd.f32 %v4587, %v5539
  %v5541 = vpop.f32.mrb[0].mxu0
  %5542 = vmatprep.mubr.f32.mxu0 0.0
  %5543 = vmatmul.mubr.f32.gmra.mrb[0].mxu0 %v5104
  %v5544 = vpop.f32.mrb[0].mxu0
  %v5545 = vadd.f32 %v4587, %v5544
  %v5546 = vpop.f32.mrb[0].mxu0
  %5547 = vmatprep.mubr.f32.mxu0 0.0
  %5548 = vmatmul.mubr.f32.gmra.mrb[0].mxu0 %v5106
  %v5549 = vpop.f32.mrb[0].mxu0
  %v5550 = vadd.f32 %v4587, %v5549
  %v5551 = vpop.f32.mrb[0].mxu0
  %5552 = vmatprep.mubr.f32.mxu0 0.0
  %5553 = vmatmul.mubr.f32.gmra.mrb[0].mxu0 %v5108
  %v5554 = vpop.f32.mrb[0].mxu0
  %v5555 = vadd.f32 %v4587, %v5554
  %v5556 = vpop.f32.mrb[0].mxu0
  %5557 = vmatprep.mubr.f32.mxu0 0.0
  %5558 = vmatmul.mubr.f32.gmra.mrb[0].mxu0 %v5110
  %v5559 = vpop.f32.mrb[0].mxu0
  %v5560 = vadd.f32 %v4587, %v5559
  %v5561 = vpop.f32.mrb[0].mxu0
  %5562 = vmatprep.mubr.f32.mxu0 0.0
  %5563 = vmatmul.mubr.f32.gmra.mrb[0].mxu0 %v5112
  %v5564 = vpop.f32.mrb[0].mxu0
  %v5565 = vadd.f32 %v4587, %v5564
  %v5566 = vpop.f32.mrb[0].mxu0
  %5567 = vmatprep.mubr.f32.mxu0 0.0
  %5568 = vmatmul.mubr.f32.gmra.mrb[0].mxu0 %v5114
  %v5569 = vpop.f32.mrb[0].mxu0
  %v5570 = vadd.f32 %v4587, %v5569
  %v5571 = vpop.f32.mrb[0].mxu0
  %5572 = vmatprep.mubr.f32.mxu0 0.0
  %5573 = vmatmul.mubr.f32.gmra.mrb[0].mxu0 %v5116
  %v5574 = vpop.f32.mrb[0].mxu0
  %v5575 = vadd.f32 %v4587, %v5574
  %v5576 = vpop.f32.mrb[0].mxu0
  %5577 = vmatprep.mubr.f32.mxu0 0.0
  %5578 = vmatmul.mubr.f32.gmra.mrb[0].mxu0 %v5118
  %v5579 = vpop.f32.mrb[0].mxu0
  %v5580 = vadd.f32 %v4587, %v5579
  %v5581 = vpop.f32.mrb[0].mxu0
  %5582 = vmatprep.mubr.f32.mxu0 0.0
  %5583 = vmatmul.mubr.f32.gmra.mrb[0].mxu0 %v5120
  %v5584 = vpop.f32.mrb[0].mxu0
  %v5585 = vadd.f32 %v4587, %v5584
  %v5586 = vpop.f32.mrb[0].mxu0
  %5587 = vmatprep.mubr.f32.mxu0 0.0
  %5588 = vmatmul.mubr.f32.gmra.mrb[0].mxu0 %v5122
  %v5589 = vpop.f32.mrb[0].mxu0
  %v5590 = vadd.f32 %v4587, %v5589
  %v5591 = vpop.f32.mrb[0].mxu0
  %5592 = vmatprep.mubr.f32.mxu0 0.0
  %5593 = vmatmul.mubr.f32.gmra.mrb[0].mxu0 %v5124
  %v5594 = vpop.f32.mrb[0].mxu0
  %v5595 = vadd.f32 %v4587, %v5594
  %v5596 = vpop.f32.mrb[0].mxu0
  %5597 = vmatprep.mubr.f32.mxu0 0.0
  %5598 = vmatmul.mubr.f32.gmra.mrb[0].mxu0 %v5126
  %v5599 = vpop.f32.mrb[0].mxu0
  %v5600 = vadd.f32 %v4587, %v5599
  %v5601 = vpop.f32.mrb[0].mxu0
  %5602 = vmatprep.mubr.f32.mxu0 0.0
  %5603 = vmatmul.mubr.f32.gmra.mrb[0].mxu0 %v5128
  %v5604 = vpop.f32.mrb[0].mxu0
  %v5605 = vadd.f32 %v4587, %v5604
  %v5606 = vpop.f32.mrb[0].mxu0
  %5607 = vmatprep.mubr.f32.mxu0 0.0
  %5608 = vmatmul.mubr.f32.gmra.mrb[0].mxu0 %v5130
  %v5609 = vpop.f32.mrb[0].mxu0
  %v5610 = vadd.f32 %v4587, %v5609
  %v5611 = vpop.f32.mrb[0].mxu0
  %5612 = vmatprep.mubr.f32.mxu0 0.0
  %5613 = vmatmul.mubr.f32.gmra.mrb[0].mxu0 %v5132
  %v5614 = vpop.f32.mrb[0].mxu0
  %v5615 = vadd.f32 %v4587, %v5614
  %v5616 = vpop.f32.mrb[0].mxu0
  %5617 = vmatprep.mubr.f32.mxu0 0.0
  %5618 = vmatmul.mubr.f32.gmra.mrb[0].mxu0 %v5134
  %v5619 = vpop.f32.mrb[0].mxu0
  %v5620 = vadd.f32 %v4587, %v5619
  %v5621 = vpop.f32.mrb[0].mxu0
  %5622 = vmatprep.mubr.f32.mxu0 0.0
  %5623 = vmatmul.mubr.f32.gmra.mrb[0].mxu0 %v5136
  %v5624 = vpop.f32.mrb[0].mxu0
  %v5625 = vadd.f32 %v4587, %v5624
  %v5626 = vpop.f32.mrb[0].mxu0
  %5627 = vmatprep.mubr.f32.mxu0 0.0
  %5628 = vmatmul.mubr.f32.gmra.mrb[0].mxu0 %v5138
  %v5629 = vpop.f32.mrb[0].mxu0
  %v5630 = vadd.f32 %v4587, %v5629
  %v5631 = vpop.f32.mrb[0].mxu0
  %5632 = vmatprep.mubr.f32.mxu0 0.0
  %5633 = vmatmul.mubr.f32.gmra.mrb[0].mxu0 %v5140
  %v5634 = vpop.f32.mrb[0].mxu0
  %v5635 = vadd.f32 %v4587, %v5634
  %v5636 = vpop.f32.mrb[0].mxu0
  %5637 = vmatprep.mubr.f32.mxu0 0.0
  %5638 = vmatmul.mubr.f32.gmra.mrb[0].mxu0 %v5142
  %v5639 = vpop.f32.mrb[0].mxu0
  %v5640 = vadd.f32 %v4587, %v5639
  %v5641 = vpop.f32.mrb[0].mxu0
  %5642 = vmatprep.mubr.f32.mxu0 0.0
  %5643 = vmatmul.mubr.f32.gmra.mrb[0].mxu0 %v5144
  %v5644 = vpop.f32.mrb[0].mxu0
  %v5645 = vadd.f32 %v4587, %v5644
  %v5646 = vpop.f32.mrb[0].mxu0
  %5647 = vmatprep.mubr.f32.mxu0 0.0
  %5648 = vmatmul.mubr.f32.gmra.mrb[0].mxu0 %v5146
  %v5649 = vpop.f32.mrb[0].mxu0
  %v5650 = vadd.f32 %v4587, %v5649
  %v5651 = vpop.f32.mrb[0].mxu0
  %5652 = vmatprep.mubr.f32.mxu0 0.0
  %5653 = vmatmul.mubr.f32.gmra.mrb[0].mxu0 %v5148
  %v5654 = vpop.f32.mrb[0].mxu0
  %v5655 = vadd.f32 %v4587, %v5654
  %v5656 = vpop.f32.mrb[0].mxu0
  %5657 = vmatprep.mubr.f32.mxu0 0.0
  %5658 = vmatmul.mubr.f32.gmra.mrb[0].mxu0 %v5150
  %v5659 = vpop.f32.mrb[0].mxu0
  %v5660 = vadd.f32 %v4587, %v5659
  %v5661 = vpop.f32.mrb[0].mxu0
  %5662 = vmatprep.mubr.f32.mxu0 0.0
  %5663 = vmatmul.mubr.f32.gmra.mrb[0].mxu0 %v5152
  %v5664 = vpop.f32.mrb[0].mxu0
  %v5665 = vadd.f32 %v4587, %v5664
  %v5666 = vpop.f32.mrb[0].mxu0
  %5667 = vmatprep.mubr.f32.mxu0 0.0
  %5668 = vmatmul.mubr.f32.gmra.mrb[0].mxu0 %v5154
  %v5669 = vpop.f32.mrb[0].mxu0
  %v5670 = vadd.f32 %v4587, %v5669
  %v5671 = vpop.f32.mrb[0].mxu0
  %5672 = vmatprep.mubr.f32.mxu0 0.0
  %5673 = vmatmul.mubr.f32.gmra.mrb[0].mxu0 %v5156
  %v5674 = vpop.f32.mrb[0].mxu0
  %v5675 = vadd.f32 %v4587, %v5674
  %v5676 = vpop.f32.mrb[0].mxu0
  %5677 = vmatprep.mubr.f32.mxu0 0.0
  %5678 = vmatmul.mubr.f32.gmra.mrb[0].mxu0 %v5158
  %v5679 = vpop.f32.mrb[0].mxu0
  %v5680 = vadd.f32 %v4587, %v5679
  %v5681 = vpop.f32.mrb[0].mxu0
  %5682 = vmatprep.mubr.f32.mxu0 0.0
  %5683 = vmatmul.mubr.f32.gmra.mrb[0].mxu0 %v5160
  %v5684 = vpop.f32.mrb[0].mxu0
  %v5685 = vadd.f32 %v4587, %v5684
  %v5686 = vpop.f32.mrb[0].mxu0
  %5687 = vmatprep.mubr.f32.mxu0 0.0
  %5688 = vmatmul.mubr.f32.gmra.mrb[0].mxu0 %v5162
  %v5689 = vpop.f32.mrb[0].mxu0
  %v5690 = vadd.f32 %v4587, %v5689
  %v5691 = vpop.f32.mrb[0].mxu0
  %5692 = vmatprep.mubr.f32.mxu0 0.0
  %5693 = vmatmul.mubr.f32.gmra.mrb[0].mxu0 %v5164
  %v5694 = vpop.f32.mrb[0].mxu0
  %v5695 = vadd.f32 %v4587, %v5694
  %v5696 = vpop.f32.mrb[0].mxu0
  %5697 = vmatprep.mubr.f32.mxu0 0.0
  %5698 = vmatmul.mubr.f32.gmra.mrb[0].mxu0 %v5166
  %v5699 = vpop.f32.mrb[0].mxu0
  %v5700 = vadd.f32 %v4587, %v5699
  %v5701 = vpop.f32.mrb[0].mxu0
  %5702 = vmatprep.mubr.f32.mxu0 0.0
  %5703 = vmatmul.mubr.f32.gmra.mrb[0].mxu0 %v5168
  %v5704 = vpop.f32.mrb[0].mxu0
  %v5705 = vadd.f32 %v4587, %v5704
  %v5706 = vpop.f32.mrb[0].mxu0
  %5707 = vmatprep.mubr.f32.mxu0 0.0
  %5708 = vmatmul.mubr.f32.gmra.mrb[0].mxu0 %v5170
  %v5709 = vpop.f32.mrb[0].mxu0
  %v5710 = vadd.f32 %v4587, %v5709
  %v5711 = vpop.f32.mrb[0].mxu0
  %5712 = vmatprep.mubr.f32.mxu0 0.0
  %5713 = vmatmul.mubr.f32.gmra.mrb[0].mxu0 %v5172
  %v5714 = vpop.f32.mrb[0].mxu0
  %v5715 = vadd.f32 %v4587, %v5714
  %v5716 = vpop.f32.mrb[0].mxu0
  %5717 = vmatprep.mubr.f32.mxu0 0.0
  %5718 = vmatmul.mubr.f32.gmra.mrb[0].mxu0 %v5174
  %v5719 = vpop.f32.mrb[0].mxu0
  %v5720 = vadd.f32 %v4587, %v5719
  %v5721 = vpop.f32.mrb[0].mxu0
  %5722 = vmatprep.mubr.f32.mxu0 0.0
  %5723 = vmatmul.mubr.f32.gmra.mrb[0].mxu0 %v5176
  %v5724 = vpop.f32.mrb[0].mxu0
  %v5725 = vadd.f32 %v4587, %v5724
  %v5726 = vpop.f32.mrb[0].mxu0
  %5727 = vmatprep.mubr.f32.mxu0 0.0
  %5728 = vmatmul.mubr.f32.gmra.mrb[0].mxu0 %v5178
  %v5729 = vpop.f32.mrb[0].mxu0
  %v5730 = vadd.f32 %v4587, %v5729
  %v5731 = vpop.f32.mrb[0].mxu0
  %5732 = vmatprep.mubr.f32.mxu0 0.0
  %5733 = vmatmul.mubr.f32.gmra.mrb[0].mxu0 %v5180
  %v5734 = vpop.f32.mrb[0].mxu0
  %v5735 = vadd.f32 %v4587, %v5734
  %v5736 = vpop.f32.mrb[0].mxu0
  %5737 = vmatprep.mubr.f32.mxu0 0.0
  %5738 = vmatmul.mubr.f32.gmra.mrb[0].mxu0 %v5182
  %v5739 = vpop.f32.mrb[0].mxu0
  %v5740 = vadd.f32 %v4587, %v5739
  %v5741 = vpop.f32.mrb[0].mxu0
  %5742 = vmatprep.mubr.f32.mxu0 0.0
  %5743 = vmatmul.mubr.f32.gmra.mrb[0].mxu0 %v5184
  %v5744 = vpop.f32.mrb[0].mxu0
  %v5745 = vadd.f32 %v4587, %v5744
  %v5746 = vpop.f32.mrb[0].mxu0
  %5747 = vmatprep.mubr.f32.mxu0 0.0
  %5748 = vmatmul.mubr.f32.gmra.mrb[0].mxu0 %v5186
  %v5749 = vpop.f32.mrb[0].mxu0
  %v5750 = vadd.f32 %v4587, %v5749
  %v5751 = vpop.f32.mrb[0].mxu0
  %5752 = vmatprep.mubr.f32.mxu0 0.0
  %5753 = vmatmul.mubr.f32.gmra.mrb[0].mxu0 %v5188
  %v5754 = vpop.f32.mrb[0].mxu0
  %v5755 = vadd.f32 %v4587, %v5754
  %v5756 = vpop.f32.mrb[0].mxu0
  %5757 = vmatprep.mubr.f32.mxu0 0.0
  %5758 = vmatmul.mubr.f32.gmra.mrb[0].mxu0 %v5190
  %v5759 = vpop.f32.mrb[0].mxu0
  %v5760 = vadd.f32 %v4587, %v5759
  %v5761 = vpop.f32.mrb[0].mxu0
  %5762 = vmatprep.mubr.f32.mxu0 0.0
  %5763 = vmatmul.mubr.f32.gmra.mrb[0].mxu0 %v5192
  %v5764 = vpop.f32.mrb[0].mxu0
  %v5765 = vadd.f32 %v4587, %v5764
  %v5766 = vpop.f32.mrb[0].mxu0
  %5767 = vmatprep.mubr.f32.mxu0 0.0
  %5768 = vmatmul.mubr.f32.gmra.mrb[0].mxu0 %v5194
  %v5769 = vpop.f32.mrb[0].mxu0
  %v5770 = vadd.f32 %v4587, %v5769
  %v5771 = vpop.f32.mrb[0].mxu0
  %5772 = vmatprep.mubr.f32.mxu0 0.0
  %5773 = vmatmul.mubr.f32.gmra.mrb[0].mxu0 %v5196
  %v5774 = vpop.f32.mrb[0].mxu0
  %v5775 = vadd.f32 %v4587, %v5774
  %v5776 = vpop.f32.mrb[0].mxu0
  %5777 = vmatprep.mubr.f32.mxu0 0.0
  %5778 = vmatmul.mubr.f32.gmra.mrb[0].mxu0 %v5198
  %v5779 = vpop.f32.mrb[0].mxu0
  %v5780 = vadd.f32 %v4587, %v5779
  %v5781 = vpop.f32.mrb[0].mxu0
  %5782 = vmatprep.mubr.f32.mxu0 0.0
  %5783 = vmatmul.mubr.f32.gmra.mrb[0].mxu0 %v5200
  %v5784 = vpop.f32.mrb[0].mxu0
  %v5785 = vadd.f32 %v4587, %v5784
  %v5786 = vpop.f32.mrb[0].mxu0
  %5787 = vmatprep.mubr.f32.mxu0 0.0
  %5788 = vmatmul.mubr.f32.gmra.mrb[0].mxu0 %v5202
  %v5789 = vpop.f32.mrb[0].mxu0
  %v5790 = vadd.f32 %v4587, %v5789
  %v5791 = vpop.f32.mrb[0].mxu0
  %5792 = vmatprep.mubr.f32.mxu0 0.0
  %5793 = vmatmul.mubr.f32.gmra.mrb[0].mxu0 %v5204
  %v5794 = vpop.f32.mrb[0].mxu0
  %v5795 = vadd.f32 %v4587, %v5794
  %v5796 = vpop.f32.mrb[0].mxu0
  %5797 = vmatprep.mubr.f32.mxu0 0.0
  %5798 = vmatmul.mubr.f32.gmra.mrb[0].mxu0 %v5206
  %v5799 = vpop.f32.mrb[0].mxu0
  %v5800 = vadd.f32 %v4587, %v5799
  %v5801 = vpop.f32.mrb[0].mxu0
  %5802 = vmatprep.mubr.f32.mxu0 0.0
  %5803 = vmatmul.mubr.f32.gmra.mrb[0].mxu0 %v5208
  %v5804 = vpop.f32.mrb[0].mxu0
  %v5805 = vadd.f32 %v4587, %v5804
  %v5806 = vpop.f32.mrb[0].mxu0
  %5807 = vmatprep.mubr.f32.mxu0 0.0
  %5808 = vmatmul.mubr.f32.gmra.mrb[0].mxu0 %v5210
  %v5809 = vpop.f32.mrb[0].mxu0
  %v5810 = vadd.f32 %v4587, %v5809
  %v5811 = vpop.f32.mrb[0].mxu0
  %5812 = vmatprep.mubr.f32.mxu0 0.0
  %5813 = vmatmul.mubr.f32.gmra.mrb[0].mxu0 %v5212
  %v5814 = vpop.f32.mrb[0].mxu0
  %v5815 = vadd.f32 %v4587, %v5814
  %v5816 = vpop.f32.mrb[0].mxu0
  %5817 = vmatprep.mubr.f32.mxu0 0.0
  %5818 = vmatmul.mubr.f32.gmra.mrb[0].mxu0 %v5214
  %v5819 = vpop.f32.mrb[0].mxu0
  %v5820 = vadd.f32 %v4587, %v5819
  %v5821 = vpop.f32.mrb[0].mxu0
  %5822 = vmatprep.mubr.f32.mxu0 0.0
  %5823 = vmatmul.mubr.f32.gmra.mrb[0].mxu0 %v5216
  %v5824 = vpop.f32.mrb[0].mxu0
  %v5825 = vadd.f32 %v4587, %v5824
  %v5826 = vpop.f32.mrb[0].mxu0
  %5827 = vmatprep.mubr.f32.mxu0 0.0
  %5828 = vmatmul.mubr.f32.gmra.mrb[0].mxu0 %v5218
  %v5829 = vpop.f32.mrb[0].mxu0
  %v5830 = vadd.f32 %v4587, %v5829
  %v5831 = vpop.f32.mrb[0].mxu0
  %5832 = vmatprep.mubr.f32.mxu0 0.0
  %5833 = vmatmul.mubr.f32.gmra.mrb[0].mxu0 %v5220
  %v5834 = vpop.f32.mrb[0].mxu0
  %v5835 = vadd.f32 %v4587, %v5834
  %v5836 = vpop.f32.mrb[0].mxu0
  %5837 = vmatprep.mubr.f32.mxu0 0.0
  %5838 = vmatmul.mubr.f32.gmra.mrb[0].mxu0 %v5222
  %v5839 = vpop.f32.mrb[0].mxu0
  %v5840 = vadd.f32 %v4587, %v5839
  %v5841 = vpop.f32.mrb[0].mxu0
  %5842 = vmatprep.mubr.f32.mxu0 0.0
  %5843 = vmatmul.mubr.f32.gmra.mrb[0].mxu0 %v5224
  %v5844 = vpop.f32.mrb[0].mxu0
  %v5845 = vadd.f32 %v4587, %v5844
  %v5846 = vpop.f32.mrb[0].mxu0
  %5847 = vmatprep.mubr.f32.mxu0 0.0
  %5848 = vmatmul.mubr.f32.gmra.mrb[0].mxu0 %v5226
  %v5849 = vpop.f32.mrb[0].mxu0
  %v5850 = vadd.f32 %v4587, %v5849
  %v5851 = vpop.f32.mrb[0].mxu0
  %5852 = vmatprep.mubr.f32.mxu0 0.0
  %5853 = vmatmul.mubr.f32.gmra.mrb[0].mxu0 %v5228
  %v5854 = vpop.f32.mrb[0].mxu0
  %v5855 = vadd.f32 %v4587, %v5854
  %v5856 = vpop.f32.mrb[0].mxu0
  %5857 = vmatprep.mubr.f32.mxu0 0.0
  %5858 = vmatmul.mubr.f32.gmra.mrb[0].mxu0 %v5230
  %v5859 = vpop.f32.mrb[0].mxu0
  %v5860 = vadd.f32 %v4587, %v5859
  %v5861 = vpop.f32.mrb[0].mxu0
  %5862 = vmatprep.mubr.f32.mxu0 0.0
  %5863 = vmatmul.mubr.f32.gmra.mrb[0].mxu0 %v5232
  %v5864 = vpop.f32.mrb[0].mxu0
  %v5865 = vadd.f32 %v4587, %v5864
  %v5866 = vpop.f32.mrb[0].mxu0
  %5867 = vmatprep.mubr.f32.mxu0 0.0
  %5868 = vmatmul.mubr.f32.gmra.mrb[0].mxu0 %v5234
  %v5869 = vpop.f32.mrb[0].mxu0
  %v5870 = vadd.f32 %v4587, %v5869
  %v5871 = vpop.f32.mrb[0].mxu0
  %5872 = vmatprep.mubr.f32.mxu0 0.0
  %5873 = vmatmul.mubr.f32.gmra.mrb[0].mxu0 %v5236
  %v5874 = vpop.f32.mrb[0].mxu0
  %v5875 = vadd.f32 %v4587, %v5874
  %v5876 = vpop.f32.mrb[0].mxu0
  %5877 = vmatprep.mubr.f32.mxu0 0.0
  %5878 = vmatmul.mubr.f32.gmra.mrb[0].mxu0 %v5238
  %v5879 = vpop.f32.mrb[0].mxu0
  %v5880 = vadd.f32 %v4587, %v5879
  %v5881 = vpop.f32.mrb[0].mxu0
  %5882 = vmatprep.mubr.f32.mxu0 0.0
  %5883 = vmatmul.mubr.f32.gmra.mrb[0].mxu0 %v5240
  %v5884 = vpop.f32.mrb[0].mxu0
  %v5885 = vadd.f32 %v4587, %v5884
  %v5886 = vpop.f32.mrb[0].mxu0
  %5887 = vmatprep.mubr.f32.mxu0 0.0
  %5888 = vmatmul.mubr.f32.gmra.mrb[0].mxu0 %v5242
  %v5889 = vpop.f32.mrb[0].mxu0
  %v5890 = vadd.f32 %v4587, %v5889
  %v5891 = vpop.f32.mrb[0].mxu0
  %5892 = vmatprep.mubr.f32.mxu0 0.0
  %5893 = vmatmul.mubr.f32.gmra.mrb[0].mxu0 %v5244
  %v5894 = vpop.f32.mrb[0].mxu0
  %v5895 = vadd.f32 %v4587, %v5894
  %v5896 = vpop.f32.mrb[0].mxu0
  %5897 = vmatprep.mubr.f32.mxu0 0.0
  %5898 = vmatmul.mubr.f32.gmra.mrb[0].mxu0 %v5246
  %v5899 = vpop.f32.mrb[0].mxu0
  %v5900 = vadd.f32 %v4587, %v5899
  %v5901 = vpop.f32.mrb[0].mxu0
  %5902 = vmatprep.mubr.f32.mxu0 0.0
  %5903 = vmatmul.mubr.f32.gmra.mrb[0].mxu0 %v5248
  %v5904 = vpop.f32.mrb[0].mxu0
  %v5905 = vadd.f32 %v4587, %v5904
  %v5906 = vpop.f32.mrb[0].mxu0
  %5907 = vmatprep.mubr.f32.mxu0 0.0
  %5908 = vmatmul.mubr.f32.gmra.mrb[0].mxu0 %v5250
  %v5909 = vpop.f32.mrb[0].mxu0
  %v5910 = vadd.f32 %v4587, %v5909
  %v5911 = vpop.f32.mrb[0].mxu0
  %5912 = vmatprep.mubr.f32.mxu0 0.0
  %5913 = vmatmul.mubr.f32.gmra.mrb[0].mxu0 %v5252
  %v5914 = vpop.f32.mrb[0].mxu0
  %v5915 = vadd.f32 %v4587, %v5914
  %v5916 = vpop.f32.mrb[0].mxu0
  %5917 = vmatprep.mubr.f32.mxu0 0.0
  %5918 = vmatmul.mubr.f32.gmra.mrb[0].mxu0 %v5254
  %v5919 = vpop.f32.mrb[0].mxu0
  %v5920 = vadd.f32 %v4587, %v5919
  %v5921 = vpop.f32.mrb[0].mxu0
  %5922 = vmatprep.mubr.f32.mxu0 0.0
  %5923 = vmatmul.mubr.f32.gmra.mrb[0].mxu0 %v5256
  %v5924 = vpop.f32.mrb[0].mxu0
  %v5925 = vadd.f32 %v4587, %v5924
  %v5926 = vpop.f32.mrb[0].mxu0
  %5927 = vmatprep.mubr.f32.mxu0 0.0
  %5928 = vmatmul.mubr.f32.gmra.mrb[0].mxu0 %v5258
  %v5929 = vpop.f32.mrb[0].mxu0
  %v5930 = vadd.f32 %v4587, %v5929
  %v5931 = vpop.f32.mrb[0].mxu0
  %5932 = vmatprep.mubr.f32.mxu0 0.0
  %5933 = vmatmul.mubr.f32.gmra.mrb[0].mxu0 %v5260
  %v5934 = vpop.f32.mrb[0].mxu0
  %v5935 = vadd.f32 %v4587, %v5934
  %v5936 = vpop.f32.mrb[0].mxu0
  %5937 = vmatprep.mubr.f32.mxu0 0.0
  %5938 = vmatmul.mubr.f32.gmra.mrb[0].mxu0 %v5262
  %v5939 = vpop.f32.mrb[0].mxu0
  %v5940 = vadd.f32 %v4587, %v5939
  %v5941 = vpop.f32.mrb[0].mxu0
  %5942 = vmatprep.mubr.f32.mxu0 0.0
  %5943 = vmatmul.mubr.f32.gmra.mrb[0].mxu0 %v5264
  %v5944 = vpop.f32.mrb[0].mxu0
  %v5945 = vadd.f32 %v4587, %v5944
  %v5946 = vpop.f32.mrb[0].mxu0
  %5947 = vmatprep.mubr.f32.mxu0 0.0
  %5948 = vmatmul.mubr.f32.gmra.mrb[0].mxu0 %v5266
  %v5949 = vpop.f32.mrb[0].mxu0
  %v5950 = vadd.f32 %v4587, %v5949
  %v5951 = vpop.f32.mrb[0].mxu0
  %5952 = vmatprep.mubr.f32.mxu0 0.0
  %5953 = vmatmul.mubr.f32.gmra.mrb[0].mxu0 %v5268
  %v5954 = vpop.f32.mrb[0].mxu0
  %v5955 = vadd.f32 %v4587, %v5954
  %v5956 = vpop.f32.mrb[0].mxu0
  %5957 = vmatprep.mubr.f32.mxu0 0.0
  %5958 = vmatmul.mubr.f32.gmra.mrb[0].mxu0 %v5270
  %v5959 = vpop.f32.mrb[0].mxu0
  %v5960 = vadd.f32 %v4587, %v5959
  %v5961 = vpop.f32.mrb[0].mxu0
  %5962 = vmatprep.mubr.f32.mxu0 0.0
  %5963 = vmatmul.mubr.f32.gmra.mrb[0].mxu0 %v5272
  %v5964 = vpop.f32.mrb[0].mxu0
  %v5965 = vadd.f32 %v4587, %v5964
  %v5966 = vpop.f32.mrb[0].mxu0
  %5967 = vmatprep.mubr.f32.mxu0 0.0
  %5968 = vmatmul.mubr.f32.gmra.mrb[0].mxu0 %v5274
  %v5969 = vpop.f32.mrb[0].mxu0
  %v5970 = vadd.f32 %v4587, %v5969
  %v5971 = vpop.f32.mrb[0].mxu0
  %5972 = vmatprep.mubr.f32.mxu0 0.0
  %5973 = vmatmul.mubr.f32.gmra.mrb[0].mxu0 %v5276
  %v5974 = vpop.f32.mrb[0].mxu0
  %v5975 = vadd.f32 %v4587, %v5974
  %v5976 = vpop.f32.mrb[0].mxu0
  %5977 = vmatprep.mubr.f32.mxu0 0.0
  %5978 = vmatmul.mubr.f32.gmra.mrb[0].mxu0 %v5278
  %v5979 = vpop.f32.mrb[0].mxu0
  %v5980 = vadd.f32 %v4587, %v5979
  %v5981 = vpop.f32.mrb[0].mxu0
  %5982 = vmatprep.mubr.f32.mxu0 0.0
  %5983 = vmatmul.mubr.f32.gmra.mrb[0].mxu0 %v5280
  %v5984 = vpop.f32.mrb[0].mxu0
  %v5985 = vadd.f32 %v4587, %v5984
  %v5986 = vpop.f32.mrb[0].mxu0
  %5987 = vmatprep.mubr.f32.mxu0 0.0
  %5988 = vmatmul.mubr.f32.gmra.mrb[0].mxu0 %v5282
  %v5989 = vpop.f32.mrb[0].mxu0
  %v5990 = vadd.f32 %v4587, %v5989
  %v5991 = vpop.f32.mrb[0].mxu0
  %5992 = vmatprep.mubr.f32.mxu0 0.0
  %5993 = vmatmul.mubr.f32.gmra.mrb[0].mxu0 %v5284
  %v5994 = vpop.f32.mrb[0].mxu0
  %v5995 = vadd.f32 %v4587, %v5994
  %v5996 = vpop.f32.mrb[0].mxu0
  %5997 = vmatprep.mubr.f32.mxu0 0.0
  %5998 = vmatmul.mubr.f32.gmra.mrb[0].mxu0 %v5286
  %v5999 = vpop.f32.mrb[0].mxu0
  %v6000 = vadd.f32 %v4587, %v5999
  %v6001 = vpop.f32.mrb[0].mxu0
  %6002 = vmatprep.mubr.f32.mxu0 0.0
  %6003 = vmatmul.mubr.f32.gmra.mrb[0].mxu0 %v5288
  %v6004 = vpop.f32.mrb[0].mxu0
  %v6005 = vadd.f32 %v4587, %v6004
  %v6006 = vpop.f32.mrb[0].mxu0
  %6007 = vmatprep.mubr.f32.mxu0 0.0
  %6008 = vmatmul.mubr.f32.gmra.mrb[0].mxu0 %v5290
  %v6009 = vpop.f32.mrb[0].mxu0
  %v6010 = vadd.f32 %v4587, %v6009
  %v6011 = vpop.f32.mrb[0].mxu0
  %6012 = vmatprep.mubr.f32.mxu0 0.0
  %6013 = vmatmul.mubr.f32.gmra.mrb[0].mxu0 %v5292
  %v6014 = vpop.f32.mrb[0].mxu0
  %v6015 = vadd.f32 %v4587, %v6014
  %v6016 = vpop.f32.mrb[0].mxu0
  %6017 = vmatprep.mubr.f32.mxu0 0.0
  %6018 = vmatmul.mubr.f32.gmra.mrb[0].mxu0 %v5294
  %v6019 = vpop.f32.mrb[0].mxu0
  %v6020 = vadd.f32 %v4587, %v6019
  %v6021 = vpop.f32.mrb[0].mxu0
  %6022 = vmatprep.mubr.f32.mxu0 0.0
  %6023 = vmatmul.mubr.f32.gmra.mrb[0].mxu0 %v5296
  %v6024 = vpop.f32.mrb[0].mxu0
  %v6025 = vadd.f32 %v4587, %v6024
  %v6026 = vpop.f32.mrb[0].mxu0
  %6027 = vmatprep.mubr.f32.mxu0 0.0
  %6028 = vmatmul.mubr.f32.gmra.mrb[0].mxu0 %v5298
  %v6029 = vpop.f32.mrb[0].mxu0
  %v6030 = vadd.f32 %v4587, %v6029
  %v6031 = vpop.f32.mrb[0].mxu0
  %6032 = vmatprep.mubr.f32.mxu0 0.0
  %6033 = vmatmul.mubr.f32.gmra.mrb[0].mxu0 %v5300
  %v6034 = vpop.f32.mrb[0].mxu0
  %v6035 = vadd.f32 %v4587, %v6034
  %v6036 = vpop.f32.mrb[0].mxu0
  %6037 = vmatprep.mubr.f32.mxu0 0.0
  %6038 = vmatmul.mubr.f32.gmra.mrb[0].mxu0 %v5302
  %v6039 = vpop.f32.mrb[0].mxu0
  %v6040 = vadd.f32 %v4587, %v6039
  %v6041 = vpop.f32.mrb[0].mxu0
  %6042 = vmatprep.mubr.f32.mxu0 0.0
  %6043 = vmatmul.mubr.f32.gmra.mrb[0].mxu0 %v5304
  %v6044 = vpop.f32.mrb[0].mxu0
  %v6045 = vadd.f32 %v4587, %v6044
  %v6046 = vpop.f32.mrb[0].mxu0
  %6047 = vmatprep.mubr.f32.mxu0 0.0
  %6048 = vmatmul.mubr.f32.gmra.mrb[0].mxu0 %v5306
  %v6049 = vpop.f32.mrb[0].mxu0
  %v6050 = vadd.f32 %v4587, %v6049
  %v6051 = vpop.f32.mrb[0].mxu0
  %6052 = vmatprep.mubr.f32.mxu0 0.0
  %6053 = vmatmul.mubr.f32.gmra.mrb[0].mxu0 %v5308
  %v6054 = vpop.f32.mrb[0].mxu0
  %v6055 = vadd.f32 %v4587, %v6054
  %v6056 = vpop.f32.mrb[0].mxu0
  %6057 = vmatprep.mubr.f32.mxu0 0.0
  %6058 = vmatmul.mubr.f32.gmra.mrb[0].mxu0 %v5310
  %v6059 = vpop.f32.mrb[0].mxu0
  %v6060 = vadd.f32 %v4587, %v6059
  %v6061 = vpop.f32.mrb[0].mxu0
  %6062 = vmatprep.mubr.f32.mxu0 0.0
  %6063 = vmatmul.mubr.f32.gmra.mrb[0].mxu0 %v5312
  %v6064 = vpop.f32.mrb[0].mxu0
  %v6065 = vadd.f32 %v4587, %v6064
  %v6066 = vpop.f32.mrb[0].mxu0
  %6067 = vmatprep.mubr.f32.mxu0 0.0
  %6068 = vmatmul.mubr.f32.gmra.mrb[0].mxu0 %v5314
  %v6069 = vpop.f32.mrb[0].mxu0
  %v6070 = vadd.f32 %v4587, %v6069
  %v6071 = vpop.f32.mrb[0].mxu0
  %6072 = vmatprep.mubr.f32.mxu0 0.0
  %6073 = vmatmul.mubr.f32.gmra.mrb[0].mxu0 %v5316
  %v6074 = vpop.f32.mrb[0].mxu0
  %v6075 = vadd.f32 %v4587, %v6074
  %v6076 = vpop.f32.mrb[0].mxu0
  %6077 = vmatprep.mubr.f32.mxu0 0.0
  %6078 = vmatmul.mubr.f32.gmra.mrb[0].mxu0 %v5318
  %v6079 = vpop.f32.mrb[0].mxu0
  %v6080 = vadd.f32 %v4587, %v6079
  %v6081 = vpop.f32.mrb[0].mxu0
  %6082 = vmatprep.mubr.f32.mxu0 0.0
  %6083 = vmatmul.mubr.f32.gmra.mrb[0].mxu0 %v5320
  %v6084 = vpop.f32.mrb[0].mxu0
  %v6085 = vadd.f32 %v4587, %v6084
  %v6086 = vpop.f32.mrb[0].mxu0
  %6087 = vmatprep.mubr.f32.mxu0 0.0
  %6088 = vmatmul.mubr.f32.gmra.mrb[0].mxu0 %v5322
  %v6089 = vpop.f32.mrb[0].mxu0
  %v6090 = vadd.f32 %v4587, %v6089
  %v6091 = vpop.f32.mrb[0].mxu0
  %6092 = vmatprep.mubr.f32.mxu0 0.0
  %6093 = vmatmul.mubr.f32.gmra.mrb[0].mxu0 %v5324
  %v6094 = vpop.f32.mrb[0].mxu0
  %v6095 = vadd.f32 %v4587, %v6094
  %v6096 = vpop.f32.mrb[0].mxu0
  %6097 = vmatprep.mubr.f32.mxu0 0.0
  %6098 = vmatmul.mubr.f32.gmra.mrb[0].mxu0 %v5326
  %v6099 = vpop.f32.mrb[0].mxu0
  %v6100 = vadd.f32 %v4587, %v6099
  %v6101 = vpop.f32.mrb[0].mxu0
  %6102 = vmatprep.mubr.f32.mxu0 0.0
  %6103 = vmatmul.mubr.f32.gmra.mrb[0].mxu0 %v5328
  %v6104 = vpop.f32.mrb[0].mxu0
  %v6105 = vadd.f32 %v4587, %v6104
  %v6106 = vpop.f32.mrb[0].mxu0
  %6107 = vmatprep.mubr.f32.mxu0 0.0
  %6108 = vmatmul.mubr.f32.gmra.mrb[0].mxu0 %v5330
  %v6109 = vpop.f32.mrb[0].mxu0
  %v6110 = vadd.f32 %v4587, %v6109
  %v6111 = vpop.f32.mrb[0].mxu0
  %6112 = vmatprep.mubr.f32.mxu0 0.0
  %6113 = vmatmul.mubr.f32.gmra.mrb[0].mxu0 %v5332
  %v6114 = vpop.f32.mrb[0].mxu0
  %v6115 = vadd.f32 %v4587, %v6114
  %v6116 = vpop.f32.mrb[0].mxu0
  %6117 = vmatprep.mubr.f32.mxu0 0.0
  %6118 = vmatmul.mubr.f32.gmra.mrb[0].mxu0 %v5334
  %v6119 = vpop.f32.mrb[0].mxu0
  %v6120 = vadd.f32 %v4587, %v6119
  %v6121 = vpop.f32.mrb[0].mxu0
  %6122 = vmatprep.mubr.f32.mxu0 0.0
  %6123 = vmatmul.mubr.f32.gmra.mrb[0].mxu0 %v5336
  %v6124 = vpop.f32.mrb[0].mxu0
  %v6125 = vadd.f32 %v4587, %v6124
  %v6126 = vpop.f32.mrb[0].mxu0
  %6127 = vmatprep.mubr.f32.mxu0 0.0
  %6128 = vmatmul.mubr.f32.gmra.mrb[0].mxu0 %v5338
  %v6129 = vpop.f32.mrb[0].mxu0
  %v6130 = vadd.f32 %v4587, %v6129
  %v6131 = vpop.f32.mrb[0].mxu0
  %6132 = vmatprep.mubr.f32.mxu0 0.0
  %6133 = vmatmul.mubr.f32.gmra.mrb[0].mxu0 %v5340
  %v6134 = vpop.f32.mrb[0].mxu0
  %v6135 = vadd.f32 %v4587, %v6134
  %v6136 = vpop.f32.mrb[0].mxu0
  %6137 = vmatprep.mubr.f32.mxu0 0.0
  %6138 = vmatmul.mubr.f32.gmra.mrb[0].mxu0 %v5342
  %v6139 = vpop.f32.mrb[0].mxu0
  %v6140 = vadd.f32 %v4587, %v6139
  %v6141 = vpop.f32.mrb[0].mxu0
  %6142 = vmatprep.mubr.f32.mxu0 0.0
  %6143 = vmatmul.mubr.f32.gmra.mrb[0].mxu0 %v5344
  %v6144 = vpop.f32.mrb[0].mxu0
  %v6145 = vadd.f32 %v4587, %v6144
  %v6146 = vpop.f32.mrb[0].mxu0
  %6147 = vmatprep.mubr.f32.mxu0 0.0
  %6148 = vmatmul.mubr.f32.gmra.mrb[0].mxu0 %v5346
  %v6149 = vpop.f32.mrb[0].mxu0
  %v6150 = vadd.f32 %v4587, %v6149
  %v6151 = vpop.f32.mrb[0].mxu0
  %6152 = vmatprep.mubr.f32.mxu0 0.0
  %6153 = vmatmul.mubr.f32.gmra.mrb[0].mxu0 %v5348
  %v6154 = vpop.f32.mrb[0].mxu0
  %v6155 = vadd.f32 %v4587, %v6154
  %v6156 = vpop.f32.mrb[0].mxu0
  %6157 = vmatprep.mubr.f32.mxu0 0.0
  %6158 = vmatmul.mubr.f32.gmra.mrb[0].mxu0 %v5350
  %v6159 = vpop.f32.mrb[0].mxu0
  %v6160 = vadd.f32 %v4587, %v6159
  %v6161 = vpop.f32.mrb[0].mxu0
  %6162 = vmatprep.mubr.f32.mxu0 0.0
  %6163 = vmatmul.mubr.f32.gmra.mrb[0].mxu0 %v5352
  %v6164 = vpop.f32.mrb[0].mxu0
  %v6165 = vadd.f32 %v4587, %v6164
  %v6166 = vpop.f32.mrb[0].mxu0
  %6167 = vmatprep.mubr.f32.mxu0 0.0
  %6168 = vmatmul.mubr.f32.gmra.mrb[0].mxu0 %v5354
  %v6169 = vpop.f32.mrb[0].mxu0
  %v6170 = vadd.f32 %v4587, %v6169
  %v6171 = vpop.f32.mrb[0].mxu0
  %6172 = vmatprep.mubr.f32.mxu0 0.0
  %6173 = vmatmul.mubr.f32.gmra.mrb[0].mxu0 %v5356
  %v6174 = vpop.f32.mrb[0].mxu0
  %v6175 = vadd.f32 %v4587, %v6174
  %v6176 = vpop.f32.mrb[0].mxu0
  %6177 = vmatprep.mubr.f32.mxu0 0.0
  %6178 = vmatmul.mubr.f32.gmra.mrb[0].mxu0 %v5358
  %v6179 = vpop.f32.mrb[0].mxu0
  %v6180 = vadd.f32 %v4587, %v6179
  %v6181 = vpop.f32.mrb[0].mxu0
  %6182 = vmatprep.mubr.f32.mxu0 0.0
  %6183 = vmatmul.mubr.f32.gmra.mrb[0].mxu0 %v5360
  %v6184 = vpop.f32.mrb[0].mxu0
  %v6185 = vadd.f32 %v4587, %v6184
  %v6186 = vpop.f32.mrb[0].mxu0
  %6187 = vmatprep.mubr.f32.mxu0 0.0
  %6188 = vmatmul.mubr.f32.gmra.mrb[0].mxu0 %v5362
  %v6189 = vpop.f32.mrb[0].mxu0
  %v6190 = vadd.f32 %v4587, %v6189
  %v6191 = vpop.f32.mrb[0].mxu0
  %6192 = vmatprep.mubr.f32.mxu0 0.0
  %6193 = vmatmul.mubr.f32.gmra.mrb[0].mxu0 %v5364
  %v6194 = vpop.f32.mrb[0].mxu0
  %v6195 = vadd.f32 %v4587, %v6194
  %v6196 = vpop.f32.mrb[0].mxu0
  %6197 = vmatprep.mubr.f32.mxu0 0.0
  %6198 = vmatmul.mubr.f32.gmra.mrb[0].mxu0 %v5366
  %v6199 = vpop.f32.mrb[0].mxu0
  %v6200 = vadd.f32 %v4587, %v6199
  %v6201 = vpop.f32.mrb[0].mxu0
  %6202 = vmatprep.mubr.f32.mxu0 0.0
  %6203 = vmatmul.mubr.f32.gmra.mrb[0].mxu0 %v5368
  %v6204 = vpop.f32.mrb[0].mxu0
  %v6205 = vadd.f32 %v4587, %v6204
  %v6206 = vpop.f32.mrb[0].mxu0
  %6207 = vmatprep.mubr.f32.mxu0 0.0
  %6208 = vmatmul.mubr.f32.gmra.mrb[0].mxu0 %v5370
  %v6209 = vpop.f32.mrb[0].mxu0
  %v6210 = vadd.f32 %v4587, %v6209
  %v6211 = vpop.f32.mrb[0].mxu0
  %6212 = vmatprep.mubr.f32.mxu0 0.0
  %6213 = vmatmul.mubr.f32.gmra.mrb[0].mxu0 %v5372
  %v6214 = vpop.f32.mrb[0].mxu0
  %v6215 = vadd.f32 %v4587, %v6214
  %v6216 = vpop.f32.mrb[0].mxu0
  %6217 = vmatprep.mubr.f32.mxu0 0.0
  %6218 = vmatmul.mubr.f32.gmra.mrb[0].mxu0 %v5374
  %v6219 = vpop.f32.mrb[0].mxu0
  %v6220 = vadd.f32 %v4587, %v6219
  %v6221 = vpop.f32.mrb[0].mxu0
  %6222 = vmatprep.mubr.f32.mxu0 0.0
  %6223 = vmatmul.mubr.f32.gmra.mrb[0].mxu0 %v5376
  %v6224 = vpop.f32.mrb[0].mxu0
  %v6225 = vadd.f32 %v4587, %v6224
  %v6226 = vpop.f32.mrb[0].mxu0
  %6227 = vmatprep.mubr.f32.mxu0 0.0
  %6228 = vmatmul.mubr.f32.gmra.mrb[0].mxu0 %v5378
  %v6229 = vpop.f32.mrb[0].mxu0
  %v6230 = vadd.f32 %v4587, %v6229
  %v6231 = vpop.f32.mrb[0].mxu0
  %6232 = vmatprep.mubr.f32.mxu0 0.0
  %6233 = vmatmul.mubr.f32.gmra.mrb[0].mxu0 %v5380
  %v6234 = vpop.f32.mrb[0].mxu0
  %v6235 = vadd.f32 %v4587, %v6234
  %v6236 = vpop.f32.mrb[0].mxu0
  %6237 = vmatprep.mubr.f32.mxu0 0.0
  %6238 = vmatmul.mubr.f32.gmra.mrb[0].mxu0 %v5382
  %v6239 = vpop.f32.mrb[0].mxu0
  %v6240 = vadd.f32 %v4587, %v6239
  %v6241 = vpop.f32.mrb[0].mxu0
  %6242 = vmatprep.mubr.f32.mxu0 0.0
  %6243 = vmatmul.mubr.f32.gmra.mrb[0].mxu0 %v5384
  %v6244 = vpop.f32.mrb[0].mxu0
  %v6245 = vadd.f32 %v4587, %v6244
  %v6246 = vpop.f32.mrb[0].mxu0
  %6247 = vmatprep.mubr.f32.mxu0 0.0
  %6248 = vmatmul.mubr.f32.gmra.mrb[0].mxu0 %v5386
  %v6249 = vpop.f32.mrb[0].mxu0
  %v6250 = vadd.f32 %v4587, %v6249
  %v6251 = vpop.f32.mrb[0].mxu0
  %6252 = vdwg.mxu0
  %v6253 = vmax.f32 %v5455, 0.0
  %v6254 = vmax.f32 %v5460, 0.0
  %v6255 = vmax.f32 %v5465, 0.0
  %v6256 = vmax.f32 %v5470, 0.0
  %v6257 = vmax.f32 %v5475, 0.0
  %v6258 = vmax.f32 %v5480, 0.0
  %v6259 = vmax.f32 %v5485, 0.0
  %v6260 = vmax.f32 %v5490, 0.0
  %v6261 = vmax.f32 %v5495, 0.0
  %v6262 = vmax.f32 %v5500, 0.0
  %v6263 = vmax.f32 %v5505, 0.0
  %v6264 = vmax.f32 %v5510, 0.0
  %v6265 = vmax.f32 %v5515, 0.0
  %v6266 = vmax.f32 %v5520, 0.0
  %v6267 = vmax.f32 %v5525, 0.0
  %v6268 = vmax.f32 %v5530, 0.0
  %v6269 = vmax.f32 %v5535, 0.0
  %v6270 = vmax.f32 %v5540, 0.0
  %v6271 = vmax.f32 %v5545, 0.0
  %v6272 = vmax.f32 %v5550, 0.0
  %v6273 = vmax.f32 %v5555, 0.0
  %v6274 = vmax.f32 %v5560, 0.0
  %v6275 = vmax.f32 %v5565, 0.0
  %v6276 = vmax.f32 %v5570, 0.0
  %v6277 = vmax.f32 %v5575, 0.0
  %v6278 = vmax.f32 %v5580, 0.0
  %v6279 = vmax.f32 %v5585, 0.0
  %v6280 = vmax.f32 %v5590, 0.0
  %v6281 = vmax.f32 %v5595, 0.0
  %v6282 = vmax.f32 %v5600, 0.0
  %v6283 = vmax.f32 %v5605, 0.0
  %v6284 = vmax.f32 %v5610, 0.0
  %v6285 = vmax.f32 %v5615, 0.0
  %v6286 = vmax.f32 %v5620, 0.0
  %v6287 = vmax.f32 %v5625, 0.0
  %v6288 = vmax.f32 %v5630, 0.0
  %v6289 = vmax.f32 %v5635, 0.0
  %v6290 = vmax.f32 %v5640, 0.0
  %v6291 = vmax.f32 %v5645, 0.0
  %v6292 = vmax.f32 %v5650, 0.0
  %v6293 = vmax.f32 %v5655, 0.0
  %v6294 = vmax.f32 %v5660, 0.0
  %v6295 = vmax.f32 %v5665, 0.0
  %v6296 = vmax.f32 %v5670, 0.0
  %v6297 = vmax.f32 %v5675, 0.0
  %v6298 = vmax.f32 %v5680, 0.0
  %v6299 = vmax.f32 %v5685, 0.0
  %v6300 = vmax.f32 %v5690, 0.0
  %v6301 = vmax.f32 %v5695, 0.0
  %v6302 = vmax.f32 %v5700, 0.0
  %v6303 = vmax.f32 %v5705, 0.0
  %v6304 = vmax.f32 %v5710, 0.0
  %v6305 = vmax.f32 %v5715, 0.0
  %v6306 = vmax.f32 %v5720, 0.0
  %v6307 = vmax.f32 %v5725, 0.0
  %v6308 = vmax.f32 %v5730, 0.0
  %v6309 = vmax.f32 %v5735, 0.0
  %v6310 = vmax.f32 %v5740, 0.0
  %v6311 = vmax.f32 %v5745, 0.0
  %v6312 = vmax.f32 %v5750, 0.0
  %v6313 = vmax.f32 %v5755, 0.0
  %v6314 = vmax.f32 %v5760, 0.0
  %v6315 = vmax.f32 %v5765, 0.0
  %v6316 = vmax.f32 %v5770, 0.0
  %v6317 = vmax.f32 %v5775, 0.0
  %v6318 = vmax.f32 %v5780, 0.0
  %v6319 = vmax.f32 %v5785, 0.0
  %v6320 = vmax.f32 %v5790, 0.0
  %v6321 = vmax.f32 %v5795, 0.0
  %v6322 = vmax.f32 %v5800, 0.0
  %v6323 = vmax.f32 %v5805, 0.0
  %v6324 = vmax.f32 %v5810, 0.0
  %v6325 = vmax.f32 %v5815, 0.0
  %v6326 = vmax.f32 %v5820, 0.0
  %v6327 = vmax.f32 %v5825, 0.0
  %v6328 = vmax.f32 %v5830, 0.0
  %v6329 = vmax.f32 %v5835, 0.0
  %v6330 = vmax.f32 %v5840, 0.0
  %v6331 = vmax.f32 %v5845, 0.0
  %v6332 = vmax.f32 %v5850, 0.0
  %v6333 = vmax.f32 %v5855, 0.0
  %v6334 = vmax.f32 %v5860, 0.0
  %v6335 = vmax.f32 %v5865, 0.0
  %v6336 = vmax.f32 %v5870, 0.0
  %v6337 = vmax.f32 %v5875, 0.0
  %v6338 = vmax.f32 %v5880, 0.0
  %v6339 = vmax.f32 %v5885, 0.0
  %v6340 = vmax.f32 %v5890, 0.0
  %v6341 = vmax.f32 %v5895, 0.0
  %v6342 = vmax.f32 %v5900, 0.0
  %v6343 = vmax.f32 %v5905, 0.0
  %v6344 = vmax.f32 %v5910, 0.0
  %v6345 = vmax.f32 %v5915, 0.0
  %v6346 = vmax.f32 %v5920, 0.0
  %v6347 = vmax.f32 %v5925, 0.0
  %v6348 = vmax.f32 %v5930, 0.0
  %v6349 = vmax.f32 %v5935, 0.0
  %v6350 = vmax.f32 %v5940, 0.0
  %v6351 = vmax.f32 %v5945, 0.0
  %v6352 = vmax.f32 %v5950, 0.0
  %v6353 = vmax.f32 %v5955, 0.0
  %v6354 = vmax.f32 %v5960, 0.0
  %v6355 = vmax.f32 %v5965, 0.0
  %v6356 = vmax.f32 %v5970, 0.0
  %v6357 = vmax.f32 %v5975, 0.0
  %v6358 = vmax.f32 %v5980, 0.0
  %v6359 = vmax.f32 %v5985, 0.0
  %v6360 = vmax.f32 %v5990, 0.0
  %v6361 = vmax.f32 %v5995, 0.0
  %v6362 = vmax.f32 %v6000, 0.0
  %v6363 = vmax.f32 %v6005, 0.0
  %v6364 = vmax.f32 %v6010, 0.0
  %v6365 = vmax.f32 %v6015, 0.0
  %v6366 = vmax.f32 %v6020, 0.0
  %v6367 = vmax.f32 %v6025, 0.0
  %v6368 = vmax.f32 %v6030, 0.0
  %v6369 = vmax.f32 %v6035, 0.0
  %v6370 = vmax.f32 %v6040, 0.0
  %v6371 = vmax.f32 %v6045, 0.0
  %v6372 = vmax.f32 %v6050, 0.0
  %v6373 = vmax.f32 %v6055, 0.0
  %v6374 = vmax.f32 %v6060, 0.0
  %v6375 = vmax.f32 %v6065, 0.0
  %v6376 = vmax.f32 %v6070, 0.0
  %v6377 = vmax.f32 %v6075, 0.0
  %v6378 = vmax.f32 %v6080, 0.0
  %v6379 = vmax.f32 %v6085, 0.0
  %v6380 = vmax.f32 %v6090, 0.0
  %v6381 = vmax.f32 %v6095, 0.0
  %v6382 = vmax.f32 %v6100, 0.0
  %v6383 = vmax.f32 %v6105, 0.0
  %v6384 = vmax.f32 %v6110, 0.0
  %v6385 = vmax.f32 %v6115, 0.0
  %v6386 = vmax.f32 %v6120, 0.0
  %v6387 = vmax.f32 %v6125, 0.0
  %v6388 = vmax.f32 %v6130, 0.0
  %v6389 = vmax.f32 %v6135, 0.0
  %v6390 = vmax.f32 %v6140, 0.0
  %v6391 = vmax.f32 %v6145, 0.0
  %v6392 = vmax.f32 %v6150, 0.0
  %v6393 = vmax.f32 %v6155, 0.0
  %v6394 = vmax.f32 %v6160, 0.0
  %v6395 = vmax.f32 %v6165, 0.0
  %v6396 = vmax.f32 %v6170, 0.0
  %v6397 = vmax.f32 %v6175, 0.0
  %v6398 = vmax.f32 %v6180, 0.0
  %v6399 = vmax.f32 %v6185, 0.0
  %v6400 = vmax.f32 %v6190, 0.0
  %v6401 = vmax.f32 %v6195, 0.0
  %v6402 = vmax.f32 %v6200, 0.0
  %v6403 = vmax.f32 %v6205, 0.0
  %v6404 = vmax.f32 %v6210, 0.0
  %v6405 = vmax.f32 %v6215, 0.0
  %v6406 = vmax.f32 %v6220, 0.0
  %v6407 = vmax.f32 %v6225, 0.0
  %v6408 = vmax.f32 %v6230, 0.0
  %v6409 = vmax.f32 %v6235, 0.0
  %v6410 = vmax.f32 %v6240, 0.0
  %v6411 = vmax.f32 %v6245, 0.0
  %v6412 = vmax.f32 %v6250, 0.0
  %v6413 = vlaneseq
  %v6414 = vshrl.u32 %v6413, 7
  %v6415 = vsub.s32 0, %v6414
  %v6416 = vrot.slane %v77, %v6415
  %v6418 = vsel %vm2116, %v6253, 0
  %v6421 = vsel %vm2116, %v6254, 0
  %v6424 = vsel %vm2116, %v6255, 0
  %v6427 = vsel %vm2116, %v6256, 0
  %v6430 = vsel %vm2116, %v6257, 0
  %v6433 = vsel %vm2116, %v6258, 0
  %v6436 = vsel %vm2116, %v6259, 0
  %v6439 = vsel %vm2116, %v6260, 0
  %v6442 = vsel %vm2116, %v6261, 0
  %v6445 = vsel %vm2116, %v6262, 0
  %v6448 = vsel %vm2116, %v6263, 0
  %v6451 = vsel %vm2116, %v6264, 0
  %v6454 = vsel %vm2116, %v6265, 0
  %v6457 = vsel %vm2116, %v6266, 0
  %v6460 = vsel %vm2116, %v6267, 0
  %v6463 = vsel %vm2116, %v6268, 0
  %v6466 = vsel %vm2116, %v6269, 0
  %v6469 = vsel %vm2116, %v6270, 0
  %v6472 = vsel %vm2116, %v6271, 0
  %v6475 = vsel %vm2116, %v6272, 0
  %v6478 = vsel %vm2116, %v6273, 0
  %v6481 = vsel %vm2116, %v6274, 0
  %v6484 = vsel %vm2116, %v6275, 0
  %v6487 = vsel %vm2116, %v6276, 0
  %v6490 = vsel %vm2116, %v6277, 0
  %v6493 = vsel %vm2116, %v6278, 0
  %v6496 = vsel %vm2116, %v6279, 0
  %v6499 = vsel %vm2116, %v6280, 0
  %v6502 = vsel %vm2116, %v6281, 0
  %v6505 = vsel %vm2116, %v6282, 0
  %v6508 = vsel %vm2116, %v6283, 0
  %v6511 = vsel %vm2116, %v6284, 0
  %v6514 = vsel %vm2116, %v6285, 0
  %v6517 = vsel %vm2116, %v6286, 0
  %v6520 = vsel %vm2116, %v6287, 0
  %v6523 = vsel %vm2116, %v6288, 0
  %v6526 = vsel %vm2116, %v6289, 0
  %v6529 = vsel %vm2116, %v6290, 0
  %v6532 = vsel %vm2116, %v6291, 0
  %v6535 = vsel %vm2116, %v6292, 0
  %v6538 = vsel %vm2116, %v6293, 0
  %v6541 = vsel %vm2116, %v6294, 0
  %v6544 = vsel %vm2116, %v6295, 0
  %v6547 = vsel %vm2116, %v6296, 0
  %v6550 = vsel %vm2116, %v6297, 0
  %v6553 = vsel %vm2116, %v6298, 0
  %v6556 = vsel %vm2116, %v6299, 0
  %v6559 = vsel %vm2116, %v6300, 0
  %v6562 = vsel %vm2116, %v6301, 0
  %v6565 = vsel %vm2116, %v6302, 0
  %v6568 = vsel %vm2116, %v6303, 0
  %v6571 = vsel %vm2116, %v6304, 0
  %v6574 = vsel %vm2116, %v6305, 0
  %v6577 = vsel %vm2116, %v6306, 0
  %v6580 = vsel %vm2116, %v6307, 0
  %v6583 = vsel %vm2116, %v6308, 0
  %v6586 = vsel %vm2116, %v6309, 0
  %v6589 = vsel %vm2116, %v6310, 0
  %v6592 = vsel %vm2116, %v6311, 0
  %v6595 = vsel %vm2116, %v6312, 0
  %v6598 = vsel %vm2116, %v6313, 0
  %v6601 = vsel %vm2116, %v6314, 0
  %v6604 = vsel %vm2116, %v6315, 0
  %v6607 = vsel %vm2116, %v6316, 0
  %v6610 = vsel %vm2116, %v6317, 0
  %v6613 = vsel %vm2116, %v6318, 0
  %v6616 = vsel %vm2116, %v6319, 0
  %v6619 = vsel %vm2116, %v6320, 0
  %v6622 = vsel %vm2116, %v6321, 0
  %v6625 = vsel %vm2116, %v6322, 0
  %v6628 = vsel %vm2116, %v6323, 0
  %v6631 = vsel %vm2116, %v6324, 0
  %v6634 = vsel %vm2116, %v6325, 0
  %v6637 = vsel %vm2116, %v6326, 0
  %v6640 = vsel %vm2116, %v6327, 0
  %v6643 = vsel %vm2116, %v6328, 0
  %v6646 = vsel %vm2116, %v6329, 0
  %v6649 = vsel %vm2116, %v6330, 0
  %v6652 = vsel %vm2116, %v6331, 0
  %v6655 = vsel %vm2116, %v6332, 0
  %v6658 = vsel %vm2116, %v6333, 0
  %v6661 = vsel %vm2116, %v6334, 0
  %v6664 = vsel %vm2116, %v6335, 0
  %v6667 = vsel %vm2116, %v6336, 0
  %v6670 = vsel %vm2116, %v6337, 0
  %v6673 = vsel %vm2116, %v6338, 0
  %v6676 = vsel %vm2116, %v6339, 0
  %v6679 = vsel %vm2116, %v6340, 0
  %v6682 = vsel %vm2116, %v6341, 0
  %v6685 = vsel %vm2116, %v6342, 0
  %v6688 = vsel %vm2116, %v6343, 0
  %v6691 = vsel %vm2116, %v6344, 0
  %v6694 = vsel %vm2116, %v6345, 0
  %v6697 = vsel %vm2116, %v6346, 0
  %v6700 = vsel %vm2116, %v6347, 0
  %v6703 = vsel %vm2116, %v6348, 0
  %v6706 = vsel %vm2116, %v6349, 0
  %v6709 = vsel %vm2116, %v6350, 0
  %v6712 = vsel %vm2116, %v6351, 0
  %v6715 = vsel %vm2116, %v6352, 0
  %v6718 = vsel %vm2116, %v6353, 0
  %v6721 = vsel %vm2116, %v6354, 0
  %v6724 = vsel %vm2116, %v6355, 0
  %v6727 = vsel %vm2116, %v6356, 0
  %v6730 = vsel %vm2116, %v6357, 0
  %v6733 = vsel %vm2116, %v6358, 0
  %v6736 = vsel %vm2116, %v6359, 0
  %v6739 = vsel %vm2116, %v6360, 0
  %v6742 = vsel %vm2116, %v6361, 0
  %v6745 = vsel %vm2116, %v6362, 0
  %v6748 = vsel %vm2116, %v6363, 0
  %v6751 = vsel %vm2116, %v6364, 0
  %v6754 = vsel %vm2116, %v6365, 0
  %v6757 = vsel %vm2116, %v6366, 0
  %v6760 = vsel %vm2116, %v6367, 0
  %v6763 = vsel %vm2116, %v6368, 0
  %v6766 = vsel %vm2116, %v6369, 0
  %v6769 = vsel %vm2116, %v6370, 0
  %v6772 = vsel %vm2116, %v6371, 0
  %v6775 = vsel %vm2116, %v6372, 0
  %v6778 = vsel %vm2116, %v6373, 0
  %v6781 = vsel %vm2116, %v6374, 0
  %v6784 = vsel %vm2116, %v6375, 0
  %v6787 = vsel %vm2116, %v6376, 0
  %v6790 = vsel %vm2116, %v6377, 0
  %v6793 = vsel %vm2116, %v6378, 0
  %v6796 = vsel %vm2116, %v6379, 0
  %v6799 = vsel %vm2116, %v6380, 0
  %v6802 = vsel %vm2116, %v6381, 0
  %v6805 = vsel %vm2116, %v6382, 0
  %v6808 = vsel %vm2116, %v6383, 0
  %v6811 = vsel %vm2116, %v6384, 0
  %v6814 = vsel %vm2116, %v6385, 0
  %v6817 = vsel %vm2116, %v6386, 0
  %v6820 = vsel %vm2116, %v6387, 0
  %v6823 = vsel %vm2116, %v6388, 0
  %v6826 = vsel %vm2116, %v6389, 0
  %v6829 = vsel %vm2116, %v6390, 0
  %v6832 = vsel %vm2116, %v6391, 0
  %v6835 = vsel %vm2116, %v6392, 0
  %v6838 = vsel %vm2116, %v6393, 0
  %v6841 = vsel %vm2116, %v6394, 0
  %v6844 = vsel %vm2116, %v6395, 0
  %v6847 = vsel %vm2116, %v6396, 0
  %v6850 = vsel %vm2116, %v6397, 0
  %v6853 = vsel %vm2116, %v6398, 0
  %v6856 = vsel %vm2116, %v6399, 0
  %v6859 = vsel %vm2116, %v6400, 0
  %v6862 = vsel %vm2116, %v6401, 0
  %v6865 = vsel %vm2116, %v6402, 0
  %v6868 = vsel %vm2116, %v6403, 0
  %v6871 = vsel %vm2116, %v6404, 0
  %v6874 = vsel %vm2116, %v6405, 0
  %v6877 = vsel %vm2116, %v6406, 0
  %v6880 = vsel %vm2116, %v6407, 0
  %v6883 = vsel %vm2116, %v6408, 0
  %v6886 = vsel %vm2116, %v6409, 0
  %v6889 = vsel %vm2116, %v6410, 0
  %v6892 = vsel %vm2116, %v6411, 0
  %v6895 = vsel %vm2116, %v6412, 0
  %6897 = vmatprep.subr.mxu0 0.0
  %6898 = vmatpush1.msra.mxu0 %v50
  %6899 = vmatprep.subr.mxu0 0.0
  %6900 = vmatpush1.msra.mxu0 %v51
  %6901 = vmatprep.subr.mxu0 0.0
  %6902 = vmatpush1.msra.mxu0 %v52
  %6903 = vmatprep.subr.mxu0 0.0
  %6904 = vmatpush1.msra.mxu0 %v53
  %6905 = vmatprep.subr.mxu0 0.0
  %6906 = vmatpush1.msra.mxu0 %v54
  %6907 = vmatprep.subr.mxu0 0.0
  %6908 = vmatpush1.msra.mxu0 %v55
  %6909 = vmatprep.subr.mxu0 0.0
  %6910 = vmatpush1.msra.mxu0 0.0
  %6911 = vmatprep.subr.mxu0 0.0
  %6912 = vmatpush1.msra.mxu0 0.0
  %6913 = vmatprep.subr.mxu0 0.0
  %6914 = vmatpush1.msra.mxu0 0.0
  %6915 = vmatprep.subr.mxu0 0.0
  %6916 = vmatpush1.msra.mxu0 0.0
  %6917 = vmatprep.subr.mxu0 0.0
  %6918 = vmatpush1.msra.mxu0 0.0
  %6919 = vmatprep.subr.mxu0 0.0
  %6920 = vmatpush1.msra.mxu0 0.0
  %6921 = vmatprep.subr.mxu0 0.0
  %6922 = vmatpush1.msra.mxu0 0.0
  %6923 = vmatprep.subr.mxu0 0.0
  %6924 = vmatpush1.msra.mxu0 0.0
  %6925 = vmatprep.subr.mxu0 0.0
  %6926 = vmatpush1.msra.mxu0 0.0
  %6927 = vmatprep.subr.mxu0 0.0
  %6928 = vmatpush1.msra.mxu0 0.0
  %6929 = vmatprep.subr.mxu0 0.0
  %6930 = vmatpush1.msra.mxu0 0.0
  %6931 = vmatprep.subr.mxu0 0.0
  %6932 = vmatpush1.msra.mxu0 0.0
  %6933 = vmatprep.subr.mxu0 0.0
  %6934 = vmatpush1.msra.mxu0 0.0
  %6935 = vmatprep.subr.mxu0 0.0
  %6936 = vmatpush1.msra.mxu0 0.0
  %6937 = vmatprep.subr.mxu0 0.0
  %6938 = vmatpush1.msra.mxu0 0.0
  %6939 = vmatprep.subr.mxu0 0.0
  %6940 = vmatpush1.msra.mxu0 0.0
  %6941 = vmatprep.subr.mxu0 0.0
  %6942 = vmatpush1.msra.mxu0 0.0
  %6943 = vmatprep.subr.mxu0 0.0
  %6944 = vmatpush1.msra.mxu0 0.0
  %6945 = vmatprep.subr.mxu0 0.0
  %6946 = vmatpush1.msra.mxu0 0.0
  %6947 = vmatprep.subr.mxu0 0.0
  %6948 = vmatpush1.msra.mxu0 0.0
  %6949 = vmatprep.subr.mxu0 0.0
  %6950 = vmatpush1.msra.mxu0 0.0
  %6951 = vmatprep.subr.mxu0 0.0
  %6952 = vmatpush1.msra.mxu0 0.0
  %6953 = vmatprep.subr.mxu0 0.0
  %6954 = vmatpush1.msra.mxu0 0.0
  %6955 = vmatprep.subr.mxu0 0.0
  %6956 = vmatpush1.msra.mxu0 0.0
  %6957 = vmatprep.subr.mxu0 0.0
  %6958 = vmatpush1.msra.mxu0 0.0
  %6959 = vmatprep.subr.mxu0 0.0
  %6960 = vmatpush1.msra.mxu0 0.0
  %6961 = vmatprep.mubr.f32.mxu0 0.0
  %6962 = vmatmul.mubr.f32.gmra.mrb[0].mxu0 %v6418
  %v6963 = vpop.f32.mrb[0].mxu0
  %v6964 = vadd.f32 %v6416, %v6963
  %v6965 = vpop.f32.mrb[0].mxu0
  %6966 = vmatprep.mubr.f32.mxu0 0.0
  %6967 = vmatmul.mubr.f32.gmra.mrb[0].mxu0 %v6421
  %v6968 = vpop.f32.mrb[0].mxu0
  %v6969 = vadd.f32 %v6416, %v6968
  %v6970 = vpop.f32.mrb[0].mxu0
  %6971 = vmatprep.mubr.f32.mxu0 0.0
  %6972 = vmatmul.mubr.f32.gmra.mrb[0].mxu0 %v6424
  %v6973 = vpop.f32.mrb[0].mxu0
  %v6974 = vadd.f32 %v6416, %v6973
  %v6975 = vpop.f32.mrb[0].mxu0
  %6976 = vmatprep.mubr.f32.mxu0 0.0
  %6977 = vmatmul.mubr.f32.gmra.mrb[0].mxu0 %v6427
  %v6978 = vpop.f32.mrb[0].mxu0
  %v6979 = vadd.f32 %v6416, %v6978
  %v6980 = vpop.f32.mrb[0].mxu0
  %6981 = vmatprep.mubr.f32.mxu0 0.0
  %6982 = vmatmul.mubr.f32.gmra.mrb[0].mxu0 %v6430
  %v6983 = vpop.f32.mrb[0].mxu0
  %v6984 = vadd.f32 %v6416, %v6983
  %v6985 = vpop.f32.mrb[0].mxu0
  %6986 = vmatprep.mubr.f32.mxu0 0.0
  %6987 = vmatmul.mubr.f32.gmra.mrb[0].mxu0 %v6433
  %v6988 = vpop.f32.mrb[0].mxu0
  %v6989 = vadd.f32 %v6416, %v6988
  %v6990 = vpop.f32.mrb[0].mxu0
  %6991 = vmatprep.mubr.f32.mxu0 0.0
  %6992 = vmatmul.mubr.f32.gmra.mrb[0].mxu0 %v6436
  %v6993 = vpop.f32.mrb[0].mxu0
  %v6994 = vadd.f32 %v6416, %v6993
  %v6995 = vpop.f32.mrb[0].mxu0
  %6996 = vmatprep.mubr.f32.mxu0 0.0
  %6997 = vmatmul.mubr.f32.gmra.mrb[0].mxu0 %v6439
  %v6998 = vpop.f32.mrb[0].mxu0
  %v6999 = vadd.f32 %v6416, %v6998
  %v7000 = vpop.f32.mrb[0].mxu0
  %7001 = vmatprep.mubr.f32.mxu0 0.0
  %7002 = vmatmul.mubr.f32.gmra.mrb[0].mxu0 %v6442
  %v7003 = vpop.f32.mrb[0].mxu0
  %v7004 = vadd.f32 %v6416, %v7003
  %v7005 = vpop.f32.mrb[0].mxu0
  %7006 = vmatprep.mubr.f32.mxu0 0.0
  %7007 = vmatmul.mubr.f32.gmra.mrb[0].mxu0 %v6445
  %v7008 = vpop.f32.mrb[0].mxu0
  %v7009 = vadd.f32 %v6416, %v7008
  %v7010 = vpop.f32.mrb[0].mxu0
  %7011 = vmatprep.mubr.f32.mxu0 0.0
  %7012 = vmatmul.mubr.f32.gmra.mrb[0].mxu0 %v6448
  %v7013 = vpop.f32.mrb[0].mxu0
  %v7014 = vadd.f32 %v6416, %v7013
  %v7015 = vpop.f32.mrb[0].mxu0
  %7016 = vmatprep.mubr.f32.mxu0 0.0
  %7017 = vmatmul.mubr.f32.gmra.mrb[0].mxu0 %v6451
  %v7018 = vpop.f32.mrb[0].mxu0
  %v7019 = vadd.f32 %v6416, %v7018
  %v7020 = vpop.f32.mrb[0].mxu0
  %7021 = vmatprep.mubr.f32.mxu0 0.0
  %7022 = vmatmul.mubr.f32.gmra.mrb[0].mxu0 %v6454
  %v7023 = vpop.f32.mrb[0].mxu0
  %v7024 = vadd.f32 %v6416, %v7023
  %v7025 = vpop.f32.mrb[0].mxu0
  %7026 = vmatprep.mubr.f32.mxu0 0.0
  %7027 = vmatmul.mubr.f32.gmra.mrb[0].mxu0 %v6457
  %v7028 = vpop.f32.mrb[0].mxu0
  %v7029 = vadd.f32 %v6416, %v7028
  %v7030 = vpop.f32.mrb[0].mxu0
  %7031 = vmatprep.mubr.f32.mxu0 0.0
  %7032 = vmatmul.mubr.f32.gmra.mrb[0].mxu0 %v6460
  %v7033 = vpop.f32.mrb[0].mxu0
  %v7034 = vadd.f32 %v6416, %v7033
  %v7035 = vpop.f32.mrb[0].mxu0
  %7036 = vmatprep.mubr.f32.mxu0 0.0
  %7037 = vmatmul.mubr.f32.gmra.mrb[0].mxu0 %v6463
  %v7038 = vpop.f32.mrb[0].mxu0
  %v7039 = vadd.f32 %v6416, %v7038
  %v7040 = vpop.f32.mrb[0].mxu0
  %7041 = vmatprep.mubr.f32.mxu0 0.0
  %7042 = vmatmul.mubr.f32.gmra.mrb[0].mxu0 %v6466
  %v7043 = vpop.f32.mrb[0].mxu0
  %v7044 = vadd.f32 %v6416, %v7043
  %v7045 = vpop.f32.mrb[0].mxu0
  %7046 = vmatprep.mubr.f32.mxu0 0.0
  %7047 = vmatmul.mubr.f32.gmra.mrb[0].mxu0 %v6469
  %v7048 = vpop.f32.mrb[0].mxu0
  %v7049 = vadd.f32 %v6416, %v7048
  %v7050 = vpop.f32.mrb[0].mxu0
  %7051 = vmatprep.mubr.f32.mxu0 0.0
  %7052 = vmatmul.mubr.f32.gmra.mrb[0].mxu0 %v6472
  %v7053 = vpop.f32.mrb[0].mxu0
  %v7054 = vadd.f32 %v6416, %v7053
  %v7055 = vpop.f32.mrb[0].mxu0
  %7056 = vmatprep.mubr.f32.mxu0 0.0
  %7057 = vmatmul.mubr.f32.gmra.mrb[0].mxu0 %v6475
  %v7058 = vpop.f32.mrb[0].mxu0
  %v7059 = vadd.f32 %v6416, %v7058
  %v7060 = vpop.f32.mrb[0].mxu0
  %7061 = vmatprep.mubr.f32.mxu0 0.0
  %7062 = vmatmul.mubr.f32.gmra.mrb[0].mxu0 %v6478
  %v7063 = vpop.f32.mrb[0].mxu0
  %v7064 = vadd.f32 %v6416, %v7063
  %v7065 = vpop.f32.mrb[0].mxu0
  %7066 = vmatprep.mubr.f32.mxu0 0.0
  %7067 = vmatmul.mubr.f32.gmra.mrb[0].mxu0 %v6481
  %v7068 = vpop.f32.mrb[0].mxu0
  %v7069 = vadd.f32 %v6416, %v7068
  %v7070 = vpop.f32.mrb[0].mxu0
  %7071 = vmatprep.mubr.f32.mxu0 0.0
  %7072 = vmatmul.mubr.f32.gmra.mrb[0].mxu0 %v6484
  %v7073 = vpop.f32.mrb[0].mxu0
  %v7074 = vadd.f32 %v6416, %v7073
  %v7075 = vpop.f32.mrb[0].mxu0
  %7076 = vmatprep.mubr.f32.mxu0 0.0
  %7077 = vmatmul.mubr.f32.gmra.mrb[0].mxu0 %v6487
  %v7078 = vpop.f32.mrb[0].mxu0
  %v7079 = vadd.f32 %v6416, %v7078
  %v7080 = vpop.f32.mrb[0].mxu0
  %7081 = vmatprep.mubr.f32.mxu0 0.0
  %7082 = vmatmul.mubr.f32.gmra.mrb[0].mxu0 %v6490
  %v7083 = vpop.f32.mrb[0].mxu0
  %v7084 = vadd.f32 %v6416, %v7083
  %v7085 = vpop.f32.mrb[0].mxu0
  %7086 = vmatprep.mubr.f32.mxu0 0.0
  %7087 = vmatmul.mubr.f32.gmra.mrb[0].mxu0 %v6493
  %v7088 = vpop.f32.mrb[0].mxu0
  %v7089 = vadd.f32 %v6416, %v7088
  %v7090 = vpop.f32.mrb[0].mxu0
  %7091 = vmatprep.mubr.f32.mxu0 0.0
  %7092 = vmatmul.mubr.f32.gmra.mrb[0].mxu0 %v6496
  %v7093 = vpop.f32.mrb[0].mxu0
  %v7094 = vadd.f32 %v6416, %v7093
  %v7095 = vpop.f32.mrb[0].mxu0
  %7096 = vmatprep.mubr.f32.mxu0 0.0
  %7097 = vmatmul.mubr.f32.gmra.mrb[0].mxu0 %v6499
  %v7098 = vpop.f32.mrb[0].mxu0
  %v7099 = vadd.f32 %v6416, %v7098
  %v7100 = vpop.f32.mrb[0].mxu0
  %7101 = vmatprep.mubr.f32.mxu0 0.0
  %7102 = vmatmul.mubr.f32.gmra.mrb[0].mxu0 %v6502
  %v7103 = vpop.f32.mrb[0].mxu0
  %v7104 = vadd.f32 %v6416, %v7103
  %v7105 = vpop.f32.mrb[0].mxu0
  %7106 = vmatprep.mubr.f32.mxu0 0.0
  %7107 = vmatmul.mubr.f32.gmra.mrb[0].mxu0 %v6505
  %v7108 = vpop.f32.mrb[0].mxu0
  %v7109 = vadd.f32 %v6416, %v7108
  %v7110 = vpop.f32.mrb[0].mxu0
  %7111 = vmatprep.mubr.f32.mxu0 0.0
  %7112 = vmatmul.mubr.f32.gmra.mrb[0].mxu0 %v6508
  %v7113 = vpop.f32.mrb[0].mxu0
  %v7114 = vadd.f32 %v6416, %v7113
  %v7115 = vpop.f32.mrb[0].mxu0
  %7116 = vmatprep.mubr.f32.mxu0 0.0
  %7117 = vmatmul.mubr.f32.gmra.mrb[0].mxu0 %v6511
  %v7118 = vpop.f32.mrb[0].mxu0
  %v7119 = vadd.f32 %v6416, %v7118
  %v7120 = vpop.f32.mrb[0].mxu0
  %7121 = vmatprep.mubr.f32.mxu0 0.0
  %7122 = vmatmul.mubr.f32.gmra.mrb[0].mxu0 %v6514
  %v7123 = vpop.f32.mrb[0].mxu0
  %v7124 = vadd.f32 %v6416, %v7123
  %v7125 = vpop.f32.mrb[0].mxu0
  %7126 = vmatprep.mubr.f32.mxu0 0.0
  %7127 = vmatmul.mubr.f32.gmra.mrb[0].mxu0 %v6517
  %v7128 = vpop.f32.mrb[0].mxu0
  %v7129 = vadd.f32 %v6416, %v7128
  %v7130 = vpop.f32.mrb[0].mxu0
  %7131 = vmatprep.mubr.f32.mxu0 0.0
  %7132 = vmatmul.mubr.f32.gmra.mrb[0].mxu0 %v6520
  %v7133 = vpop.f32.mrb[0].mxu0
  %v7134 = vadd.f32 %v6416, %v7133
  %v7135 = vpop.f32.mrb[0].mxu0
  %7136 = vmatprep.mubr.f32.mxu0 0.0
  %7137 = vmatmul.mubr.f32.gmra.mrb[0].mxu0 %v6523
  %v7138 = vpop.f32.mrb[0].mxu0
  %v7139 = vadd.f32 %v6416, %v7138
  %v7140 = vpop.f32.mrb[0].mxu0
  %7141 = vmatprep.mubr.f32.mxu0 0.0
  %7142 = vmatmul.mubr.f32.gmra.mrb[0].mxu0 %v6526
  %v7143 = vpop.f32.mrb[0].mxu0
  %v7144 = vadd.f32 %v6416, %v7143
  %v7145 = vpop.f32.mrb[0].mxu0
  %7146 = vmatprep.mubr.f32.mxu0 0.0
  %7147 = vmatmul.mubr.f32.gmra.mrb[0].mxu0 %v6529
  %v7148 = vpop.f32.mrb[0].mxu0
  %v7149 = vadd.f32 %v6416, %v7148
  %v7150 = vpop.f32.mrb[0].mxu0
  %7151 = vmatprep.mubr.f32.mxu0 0.0
  %7152 = vmatmul.mubr.f32.gmra.mrb[0].mxu0 %v6532
  %v7153 = vpop.f32.mrb[0].mxu0
  %v7154 = vadd.f32 %v6416, %v7153
  %v7155 = vpop.f32.mrb[0].mxu0
  %7156 = vmatprep.mubr.f32.mxu0 0.0
  %7157 = vmatmul.mubr.f32.gmra.mrb[0].mxu0 %v6535
  %v7158 = vpop.f32.mrb[0].mxu0
  %v7159 = vadd.f32 %v6416, %v7158
  %v7160 = vpop.f32.mrb[0].mxu0
  %7161 = vmatprep.mubr.f32.mxu0 0.0
  %7162 = vmatmul.mubr.f32.gmra.mrb[0].mxu0 %v6538
  %v7163 = vpop.f32.mrb[0].mxu0
  %v7164 = vadd.f32 %v6416, %v7163
  %v7165 = vpop.f32.mrb[0].mxu0
  %7166 = vmatprep.mubr.f32.mxu0 0.0
  %7167 = vmatmul.mubr.f32.gmra.mrb[0].mxu0 %v6541
  %v7168 = vpop.f32.mrb[0].mxu0
  %v7169 = vadd.f32 %v6416, %v7168
  %v7170 = vpop.f32.mrb[0].mxu0
  %7171 = vmatprep.mubr.f32.mxu0 0.0
  %7172 = vmatmul.mubr.f32.gmra.mrb[0].mxu0 %v6544
  %v7173 = vpop.f32.mrb[0].mxu0
  %v7174 = vadd.f32 %v6416, %v7173
  %v7175 = vpop.f32.mrb[0].mxu0
  %7176 = vmatprep.mubr.f32.mxu0 0.0
  %7177 = vmatmul.mubr.f32.gmra.mrb[0].mxu0 %v6547
  %v7178 = vpop.f32.mrb[0].mxu0
  %v7179 = vadd.f32 %v6416, %v7178
  %v7180 = vpop.f32.mrb[0].mxu0
  %7181 = vmatprep.mubr.f32.mxu0 0.0
  %7182 = vmatmul.mubr.f32.gmra.mrb[0].mxu0 %v6550
  %v7183 = vpop.f32.mrb[0].mxu0
  %v7184 = vadd.f32 %v6416, %v7183
  %v7185 = vpop.f32.mrb[0].mxu0
  %7186 = vmatprep.mubr.f32.mxu0 0.0
  %7187 = vmatmul.mubr.f32.gmra.mrb[0].mxu0 %v6553
  %v7188 = vpop.f32.mrb[0].mxu0
  %v7189 = vadd.f32 %v6416, %v7188
  %v7190 = vpop.f32.mrb[0].mxu0
  %7191 = vmatprep.mubr.f32.mxu0 0.0
  %7192 = vmatmul.mubr.f32.gmra.mrb[0].mxu0 %v6556
  %v7193 = vpop.f32.mrb[0].mxu0
  %v7194 = vadd.f32 %v6416, %v7193
  %v7195 = vpop.f32.mrb[0].mxu0
  %7196 = vmatprep.mubr.f32.mxu0 0.0
  %7197 = vmatmul.mubr.f32.gmra.mrb[0].mxu0 %v6559
  %v7198 = vpop.f32.mrb[0].mxu0
  %v7199 = vadd.f32 %v6416, %v7198
  %v7200 = vpop.f32.mrb[0].mxu0
  %7201 = vmatprep.mubr.f32.mxu0 0.0
  %7202 = vmatmul.mubr.f32.gmra.mrb[0].mxu0 %v6562
  %v7203 = vpop.f32.mrb[0].mxu0
  %v7204 = vadd.f32 %v6416, %v7203
  %v7205 = vpop.f32.mrb[0].mxu0
  %7206 = vmatprep.mubr.f32.mxu0 0.0
  %7207 = vmatmul.mubr.f32.gmra.mrb[0].mxu0 %v6565
  %v7208 = vpop.f32.mrb[0].mxu0
  %v7209 = vadd.f32 %v6416, %v7208
  %v7210 = vpop.f32.mrb[0].mxu0
  %7211 = vmatprep.mubr.f32.mxu0 0.0
  %7212 = vmatmul.mubr.f32.gmra.mrb[0].mxu0 %v6568
  %v7213 = vpop.f32.mrb[0].mxu0
  %v7214 = vadd.f32 %v6416, %v7213
  %v7215 = vpop.f32.mrb[0].mxu0
  %7216 = vmatprep.mubr.f32.mxu0 0.0
  %7217 = vmatmul.mubr.f32.gmra.mrb[0].mxu0 %v6571
  %v7218 = vpop.f32.mrb[0].mxu0
  %v7219 = vadd.f32 %v6416, %v7218
  %v7220 = vpop.f32.mrb[0].mxu0
  %7221 = vmatprep.mubr.f32.mxu0 0.0
  %7222 = vmatmul.mubr.f32.gmra.mrb[0].mxu0 %v6574
  %v7223 = vpop.f32.mrb[0].mxu0
  %v7224 = vadd.f32 %v6416, %v7223
  %v7225 = vpop.f32.mrb[0].mxu0
  %7226 = vmatprep.mubr.f32.mxu0 0.0
  %7227 = vmatmul.mubr.f32.gmra.mrb[0].mxu0 %v6577
  %v7228 = vpop.f32.mrb[0].mxu0
  %v7229 = vadd.f32 %v6416, %v7228
  %v7230 = vpop.f32.mrb[0].mxu0
  %7231 = vmatprep.mubr.f32.mxu0 0.0
  %7232 = vmatmul.mubr.f32.gmra.mrb[0].mxu0 %v6580
  %v7233 = vpop.f32.mrb[0].mxu0
  %v7234 = vadd.f32 %v6416, %v7233
  %v7235 = vpop.f32.mrb[0].mxu0
  %7236 = vmatprep.mubr.f32.mxu0 0.0
  %7237 = vmatmul.mubr.f32.gmra.mrb[0].mxu0 %v6583
  %v7238 = vpop.f32.mrb[0].mxu0
  %v7239 = vadd.f32 %v6416, %v7238
  %v7240 = vpop.f32.mrb[0].mxu0
  %7241 = vmatprep.mubr.f32.mxu0 0.0
  %7242 = vmatmul.mubr.f32.gmra.mrb[0].mxu0 %v6586
  %v7243 = vpop.f32.mrb[0].mxu0
  %v7244 = vadd.f32 %v6416, %v7243
  %v7245 = vpop.f32.mrb[0].mxu0
  %7246 = vmatprep.mubr.f32.mxu0 0.0
  %7247 = vmatmul.mubr.f32.gmra.mrb[0].mxu0 %v6589
  %v7248 = vpop.f32.mrb[0].mxu0
  %v7249 = vadd.f32 %v6416, %v7248
  %v7250 = vpop.f32.mrb[0].mxu0
  %7251 = vmatprep.mubr.f32.mxu0 0.0
  %7252 = vmatmul.mubr.f32.gmra.mrb[0].mxu0 %v6592
  %v7253 = vpop.f32.mrb[0].mxu0
  %v7254 = vadd.f32 %v6416, %v7253
  %v7255 = vpop.f32.mrb[0].mxu0
  %7256 = vmatprep.mubr.f32.mxu0 0.0
  %7257 = vmatmul.mubr.f32.gmra.mrb[0].mxu0 %v6595
  %v7258 = vpop.f32.mrb[0].mxu0
  %v7259 = vadd.f32 %v6416, %v7258
  %v7260 = vpop.f32.mrb[0].mxu0
  %7261 = vmatprep.mubr.f32.mxu0 0.0
  %7262 = vmatmul.mubr.f32.gmra.mrb[0].mxu0 %v6598
  %v7263 = vpop.f32.mrb[0].mxu0
  %v7264 = vadd.f32 %v6416, %v7263
  %v7265 = vpop.f32.mrb[0].mxu0
  %7266 = vmatprep.mubr.f32.mxu0 0.0
  %7267 = vmatmul.mubr.f32.gmra.mrb[0].mxu0 %v6601
  %v7268 = vpop.f32.mrb[0].mxu0
  %v7269 = vadd.f32 %v6416, %v7268
  %v7270 = vpop.f32.mrb[0].mxu0
  %7271 = vmatprep.mubr.f32.mxu0 0.0
  %7272 = vmatmul.mubr.f32.gmra.mrb[0].mxu0 %v6604
  %v7273 = vpop.f32.mrb[0].mxu0
  %v7274 = vadd.f32 %v6416, %v7273
  %v7275 = vpop.f32.mrb[0].mxu0
  %7276 = vmatprep.mubr.f32.mxu0 0.0
  %7277 = vmatmul.mubr.f32.gmra.mrb[0].mxu0 %v6607
  %v7278 = vpop.f32.mrb[0].mxu0
  %v7279 = vadd.f32 %v6416, %v7278
  %v7280 = vpop.f32.mrb[0].mxu0
  %7281 = vmatprep.mubr.f32.mxu0 0.0
  %7282 = vmatmul.mubr.f32.gmra.mrb[0].mxu0 %v6610
  %v7283 = vpop.f32.mrb[0].mxu0
  %v7284 = vadd.f32 %v6416, %v7283
  %v7285 = vpop.f32.mrb[0].mxu0
  %7286 = vmatprep.mubr.f32.mxu0 0.0
  %7287 = vmatmul.mubr.f32.gmra.mrb[0].mxu0 %v6613
  %v7288 = vpop.f32.mrb[0].mxu0
  %v7289 = vadd.f32 %v6416, %v7288
  %v7290 = vpop.f32.mrb[0].mxu0
  %7291 = vmatprep.mubr.f32.mxu0 0.0
  %7292 = vmatmul.mubr.f32.gmra.mrb[0].mxu0 %v6616
  %v7293 = vpop.f32.mrb[0].mxu0
  %v7294 = vadd.f32 %v6416, %v7293
  %v7295 = vpop.f32.mrb[0].mxu0
  %7296 = vmatprep.mubr.f32.mxu0 0.0
  %7297 = vmatmul.mubr.f32.gmra.mrb[0].mxu0 %v6619
  %v7298 = vpop.f32.mrb[0].mxu0
  %v7299 = vadd.f32 %v6416, %v7298
  %v7300 = vpop.f32.mrb[0].mxu0
  %7301 = vmatprep.mubr.f32.mxu0 0.0
  %7302 = vmatmul.mubr.f32.gmra.mrb[0].mxu0 %v6622
  %v7303 = vpop.f32.mrb[0].mxu0
  %v7304 = vadd.f32 %v6416, %v7303
  %v7305 = vpop.f32.mrb[0].mxu0
  %7306 = vmatprep.mubr.f32.mxu0 0.0
  %7307 = vmatmul.mubr.f32.gmra.mrb[0].mxu0 %v6625
  %v7308 = vpop.f32.mrb[0].mxu0
  %v7309 = vadd.f32 %v6416, %v7308
  %v7310 = vpop.f32.mrb[0].mxu0
  %7311 = vmatprep.mubr.f32.mxu0 0.0
  %7312 = vmatmul.mubr.f32.gmra.mrb[0].mxu0 %v6628
  %v7313 = vpop.f32.mrb[0].mxu0
  %v7314 = vadd.f32 %v6416, %v7313
  %v7315 = vpop.f32.mrb[0].mxu0
  %7316 = vmatprep.mubr.f32.mxu0 0.0
  %7317 = vmatmul.mubr.f32.gmra.mrb[0].mxu0 %v6631
  %v7318 = vpop.f32.mrb[0].mxu0
  %v7319 = vadd.f32 %v6416, %v7318
  %v7320 = vpop.f32.mrb[0].mxu0
  %7321 = vmatprep.mubr.f32.mxu0 0.0
  %7322 = vmatmul.mubr.f32.gmra.mrb[0].mxu0 %v6634
  %v7323 = vpop.f32.mrb[0].mxu0
  %v7324 = vadd.f32 %v6416, %v7323
  %v7325 = vpop.f32.mrb[0].mxu0
  %7326 = vmatprep.mubr.f32.mxu0 0.0
  %7327 = vmatmul.mubr.f32.gmra.mrb[0].mxu0 %v6637
  %v7328 = vpop.f32.mrb[0].mxu0
  %v7329 = vadd.f32 %v6416, %v7328
  %v7330 = vpop.f32.mrb[0].mxu0
  %7331 = vmatprep.mubr.f32.mxu0 0.0
  %7332 = vmatmul.mubr.f32.gmra.mrb[0].mxu0 %v6640
  %v7333 = vpop.f32.mrb[0].mxu0
  %v7334 = vadd.f32 %v6416, %v7333
  %v7335 = vpop.f32.mrb[0].mxu0
  %7336 = vmatprep.mubr.f32.mxu0 0.0
  %7337 = vmatmul.mubr.f32.gmra.mrb[0].mxu0 %v6643
  %v7338 = vpop.f32.mrb[0].mxu0
  %v7339 = vadd.f32 %v6416, %v7338
  %v7340 = vpop.f32.mrb[0].mxu0
  %7341 = vmatprep.mubr.f32.mxu0 0.0
  %7342 = vmatmul.mubr.f32.gmra.mrb[0].mxu0 %v6646
  %v7343 = vpop.f32.mrb[0].mxu0
  %v7344 = vadd.f32 %v6416, %v7343
  %v7345 = vpop.f32.mrb[0].mxu0
  %7346 = vmatprep.mubr.f32.mxu0 0.0
  %7347 = vmatmul.mubr.f32.gmra.mrb[0].mxu0 %v6649
  %v7348 = vpop.f32.mrb[0].mxu0
  %v7349 = vadd.f32 %v6416, %v7348
  %v7350 = vpop.f32.mrb[0].mxu0
  %7351 = vmatprep.mubr.f32.mxu0 0.0
  %7352 = vmatmul.mubr.f32.gmra.mrb[0].mxu0 %v6652
  %v7353 = vpop.f32.mrb[0].mxu0
  %v7354 = vadd.f32 %v6416, %v7353
  %v7355 = vpop.f32.mrb[0].mxu0
  %7356 = vmatprep.mubr.f32.mxu0 0.0
  %7357 = vmatmul.mubr.f32.gmra.mrb[0].mxu0 %v6655
  %v7358 = vpop.f32.mrb[0].mxu0
  %v7359 = vadd.f32 %v6416, %v7358
  %v7360 = vpop.f32.mrb[0].mxu0
  %7361 = vmatprep.mubr.f32.mxu0 0.0
  %7362 = vmatmul.mubr.f32.gmra.mrb[0].mxu0 %v6658
  %v7363 = vpop.f32.mrb[0].mxu0
  %v7364 = vadd.f32 %v6416, %v7363
  %v7365 = vpop.f32.mrb[0].mxu0
  %7366 = vmatprep.mubr.f32.mxu0 0.0
  %7367 = vmatmul.mubr.f32.gmra.mrb[0].mxu0 %v6661
  %v7368 = vpop.f32.mrb[0].mxu0
  %v7369 = vadd.f32 %v6416, %v7368
  %v7370 = vpop.f32.mrb[0].mxu0
  %7371 = vmatprep.mubr.f32.mxu0 0.0
  %7372 = vmatmul.mubr.f32.gmra.mrb[0].mxu0 %v6664
  %v7373 = vpop.f32.mrb[0].mxu0
  %v7374 = vadd.f32 %v6416, %v7373
  %v7375 = vpop.f32.mrb[0].mxu0
  %7376 = vmatprep.mubr.f32.mxu0 0.0
  %7377 = vmatmul.mubr.f32.gmra.mrb[0].mxu0 %v6667
  %v7378 = vpop.f32.mrb[0].mxu0
  %v7379 = vadd.f32 %v6416, %v7378
  %v7380 = vpop.f32.mrb[0].mxu0
  %7381 = vmatprep.mubr.f32.mxu0 0.0
  %7382 = vmatmul.mubr.f32.gmra.mrb[0].mxu0 %v6670
  %v7383 = vpop.f32.mrb[0].mxu0
  %v7384 = vadd.f32 %v6416, %v7383
  %v7385 = vpop.f32.mrb[0].mxu0
  %7386 = vmatprep.mubr.f32.mxu0 0.0
  %7387 = vmatmul.mubr.f32.gmra.mrb[0].mxu0 %v6673
  %v7388 = vpop.f32.mrb[0].mxu0
  %v7389 = vadd.f32 %v6416, %v7388
  %v7390 = vpop.f32.mrb[0].mxu0
  %7391 = vmatprep.mubr.f32.mxu0 0.0
  %7392 = vmatmul.mubr.f32.gmra.mrb[0].mxu0 %v6676
  %v7393 = vpop.f32.mrb[0].mxu0
  %v7394 = vadd.f32 %v6416, %v7393
  %v7395 = vpop.f32.mrb[0].mxu0
  %7396 = vmatprep.mubr.f32.mxu0 0.0
  %7397 = vmatmul.mubr.f32.gmra.mrb[0].mxu0 %v6679
  %v7398 = vpop.f32.mrb[0].mxu0
  %v7399 = vadd.f32 %v6416, %v7398
  %v7400 = vpop.f32.mrb[0].mxu0
  %7401 = vmatprep.mubr.f32.mxu0 0.0
  %7402 = vmatmul.mubr.f32.gmra.mrb[0].mxu0 %v6682
  %v7403 = vpop.f32.mrb[0].mxu0
  %v7404 = vadd.f32 %v6416, %v7403
  %v7405 = vpop.f32.mrb[0].mxu0
  %7406 = vmatprep.mubr.f32.mxu0 0.0
  %7407 = vmatmul.mubr.f32.gmra.mrb[0].mxu0 %v6685
  %v7408 = vpop.f32.mrb[0].mxu0
  %v7409 = vadd.f32 %v6416, %v7408
  %v7410 = vpop.f32.mrb[0].mxu0
  %7411 = vmatprep.mubr.f32.mxu0 0.0
  %7412 = vmatmul.mubr.f32.gmra.mrb[0].mxu0 %v6688
  %v7413 = vpop.f32.mrb[0].mxu0
  %v7414 = vadd.f32 %v6416, %v7413
  %v7415 = vpop.f32.mrb[0].mxu0
  %7416 = vmatprep.mubr.f32.mxu0 0.0
  %7417 = vmatmul.mubr.f32.gmra.mrb[0].mxu0 %v6691
  %v7418 = vpop.f32.mrb[0].mxu0
  %v7419 = vadd.f32 %v6416, %v7418
  %v7420 = vpop.f32.mrb[0].mxu0
  %7421 = vmatprep.mubr.f32.mxu0 0.0
  %7422 = vmatmul.mubr.f32.gmra.mrb[0].mxu0 %v6694
  %v7423 = vpop.f32.mrb[0].mxu0
  %v7424 = vadd.f32 %v6416, %v7423
  %v7425 = vpop.f32.mrb[0].mxu0
  %7426 = vmatprep.mubr.f32.mxu0 0.0
  %7427 = vmatmul.mubr.f32.gmra.mrb[0].mxu0 %v6697
  %v7428 = vpop.f32.mrb[0].mxu0
  %v7429 = vadd.f32 %v6416, %v7428
  %v7430 = vpop.f32.mrb[0].mxu0
  %7431 = vmatprep.mubr.f32.mxu0 0.0
  %7432 = vmatmul.mubr.f32.gmra.mrb[0].mxu0 %v6700
  %v7433 = vpop.f32.mrb[0].mxu0
  %v7434 = vadd.f32 %v6416, %v7433
  %v7435 = vpop.f32.mrb[0].mxu0
  %7436 = vmatprep.mubr.f32.mxu0 0.0
  %7437 = vmatmul.mubr.f32.gmra.mrb[0].mxu0 %v6703
  %v7438 = vpop.f32.mrb[0].mxu0
  %v7439 = vadd.f32 %v6416, %v7438
  %v7440 = vpop.f32.mrb[0].mxu0
  %7441 = vmatprep.mubr.f32.mxu0 0.0
  %7442 = vmatmul.mubr.f32.gmra.mrb[0].mxu0 %v6706
  %v7443 = vpop.f32.mrb[0].mxu0
  %v7444 = vadd.f32 %v6416, %v7443
  %v7445 = vpop.f32.mrb[0].mxu0
  %7446 = vmatprep.mubr.f32.mxu0 0.0
  %7447 = vmatmul.mubr.f32.gmra.mrb[0].mxu0 %v6709
  %v7448 = vpop.f32.mrb[0].mxu0
  %v7449 = vadd.f32 %v6416, %v7448
  %v7450 = vpop.f32.mrb[0].mxu0
  %7451 = vmatprep.mubr.f32.mxu0 0.0
  %7452 = vmatmul.mubr.f32.gmra.mrb[0].mxu0 %v6712
  %v7453 = vpop.f32.mrb[0].mxu0
  %v7454 = vadd.f32 %v6416, %v7453
  %v7455 = vpop.f32.mrb[0].mxu0
  %7456 = vmatprep.mubr.f32.mxu0 0.0
  %7457 = vmatmul.mubr.f32.gmra.mrb[0].mxu0 %v6715
  %v7458 = vpop.f32.mrb[0].mxu0
  %v7459 = vadd.f32 %v6416, %v7458
  %v7460 = vpop.f32.mrb[0].mxu0
  %7461 = vmatprep.mubr.f32.mxu0 0.0
  %7462 = vmatmul.mubr.f32.gmra.mrb[0].mxu0 %v6718
  %v7463 = vpop.f32.mrb[0].mxu0
  %v7464 = vadd.f32 %v6416, %v7463
  %v7465 = vpop.f32.mrb[0].mxu0
  %7466 = vmatprep.mubr.f32.mxu0 0.0
  %7467 = vmatmul.mubr.f32.gmra.mrb[0].mxu0 %v6721
  %v7468 = vpop.f32.mrb[0].mxu0
  %v7469 = vadd.f32 %v6416, %v7468
  %v7470 = vpop.f32.mrb[0].mxu0
  %7471 = vmatprep.mubr.f32.mxu0 0.0
  %7472 = vmatmul.mubr.f32.gmra.mrb[0].mxu0 %v6724
  %v7473 = vpop.f32.mrb[0].mxu0
  %v7474 = vadd.f32 %v6416, %v7473
  %v7475 = vpop.f32.mrb[0].mxu0
  %7476 = vmatprep.mubr.f32.mxu0 0.0
  %7477 = vmatmul.mubr.f32.gmra.mrb[0].mxu0 %v6727
  %v7478 = vpop.f32.mrb[0].mxu0
  %v7479 = vadd.f32 %v6416, %v7478
  %v7480 = vpop.f32.mrb[0].mxu0
  %7481 = vmatprep.mubr.f32.mxu0 0.0
  %7482 = vmatmul.mubr.f32.gmra.mrb[0].mxu0 %v6730
  %v7483 = vpop.f32.mrb[0].mxu0
  %v7484 = vadd.f32 %v6416, %v7483
  %v7485 = vpop.f32.mrb[0].mxu0
  %7486 = vmatprep.mubr.f32.mxu0 0.0
  %7487 = vmatmul.mubr.f32.gmra.mrb[0].mxu0 %v6733
  %v7488 = vpop.f32.mrb[0].mxu0
  %v7489 = vadd.f32 %v6416, %v7488
  %v7490 = vpop.f32.mrb[0].mxu0
  %7491 = vmatprep.mubr.f32.mxu0 0.0
  %7492 = vmatmul.mubr.f32.gmra.mrb[0].mxu0 %v6736
  %v7493 = vpop.f32.mrb[0].mxu0
  %v7494 = vadd.f32 %v6416, %v7493
  %v7495 = vpop.f32.mrb[0].mxu0
  %7496 = vmatprep.mubr.f32.mxu0 0.0
  %7497 = vmatmul.mubr.f32.gmra.mrb[0].mxu0 %v6739
  %v7498 = vpop.f32.mrb[0].mxu0
  %v7499 = vadd.f32 %v6416, %v7498
  %v7500 = vpop.f32.mrb[0].mxu0
  %7501 = vmatprep.mubr.f32.mxu0 0.0
  %7502 = vmatmul.mubr.f32.gmra.mrb[0].mxu0 %v6742
  %v7503 = vpop.f32.mrb[0].mxu0
  %v7504 = vadd.f32 %v6416, %v7503
  %v7505 = vpop.f32.mrb[0].mxu0
  %7506 = vmatprep.mubr.f32.mxu0 0.0
  %7507 = vmatmul.mubr.f32.gmra.mrb[0].mxu0 %v6745
  %v7508 = vpop.f32.mrb[0].mxu0
  %v7509 = vadd.f32 %v6416, %v7508
  %v7510 = vpop.f32.mrb[0].mxu0
  %7511 = vmatprep.mubr.f32.mxu0 0.0
  %7512 = vmatmul.mubr.f32.gmra.mrb[0].mxu0 %v6748
  %v7513 = vpop.f32.mrb[0].mxu0
  %v7514 = vadd.f32 %v6416, %v7513
  %v7515 = vpop.f32.mrb[0].mxu0
  %7516 = vmatprep.mubr.f32.mxu0 0.0
  %7517 = vmatmul.mubr.f32.gmra.mrb[0].mxu0 %v6751
  %v7518 = vpop.f32.mrb[0].mxu0
  %v7519 = vadd.f32 %v6416, %v7518
  %v7520 = vpop.f32.mrb[0].mxu0
  %7521 = vmatprep.mubr.f32.mxu0 0.0
  %7522 = vmatmul.mubr.f32.gmra.mrb[0].mxu0 %v6754
  %v7523 = vpop.f32.mrb[0].mxu0
  %v7524 = vadd.f32 %v6416, %v7523
  %v7525 = vpop.f32.mrb[0].mxu0
  %7526 = vmatprep.mubr.f32.mxu0 0.0
  %7527 = vmatmul.mubr.f32.gmra.mrb[0].mxu0 %v6757
  %v7528 = vpop.f32.mrb[0].mxu0
  %v7529 = vadd.f32 %v6416, %v7528
  %v7530 = vpop.f32.mrb[0].mxu0
  %7531 = vmatprep.mubr.f32.mxu0 0.0
  %7532 = vmatmul.mubr.f32.gmra.mrb[0].mxu0 %v6760
  %v7533 = vpop.f32.mrb[0].mxu0
  %v7534 = vadd.f32 %v6416, %v7533
  %v7535 = vpop.f32.mrb[0].mxu0
  %7536 = vmatprep.mubr.f32.mxu0 0.0
  %7537 = vmatmul.mubr.f32.gmra.mrb[0].mxu0 %v6763
  %v7538 = vpop.f32.mrb[0].mxu0
  %v7539 = vadd.f32 %v6416, %v7538
  %v7540 = vpop.f32.mrb[0].mxu0
  %7541 = vmatprep.mubr.f32.mxu0 0.0
  %7542 = vmatmul.mubr.f32.gmra.mrb[0].mxu0 %v6766
  %v7543 = vpop.f32.mrb[0].mxu0
  %v7544 = vadd.f32 %v6416, %v7543
  %v7545 = vpop.f32.mrb[0].mxu0
  %7546 = vmatprep.mubr.f32.mxu0 0.0
  %7547 = vmatmul.mubr.f32.gmra.mrb[0].mxu0 %v6769
  %v7548 = vpop.f32.mrb[0].mxu0
  %v7549 = vadd.f32 %v6416, %v7548
  %v7550 = vpop.f32.mrb[0].mxu0
  %7551 = vmatprep.mubr.f32.mxu0 0.0
  %7552 = vmatmul.mubr.f32.gmra.mrb[0].mxu0 %v6772
  %v7553 = vpop.f32.mrb[0].mxu0
  %v7554 = vadd.f32 %v6416, %v7553
  %v7555 = vpop.f32.mrb[0].mxu0
  %7556 = vmatprep.mubr.f32.mxu0 0.0
  %7557 = vmatmul.mubr.f32.gmra.mrb[0].mxu0 %v6775
  %v7558 = vpop.f32.mrb[0].mxu0
  %v7559 = vadd.f32 %v6416, %v7558
  %v7560 = vpop.f32.mrb[0].mxu0
  %7561 = vmatprep.mubr.f32.mxu0 0.0
  %7562 = vmatmul.mubr.f32.gmra.mrb[0].mxu0 %v6778
  %v7563 = vpop.f32.mrb[0].mxu0
  %v7564 = vadd.f32 %v6416, %v7563
  %v7565 = vpop.f32.mrb[0].mxu0
  %7566 = vmatprep.mubr.f32.mxu0 0.0
  %7567 = vmatmul.mubr.f32.gmra.mrb[0].mxu0 %v6781
  %v7568 = vpop.f32.mrb[0].mxu0
  %v7569 = vadd.f32 %v6416, %v7568
  %v7570 = vpop.f32.mrb[0].mxu0
  %7571 = vmatprep.mubr.f32.mxu0 0.0
  %7572 = vmatmul.mubr.f32.gmra.mrb[0].mxu0 %v6784
  %v7573 = vpop.f32.mrb[0].mxu0
  %v7574 = vadd.f32 %v6416, %v7573
  %v7575 = vpop.f32.mrb[0].mxu0
  %7576 = vmatprep.mubr.f32.mxu0 0.0
  %7577 = vmatmul.mubr.f32.gmra.mrb[0].mxu0 %v6787
  %v7578 = vpop.f32.mrb[0].mxu0
  %v7579 = vadd.f32 %v6416, %v7578
  %v7580 = vpop.f32.mrb[0].mxu0
  %7581 = vmatprep.mubr.f32.mxu0 0.0
  %7582 = vmatmul.mubr.f32.gmra.mrb[0].mxu0 %v6790
  %v7583 = vpop.f32.mrb[0].mxu0
  %v7584 = vadd.f32 %v6416, %v7583
  %v7585 = vpop.f32.mrb[0].mxu0
  %7586 = vmatprep.mubr.f32.mxu0 0.0
  %7587 = vmatmul.mubr.f32.gmra.mrb[0].mxu0 %v6793
  %v7588 = vpop.f32.mrb[0].mxu0
  %v7589 = vadd.f32 %v6416, %v7588
  %v7590 = vpop.f32.mrb[0].mxu0
  %7591 = vmatprep.mubr.f32.mxu0 0.0
  %7592 = vmatmul.mubr.f32.gmra.mrb[0].mxu0 %v6796
  %v7593 = vpop.f32.mrb[0].mxu0
  %v7594 = vadd.f32 %v6416, %v7593
  %v7595 = vpop.f32.mrb[0].mxu0
  %7596 = vmatprep.mubr.f32.mxu0 0.0
  %7597 = vmatmul.mubr.f32.gmra.mrb[0].mxu0 %v6799
  %v7598 = vpop.f32.mrb[0].mxu0
  %v7599 = vadd.f32 %v6416, %v7598
  %v7600 = vpop.f32.mrb[0].mxu0
  %7601 = vmatprep.mubr.f32.mxu0 0.0
  %7602 = vmatmul.mubr.f32.gmra.mrb[0].mxu0 %v6802
  %v7603 = vpop.f32.mrb[0].mxu0
  %v7604 = vadd.f32 %v6416, %v7603
  %v7605 = vpop.f32.mrb[0].mxu0
  %7606 = vmatprep.mubr.f32.mxu0 0.0
  %7607 = vmatmul.mubr.f32.gmra.mrb[0].mxu0 %v6805
  %v7608 = vpop.f32.mrb[0].mxu0
  %v7609 = vadd.f32 %v6416, %v7608
  %v7610 = vpop.f32.mrb[0].mxu0
  %7611 = vmatprep.mubr.f32.mxu0 0.0
  %7612 = vmatmul.mubr.f32.gmra.mrb[0].mxu0 %v6808
  %v7613 = vpop.f32.mrb[0].mxu0
  %v7614 = vadd.f32 %v6416, %v7613
  %v7615 = vpop.f32.mrb[0].mxu0
  %7616 = vmatprep.mubr.f32.mxu0 0.0
  %7617 = vmatmul.mubr.f32.gmra.mrb[0].mxu0 %v6811
  %v7618 = vpop.f32.mrb[0].mxu0
  %v7619 = vadd.f32 %v6416, %v7618
  %v7620 = vpop.f32.mrb[0].mxu0
  %7621 = vmatprep.mubr.f32.mxu0 0.0
  %7622 = vmatmul.mubr.f32.gmra.mrb[0].mxu0 %v6814
  %v7623 = vpop.f32.mrb[0].mxu0
  %v7624 = vadd.f32 %v6416, %v7623
  %v7625 = vpop.f32.mrb[0].mxu0
  %7626 = vmatprep.mubr.f32.mxu0 0.0
  %7627 = vmatmul.mubr.f32.gmra.mrb[0].mxu0 %v6817
  %v7628 = vpop.f32.mrb[0].mxu0
  %v7629 = vadd.f32 %v6416, %v7628
  %v7630 = vpop.f32.mrb[0].mxu0
  %7631 = vmatprep.mubr.f32.mxu0 0.0
  %7632 = vmatmul.mubr.f32.gmra.mrb[0].mxu0 %v6820
  %v7633 = vpop.f32.mrb[0].mxu0
  %v7634 = vadd.f32 %v6416, %v7633
  %v7635 = vpop.f32.mrb[0].mxu0
  %7636 = vmatprep.mubr.f32.mxu0 0.0
  %7637 = vmatmul.mubr.f32.gmra.mrb[0].mxu0 %v6823
  %v7638 = vpop.f32.mrb[0].mxu0
  %v7639 = vadd.f32 %v6416, %v7638
  %v7640 = vpop.f32.mrb[0].mxu0
  %7641 = vmatprep.mubr.f32.mxu0 0.0
  %7642 = vmatmul.mubr.f32.gmra.mrb[0].mxu0 %v6826
  %v7643 = vpop.f32.mrb[0].mxu0
  %v7644 = vadd.f32 %v6416, %v7643
  %v7645 = vpop.f32.mrb[0].mxu0
  %7646 = vmatprep.mubr.f32.mxu0 0.0
  %7647 = vmatmul.mubr.f32.gmra.mrb[0].mxu0 %v6829
  %v7648 = vpop.f32.mrb[0].mxu0
  %v7649 = vadd.f32 %v6416, %v7648
  %v7650 = vpop.f32.mrb[0].mxu0
  %7651 = vmatprep.mubr.f32.mxu0 0.0
  %7652 = vmatmul.mubr.f32.gmra.mrb[0].mxu0 %v6832
  %v7653 = vpop.f32.mrb[0].mxu0
  %v7654 = vadd.f32 %v6416, %v7653
  %v7655 = vpop.f32.mrb[0].mxu0
  %7656 = vmatprep.mubr.f32.mxu0 0.0
  %7657 = vmatmul.mubr.f32.gmra.mrb[0].mxu0 %v6835
  %v7658 = vpop.f32.mrb[0].mxu0
  %v7659 = vadd.f32 %v6416, %v7658
  %v7660 = vpop.f32.mrb[0].mxu0
  %7661 = vmatprep.mubr.f32.mxu0 0.0
  %7662 = vmatmul.mubr.f32.gmra.mrb[0].mxu0 %v6838
  %v7663 = vpop.f32.mrb[0].mxu0
  %v7664 = vadd.f32 %v6416, %v7663
  %v7665 = vpop.f32.mrb[0].mxu0
  %7666 = vmatprep.mubr.f32.mxu0 0.0
  %7667 = vmatmul.mubr.f32.gmra.mrb[0].mxu0 %v6841
  %v7668 = vpop.f32.mrb[0].mxu0
  %v7669 = vadd.f32 %v6416, %v7668
  %v7670 = vpop.f32.mrb[0].mxu0
  %7671 = vmatprep.mubr.f32.mxu0 0.0
  %7672 = vmatmul.mubr.f32.gmra.mrb[0].mxu0 %v6844
  %v7673 = vpop.f32.mrb[0].mxu0
  %v7674 = vadd.f32 %v6416, %v7673
  %v7675 = vpop.f32.mrb[0].mxu0
  %7676 = vmatprep.mubr.f32.mxu0 0.0
  %7677 = vmatmul.mubr.f32.gmra.mrb[0].mxu0 %v6847
  %v7678 = vpop.f32.mrb[0].mxu0
  %v7679 = vadd.f32 %v6416, %v7678
  %v7680 = vpop.f32.mrb[0].mxu0
  %7681 = vmatprep.mubr.f32.mxu0 0.0
  %7682 = vmatmul.mubr.f32.gmra.mrb[0].mxu0 %v6850
  %v7683 = vpop.f32.mrb[0].mxu0
  %v7684 = vadd.f32 %v6416, %v7683
  %v7685 = vpop.f32.mrb[0].mxu0
  %7686 = vmatprep.mubr.f32.mxu0 0.0
  %7687 = vmatmul.mubr.f32.gmra.mrb[0].mxu0 %v6853
  %v7688 = vpop.f32.mrb[0].mxu0
  %v7689 = vadd.f32 %v6416, %v7688
  %v7690 = vpop.f32.mrb[0].mxu0
  %7691 = vmatprep.mubr.f32.mxu0 0.0
  %7692 = vmatmul.mubr.f32.gmra.mrb[0].mxu0 %v6856
  %v7693 = vpop.f32.mrb[0].mxu0
  %v7694 = vadd.f32 %v6416, %v7693
  %v7695 = vpop.f32.mrb[0].mxu0
  %7696 = vmatprep.mubr.f32.mxu0 0.0
  %7697 = vmatmul.mubr.f32.gmra.mrb[0].mxu0 %v6859
  %v7698 = vpop.f32.mrb[0].mxu0
  %v7699 = vadd.f32 %v6416, %v7698
  %v7700 = vpop.f32.mrb[0].mxu0
  %7701 = vmatprep.mubr.f32.mxu0 0.0
  %7702 = vmatmul.mubr.f32.gmra.mrb[0].mxu0 %v6862
  %v7703 = vpop.f32.mrb[0].mxu0
  %v7704 = vadd.f32 %v6416, %v7703
  %v7705 = vpop.f32.mrb[0].mxu0
  %7706 = vmatprep.mubr.f32.mxu0 0.0
  %7707 = vmatmul.mubr.f32.gmra.mrb[0].mxu0 %v6865
  %v7708 = vpop.f32.mrb[0].mxu0
  %v7709 = vadd.f32 %v6416, %v7708
  %v7710 = vpop.f32.mrb[0].mxu0
  %7711 = vmatprep.mubr.f32.mxu0 0.0
  %7712 = vmatmul.mubr.f32.gmra.mrb[0].mxu0 %v6868
  %v7713 = vpop.f32.mrb[0].mxu0
  %v7714 = vadd.f32 %v6416, %v7713
  %v7715 = vpop.f32.mrb[0].mxu0
  %7716 = vmatprep.mubr.f32.mxu0 0.0
  %7717 = vmatmul.mubr.f32.gmra.mrb[0].mxu0 %v6871
  %v7718 = vpop.f32.mrb[0].mxu0
  %v7719 = vadd.f32 %v6416, %v7718
  %v7720 = vpop.f32.mrb[0].mxu0
  %7721 = vmatprep.mubr.f32.mxu0 0.0
  %7722 = vmatmul.mubr.f32.gmra.mrb[0].mxu0 %v6874
  %v7723 = vpop.f32.mrb[0].mxu0
  %v7724 = vadd.f32 %v6416, %v7723
  %v7725 = vpop.f32.mrb[0].mxu0
  %7726 = vmatprep.mubr.f32.mxu0 0.0
  %7727 = vmatmul.mubr.f32.gmra.mrb[0].mxu0 %v6877
  %v7728 = vpop.f32.mrb[0].mxu0
  %v7729 = vadd.f32 %v6416, %v7728
  %v7730 = vpop.f32.mrb[0].mxu0
  %7731 = vmatprep.mubr.f32.mxu0 0.0
  %7732 = vmatmul.mubr.f32.gmra.mrb[0].mxu0 %v6880
  %v7733 = vpop.f32.mrb[0].mxu0
  %v7734 = vadd.f32 %v6416, %v7733
  %v7735 = vpop.f32.mrb[0].mxu0
  %7736 = vmatprep.mubr.f32.mxu0 0.0
  %7737 = vmatmul.mubr.f32.gmra.mrb[0].mxu0 %v6883
  %v7738 = vpop.f32.mrb[0].mxu0
  %v7739 = vadd.f32 %v6416, %v7738
  %v7740 = vpop.f32.mrb[0].mxu0
  %7741 = vmatprep.mubr.f32.mxu0 0.0
  %7742 = vmatmul.mubr.f32.gmra.mrb[0].mxu0 %v6886
  %v7743 = vpop.f32.mrb[0].mxu0
  %v7744 = vadd.f32 %v6416, %v7743
  %v7745 = vpop.f32.mrb[0].mxu0
  %7746 = vmatprep.mubr.f32.mxu0 0.0
  %7747 = vmatmul.mubr.f32.gmra.mrb[0].mxu0 %v6889
  %v7748 = vpop.f32.mrb[0].mxu0
  %v7749 = vadd.f32 %v6416, %v7748
  %v7750 = vpop.f32.mrb[0].mxu0
  %7751 = vmatprep.mubr.f32.mxu0 0.0
  %7752 = vmatmul.mubr.f32.gmra.mrb[0].mxu0 %v6892
  %v7753 = vpop.f32.mrb[0].mxu0
  %v7754 = vadd.f32 %v6416, %v7753
  %v7755 = vpop.f32.mrb[0].mxu0
  %7756 = vmatprep.mubr.f32.mxu0 0.0
  %7757 = vmatmul.mubr.f32.gmra.mrb[0].mxu0 %v6895
  %v7758 = vpop.f32.mrb[0].mxu0
  %v7759 = vadd.f32 %v6416, %v7758
  %v7760 = vpop.f32.mrb[0].mxu0
  %7761 = vdwg.mxu0
  %vm7762 = vcmask 269568
  %v7763 = vsel %vm7762, %v6964, -inf
  %v7764 = vsel %vm7762, %v7004, -inf
  %v7765 = vmax.f32 %v7763, %v7764
  %v7766 = vsel %vm7762, %v7044, -inf
  %v7767 = vmax.f32 %v7765, %v7766
  %v7768 = vsel %vm7762, %v7084, -inf
  %v7769 = vmax.f32 %v7767, %v7768
  %v7770 = vsel %vm7762, %v7124, -inf
  %v7771 = vmax.f32 %v7769, %v7770
  %v7772 = vsel %vm7762, %v6969, -inf
  %v7773 = vsel %vm7762, %v7009, -inf
  %v7774 = vmax.f32 %v7772, %v7773
  %v7775 = vsel %vm7762, %v7049, -inf
  %v7776 = vmax.f32 %v7774, %v7775
  %v7777 = vsel %vm7762, %v7089, -inf
  %v7778 = vmax.f32 %v7776, %v7777
  %v7779 = vsel %vm7762, %v7129, -inf
  %v7780 = vmax.f32 %v7778, %v7779
  %v7781 = vsel %vm7762, %v6974, -inf
  %v7782 = vsel %vm7762, %v7014, -inf
  %v7783 = vmax.f32 %v7781, %v7782
  %v7784 = vsel %vm7762, %v7054, -inf
  %v7785 = vmax.f32 %v7783, %v7784
  %v7786 = vsel %vm7762, %v7094, -inf
  %v7787 = vmax.f32 %v7785, %v7786
  %v7788 = vsel %vm7762, %v7134, -inf
  %v7789 = vmax.f32 %v7787, %v7788
  %v7790 = vsel %vm7762, %v6979, -inf
  %v7791 = vsel %vm7762, %v7019, -inf
  %v7792 = vmax.f32 %v7790, %v7791
  %v7793 = vsel %vm7762, %v7059, -inf
  %v7794 = vmax.f32 %v7792, %v7793
  %v7795 = vsel %vm7762, %v7099, -inf
  %v7796 = vmax.f32 %v7794, %v7795
  %v7797 = vsel %vm7762, %v7139, -inf
  %v7798 = vmax.f32 %v7796, %v7797
  %v7799 = vsel %vm7762, %v6984, -inf
  %v7800 = vsel %vm7762, %v7024, -inf
  %v7801 = vmax.f32 %v7799, %v7800
  %v7802 = vsel %vm7762, %v7064, -inf
  %v7803 = vmax.f32 %v7801, %v7802
  %v7804 = vsel %vm7762, %v7104, -inf
  %v7805 = vmax.f32 %v7803, %v7804
  %v7806 = vsel %vm7762, %v7144, -inf
  %v7807 = vmax.f32 %v7805, %v7806
  %v7808 = vsel %vm7762, %v6989, -inf
  %v7809 = vsel %vm7762, %v7029, -inf
  %v7810 = vmax.f32 %v7808, %v7809
  %v7811 = vsel %vm7762, %v7069, -inf
  %v7812 = vmax.f32 %v7810, %v7811
  %v7813 = vsel %vm7762, %v7109, -inf
  %v7814 = vmax.f32 %v7812, %v7813
  %v7815 = vsel %vm7762, %v7149, -inf
  %v7816 = vmax.f32 %v7814, %v7815
  %v7817 = vsel %vm7762, %v6994, -inf
  %v7818 = vsel %vm7762, %v7034, -inf
  %v7819 = vmax.f32 %v7817, %v7818
  %v7820 = vsel %vm7762, %v7074, -inf
  %v7821 = vmax.f32 %v7819, %v7820
  %v7822 = vsel %vm7762, %v7114, -inf
  %v7823 = vmax.f32 %v7821, %v7822
  %v7824 = vsel %vm7762, %v7154, -inf
  %v7825 = vmax.f32 %v7823, %v7824
  %v7826 = vsel %vm7762, %v6999, -inf
  %v7827 = vsel %vm7762, %v7039, -inf
  %v7828 = vmax.f32 %v7826, %v7827
  %v7829 = vsel %vm7762, %v7079, -inf
  %v7830 = vmax.f32 %v7828, %v7829
  %v7831 = vsel %vm7762, %v7119, -inf
  %v7832 = vmax.f32 %v7830, %v7831
  %v7833 = vsel %vm7762, %v7159, -inf
  %v7834 = vmax.f32 %v7832, %v7833
  %v7835 = vsel %vm7762, %v7164, -inf
  %v7836 = vsel %vm7762, %v7204, -inf
  %v7837 = vmax.f32 %v7835, %v7836
  %v7838 = vsel %vm7762, %v7244, -inf
  %v7839 = vmax.f32 %v7837, %v7838
  %v7840 = vsel %vm7762, %v7284, -inf
  %v7841 = vmax.f32 %v7839, %v7840
  %v7842 = vsel %vm7762, %v7324, -inf
  %v7843 = vmax.f32 %v7841, %v7842
  %v7844 = vsel %vm7762, %v7169, -inf
  %v7845 = vsel %vm7762, %v7209, -inf
  %v7846 = vmax.f32 %v7844, %v7845
  %v7847 = vsel %vm7762, %v7249, -inf
  %v7848 = vmax.f32 %v7846, %v7847
  %v7849 = vsel %vm7762, %v7289, -inf
  %v7850 = vmax.f32 %v7848, %v7849
  %v7851 = vsel %vm7762, %v7329, -inf
  %v7852 = vmax.f32 %v7850, %v7851
  %v7853 = vsel %vm7762, %v7174, -inf
  %v7854 = vsel %vm7762, %v7214, -inf
  %v7855 = vmax.f32 %v7853, %v7854
  %v7856 = vsel %vm7762, %v7254, -inf
  %v7857 = vmax.f32 %v7855, %v7856
  %v7858 = vsel %vm7762, %v7294, -inf
  %v7859 = vmax.f32 %v7857, %v7858
  %v7860 = vsel %vm7762, %v7334, -inf
  %v7861 = vmax.f32 %v7859, %v7860
  %v7862 = vsel %vm7762, %v7179, -inf
  %v7863 = vsel %vm7762, %v7219, -inf
  %v7864 = vmax.f32 %v7862, %v7863
  %v7865 = vsel %vm7762, %v7259, -inf
  %v7866 = vmax.f32 %v7864, %v7865
  %v7867 = vsel %vm7762, %v7299, -inf
  %v7868 = vmax.f32 %v7866, %v7867
  %v7869 = vsel %vm7762, %v7339, -inf
  %v7870 = vmax.f32 %v7868, %v7869
  %v7871 = vsel %vm7762, %v7184, -inf
  %v7872 = vsel %vm7762, %v7224, -inf
  %v7873 = vmax.f32 %v7871, %v7872
  %v7874 = vsel %vm7762, %v7264, -inf
  %v7875 = vmax.f32 %v7873, %v7874
  %v7876 = vsel %vm7762, %v7304, -inf
  %v7877 = vmax.f32 %v7875, %v7876
  %v7878 = vsel %vm7762, %v7344, -inf
  %v7879 = vmax.f32 %v7877, %v7878
  %v7880 = vsel %vm7762, %v7189, -inf
  %v7881 = vsel %vm7762, %v7229, -inf
  %v7882 = vmax.f32 %v7880, %v7881
  %v7883 = vsel %vm7762, %v7269, -inf
  %v7884 = vmax.f32 %v7882, %v7883
  %v7885 = vsel %vm7762, %v7309, -inf
  %v7886 = vmax.f32 %v7884, %v7885
  %v7887 = vsel %vm7762, %v7349, -inf
  %v7888 = vmax.f32 %v7886, %v7887
  %v7889 = vsel %vm7762, %v7194, -inf
  %v7890 = vsel %vm7762, %v7234, -inf
  %v7891 = vmax.f32 %v7889, %v7890
  %v7892 = vsel %vm7762, %v7274, -inf
  %v7893 = vmax.f32 %v7891, %v7892
  %v7894 = vsel %vm7762, %v7314, -inf
  %v7895 = vmax.f32 %v7893, %v7894
  %v7896 = vsel %vm7762, %v7354, -inf
  %v7897 = vmax.f32 %v7895, %v7896
  %v7898 = vsel %vm7762, %v7199, -inf
  %v7899 = vsel %vm7762, %v7239, -inf
  %v7900 = vmax.f32 %v7898, %v7899
  %v7901 = vsel %vm7762, %v7279, -inf
  %v7902 = vmax.f32 %v7900, %v7901
  %v7903 = vsel %vm7762, %v7319, -inf
  %v7904 = vmax.f32 %v7902, %v7903
  %v7905 = vsel %vm7762, %v7359, -inf
  %v7906 = vmax.f32 %v7904, %v7905
  %v7907 = vsel %vm7762, %v7364, -inf
  %v7908 = vsel %vm7762, %v7404, -inf
  %v7909 = vmax.f32 %v7907, %v7908
  %v7910 = vsel %vm7762, %v7444, -inf
  %v7911 = vmax.f32 %v7909, %v7910
  %v7912 = vsel %vm7762, %v7484, -inf
  %v7913 = vmax.f32 %v7911, %v7912
  %v7914 = vsel %vm7762, %v7524, -inf
  %v7915 = vmax.f32 %v7913, %v7914
  %v7916 = vsel %vm7762, %v7369, -inf
  %v7917 = vsel %vm7762, %v7409, -inf
  %v7918 = vmax.f32 %v7916, %v7917
  %v7919 = vsel %vm7762, %v7449, -inf
  %v7920 = vmax.f32 %v7918, %v7919
  %v7921 = vsel %vm7762, %v7489, -inf
  %v7922 = vmax.f32 %v7920, %v7921
  %v7923 = vsel %vm7762, %v7529, -inf
  %v7924 = vmax.f32 %v7922, %v7923
  %v7925 = vsel %vm7762, %v7374, -inf
  %v7926 = vsel %vm7762, %v7414, -inf
  %v7927 = vmax.f32 %v7925, %v7926
  %v7928 = vsel %vm7762, %v7454, -inf
  %v7929 = vmax.f32 %v7927, %v7928
  %v7930 = vsel %vm7762, %v7494, -inf
  %v7931 = vmax.f32 %v7929, %v7930
  %v7932 = vsel %vm7762, %v7534, -inf
  %v7933 = vmax.f32 %v7931, %v7932
  %v7934 = vsel %vm7762, %v7379, -inf
  %v7935 = vsel %vm7762, %v7419, -inf
  %v7936 = vmax.f32 %v7934, %v7935
  %v7937 = vsel %vm7762, %v7459, -inf
  %v7938 = vmax.f32 %v7936, %v7937
  %v7939 = vsel %vm7762, %v7499, -inf
  %v7940 = vmax.f32 %v7938, %v7939
  %v7941 = vsel %vm7762, %v7539, -inf
  %v7942 = vmax.f32 %v7940, %v7941
  %v7943 = vsel %vm7762, %v7384, -inf
  %v7944 = vsel %vm7762, %v7424, -inf
  %v7945 = vmax.f32 %v7943, %v7944
  %v7946 = vsel %vm7762, %v7464, -inf
  %v7947 = vmax.f32 %v7945, %v7946
  %v7948 = vsel %vm7762, %v7504, -inf
  %v7949 = vmax.f32 %v7947, %v7948
  %v7950 = vsel %vm7762, %v7544, -inf
  %v7951 = vmax.f32 %v7949, %v7950
  %v7952 = vsel %vm7762, %v7389, -inf
  %v7953 = vsel %vm7762, %v7429, -inf
  %v7954 = vmax.f32 %v7952, %v7953
  %v7955 = vsel %vm7762, %v7469, -inf
  %v7956 = vmax.f32 %v7954, %v7955
  %v7957 = vsel %vm7762, %v7509, -inf
  %v7958 = vmax.f32 %v7956, %v7957
  %v7959 = vsel %vm7762, %v7549, -inf
  %v7960 = vmax.f32 %v7958, %v7959
  %v7961 = vsel %vm7762, %v7394, -inf
  %v7962 = vsel %vm7762, %v7434, -inf
  %v7963 = vmax.f32 %v7961, %v7962
  %v7964 = vsel %vm7762, %v7474, -inf
  %v7965 = vmax.f32 %v7963, %v7964
  %v7966 = vsel %vm7762, %v7514, -inf
  %v7967 = vmax.f32 %v7965, %v7966
  %v7968 = vsel %vm7762, %v7554, -inf
  %v7969 = vmax.f32 %v7967, %v7968
  %v7970 = vsel %vm7762, %v7399, -inf
  %v7971 = vsel %vm7762, %v7439, -inf
  %v7972 = vmax.f32 %v7970, %v7971
  %v7973 = vsel %vm7762, %v7479, -inf
  %v7974 = vmax.f32 %v7972, %v7973
  %v7975 = vsel %vm7762, %v7519, -inf
  %v7976 = vmax.f32 %v7974, %v7975
  %v7977 = vsel %vm7762, %v7559, -inf
  %v7978 = vmax.f32 %v7976, %v7977
  %v7979 = vsel %vm7762, %v7564, -inf
  %v7980 = vsel %vm7762, %v7604, -inf
  %v7981 = vmax.f32 %v7979, %v7980
  %v7982 = vsel %vm7762, %v7644, -inf
  %v7983 = vmax.f32 %v7981, %v7982
  %v7984 = vsel %vm7762, %v7684, -inf
  %v7985 = vmax.f32 %v7983, %v7984
  %v7986 = vsel %vm7762, %v7724, -inf
  %v7987 = vmax.f32 %v7985, %v7986
  %v7988 = vsel %vm7762, %v7569, -inf
  %v7989 = vsel %vm7762, %v7609, -inf
  %v7990 = vmax.f32 %v7988, %v7989
  %v7991 = vsel %vm7762, %v7649, -inf
  %v7992 = vmax.f32 %v7990, %v7991
  %v7993 = vsel %vm7762, %v7689, -inf
  %v7994 = vmax.f32 %v7992, %v7993
  %v7995 = vsel %vm7762, %v7729, -inf
  %v7996 = vmax.f32 %v7994, %v7995
  %v7997 = vsel %vm7762, %v7574, -inf
  %v7998 = vsel %vm7762, %v7614, -inf
  %v7999 = vmax.f32 %v7997, %v7998
  %v8000 = vsel %vm7762, %v7654, -inf
  %v8001 = vmax.f32 %v7999, %v8000
  %v8002 = vsel %vm7762, %v7694, -inf
  %v8003 = vmax.f32 %v8001, %v8002
  %v8004 = vsel %vm7762, %v7734, -inf
  %v8005 = vmax.f32 %v8003, %v8004
  %v8006 = vsel %vm7762, %v7579, -inf
  %v8007 = vsel %vm7762, %v7619, -inf
  %v8008 = vmax.f32 %v8006, %v8007
  %v8009 = vsel %vm7762, %v7659, -inf
  %v8010 = vmax.f32 %v8008, %v8009
  %v8011 = vsel %vm7762, %v7699, -inf
  %v8012 = vmax.f32 %v8010, %v8011
  %v8013 = vsel %vm7762, %v7739, -inf
  %v8014 = vmax.f32 %v8012, %v8013
  %v8015 = vsel %vm7762, %v7584, -inf
  %v8016 = vsel %vm7762, %v7624, -inf
  %v8017 = vmax.f32 %v8015, %v8016
  %v8018 = vsel %vm7762, %v7664, -inf
  %v8019 = vmax.f32 %v8017, %v8018
  %v8020 = vsel %vm7762, %v7704, -inf
  %v8021 = vmax.f32 %v8019, %v8020
  %v8022 = vsel %vm7762, %v7744, -inf
  %v8023 = vmax.f32 %v8021, %v8022
  %v8024 = vsel %vm7762, %v7589, -inf
  %v8025 = vsel %vm7762, %v7629, -inf
  %v8026 = vmax.f32 %v8024, %v8025
  %v8027 = vsel %vm7762, %v7669, -inf
  %v8028 = vmax.f32 %v8026, %v8027
  %v8029 = vsel %vm7762, %v7709, -inf
  %v8030 = vmax.f32 %v8028, %v8029
  %v8031 = vsel %vm7762, %v7749, -inf
  %v8032 = vmax.f32 %v8030, %v8031
  %v8033 = vsel %vm7762, %v7594, -inf
  %v8034 = vsel %vm7762, %v7634, -inf
  %v8035 = vmax.f32 %v8033, %v8034
  %v8036 = vsel %vm7762, %v7674, -inf
  %v8037 = vmax.f32 %v8035, %v8036
  %v8038 = vsel %vm7762, %v7714, -inf
  %v8039 = vmax.f32 %v8037, %v8038
  %v8040 = vsel %vm7762, %v7754, -inf
  %v8041 = vmax.f32 %v8039, %v8040
  %v8042 = vsel %vm7762, %v7599, -inf
  %v8043 = vsel %vm7762, %v7639, -inf
  %v8044 = vmax.f32 %v8042, %v8043
  %v8045 = vsel %vm7762, %v7679, -inf
  %v8046 = vmax.f32 %v8044, %v8045
  %v8047 = vsel %vm7762, %v7719, -inf
  %v8048 = vmax.f32 %v8046, %v8047
  %v8049 = vsel %vm7762, %v7759, -inf
  %v8050 = vmax.f32 %v8048, %v8049
  %v8051 = vsub.f32 %v6964, %v7771
  %v8052 = vsub.f32 %v6969, %v7780
  %v8053 = vsub.f32 %v6974, %v7789
  %v8054 = vsub.f32 %v6979, %v7798
  %v8055 = vsub.f32 %v6984, %v7807
  %v8056 = vsub.f32 %v6989, %v7816
  %v8057 = vsub.f32 %v6994, %v7825
  %v8058 = vsub.f32 %v6999, %v7834
  %v8059 = vsub.f32 %v7004, %v7771
  %v8060 = vsub.f32 %v7009, %v7780
  %v8061 = vsub.f32 %v7014, %v7789
  %v8062 = vsub.f32 %v7019, %v7798
  %v8063 = vsub.f32 %v7024, %v7807
  %v8064 = vsub.f32 %v7029, %v7816
  %v8065 = vsub.f32 %v7034, %v7825
  %v8066 = vsub.f32 %v7039, %v7834
  %v8067 = vsub.f32 %v7044, %v7771
  %v8068 = vsub.f32 %v7049, %v7780
  %v8069 = vsub.f32 %v7054, %v7789
  %v8070 = vsub.f32 %v7059, %v7798
  %v8071 = vsub.f32 %v7064, %v7807
  %v8072 = vsub.f32 %v7069, %v7816
  %v8073 = vsub.f32 %v7074, %v7825
  %v8074 = vsub.f32 %v7079, %v7834
  %v8075 = vsub.f32 %v7084, %v7771
  %v8076 = vsub.f32 %v7089, %v7780
  %v8077 = vsub.f32 %v7094, %v7789
  %v8078 = vsub.f32 %v7099, %v7798
  %v8079 = vsub.f32 %v7104, %v7807
  %v8080 = vsub.f32 %v7109, %v7816
  %v8081 = vsub.f32 %v7114, %v7825
  %v8082 = vsub.f32 %v7119, %v7834
  %v8083 = vsub.f32 %v7124, %v7771
  %v8084 = vsub.f32 %v7129, %v7780
  %v8085 = vsub.f32 %v7134, %v7789
  %v8086 = vsub.f32 %v7139, %v7798
  %v8087 = vsub.f32 %v7144, %v7807
  %v8088 = vsub.f32 %v7149, %v7816
  %v8089 = vsub.f32 %v7154, %v7825
  %v8090 = vsub.f32 %v7159, %v7834
  %v8091 = vsub.f32 %v7164, %v7843
  %v8092 = vsub.f32 %v7169, %v7852
  %v8093 = vsub.f32 %v7174, %v7861
  %v8094 = vsub.f32 %v7179, %v7870
  %v8095 = vsub.f32 %v7184, %v7879
  %v8096 = vsub.f32 %v7189, %v7888
  %v8097 = vsub.f32 %v7194, %v7897
  %v8098 = vsub.f32 %v7199, %v7906
  %v8099 = vsub.f32 %v7204, %v7843
  %v8100 = vsub.f32 %v7209, %v7852
  %v8101 = vsub.f32 %v7214, %v7861
  %v8102 = vsub.f32 %v7219, %v7870
  %v8103 = vsub.f32 %v7224, %v7879
  %v8104 = vsub.f32 %v7229, %v7888
  %v8105 = vsub.f32 %v7234, %v7897
  %v8106 = vsub.f32 %v7239, %v7906
  %v8107 = vsub.f32 %v7244, %v7843
  %v8108 = vsub.f32 %v7249, %v7852
  %v8109 = vsub.f32 %v7254, %v7861
  %v8110 = vsub.f32 %v7259, %v7870
  %v8111 = vsub.f32 %v7264, %v7879
  %v8112 = vsub.f32 %v7269, %v7888
  %v8113 = vsub.f32 %v7274, %v7897
  %v8114 = vsub.f32 %v7279, %v7906
  %v8115 = vsub.f32 %v7284, %v7843
  %v8116 = vsub.f32 %v7289, %v7852
  %v8117 = vsub.f32 %v7294, %v7861
  %v8118 = vsub.f32 %v7299, %v7870
  %v8119 = vsub.f32 %v7304, %v7879
  %v8120 = vsub.f32 %v7309, %v7888
  %v8121 = vsub.f32 %v7314, %v7897
  %v8122 = vsub.f32 %v7319, %v7906
  %v8123 = vsub.f32 %v7324, %v7843
  %v8124 = vsub.f32 %v7329, %v7852
  %v8125 = vsub.f32 %v7334, %v7861
  %v8126 = vsub.f32 %v7339, %v7870
  %v8127 = vsub.f32 %v7344, %v7879
  %v8128 = vsub.f32 %v7349, %v7888
  %v8129 = vsub.f32 %v7354, %v7897
  %v8130 = vsub.f32 %v7359, %v7906
  %v8131 = vsub.f32 %v7364, %v7915
  %v8132 = vsub.f32 %v7369, %v7924
  %v8133 = vsub.f32 %v7374, %v7933
  %v8134 = vsub.f32 %v7379, %v7942
  %v8135 = vsub.f32 %v7384, %v7951
  %v8136 = vsub.f32 %v7389, %v7960
  %v8137 = vsub.f32 %v7394, %v7969
  %v8138 = vsub.f32 %v7399, %v7978
  %v8139 = vsub.f32 %v7404, %v7915
  %v8140 = vsub.f32 %v7409, %v7924
  %v8141 = vsub.f32 %v7414, %v7933
  %v8142 = vsub.f32 %v7419, %v7942
  %v8143 = vsub.f32 %v7424, %v7951
  %v8144 = vsub.f32 %v7429, %v7960
  %v8145 = vsub.f32 %v7434, %v7969
  %v8146 = vsub.f32 %v7439, %v7978
  %v8147 = vsub.f32 %v7444, %v7915
  %v8148 = vsub.f32 %v7449, %v7924
  %v8149 = vsub.f32 %v7454, %v7933
  %v8150 = vsub.f32 %v7459, %v7942
  %v8151 = vsub.f32 %v7464, %v7951
  %v8152 = vsub.f32 %v7469, %v7960
  %v8153 = vsub.f32 %v7474, %v7969
  %v8154 = vsub.f32 %v7479, %v7978
  %v8155 = vsub.f32 %v7484, %v7915
  %v8156 = vsub.f32 %v7489, %v7924
  %v8157 = vsub.f32 %v7494, %v7933
  %v8158 = vsub.f32 %v7499, %v7942
  %v8159 = vsub.f32 %v7504, %v7951
  %v8160 = vsub.f32 %v7509, %v7960
  %v8161 = vsub.f32 %v7514, %v7969
  %v8162 = vsub.f32 %v7519, %v7978
  %v8163 = vsub.f32 %v7524, %v7915
  %v8164 = vsub.f32 %v7529, %v7924
  %v8165 = vsub.f32 %v7534, %v7933
  %v8166 = vsub.f32 %v7539, %v7942
  %v8167 = vsub.f32 %v7544, %v7951
  %v8168 = vsub.f32 %v7549, %v7960
  %v8169 = vsub.f32 %v7554, %v7969
  %v8170 = vsub.f32 %v7559, %v7978
  %v8171 = vsub.f32 %v7564, %v7987
  %v8172 = vsub.f32 %v7569, %v7996
  %v8173 = vsub.f32 %v7574, %v8005
  %v8174 = vsub.f32 %v7579, %v8014
  %v8175 = vsub.f32 %v7584, %v8023
  %v8176 = vsub.f32 %v7589, %v8032
  %v8177 = vsub.f32 %v7594, %v8041
  %v8178 = vsub.f32 %v7599, %v8050
  %v8179 = vsub.f32 %v7604, %v7987
  %v8180 = vsub.f32 %v7609, %v7996
  %v8181 = vsub.f32 %v7614, %v8005
  %v8182 = vsub.f32 %v7619, %v8014
  %v8183 = vsub.f32 %v7624, %v8023
  %v8184 = vsub.f32 %v7629, %v8032
  %v8185 = vsub.f32 %v7634, %v8041
  %v8186 = vsub.f32 %v7639, %v8050
  %v8187 = vsub.f32 %v7644, %v7987
  %v8188 = vsub.f32 %v7649, %v7996
  %v8189 = vsub.f32 %v7654, %v8005
  %v8190 = vsub.f32 %v7659, %v8014
  %v8191 = vsub.f32 %v7664, %v8023
  %v8192 = vsub.f32 %v7669, %v8032
  %v8193 = vsub.f32 %v7674, %v8041
  %v8194 = vsub.f32 %v7679, %v8050
  %v8195 = vsub.f32 %v7684, %v7987
  %v8196 = vsub.f32 %v7689, %v7996
  %v8197 = vsub.f32 %v7694, %v8005
  %v8198 = vsub.f32 %v7699, %v8014
  %v8199 = vsub.f32 %v7704, %v8023
  %v8200 = vsub.f32 %v7709, %v8032
  %v8201 = vsub.f32 %v7714, %v8041
  %v8202 = vsub.f32 %v7719, %v8050
  %v8203 = vsub.f32 %v7724, %v7987
  %v8204 = vsub.f32 %v7729, %v7996
  %v8205 = vsub.f32 %v7734, %v8005
  %v8206 = vsub.f32 %v7739, %v8014
  %v8207 = vsub.f32 %v7744, %v8023
  %v8208 = vsub.f32 %v7749, %v8032
  %v8209 = vsub.f32 %v7754, %v8041
  %v8210 = vsub.f32 %v7759, %v8050
  %v8211 = vmul.f32 %v8051, 1.442695
  %v8212 = vpow.pop %v8211
  %v8213 = vmul.f32 %v8052, 1.442695
  %v8214 = vpow.pop %v8213
  %v8215 = vmul.f32 %v8053, 1.442695
  %v8216 = vpow.pop %v8215
  %v8217 = vmul.f32 %v8054, 1.442695
  %v8218 = vpow.pop %v8217
  %v8219 = vmul.f32 %v8055, 1.442695
  %v8220 = vpow.pop %v8219
  %v8221 = vmul.f32 %v8056, 1.442695
  %v8222 = vpow.pop %v8221
  %v8223 = vmul.f32 %v8057, 1.442695
  %v8224 = vpow.pop %v8223
  %v8225 = vmul.f32 %v8058, 1.442695
  %v8226 = vpow.pop %v8225
  %v8227 = vmul.f32 %v8059, 1.442695
  %v8228 = vpow.pop %v8227
  %v8229 = vmul.f32 %v8060, 1.442695
  %v8230 = vpow.pop %v8229
  %v8231 = vmul.f32 %v8061, 1.442695
  %v8232 = vpow.pop %v8231
  %v8233 = vmul.f32 %v8062, 1.442695
  %v8234 = vpow.pop %v8233
  %v8235 = vmul.f32 %v8063, 1.442695
  %v8236 = vpow.pop %v8235
  %v8237 = vmul.f32 %v8064, 1.442695
  %v8238 = vpow.pop %v8237
  %v8239 = vmul.f32 %v8065, 1.442695
  %v8240 = vpow.pop %v8239
  %v8241 = vmul.f32 %v8066, 1.442695
  %v8242 = vpow.pop %v8241
  %v8243 = vmul.f32 %v8067, 1.442695
  %v8244 = vpow.pop %v8243
  %v8245 = vmul.f32 %v8068, 1.442695
  %v8246 = vpow.pop %v8245
  %v8247 = vmul.f32 %v8069, 1.442695
  %v8248 = vpow.pop %v8247
  %v8249 = vmul.f32 %v8070, 1.442695
  %v8250 = vpow.pop %v8249
  %v8251 = vmul.f32 %v8071, 1.442695
  %v8252 = vpow.pop %v8251
  %v8253 = vmul.f32 %v8072, 1.442695
  %v8254 = vpow.pop %v8253
  %v8255 = vmul.f32 %v8073, 1.442695
  %v8256 = vpow.pop %v8255
  %v8257 = vmul.f32 %v8074, 1.442695
  %v8258 = vpow.pop %v8257
  %v8259 = vmul.f32 %v8075, 1.442695
  %v8260 = vpow.pop %v8259
  %v8261 = vmul.f32 %v8076, 1.442695
  %v8262 = vpow.pop %v8261
  %v8263 = vmul.f32 %v8077, 1.442695
  %v8264 = vpow.pop %v8263
  %v8265 = vmul.f32 %v8078, 1.442695
  %v8266 = vpow.pop %v8265
  %v8267 = vmul.f32 %v8079, 1.442695
  %v8268 = vpow.pop %v8267
  %v8269 = vmul.f32 %v8080, 1.442695
  %v8270 = vpow.pop %v8269
  %v8271 = vmul.f32 %v8081, 1.442695
  %v8272 = vpow.pop %v8271
  %v8273 = vmul.f32 %v8082, 1.442695
  %v8274 = vpow.pop %v8273
  %v8275 = vmul.f32 %v8083, 1.442695
  %v8276 = vpow.pop %v8275
  %v8277 = vmul.f32 %v8084, 1.442695
  %v8278 = vpow.pop %v8277
  %v8279 = vmul.f32 %v8085, 1.442695
  %v8280 = vpow.pop %v8279
  %v8281 = vmul.f32 %v8086, 1.442695
  %v8282 = vpow.pop %v8281
  %v8283 = vmul.f32 %v8087, 1.442695
  %v8284 = vpow.pop %v8283
  %v8285 = vmul.f32 %v8088, 1.442695
  %v8286 = vpow.pop %v8285
  %v8287 = vmul.f32 %v8089, 1.442695
  %v8288 = vpow.pop %v8287
  %v8289 = vmul.f32 %v8090, 1.442695
  %v8290 = vpow.pop %v8289
  %v8291 = vmul.f32 %v8091, 1.442695
  %v8292 = vpow.pop %v8291
  %v8293 = vmul.f32 %v8092, 1.442695
  %v8294 = vpow.pop %v8293
  %v8295 = vmul.f32 %v8093, 1.442695
  %v8296 = vpow.pop %v8295
  %v8297 = vmul.f32 %v8094, 1.442695
  %v8298 = vpow.pop %v8297
  %v8299 = vmul.f32 %v8095, 1.442695
  %v8300 = vpow.pop %v8299
  %v8301 = vmul.f32 %v8096, 1.442695
  %v8302 = vpow.pop %v8301
  %v8303 = vmul.f32 %v8097, 1.442695
  %v8304 = vpow.pop %v8303
  %v8305 = vmul.f32 %v8098, 1.442695
  %v8306 = vpow.pop %v8305
  %v8307 = vmul.f32 %v8099, 1.442695
  %v8308 = vpow.pop %v8307
  %v8309 = vmul.f32 %v8100, 1.442695
  %v8310 = vpow.pop %v8309
  %v8311 = vmul.f32 %v8101, 1.442695
  %v8312 = vpow.pop %v8311
  %v8313 = vmul.f32 %v8102, 1.442695
  %v8314 = vpow.pop %v8313
  %v8315 = vmul.f32 %v8103, 1.442695
  %v8316 = vpow.pop %v8315
  %v8317 = vmul.f32 %v8104, 1.442695
  %v8318 = vpow.pop %v8317
  %v8319 = vmul.f32 %v8105, 1.442695
  %v8320 = vpow.pop %v8319
  %v8321 = vmul.f32 %v8106, 1.442695
  %v8322 = vpow.pop %v8321
  %v8323 = vmul.f32 %v8107, 1.442695
  %v8324 = vpow.pop %v8323
  %v8325 = vmul.f32 %v8108, 1.442695
  %v8326 = vpow.pop %v8325
  %v8327 = vmul.f32 %v8109, 1.442695
  %v8328 = vpow.pop %v8327
  %v8329 = vmul.f32 %v8110, 1.442695
  %v8330 = vpow.pop %v8329
  %v8331 = vmul.f32 %v8111, 1.442695
  %v8332 = vpow.pop %v8331
  %v8333 = vmul.f32 %v8112, 1.442695
  %v8334 = vpow.pop %v8333
  %v8335 = vmul.f32 %v8113, 1.442695
  %v8336 = vpow.pop %v8335
  %v8337 = vmul.f32 %v8114, 1.442695
  %v8338 = vpow.pop %v8337
  %v8339 = vmul.f32 %v8115, 1.442695
  %v8340 = vpow.pop %v8339
  %v8341 = vmul.f32 %v8116, 1.442695
  %v8342 = vpow.pop %v8341
  %v8343 = vmul.f32 %v8117, 1.442695
  %v8344 = vpow.pop %v8343
  %v8345 = vmul.f32 %v8118, 1.442695
  %v8346 = vpow.pop %v8345
  %v8347 = vmul.f32 %v8119, 1.442695
  %v8348 = vpow.pop %v8347
  %v8349 = vmul.f32 %v8120, 1.442695
  %v8350 = vpow.pop %v8349
  %v8351 = vmul.f32 %v8121, 1.442695
  %v8352 = vpow.pop %v8351
  %v8353 = vmul.f32 %v8122, 1.442695
  %v8354 = vpow.pop %v8353
  %v8355 = vmul.f32 %v8123, 1.442695
  %v8356 = vpow.pop %v8355
  %v8357 = vmul.f32 %v8124, 1.442695
  %v8358 = vpow.pop %v8357
  %v8359 = vmul.f32 %v8125, 1.442695
  %v8360 = vpow.pop %v8359
  %v8361 = vmul.f32 %v8126, 1.442695
  %v8362 = vpow.pop %v8361
  %v8363 = vmul.f32 %v8127, 1.442695
  %v8364 = vpow.pop %v8363
  %v8365 = vmul.f32 %v8128, 1.442695
  %v8366 = vpow.pop %v8365
  %v8367 = vmul.f32 %v8129, 1.442695
  %v8368 = vpow.pop %v8367
  %v8369 = vmul.f32 %v8130, 1.442695
  %v8370 = vpow.pop %v8369
  %v8371 = vmul.f32 %v8131, 1.442695
  %v8372 = vpow.pop %v8371
  %v8373 = vmul.f32 %v8132, 1.442695
  %v8374 = vpow.pop %v8373
  %v8375 = vmul.f32 %v8133, 1.442695
  %v8376 = vpow.pop %v8375
  %v8377 = vmul.f32 %v8134, 1.442695
  %v8378 = vpow.pop %v8377
  %v8379 = vmul.f32 %v8135, 1.442695
  %v8380 = vpow.pop %v8379
  %v8381 = vmul.f32 %v8136, 1.442695
  %v8382 = vpow.pop %v8381
  %v8383 = vmul.f32 %v8137, 1.442695
  %v8384 = vpow.pop %v8383
  %v8385 = vmul.f32 %v8138, 1.442695
  %v8386 = vpow.pop %v8385
  %v8387 = vmul.f32 %v8139, 1.442695
  %v8388 = vpow.pop %v8387
  %v8389 = vmul.f32 %v8140, 1.442695
  %v8390 = vpow.pop %v8389
  %v8391 = vmul.f32 %v8141, 1.442695
  %v8392 = vpow.pop %v8391
  %v8393 = vmul.f32 %v8142, 1.442695
  %v8394 = vpow.pop %v8393
  %v8395 = vmul.f32 %v8143, 1.442695
  %v8396 = vpow.pop %v8395
  %v8397 = vmul.f32 %v8144, 1.442695
  %v8398 = vpow.pop %v8397
  %v8399 = vmul.f32 %v8145, 1.442695
  %v8400 = vpow.pop %v8399
  %v8401 = vmul.f32 %v8146, 1.442695
  %v8402 = vpow.pop %v8401
  %v8403 = vmul.f32 %v8147, 1.442695
  %v8404 = vpow.pop %v8403
  %v8405 = vmul.f32 %v8148, 1.442695
  %v8406 = vpow.pop %v8405
  %v8407 = vmul.f32 %v8149, 1.442695
  %v8408 = vpow.pop %v8407
  %v8409 = vmul.f32 %v8150, 1.442695
  %v8410 = vpow.pop %v8409
  %v8411 = vmul.f32 %v8151, 1.442695
  %v8412 = vpow.pop %v8411
  %v8413 = vmul.f32 %v8152, 1.442695
  %v8414 = vpow.pop %v8413
  %v8415 = vmul.f32 %v8153, 1.442695
  %v8416 = vpow.pop %v8415
  %v8417 = vmul.f32 %v8154, 1.442695
  %v8418 = vpow.pop %v8417
  %v8419 = vmul.f32 %v8155, 1.442695
  %v8420 = vpow.pop %v8419
  %v8421 = vmul.f32 %v8156, 1.442695
  %v8422 = vpow.pop %v8421
  %v8423 = vmul.f32 %v8157, 1.442695
  %v8424 = vpow.pop %v8423
  %v8425 = vmul.f32 %v8158, 1.442695
  %v8426 = vpow.pop %v8425
  %v8427 = vmul.f32 %v8159, 1.442695
  %v8428 = vpow.pop %v8427
  %v8429 = vmul.f32 %v8160, 1.442695
  %v8430 = vpow.pop %v8429
  %v8431 = vmul.f32 %v8161, 1.442695
  %v8432 = vpow.pop %v8431
  %v8433 = vmul.f32 %v8162, 1.442695
  %v8434 = vpow.pop %v8433
  %v8435 = vmul.f32 %v8163, 1.442695
  %v8436 = vpow.pop %v8435
  %v8437 = vmul.f32 %v8164, 1.442695
  %v8438 = vpow.pop %v8437
  %v8439 = vmul.f32 %v8165, 1.442695
  %v8440 = vpow.pop %v8439
  %v8441 = vmul.f32 %v8166, 1.442695
  %v8442 = vpow.pop %v8441
  %v8443 = vmul.f32 %v8167, 1.442695
  %v8444 = vpow.pop %v8443
  %v8445 = vmul.f32 %v8168, 1.442695
  %v8446 = vpow.pop %v8445
  %v8447 = vmul.f32 %v8169, 1.442695
  %v8448 = vpow.pop %v8447
  %v8449 = vmul.f32 %v8170, 1.442695
  %v8450 = vpow.pop %v8449
  %v8451 = vmul.f32 %v8171, 1.442695
  %v8452 = vpow.pop %v8451
  %v8453 = vmul.f32 %v8172, 1.442695
  %v8454 = vpow.pop %v8453
  %v8455 = vmul.f32 %v8173, 1.442695
  %v8456 = vpow.pop %v8455
  %v8457 = vmul.f32 %v8174, 1.442695
  %v8458 = vpow.pop %v8457
  %v8459 = vmul.f32 %v8175, 1.442695
  %v8460 = vpow.pop %v8459
  %v8461 = vmul.f32 %v8176, 1.442695
  %v8462 = vpow.pop %v8461
  %v8463 = vmul.f32 %v8177, 1.442695
  %v8464 = vpow.pop %v8463
  %v8465 = vmul.f32 %v8178, 1.442695
  %v8466 = vpow.pop %v8465
  %v8467 = vmul.f32 %v8179, 1.442695
  %v8468 = vpow.pop %v8467
  %v8469 = vmul.f32 %v8180, 1.442695
  %v8470 = vpow.pop %v8469
  %v8471 = vmul.f32 %v8181, 1.442695
  %v8472 = vpow.pop %v8471
  %v8473 = vmul.f32 %v8182, 1.442695
  %v8474 = vpow.pop %v8473
  %v8475 = vmul.f32 %v8183, 1.442695
  %v8476 = vpow.pop %v8475
  %v8477 = vmul.f32 %v8184, 1.442695
  %v8478 = vpow.pop %v8477
  %v8479 = vmul.f32 %v8185, 1.442695
  %v8480 = vpow.pop %v8479
  %v8481 = vmul.f32 %v8186, 1.442695
  %v8482 = vpow.pop %v8481
  %v8483 = vmul.f32 %v8187, 1.442695
  %v8484 = vpow.pop %v8483
  %v8485 = vmul.f32 %v8188, 1.442695
  %v8486 = vpow.pop %v8485
  %v8487 = vmul.f32 %v8189, 1.442695
  %v8488 = vpow.pop %v8487
  %v8489 = vmul.f32 %v8190, 1.442695
  %v8490 = vpow.pop %v8489
  %v8491 = vmul.f32 %v8191, 1.442695
  %v8492 = vpow.pop %v8491
  %v8493 = vmul.f32 %v8192, 1.442695
  %v8494 = vpow.pop %v8493
  %v8495 = vmul.f32 %v8193, 1.442695
  %v8496 = vpow.pop %v8495
  %v8497 = vmul.f32 %v8194, 1.442695
  %v8498 = vpow.pop %v8497
  %v8499 = vmul.f32 %v8195, 1.442695
  %v8500 = vpow.pop %v8499
  %v8501 = vmul.f32 %v8196, 1.442695
  %v8502 = vpow.pop %v8501
  %v8503 = vmul.f32 %v8197, 1.442695
  %v8504 = vpow.pop %v8503
  %v8505 = vmul.f32 %v8198, 1.442695
  %v8506 = vpow.pop %v8505
  %v8507 = vmul.f32 %v8199, 1.442695
  %v8508 = vpow.pop %v8507
  %v8509 = vmul.f32 %v8200, 1.442695
  %v8510 = vpow.pop %v8509
  %v8511 = vmul.f32 %v8201, 1.442695
  %v8512 = vpow.pop %v8511
  %v8513 = vmul.f32 %v8202, 1.442695
  %v8514 = vpow.pop %v8513
  %v8515 = vmul.f32 %v8203, 1.442695
  %v8516 = vpow.pop %v8515
  %v8517 = vmul.f32 %v8204, 1.442695
  %v8518 = vpow.pop %v8517
  %v8519 = vmul.f32 %v8205, 1.442695
  %v8520 = vpow.pop %v8519
  %v8521 = vmul.f32 %v8206, 1.442695
  %v8522 = vpow.pop %v8521
  %v8523 = vmul.f32 %v8207, 1.442695
  %v8524 = vpow.pop %v8523
  %v8525 = vmul.f32 %v8208, 1.442695
  %v8526 = vpow.pop %v8525
  %v8527 = vmul.f32 %v8209, 1.442695
  %v8528 = vpow.pop %v8527
  %v8529 = vmul.f32 %v8210, 1.442695
  %v8530 = vpow.pop %v8529
  %v8531 = vsel %vm7762, %v8212, 0.0
  %v8532 = vsel %vm7762, %v8228, 0.0
  %v8533 = vadd.f32 %v8531, %v8532
  %v8534 = vsel %vm7762, %v8244, 0.0
  %v8535 = vadd.f32 %v8533, %v8534
  %v8536 = vsel %vm7762, %v8260, 0.0
  %v8537 = vadd.f32 %v8535, %v8536
  %v8538 = vsel %vm7762, %v8276, 0.0
  %v8539 = vadd.f32 %v8537, %v8538
  %v8540 = vsel %vm7762, %v8214, 0.0
  %v8541 = vsel %vm7762, %v8230, 0.0
  %v8542 = vadd.f32 %v8540, %v8541
  %v8543 = vsel %vm7762, %v8246, 0.0
  %v8544 = vadd.f32 %v8542, %v8543
  %v8545 = vsel %vm7762, %v8262, 0.0
  %v8546 = vadd.f32 %v8544, %v8545
  %v8547 = vsel %vm7762, %v8278, 0.0
  %v8548 = vadd.f32 %v8546, %v8547
  %v8549 = vsel %vm7762, %v8216, 0.0
  %v8550 = vsel %vm7762, %v8232, 0.0
  %v8551 = vadd.f32 %v8549, %v8550
  %v8552 = vsel %vm7762, %v8248, 0.0
  %v8553 = vadd.f32 %v8551, %v8552
  %v8554 = vsel %vm7762, %v8264, 0.0
  %v8555 = vadd.f32 %v8553, %v8554
  %v8556 = vsel %vm7762, %v8280, 0.0
  %v8557 = vadd.f32 %v8555, %v8556
  %v8558 = vsel %vm7762, %v8218, 0.0
  %v8559 = vsel %vm7762, %v8234, 0.0
  %v8560 = vadd.f32 %v8558, %v8559
  %v8561 = vsel %vm7762, %v8250, 0.0
  %v8562 = vadd.f32 %v8560, %v8561
  %v8563 = vsel %vm7762, %v8266, 0.0
  %v8564 = vadd.f32 %v8562, %v8563
  %v8565 = vsel %vm7762, %v8282, 0.0
  %v8566 = vadd.f32 %v8564, %v8565
  %v8567 = vsel %vm7762, %v8220, 0.0
  %v8568 = vsel %vm7762, %v8236, 0.0
  %v8569 = vadd.f32 %v8567, %v8568
  %v8570 = vsel %vm7762, %v8252, 0.0
  %v8571 = vadd.f32 %v8569, %v8570
  %v8572 = vsel %vm7762, %v8268, 0.0
  %v8573 = vadd.f32 %v8571, %v8572
  %v8574 = vsel %vm7762, %v8284, 0.0
  %v8575 = vadd.f32 %v8573, %v8574
  %v8576 = vsel %vm7762, %v8222, 0.0
  %v8577 = vsel %vm7762, %v8238, 0.0
  %v8578 = vadd.f32 %v8576, %v8577
  %v8579 = vsel %vm7762, %v8254, 0.0
  %v8580 = vadd.f32 %v8578, %v8579
  %v8581 = vsel %vm7762, %v8270, 0.0
  %v8582 = vadd.f32 %v8580, %v8581
  %v8583 = vsel %vm7762, %v8286, 0.0
  %v8584 = vadd.f32 %v8582, %v8583
  %v8585 = vsel %vm7762, %v8224, 0.0
  %v8586 = vsel %vm7762, %v8240, 0.0
  %v8587 = vadd.f32 %v8585, %v8586
  %v8588 = vsel %vm7762, %v8256, 0.0
  %v8589 = vadd.f32 %v8587, %v8588
  %v8590 = vsel %vm7762, %v8272, 0.0
  %v8591 = vadd.f32 %v8589, %v8590
  %v8592 = vsel %vm7762, %v8288, 0.0
  %v8593 = vadd.f32 %v8591, %v8592
  %v8594 = vsel %vm7762, %v8226, 0.0
  %v8595 = vsel %vm7762, %v8242, 0.0
  %v8596 = vadd.f32 %v8594, %v8595
  %v8597 = vsel %vm7762, %v8258, 0.0
  %v8598 = vadd.f32 %v8596, %v8597
  %v8599 = vsel %vm7762, %v8274, 0.0
  %v8600 = vadd.f32 %v8598, %v8599
  %v8601 = vsel %vm7762, %v8290, 0.0
  %v8602 = vadd.f32 %v8600, %v8601
  %v8603 = vsel %vm7762, %v8292, 0.0
  %v8604 = vsel %vm7762, %v8308, 0.0
  %v8605 = vadd.f32 %v8603, %v8604
  %v8606 = vsel %vm7762, %v8324, 0.0
  %v8607 = vadd.f32 %v8605, %v8606
  %v8608 = vsel %vm7762, %v8340, 0.0
  %v8609 = vadd.f32 %v8607, %v8608
  %v8610 = vsel %vm7762, %v8356, 0.0
  %v8611 = vadd.f32 %v8609, %v8610
  %v8612 = vsel %vm7762, %v8294, 0.0
  %v8613 = vsel %vm7762, %v8310, 0.0
  %v8614 = vadd.f32 %v8612, %v8613
  %v8615 = vsel %vm7762, %v8326, 0.0
  %v8616 = vadd.f32 %v8614, %v8615
  %v8617 = vsel %vm7762, %v8342, 0.0
  %v8618 = vadd.f32 %v8616, %v8617
  %v8619 = vsel %vm7762, %v8358, 0.0
  %v8620 = vadd.f32 %v8618, %v8619
  %v8621 = vsel %vm7762, %v8296, 0.0
  %v8622 = vsel %vm7762, %v8312, 0.0
  %v8623 = vadd.f32 %v8621, %v8622
  %v8624 = vsel %vm7762, %v8328, 0.0
  %v8625 = vadd.f32 %v8623, %v8624
  %v8626 = vsel %vm7762, %v8344, 0.0
  %v8627 = vadd.f32 %v8625, %v8626
  %v8628 = vsel %vm7762, %v8360, 0.0
  %v8629 = vadd.f32 %v8627, %v8628
  %v8630 = vsel %vm7762, %v8298, 0.0
  %v8631 = vsel %vm7762, %v8314, 0.0
  %v8632 = vadd.f32 %v8630, %v8631
  %v8633 = vsel %vm7762, %v8330, 0.0
  %v8634 = vadd.f32 %v8632, %v8633
  %v8635 = vsel %vm7762, %v8346, 0.0
  %v8636 = vadd.f32 %v8634, %v8635
  %v8637 = vsel %vm7762, %v8362, 0.0
  %v8638 = vadd.f32 %v8636, %v8637
  %v8639 = vsel %vm7762, %v8300, 0.0
  %v8640 = vsel %vm7762, %v8316, 0.0
  %v8641 = vadd.f32 %v8639, %v8640
  %v8642 = vsel %vm7762, %v8332, 0.0
  %v8643 = vadd.f32 %v8641, %v8642
  %v8644 = vsel %vm7762, %v8348, 0.0
  %v8645 = vadd.f32 %v8643, %v8644
  %v8646 = vsel %vm7762, %v8364, 0.0
  %v8647 = vadd.f32 %v8645, %v8646
  %v8648 = vsel %vm7762, %v8302, 0.0
  %v8649 = vsel %vm7762, %v8318, 0.0
  %v8650 = vadd.f32 %v8648, %v8649
  %v8651 = vsel %vm7762, %v8334, 0.0
  %v8652 = vadd.f32 %v8650, %v8651
  %v8653 = vsel %vm7762, %v8350, 0.0
  %v8654 = vadd.f32 %v8652, %v8653
  %v8655 = vsel %vm7762, %v8366, 0.0
  %v8656 = vadd.f32 %v8654, %v8655
  %v8657 = vsel %vm7762, %v8304, 0.0
  %v8658 = vsel %vm7762, %v8320, 0.0
  %v8659 = vadd.f32 %v8657, %v8658
  %v8660 = vsel %vm7762, %v8336, 0.0
  %v8661 = vadd.f32 %v8659, %v8660
  %v8662 = vsel %vm7762, %v8352, 0.0
  %v8663 = vadd.f32 %v8661, %v8662
  %v8664 = vsel %vm7762, %v8368, 0.0
  %v8665 = vadd.f32 %v8663, %v8664
  %v8666 = vsel %vm7762, %v8306, 0.0
  %v8667 = vsel %vm7762, %v8322, 0.0
  %v8668 = vadd.f32 %v8666, %v8667
  %v8669 = vsel %vm7762, %v8338, 0.0
  %v8670 = vadd.f32 %v8668, %v8669
  %v8671 = vsel %vm7762, %v8354, 0.0
  %v8672 = vadd.f32 %v8670, %v8671
  %v8673 = vsel %vm7762, %v8370, 0.0
  %v8674 = vadd.f32 %v8672, %v8673
  %v8675 = vsel %vm7762, %v8372, 0.0
  %v8676 = vsel %vm7762, %v8388, 0.0
  %v8677 = vadd.f32 %v8675, %v8676
  %v8678 = vsel %vm7762, %v8404, 0.0
  %v8679 = vadd.f32 %v8677, %v8678
  %v8680 = vsel %vm7762, %v8420, 0.0
  %v8681 = vadd.f32 %v8679, %v8680
  %v8682 = vsel %vm7762, %v8436, 0.0
  %v8683 = vadd.f32 %v8681, %v8682
  %v8684 = vsel %vm7762, %v8374, 0.0
  %v8685 = vsel %vm7762, %v8390, 0.0
  %v8686 = vadd.f32 %v8684, %v8685
  %v8687 = vsel %vm7762, %v8406, 0.0
  %v8688 = vadd.f32 %v8686, %v8687
  %v8689 = vsel %vm7762, %v8422, 0.0
  %v8690 = vadd.f32 %v8688, %v8689
  %v8691 = vsel %vm7762, %v8438, 0.0
  %v8692 = vadd.f32 %v8690, %v8691
  %v8693 = vsel %vm7762, %v8376, 0.0
  %v8694 = vsel %vm7762, %v8392, 0.0
  %v8695 = vadd.f32 %v8693, %v8694
  %v8696 = vsel %vm7762, %v8408, 0.0
  %v8697 = vadd.f32 %v8695, %v8696
  %v8698 = vsel %vm7762, %v8424, 0.0
  %v8699 = vadd.f32 %v8697, %v8698
  %v8700 = vsel %vm7762, %v8440, 0.0
  %v8701 = vadd.f32 %v8699, %v8700
  %v8702 = vsel %vm7762, %v8378, 0.0
  %v8703 = vsel %vm7762, %v8394, 0.0
  %v8704 = vadd.f32 %v8702, %v8703
  %v8705 = vsel %vm7762, %v8410, 0.0
  %v8706 = vadd.f32 %v8704, %v8705
  %v8707 = vsel %vm7762, %v8426, 0.0
  %v8708 = vadd.f32 %v8706, %v8707
  %v8709 = vsel %vm7762, %v8442, 0.0
  %v8710 = vadd.f32 %v8708, %v8709
  %v8711 = vsel %vm7762, %v8380, 0.0
  %v8712 = vsel %vm7762, %v8396, 0.0
  %v8713 = vadd.f32 %v8711, %v8712
  %v8714 = vsel %vm7762, %v8412, 0.0
  %v8715 = vadd.f32 %v8713, %v8714
  %v8716 = vsel %vm7762, %v8428, 0.0
  %v8717 = vadd.f32 %v8715, %v8716
  %v8718 = vsel %vm7762, %v8444, 0.0
  %v8719 = vadd.f32 %v8717, %v8718
  %v8720 = vsel %vm7762, %v8382, 0.0
  %v8721 = vsel %vm7762, %v8398, 0.0
  %v8722 = vadd.f32 %v8720, %v8721
  %v8723 = vsel %vm7762, %v8414, 0.0
  %v8724 = vadd.f32 %v8722, %v8723
  %v8725 = vsel %vm7762, %v8430, 0.0
  %v8726 = vadd.f32 %v8724, %v8725
  %v8727 = vsel %vm7762, %v8446, 0.0
  %v8728 = vadd.f32 %v8726, %v8727
  %v8729 = vsel %vm7762, %v8384, 0.0
  %v8730 = vsel %vm7762, %v8400, 0.0
  %v8731 = vadd.f32 %v8729, %v8730
  %v8732 = vsel %vm7762, %v8416, 0.0
  %v8733 = vadd.f32 %v8731, %v8732
  %v8734 = vsel %vm7762, %v8432, 0.0
  %v8735 = vadd.f32 %v8733, %v8734
  %v8736 = vsel %vm7762, %v8448, 0.0
  %v8737 = vadd.f32 %v8735, %v8736
  %v8738 = vsel %vm7762, %v8386, 0.0
  %v8739 = vsel %vm7762, %v8402, 0.0
  %v8740 = vadd.f32 %v8738, %v8739
  %v8741 = vsel %vm7762, %v8418, 0.0
  %v8742 = vadd.f32 %v8740, %v8741
  %v8743 = vsel %vm7762, %v8434, 0.0
  %v8744 = vadd.f32 %v8742, %v8743
  %v8745 = vsel %vm7762, %v8450, 0.0
  %v8746 = vadd.f32 %v8744, %v8745
  %v8747 = vsel %vm7762, %v8452, 0.0
  %v8748 = vsel %vm7762, %v8468, 0.0
  %v8749 = vadd.f32 %v8747, %v8748
  %v8750 = vsel %vm7762, %v8484, 0.0
  %v8751 = vadd.f32 %v8749, %v8750
  %v8752 = vsel %vm7762, %v8500, 0.0
  %v8753 = vadd.f32 %v8751, %v8752
  %v8754 = vsel %vm7762, %v8516, 0.0
  %v8755 = vadd.f32 %v8753, %v8754
  %v8756 = vsel %vm7762, %v8454, 0.0
  %v8757 = vsel %vm7762, %v8470, 0.0
  %v8758 = vadd.f32 %v8756, %v8757
  %v8759 = vsel %vm7762, %v8486, 0.0
  %v8760 = vadd.f32 %v8758, %v8759
  %v8761 = vsel %vm7762, %v8502, 0.0
  %v8762 = vadd.f32 %v8760, %v8761
  %v8763 = vsel %vm7762, %v8518, 0.0
  %v8764 = vadd.f32 %v8762, %v8763
  %v8765 = vsel %vm7762, %v8456, 0.0
  %v8766 = vsel %vm7762, %v8472, 0.0
  %v8767 = vadd.f32 %v8765, %v8766
  %v8768 = vsel %vm7762, %v8488, 0.0
  %v8769 = vadd.f32 %v8767, %v8768
  %v8770 = vsel %vm7762, %v8504, 0.0
  %v8771 = vadd.f32 %v8769, %v8770
  %v8772 = vsel %vm7762, %v8520, 0.0
  %v8773 = vadd.f32 %v8771, %v8772
  %v8774 = vsel %vm7762, %v8458, 0.0
  %v8775 = vsel %vm7762, %v8474, 0.0
  %v8776 = vadd.f32 %v8774, %v8775
  %v8777 = vsel %vm7762, %v8490, 0.0
  %v8778 = vadd.f32 %v8776, %v8777
  %v8779 = vsel %vm7762, %v8506, 0.0
  %v8780 = vadd.f32 %v8778, %v8779
  %v8781 = vsel %vm7762, %v8522, 0.0
  %v8782 = vadd.f32 %v8780, %v8781
  %v8783 = vsel %vm7762, %v8460, 0.0
  %v8784 = vsel %vm7762, %v8476, 0.0
  %v8785 = vadd.f32 %v8783, %v8784
  %v8786 = vsel %vm7762, %v8492, 0.0
  %v8787 = vadd.f32 %v8785, %v8786
  %v8788 = vsel %vm7762, %v8508, 0.0
  %v8789 = vadd.f32 %v8787, %v8788
  %v8790 = vsel %vm7762, %v8524, 0.0
  %v8791 = vadd.f32 %v8789, %v8790
  %v8792 = vsel %vm7762, %v8462, 0.0
  %v8793 = vsel %vm7762, %v8478, 0.0
  %v8794 = vadd.f32 %v8792, %v8793
  %v8795 = vsel %vm7762, %v8494, 0.0
  %v8796 = vadd.f32 %v8794, %v8795
  %v8797 = vsel %vm7762, %v8510, 0.0
  %v8798 = vadd.f32 %v8796, %v8797
  %v8799 = vsel %vm7762, %v8526, 0.0
  %v8800 = vadd.f32 %v8798, %v8799
  %v8801 = vsel %vm7762, %v8464, 0.0
  %v8802 = vsel %vm7762, %v8480, 0.0
  %v8803 = vadd.f32 %v8801, %v8802
  %v8804 = vsel %vm7762, %v8496, 0.0
  %v8805 = vadd.f32 %v8803, %v8804
  %v8806 = vsel %vm7762, %v8512, 0.0
  %v8807 = vadd.f32 %v8805, %v8806
  %v8808 = vsel %vm7762, %v8528, 0.0
  %v8809 = vadd.f32 %v8807, %v8808
  %v8810 = vsel %vm7762, %v8466, 0.0
  %v8811 = vsel %vm7762, %v8482, 0.0
  %v8812 = vadd.f32 %v8810, %v8811
  %v8813 = vsel %vm7762, %v8498, 0.0
  %v8814 = vadd.f32 %v8812, %v8813
  %v8815 = vsel %vm7762, %v8514, 0.0
  %v8816 = vadd.f32 %v8814, %v8815
  %v8817 = vsel %vm7762, %v8530, 0.0
  %v8818 = vadd.f32 %v8816, %v8817
  %v8819 = vrcp.pop %v8539
  %v8820 = vmul.f32 %v8212, %v8819
  %v8821 = vrcp.pop %v8548
  %v8822 = vmul.f32 %v8214, %v8821
  %v8823 = vrcp.pop %v8557
  %v8824 = vmul.f32 %v8216, %v8823
  %v8825 = vrcp.pop %v8566
  %v8826 = vmul.f32 %v8218, %v8825
  %v8827 = vrcp.pop %v8575
  %v8828 = vmul.f32 %v8220, %v8827
  %v8829 = vrcp.pop %v8584
  %v8830 = vmul.f32 %v8222, %v8829
  %v8831 = vrcp.pop %v8593
  %v8832 = vmul.f32 %v8224, %v8831
  %v8833 = vrcp.pop %v8602
  %v8834 = vmul.f32 %v8226, %v8833
  %v8835 = vmul.f32 %v8228, %v8819
  %v8836 = vmul.f32 %v8230, %v8821
  %v8837 = vmul.f32 %v8232, %v8823
  %v8838 = vmul.f32 %v8234, %v8825
  %v8839 = vmul.f32 %v8236, %v8827
  %v8840 = vmul.f32 %v8238, %v8829
  %v8841 = vmul.f32 %v8240, %v8831
  %v8842 = vmul.f32 %v8242, %v8833
  %v8843 = vmul.f32 %v8244, %v8819
  %v8844 = vmul.f32 %v8246, %v8821
  %v8845 = vmul.f32 %v8248, %v8823
  %v8846 = vmul.f32 %v8250, %v8825
  %v8847 = vmul.f32 %v8252, %v8827
  %v8848 = vmul.f32 %v8254, %v8829
  %v8849 = vmul.f32 %v8256, %v8831
  %v8850 = vmul.f32 %v8258, %v8833
  %v8851 = vmul.f32 %v8260, %v8819
  %v8852 = vmul.f32 %v8262, %v8821
  %v8853 = vmul.f32 %v8264, %v8823
  %v8854 = vmul.f32 %v8266, %v8825
  %v8855 = vmul.f32 %v8268, %v8827
  %v8856 = vmul.f32 %v8270, %v8829
  %v8857 = vmul.f32 %v8272, %v8831
  %v8858 = vmul.f32 %v8274, %v8833
  %v8859 = vmul.f32 %v8276, %v8819
  %v8860 = vmul.f32 %v8278, %v8821
  %v8861 = vmul.f32 %v8280, %v8823
  %v8862 = vmul.f32 %v8282, %v8825
  %v8863 = vmul.f32 %v8284, %v8827
  %v8864 = vmul.f32 %v8286, %v8829
  %v8865 = vmul.f32 %v8288, %v8831
  %v8866 = vmul.f32 %v8290, %v8833
  %v8867 = vrcp.pop %v8611
  %v8868 = vmul.f32 %v8292, %v8867
  %v8869 = vrcp.pop %v8620
  %v8870 = vmul.f32 %v8294, %v8869
  %v8871 = vrcp.pop %v8629
  %v8872 = vmul.f32 %v8296, %v8871
  %v8873 = vrcp.pop %v8638
  %v8874 = vmul.f32 %v8298, %v8873
  %v8875 = vrcp.pop %v8647
  %v8876 = vmul.f32 %v8300, %v8875
  %v8877 = vrcp.pop %v8656
  %v8878 = vmul.f32 %v8302, %v8877
  %v8879 = vrcp.pop %v8665
  %v8880 = vmul.f32 %v8304, %v8879
  %v8881 = vrcp.pop %v8674
  %v8882 = vmul.f32 %v8306, %v8881
  %v8883 = vmul.f32 %v8308, %v8867
  %v8884 = vmul.f32 %v8310, %v8869
  %v8885 = vmul.f32 %v8312, %v8871
  %v8886 = vmul.f32 %v8314, %v8873
  %v8887 = vmul.f32 %v8316, %v8875
  %v8888 = vmul.f32 %v8318, %v8877
  %v8889 = vmul.f32 %v8320, %v8879
  %v8890 = vmul.f32 %v8322, %v8881
  %v8891 = vmul.f32 %v8324, %v8867
  %v8892 = vmul.f32 %v8326, %v8869
  %v8893 = vmul.f32 %v8328, %v8871
  %v8894 = vmul.f32 %v8330, %v8873
  %v8895 = vmul.f32 %v8332, %v8875
  %v8896 = vmul.f32 %v8334, %v8877
  %v8897 = vmul.f32 %v8336, %v8879
  %v8898 = vmul.f32 %v8338, %v8881
  %v8899 = vmul.f32 %v8340, %v8867
  %v8900 = vmul.f32 %v8342, %v8869
  %v8901 = vmul.f32 %v8344, %v8871
  %v8902 = vmul.f32 %v8346, %v8873
  %v8903 = vmul.f32 %v8348, %v8875
  %v8904 = vmul.f32 %v8350, %v8877
  %v8905 = vmul.f32 %v8352, %v8879
  %v8906 = vmul.f32 %v8354, %v8881
  %v8907 = vmul.f32 %v8356, %v8867
  %v8908 = vmul.f32 %v8358, %v8869
  %v8909 = vmul.f32 %v8360, %v8871
  %v8910 = vmul.f32 %v8362, %v8873
  %v8911 = vmul.f32 %v8364, %v8875
  %v8912 = vmul.f32 %v8366, %v8877
  %v8913 = vmul.f32 %v8368, %v8879
  %v8914 = vmul.f32 %v8370, %v8881
  %v8915 = vrcp.pop %v8683
  %v8916 = vmul.f32 %v8372, %v8915
  %v8917 = vrcp.pop %v8692
  %v8918 = vmul.f32 %v8374, %v8917
  %v8919 = vrcp.pop %v8701
  %v8920 = vmul.f32 %v8376, %v8919
  %v8921 = vrcp.pop %v8710
  %v8922 = vmul.f32 %v8378, %v8921
  %v8923 = vrcp.pop %v8719
  %v8924 = vmul.f32 %v8380, %v8923
  %v8925 = vrcp.pop %v8728
  %v8926 = vmul.f32 %v8382, %v8925
  %v8927 = vrcp.pop %v8737
  %v8928 = vmul.f32 %v8384, %v8927
  %v8929 = vrcp.pop %v8746
  %v8930 = vmul.f32 %v8386, %v8929
  %v8931 = vmul.f32 %v8388, %v8915
  %v8932 = vmul.f32 %v8390, %v8917
  %v8933 = vmul.f32 %v8392, %v8919
  %v8934 = vmul.f32 %v8394, %v8921
  %v8935 = vmul.f32 %v8396, %v8923
  %v8936 = vmul.f32 %v8398, %v8925
  %v8937 = vmul.f32 %v8400, %v8927
  %v8938 = vmul.f32 %v8402, %v8929
  %v8939 = vmul.f32 %v8404, %v8915
  %v8940 = vmul.f32 %v8406, %v8917
  %v8941 = vmul.f32 %v8408, %v8919
  %v8942 = vmul.f32 %v8410, %v8921
  %v8943 = vmul.f32 %v8412, %v8923
  %v8944 = vmul.f32 %v8414, %v8925
  %v8945 = vmul.f32 %v8416, %v8927
  %v8946 = vmul.f32 %v8418, %v8929
  %v8947 = vmul.f32 %v8420, %v8915
  %v8948 = vmul.f32 %v8422, %v8917
  %v8949 = vmul.f32 %v8424, %v8919
  %v8950 = vmul.f32 %v8426, %v8921
  %v8951 = vmul.f32 %v8428, %v8923
  %v8952 = vmul.f32 %v8430, %v8925
  %v8953 = vmul.f32 %v8432, %v8927
  %v8954 = vmul.f32 %v8434, %v8929
  %v8955 = vmul.f32 %v8436, %v8915
  %v8956 = vmul.f32 %v8438, %v8917
  %v8957 = vmul.f32 %v8440, %v8919
  %v8958 = vmul.f32 %v8442, %v8921
  %v8959 = vmul.f32 %v8444, %v8923
  %v8960 = vmul.f32 %v8446, %v8925
  %v8961 = vmul.f32 %v8448, %v8927
  %v8962 = vmul.f32 %v8450, %v8929
  %v8963 = vrcp.pop %v8755
  %v8964 = vmul.f32 %v8452, %v8963
  %v8965 = vrcp.pop %v8764
  %v8966 = vmul.f32 %v8454, %v8965
  %v8967 = vrcp.pop %v8773
  %v8968 = vmul.f32 %v8456, %v8967
  %v8969 = vrcp.pop %v8782
  %v8970 = vmul.f32 %v8458, %v8969
  %v8971 = vrcp.pop %v8791
  %v8972 = vmul.f32 %v8460, %v8971
  %v8973 = vrcp.pop %v8800
  %v8974 = vmul.f32 %v8462, %v8973
  %v8975 = vrcp.pop %v8809
  %v8976 = vmul.f32 %v8464, %v8975
  %v8977 = vrcp.pop %v8818
  %v8978 = vmul.f32 %v8466, %v8977
  %v8979 = vmul.f32 %v8468, %v8963
  %v8980 = vmul.f32 %v8470, %v8965
  %v8981 = vmul.f32 %v8472, %v8967
  %v8982 = vmul.f32 %v8474, %v8969
  %v8983 = vmul.f32 %v8476, %v8971
  %v8984 = vmul.f32 %v8478, %v8973
  %v8985 = vmul.f32 %v8480, %v8975
  %v8986 = vmul.f32 %v8482, %v8977
  %v8987 = vmul.f32 %v8484, %v8963
  %v8988 = vmul.f32 %v8486, %v8965
  %v8989 = vmul.f32 %v8488, %v8967
  %v8990 = vmul.f32 %v8490, %v8969
  %v8991 = vmul.f32 %v8492, %v8971
  %v8992 = vmul.f32 %v8494, %v8973
  %v8993 = vmul.f32 %v8496, %v8975
  %v8994 = vmul.f32 %v8498, %v8977
  %v8995 = vmul.f32 %v8500, %v8963
  %v8996 = vmul.f32 %v8502, %v8965
  %v8997 = vmul.f32 %v8504, %v8967
  %v8998 = vmul.f32 %v8506, %v8969
  %v8999 = vmul.f32 %v8508, %v8971
  %v9000 = vmul.f32 %v8510, %v8973
  %v9001 = vmul.f32 %v8512, %v8975
  %v9002 = vmul.f32 %v8514, %v8977
  %v9003 = vmul.f32 %v8516, %v8963
  %v9004 = vmul.f32 %v8518, %v8965
  %v9005 = vmul.f32 %v8520, %v8967
  %v9006 = vmul.f32 %v8522, %v8969
  %v9007 = vmul.f32 %v8524, %v8971
  %v9008 = vmul.f32 %v8526, %v8973
  %v9009 = vmul.f32 %v8528, %v8975
  %v9010 = vmul.f32 %v8530, %v8977
  %9012 = vset.pattern.permute.xlu0 32
  %9013 = vperm.xlu0 %9012, %v8820
  %v9014 = vpop.permute.xlu0 %9013
  %9017 = vset.pattern.permute.xlu0 32
  %9018 = vperm.xlu0 %9017, %v8822
  %v9019 = vpop.permute.xlu0 %9018
  %9022 = vset.pattern.permute.xlu0 32
  %9023 = vperm.xlu0 %9022, %v8824
  %v9024 = vpop.permute.xlu0 %9023
  %9027 = vset.pattern.permute.xlu0 32
  %9028 = vperm.xlu0 %9027, %v8826
  %v9029 = vpop.permute.xlu0 %9028
  %9032 = vset.pattern.permute.xlu0 32
  %9033 = vperm.xlu0 %9032, %v8828
  %v9034 = vpop.permute.xlu0 %9033
  %9037 = vset.pattern.permute.xlu0 32
  %9038 = vperm.xlu0 %9037, %v8830
  %v9039 = vpop.permute.xlu0 %9038
  %9042 = vset.pattern.permute.xlu0 32
  %9043 = vperm.xlu0 %9042, %v8832
  %v9044 = vpop.permute.xlu0 %9043
  %9047 = vset.pattern.permute.xlu0 32
  %9048 = vperm.xlu0 %9047, %v8834
  %v9049 = vpop.permute.xlu0 %9048
  %9052 = vset.pattern.permute.xlu0 32
  %9053 = vperm.xlu0 %9052, %v8835
  %v9054 = vpop.permute.xlu0 %9053
  %9057 = vset.pattern.permute.xlu0 32
  %9058 = vperm.xlu0 %9057, %v8836
  %v9059 = vpop.permute.xlu0 %9058
  %9062 = vset.pattern.permute.xlu0 32
  %9063 = vperm.xlu0 %9062, %v8837
  %v9064 = vpop.permute.xlu0 %9063
  %9067 = vset.pattern.permute.xlu0 32
  %9068 = vperm.xlu0 %9067, %v8838
  %v9069 = vpop.permute.xlu0 %9068
  %9072 = vset.pattern.permute.xlu0 32
  %9073 = vperm.xlu0 %9072, %v8839
  %v9074 = vpop.permute.xlu0 %9073
  %9077 = vset.pattern.permute.xlu0 32
  %9078 = vperm.xlu0 %9077, %v8840
  %v9079 = vpop.permute.xlu0 %9078
  %9082 = vset.pattern.permute.xlu0 32
  %9083 = vperm.xlu0 %9082, %v8841
  %v9084 = vpop.permute.xlu0 %9083
  %9087 = vset.pattern.permute.xlu0 32
  %9088 = vperm.xlu0 %9087, %v8842
  %v9089 = vpop.permute.xlu0 %9088
  %9092 = vset.pattern.permute.xlu0 32
  %9093 = vperm.xlu0 %9092, %v8843
  %v9094 = vpop.permute.xlu0 %9093
  %9097 = vset.pattern.permute.xlu0 32
  %9098 = vperm.xlu0 %9097, %v8844
  %v9099 = vpop.permute.xlu0 %9098
  %9102 = vset.pattern.permute.xlu0 32
  %9103 = vperm.xlu0 %9102, %v8845
  %v9104 = vpop.permute.xlu0 %9103
  %9107 = vset.pattern.permute.xlu0 32
  %9108 = vperm.xlu0 %9107, %v8846
  %v9109 = vpop.permute.xlu0 %9108
  %9112 = vset.pattern.permute.xlu0 32
  %9113 = vperm.xlu0 %9112, %v8847
  %v9114 = vpop.permute.xlu0 %9113
  %9117 = vset.pattern.permute.xlu0 32
  %9118 = vperm.xlu0 %9117, %v8848
  %v9119 = vpop.permute.xlu0 %9118
  %9122 = vset.pattern.permute.xlu0 32
  %9123 = vperm.xlu0 %9122, %v8849
  %v9124 = vpop.permute.xlu0 %9123
  %9127 = vset.pattern.permute.xlu0 32
  %9128 = vperm.xlu0 %9127, %v8850
  %v9129 = vpop.permute.xlu0 %9128
  %9132 = vset.pattern.permute.xlu0 32
  %9133 = vperm.xlu0 %9132, %v8851
  %v9134 = vpop.permute.xlu0 %9133
  %9137 = vset.pattern.permute.xlu0 32
  %9138 = vperm.xlu0 %9137, %v8852
  %v9139 = vpop.permute.xlu0 %9138
  %9142 = vset.pattern.permute.xlu0 32
  %9143 = vperm.xlu0 %9142, %v8853
  %v9144 = vpop.permute.xlu0 %9143
  %9147 = vset.pattern.permute.xlu0 32
  %9148 = vperm.xlu0 %9147, %v8854
  %v9149 = vpop.permute.xlu0 %9148
  %9152 = vset.pattern.permute.xlu0 32
  %9153 = vperm.xlu0 %9152, %v8855
  %v9154 = vpop.permute.xlu0 %9153
  %9157 = vset.pattern.permute.xlu0 32
  %9158 = vperm.xlu0 %9157, %v8856
  %v9159 = vpop.permute.xlu0 %9158
  %9162 = vset.pattern.permute.xlu0 32
  %9163 = vperm.xlu0 %9162, %v8857
  %v9164 = vpop.permute.xlu0 %9163
  %9167 = vset.pattern.permute.xlu0 32
  %9168 = vperm.xlu0 %9167, %v8858
  %v9169 = vpop.permute.xlu0 %9168
  %9172 = vset.pattern.permute.xlu0 32
  %9173 = vperm.xlu0 %9172, %v8859
  %v9174 = vpop.permute.xlu0 %9173
  %9177 = vset.pattern.permute.xlu0 32
  %9178 = vperm.xlu0 %9177, %v8860
  %v9179 = vpop.permute.xlu0 %9178
  %9182 = vset.pattern.permute.xlu0 32
  %9183 = vperm.xlu0 %9182, %v8861
  %v9184 = vpop.permute.xlu0 %9183
  %9187 = vset.pattern.permute.xlu0 32
  %9188 = vperm.xlu0 %9187, %v8862
  %v9189 = vpop.permute.xlu0 %9188
  %9192 = vset.pattern.permute.xlu0 32
  %9193 = vperm.xlu0 %9192, %v8863
  %v9194 = vpop.permute.xlu0 %9193
  %9197 = vset.pattern.permute.xlu0 32
  %9198 = vperm.xlu0 %9197, %v8864
  %v9199 = vpop.permute.xlu0 %9198
  %9202 = vset.pattern.permute.xlu0 32
  %9203 = vperm.xlu0 %9202, %v8865
  %v9204 = vpop.permute.xlu0 %9203
  %9207 = vset.pattern.permute.xlu0 32
  %9208 = vperm.xlu0 %9207, %v8866
  %v9209 = vpop.permute.xlu0 %9208
  %9212 = vset.pattern.permute.xlu0 32
  %9213 = vperm.xlu0 %9212, %v8868
  %v9214 = vpop.permute.xlu0 %9213
  %9217 = vset.pattern.permute.xlu0 32
  %9218 = vperm.xlu0 %9217, %v8870
  %v9219 = vpop.permute.xlu0 %9218
  %9222 = vset.pattern.permute.xlu0 32
  %9223 = vperm.xlu0 %9222, %v8872
  %v9224 = vpop.permute.xlu0 %9223
  %9227 = vset.pattern.permute.xlu0 32
  %9228 = vperm.xlu0 %9227, %v8874
  %v9229 = vpop.permute.xlu0 %9228
  %9232 = vset.pattern.permute.xlu0 32
  %9233 = vperm.xlu0 %9232, %v8876
  %v9234 = vpop.permute.xlu0 %9233
  %9237 = vset.pattern.permute.xlu0 32
  %9238 = vperm.xlu0 %9237, %v8878
  %v9239 = vpop.permute.xlu0 %9238
  %9242 = vset.pattern.permute.xlu0 32
  %9243 = vperm.xlu0 %9242, %v8880
  %v9244 = vpop.permute.xlu0 %9243
  %9247 = vset.pattern.permute.xlu0 32
  %9248 = vperm.xlu0 %9247, %v8882
  %v9249 = vpop.permute.xlu0 %9248
  %9252 = vset.pattern.permute.xlu0 32
  %9253 = vperm.xlu0 %9252, %v8883
  %v9254 = vpop.permute.xlu0 %9253
  %9257 = vset.pattern.permute.xlu0 32
  %9258 = vperm.xlu0 %9257, %v8884
  %v9259 = vpop.permute.xlu0 %9258
  %9262 = vset.pattern.permute.xlu0 32
  %9263 = vperm.xlu0 %9262, %v8885
  %v9264 = vpop.permute.xlu0 %9263
  %9267 = vset.pattern.permute.xlu0 32
  %9268 = vperm.xlu0 %9267, %v8886
  %v9269 = vpop.permute.xlu0 %9268
  %9272 = vset.pattern.permute.xlu0 32
  %9273 = vperm.xlu0 %9272, %v8887
  %v9274 = vpop.permute.xlu0 %9273
  %9277 = vset.pattern.permute.xlu0 32
  %9278 = vperm.xlu0 %9277, %v8888
  %v9279 = vpop.permute.xlu0 %9278
  %9282 = vset.pattern.permute.xlu0 32
  %9283 = vperm.xlu0 %9282, %v8889
  %v9284 = vpop.permute.xlu0 %9283
  %9287 = vset.pattern.permute.xlu0 32
  %9288 = vperm.xlu0 %9287, %v8890
  %v9289 = vpop.permute.xlu0 %9288
  %9292 = vset.pattern.permute.xlu0 32
  %9293 = vperm.xlu0 %9292, %v8891
  %v9294 = vpop.permute.xlu0 %9293
  %9297 = vset.pattern.permute.xlu0 32
  %9298 = vperm.xlu0 %9297, %v8892
  %v9299 = vpop.permute.xlu0 %9298
  %9302 = vset.pattern.permute.xlu0 32
  %9303 = vperm.xlu0 %9302, %v8893
  %v9304 = vpop.permute.xlu0 %9303
  %9307 = vset.pattern.permute.xlu0 32
  %9308 = vperm.xlu0 %9307, %v8894
  %v9309 = vpop.permute.xlu0 %9308
  %9312 = vset.pattern.permute.xlu0 32
  %9313 = vperm.xlu0 %9312, %v8895
  %v9314 = vpop.permute.xlu0 %9313
  %9317 = vset.pattern.permute.xlu0 32
  %9318 = vperm.xlu0 %9317, %v8896
  %v9319 = vpop.permute.xlu0 %9318
  %9322 = vset.pattern.permute.xlu0 32
  %9323 = vperm.xlu0 %9322, %v8897
  %v9324 = vpop.permute.xlu0 %9323
  %9327 = vset.pattern.permute.xlu0 32
  %9328 = vperm.xlu0 %9327, %v8898
  %v9329 = vpop.permute.xlu0 %9328
  %9332 = vset.pattern.permute.xlu0 32
  %9333 = vperm.xlu0 %9332, %v8899
  %v9334 = vpop.permute.xlu0 %9333
  %9337 = vset.pattern.permute.xlu0 32
  %9338 = vperm.xlu0 %9337, %v8900
  %v9339 = vpop.permute.xlu0 %9338
  %9342 = vset.pattern.permute.xlu0 32
  %9343 = vperm.xlu0 %9342, %v8901
  %v9344 = vpop.permute.xlu0 %9343
  %9347 = vset.pattern.permute.xlu0 32
  %9348 = vperm.xlu0 %9347, %v8902
  %v9349 = vpop.permute.xlu0 %9348
  %9352 = vset.pattern.permute.xlu0 32
  %9353 = vperm.xlu0 %9352, %v8903
  %v9354 = vpop.permute.xlu0 %9353
  %9357 = vset.pattern.permute.xlu0 32
  %9358 = vperm.xlu0 %9357, %v8904
  %v9359 = vpop.permute.xlu0 %9358
  %9362 = vset.pattern.permute.xlu0 32
  %9363 = vperm.xlu0 %9362, %v8905
  %v9364 = vpop.permute.xlu0 %9363
  %9367 = vset.pattern.permute.xlu0 32
  %9368 = vperm.xlu0 %9367, %v8906
  %v9369 = vpop.permute.xlu0 %9368
  %9372 = vset.pattern.permute.xlu0 32
  %9373 = vperm.xlu0 %9372, %v8907
  %v9374 = vpop.permute.xlu0 %9373
  %9377 = vset.pattern.permute.xlu0 32
  %9378 = vperm.xlu0 %9377, %v8908
  %v9379 = vpop.permute.xlu0 %9378
  %9382 = vset.pattern.permute.xlu0 32
  %9383 = vperm.xlu0 %9382, %v8909
  %v9384 = vpop.permute.xlu0 %9383
  %9387 = vset.pattern.permute.xlu0 32
  %9388 = vperm.xlu0 %9387, %v8910
  %v9389 = vpop.permute.xlu0 %9388
  %9392 = vset.pattern.permute.xlu0 32
  %9393 = vperm.xlu0 %9392, %v8911
  %v9394 = vpop.permute.xlu0 %9393
  %9397 = vset.pattern.permute.xlu0 32
  %9398 = vperm.xlu0 %9397, %v8912
  %v9399 = vpop.permute.xlu0 %9398
  %9402 = vset.pattern.permute.xlu0 32
  %9403 = vperm.xlu0 %9402, %v8913
  %v9404 = vpop.permute.xlu0 %9403
  %9407 = vset.pattern.permute.xlu0 32
  %9408 = vperm.xlu0 %9407, %v8914
  %v9409 = vpop.permute.xlu0 %9408
  %9412 = vset.pattern.permute.xlu0 32
  %9413 = vperm.xlu0 %9412, %v8916
  %v9414 = vpop.permute.xlu0 %9413
  %9417 = vset.pattern.permute.xlu0 32
  %9418 = vperm.xlu0 %9417, %v8918
  %v9419 = vpop.permute.xlu0 %9418
  %9422 = vset.pattern.permute.xlu0 32
  %9423 = vperm.xlu0 %9422, %v8920
  %v9424 = vpop.permute.xlu0 %9423
  %9427 = vset.pattern.permute.xlu0 32
  %9428 = vperm.xlu0 %9427, %v8922
  %v9429 = vpop.permute.xlu0 %9428
  %9432 = vset.pattern.permute.xlu0 32
  %9433 = vperm.xlu0 %9432, %v8924
  %v9434 = vpop.permute.xlu0 %9433
  %9437 = vset.pattern.permute.xlu0 32
  %9438 = vperm.xlu0 %9437, %v8926
  %v9439 = vpop.permute.xlu0 %9438
  %9442 = vset.pattern.permute.xlu0 32
  %9443 = vperm.xlu0 %9442, %v8928
  %v9444 = vpop.permute.xlu0 %9443
  %9447 = vset.pattern.permute.xlu0 32
  %9448 = vperm.xlu0 %9447, %v8930
  %v9449 = vpop.permute.xlu0 %9448
  %9452 = vset.pattern.permute.xlu0 32
  %9453 = vperm.xlu0 %9452, %v8931
  %v9454 = vpop.permute.xlu0 %9453
  %9457 = vset.pattern.permute.xlu0 32
  %9458 = vperm.xlu0 %9457, %v8932
  %v9459 = vpop.permute.xlu0 %9458
  %9462 = vset.pattern.permute.xlu0 32
  %9463 = vperm.xlu0 %9462, %v8933
  %v9464 = vpop.permute.xlu0 %9463
  %9467 = vset.pattern.permute.xlu0 32
  %9468 = vperm.xlu0 %9467, %v8934
  %v9469 = vpop.permute.xlu0 %9468
  %9472 = vset.pattern.permute.xlu0 32
  %9473 = vperm.xlu0 %9472, %v8935
  %v9474 = vpop.permute.xlu0 %9473
  %9477 = vset.pattern.permute.xlu0 32
  %9478 = vperm.xlu0 %9477, %v8936
  %v9479 = vpop.permute.xlu0 %9478
  %9482 = vset.pattern.permute.xlu0 32
  %9483 = vperm.xlu0 %9482, %v8937
  %v9484 = vpop.permute.xlu0 %9483
  %9487 = vset.pattern.permute.xlu0 32
  %9488 = vperm.xlu0 %9487, %v8938
  %v9489 = vpop.permute.xlu0 %9488
  %9492 = vset.pattern.permute.xlu0 32
  %9493 = vperm.xlu0 %9492, %v8939
  %v9494 = vpop.permute.xlu0 %9493
  %9497 = vset.pattern.permute.xlu0 32
  %9498 = vperm.xlu0 %9497, %v8940
  %v9499 = vpop.permute.xlu0 %9498
  %9502 = vset.pattern.permute.xlu0 32
  %9503 = vperm.xlu0 %9502, %v8941
  %v9504 = vpop.permute.xlu0 %9503
  %9507 = vset.pattern.permute.xlu0 32
  %9508 = vperm.xlu0 %9507, %v8942
  %v9509 = vpop.permute.xlu0 %9508
  %9512 = vset.pattern.permute.xlu0 32
  %9513 = vperm.xlu0 %9512, %v8943
  %v9514 = vpop.permute.xlu0 %9513
  %9517 = vset.pattern.permute.xlu0 32
  %9518 = vperm.xlu0 %9517, %v8944
  %v9519 = vpop.permute.xlu0 %9518
  %9522 = vset.pattern.permute.xlu0 32
  %9523 = vperm.xlu0 %9522, %v8945
  %v9524 = vpop.permute.xlu0 %9523
  %9527 = vset.pattern.permute.xlu0 32
  %9528 = vperm.xlu0 %9527, %v8946
  %v9529 = vpop.permute.xlu0 %9528
  %9532 = vset.pattern.permute.xlu0 32
  %9533 = vperm.xlu0 %9532, %v8947
  %v9534 = vpop.permute.xlu0 %9533
  %9537 = vset.pattern.permute.xlu0 32
  %9538 = vperm.xlu0 %9537, %v8948
  %v9539 = vpop.permute.xlu0 %9538
  %9542 = vset.pattern.permute.xlu0 32
  %9543 = vperm.xlu0 %9542, %v8949
  %v9544 = vpop.permute.xlu0 %9543
  %9547 = vset.pattern.permute.xlu0 32
  %9548 = vperm.xlu0 %9547, %v8950
  %v9549 = vpop.permute.xlu0 %9548
  %9552 = vset.pattern.permute.xlu0 32
  %9553 = vperm.xlu0 %9552, %v8951
  %v9554 = vpop.permute.xlu0 %9553
  %9557 = vset.pattern.permute.xlu0 32
  %9558 = vperm.xlu0 %9557, %v8952
  %v9559 = vpop.permute.xlu0 %9558
  %9562 = vset.pattern.permute.xlu0 32
  %9563 = vperm.xlu0 %9562, %v8953
  %v9564 = vpop.permute.xlu0 %9563
  %9567 = vset.pattern.permute.xlu0 32
  %9568 = vperm.xlu0 %9567, %v8954
  %v9569 = vpop.permute.xlu0 %9568
  %9572 = vset.pattern.permute.xlu0 32
  %9573 = vperm.xlu0 %9572, %v8955
  %v9574 = vpop.permute.xlu0 %9573
  %9577 = vset.pattern.permute.xlu0 32
  %9578 = vperm.xlu0 %9577, %v8956
  %v9579 = vpop.permute.xlu0 %9578
  %9582 = vset.pattern.permute.xlu0 32
  %9583 = vperm.xlu0 %9582, %v8957
  %v9584 = vpop.permute.xlu0 %9583
  %9587 = vset.pattern.permute.xlu0 32
  %9588 = vperm.xlu0 %9587, %v8958
  %v9589 = vpop.permute.xlu0 %9588
  %9592 = vset.pattern.permute.xlu0 32
  %9593 = vperm.xlu0 %9592, %v8959
  %v9594 = vpop.permute.xlu0 %9593
  %9597 = vset.pattern.permute.xlu0 32
  %9598 = vperm.xlu0 %9597, %v8960
  %v9599 = vpop.permute.xlu0 %9598
  %9602 = vset.pattern.permute.xlu0 32
  %9603 = vperm.xlu0 %9602, %v8961
  %v9604 = vpop.permute.xlu0 %9603
  %9607 = vset.pattern.permute.xlu0 32
  %9608 = vperm.xlu0 %9607, %v8962
  %v9609 = vpop.permute.xlu0 %9608
  %9612 = vset.pattern.permute.xlu0 32
  %9613 = vperm.xlu0 %9612, %v8964
  %v9614 = vpop.permute.xlu0 %9613
  %9617 = vset.pattern.permute.xlu0 32
  %9618 = vperm.xlu0 %9617, %v8966
  %v9619 = vpop.permute.xlu0 %9618
  %9622 = vset.pattern.permute.xlu0 32
  %9623 = vperm.xlu0 %9622, %v8968
  %v9624 = vpop.permute.xlu0 %9623
  %9627 = vset.pattern.permute.xlu0 32
  %9628 = vperm.xlu0 %9627, %v8970
  %v9629 = vpop.permute.xlu0 %9628
  %9632 = vset.pattern.permute.xlu0 32
  %9633 = vperm.xlu0 %9632, %v8972
  %v9634 = vpop.permute.xlu0 %9633
  %9637 = vset.pattern.permute.xlu0 32
  %9638 = vperm.xlu0 %9637, %v8974
  %v9639 = vpop.permute.xlu0 %9638
  %9642 = vset.pattern.permute.xlu0 32
  %9643 = vperm.xlu0 %9642, %v8976
  %v9644 = vpop.permute.xlu0 %9643
  %9647 = vset.pattern.permute.xlu0 32
  %9648 = vperm.xlu0 %9647, %v8978
  %v9649 = vpop.permute.xlu0 %9648
  %9652 = vset.pattern.permute.xlu0 32
  %9653 = vperm.xlu0 %9652, %v8979
  %v9654 = vpop.permute.xlu0 %9653
  %9657 = vset.pattern.permute.xlu0 32
  %9658 = vperm.xlu0 %9657, %v8980
  %v9659 = vpop.permute.xlu0 %9658
  %9662 = vset.pattern.permute.xlu0 32
  %9663 = vperm.xlu0 %9662, %v8981
  %v9664 = vpop.permute.xlu0 %9663
  %9667 = vset.pattern.permute.xlu0 32
  %9668 = vperm.xlu0 %9667, %v8982
  %v9669 = vpop.permute.xlu0 %9668
  %9672 = vset.pattern.permute.xlu0 32
  %9673 = vperm.xlu0 %9672, %v8983
  %v9674 = vpop.permute.xlu0 %9673
  %9677 = vset.pattern.permute.xlu0 32
  %9678 = vperm.xlu0 %9677, %v8984
  %v9679 = vpop.permute.xlu0 %9678
  %9682 = vset.pattern.permute.xlu0 32
  %9683 = vperm.xlu0 %9682, %v8985
  %v9684 = vpop.permute.xlu0 %9683
  %9687 = vset.pattern.permute.xlu0 32
  %9688 = vperm.xlu0 %9687, %v8986
  %v9689 = vpop.permute.xlu0 %9688
  %9692 = vset.pattern.permute.xlu0 32
  %9693 = vperm.xlu0 %9692, %v8987
  %v9694 = vpop.permute.xlu0 %9693
  %9697 = vset.pattern.permute.xlu0 32
  %9698 = vperm.xlu0 %9697, %v8988
  %v9699 = vpop.permute.xlu0 %9698
  %9702 = vset.pattern.permute.xlu0 32
  %9703 = vperm.xlu0 %9702, %v8989
  %v9704 = vpop.permute.xlu0 %9703
  %9707 = vset.pattern.permute.xlu0 32
  %9708 = vperm.xlu0 %9707, %v8990
  %v9709 = vpop.permute.xlu0 %9708
  %9712 = vset.pattern.permute.xlu0 32
  %9713 = vperm.xlu0 %9712, %v8991
  %v9714 = vpop.permute.xlu0 %9713
  %9717 = vset.pattern.permute.xlu0 32
  %9718 = vperm.xlu0 %9717, %v8992
  %v9719 = vpop.permute.xlu0 %9718
  %9722 = vset.pattern.permute.xlu0 32
  %9723 = vperm.xlu0 %9722, %v8993
  %v9724 = vpop.permute.xlu0 %9723
  %9727 = vset.pattern.permute.xlu0 32
  %9728 = vperm.xlu0 %9727, %v8994
  %v9729 = vpop.permute.xlu0 %9728
  %9732 = vset.pattern.permute.xlu0 32
  %9733 = vperm.xlu0 %9732, %v8995
  %v9734 = vpop.permute.xlu0 %9733
  %9737 = vset.pattern.permute.xlu0 32
  %9738 = vperm.xlu0 %9737, %v8996
  %v9739 = vpop.permute.xlu0 %9738
  %9742 = vset.pattern.permute.xlu0 32
  %9743 = vperm.xlu0 %9742, %v8997
  %v9744 = vpop.permute.xlu0 %9743
  %9747 = vset.pattern.permute.xlu0 32
  %9748 = vperm.xlu0 %9747, %v8998
  %v9749 = vpop.permute.xlu0 %9748
  %9752 = vset.pattern.permute.xlu0 32
  %9753 = vperm.xlu0 %9752, %v8999
  %v9754 = vpop.permute.xlu0 %9753
  %9757 = vset.pattern.permute.xlu0 32
  %9758 = vperm.xlu0 %9757, %v9000
  %v9759 = vpop.permute.xlu0 %9758
  %9762 = vset.pattern.permute.xlu0 32
  %9763 = vperm.xlu0 %9762, %v9001
  %v9764 = vpop.permute.xlu0 %9763
  %9767 = vset.pattern.permute.xlu0 32
  %9768 = vperm.xlu0 %9767, %v9002
  %v9769 = vpop.permute.xlu0 %9768
  %9772 = vset.pattern.permute.xlu0 32
  %9773 = vperm.xlu0 %9772, %v9003
  %v9774 = vpop.permute.xlu0 %9773
  %9777 = vset.pattern.permute.xlu0 32
  %9778 = vperm.xlu0 %9777, %v9004
  %v9779 = vpop.permute.xlu0 %9778
  %9782 = vset.pattern.permute.xlu0 32
  %9783 = vperm.xlu0 %9782, %v9005
  %v9784 = vpop.permute.xlu0 %9783
  %9787 = vset.pattern.permute.xlu0 32
  %9788 = vperm.xlu0 %9787, %v9006
  %v9789 = vpop.permute.xlu0 %9788
  %9792 = vset.pattern.permute.xlu0 32
  %9793 = vperm.xlu0 %9792, %v9007
  %v9794 = vpop.permute.xlu0 %9793
  %9797 = vset.pattern.permute.xlu0 32
  %9798 = vperm.xlu0 %9797, %v9008
  %v9799 = vpop.permute.xlu0 %9798
  %9802 = vset.pattern.permute.xlu0 32
  %9803 = vperm.xlu0 %9802, %v9009
  %v9804 = vpop.permute.xlu0 %9803
  %9807 = vset.pattern.permute.xlu0 32
  %9808 = vperm.xlu0 %9807, %v9010
  %v9809 = vpop.permute.xlu0 %9808
  %v9811 = vmul.f32 %v9014, %v6964
  %v9812 = vmul.f32 %v9019, %v6969
  %v9813 = vmul.f32 %v9024, %v6974
  %v9814 = vmul.f32 %v9029, %v6979
  %v9815 = vmul.f32 %v9034, %v6984
  %v9816 = vmul.f32 %v9039, %v6989
  %v9817 = vmul.f32 %v9044, %v6994
  %v9818 = vmul.f32 %v9049, %v6999
  %v9819 = vmul.f32 %v9054, %v7004
  %v9820 = vmul.f32 %v9059, %v7009
  %v9821 = vmul.f32 %v9064, %v7014
  %v9822 = vmul.f32 %v9069, %v7019
  %v9823 = vmul.f32 %v9074, %v7024
  %v9824 = vmul.f32 %v9079, %v7029
  %v9825 = vmul.f32 %v9084, %v7034
  %v9826 = vmul.f32 %v9089, %v7039
  %v9827 = vmul.f32 %v9094, %v7044
  %v9828 = vmul.f32 %v9099, %v7049
  %v9829 = vmul.f32 %v9104, %v7054
  %v9830 = vmul.f32 %v9109, %v7059
  %v9831 = vmul.f32 %v9114, %v7064
  %v9832 = vmul.f32 %v9119, %v7069
  %v9833 = vmul.f32 %v9124, %v7074
  %v9834 = vmul.f32 %v9129, %v7079
  %v9835 = vmul.f32 %v9134, %v7084
  %v9836 = vmul.f32 %v9139, %v7089
  %v9837 = vmul.f32 %v9144, %v7094
  %v9838 = vmul.f32 %v9149, %v7099
  %v9839 = vmul.f32 %v9154, %v7104
  %v9840 = vmul.f32 %v9159, %v7109
  %v9841 = vmul.f32 %v9164, %v7114
  %v9842 = vmul.f32 %v9169, %v7119
  %v9843 = vmul.f32 %v9174, %v7124
  %v9844 = vmul.f32 %v9179, %v7129
  %v9845 = vmul.f32 %v9184, %v7134
  %v9846 = vmul.f32 %v9189, %v7139
  %v9847 = vmul.f32 %v9194, %v7144
  %v9848 = vmul.f32 %v9199, %v7149
  %v9849 = vmul.f32 %v9204, %v7154
  %v9850 = vmul.f32 %v9209, %v7159
  %v9851 = vmul.f32 %v9214, %v7164
  %v9852 = vmul.f32 %v9219, %v7169
  %v9853 = vmul.f32 %v9224, %v7174
  %v9854 = vmul.f32 %v9229, %v7179
  %v9855 = vmul.f32 %v9234, %v7184
  %v9856 = vmul.f32 %v9239, %v7189
  %v9857 = vmul.f32 %v9244, %v7194
  %v9858 = vmul.f32 %v9249, %v7199
  %v9859 = vmul.f32 %v9254, %v7204
  %v9860 = vmul.f32 %v9259, %v7209
  %v9861 = vmul.f32 %v9264, %v7214
  %v9862 = vmul.f32 %v9269, %v7219
  %v9863 = vmul.f32 %v9274, %v7224
  %v9864 = vmul.f32 %v9279, %v7229
  %v9865 = vmul.f32 %v9284, %v7234
  %v9866 = vmul.f32 %v9289, %v7239
  %v9867 = vmul.f32 %v9294, %v7244
  %v9868 = vmul.f32 %v9299, %v7249
  %v9869 = vmul.f32 %v9304, %v7254
  %v9870 = vmul.f32 %v9309, %v7259
  %v9871 = vmul.f32 %v9314, %v7264
  %v9872 = vmul.f32 %v9319, %v7269
  %v9873 = vmul.f32 %v9324, %v7274
  %v9874 = vmul.f32 %v9329, %v7279
  %v9875 = vmul.f32 %v9334, %v7284
  %v9876 = vmul.f32 %v9339, %v7289
  %v9877 = vmul.f32 %v9344, %v7294
  %v9878 = vmul.f32 %v9349, %v7299
  %v9879 = vmul.f32 %v9354, %v7304
  %v9880 = vmul.f32 %v9359, %v7309
  %v9881 = vmul.f32 %v9364, %v7314
  %v9882 = vmul.f32 %v9369, %v7319
  %v9883 = vmul.f32 %v9374, %v7324
  %v9884 = vmul.f32 %v9379, %v7329
  %v9885 = vmul.f32 %v9384, %v7334
  %v9886 = vmul.f32 %v9389, %v7339
  %v9887 = vmul.f32 %v9394, %v7344
  %v9888 = vmul.f32 %v9399, %v7349
  %v9889 = vmul.f32 %v9404, %v7354
  %v9890 = vmul.f32 %v9409, %v7359
  %v9891 = vmul.f32 %v9414, %v7364
  %v9892 = vmul.f32 %v9419, %v7369
  %v9893 = vmul.f32 %v9424, %v7374
  %v9894 = vmul.f32 %v9429, %v7379
  %v9895 = vmul.f32 %v9434, %v7384
  %v9896 = vmul.f32 %v9439, %v7389
  %v9897 = vmul.f32 %v9444, %v7394
  %v9898 = vmul.f32 %v9449, %v7399
  %v9899 = vmul.f32 %v9454, %v7404
  %v9900 = vmul.f32 %v9459, %v7409
  %v9901 = vmul.f32 %v9464, %v7414
  %v9902 = vmul.f32 %v9469, %v7419
  %v9903 = vmul.f32 %v9474, %v7424
  %v9904 = vmul.f32 %v9479, %v7429
  %v9905 = vmul.f32 %v9484, %v7434
  %v9906 = vmul.f32 %v9489, %v7439
  %v9907 = vmul.f32 %v9494, %v7444
  %v9908 = vmul.f32 %v9499, %v7449
  %v9909 = vmul.f32 %v9504, %v7454
  %v9910 = vmul.f32 %v9509, %v7459
  %v9911 = vmul.f32 %v9514, %v7464
  %v9912 = vmul.f32 %v9519, %v7469
  %v9913 = vmul.f32 %v9524, %v7474
  %v9914 = vmul.f32 %v9529, %v7479
  %v9915 = vmul.f32 %v9534, %v7484
  %v9916 = vmul.f32 %v9539, %v7489
  %v9917 = vmul.f32 %v9544, %v7494
  %v9918 = vmul.f32 %v9549, %v7499
  %v9919 = vmul.f32 %v9554, %v7504
  %v9920 = vmul.f32 %v9559, %v7509
  %v9921 = vmul.f32 %v9564, %v7514
  %v9922 = vmul.f32 %v9569, %v7519
  %v9923 = vmul.f32 %v9574, %v7524
  %v9924 = vmul.f32 %v9579, %v7529
  %v9925 = vmul.f32 %v9584, %v7534
  %v9926 = vmul.f32 %v9589, %v7539
  %v9927 = vmul.f32 %v9594, %v7544
  %v9928 = vmul.f32 %v9599, %v7549
  %v9929 = vmul.f32 %v9604, %v7554
  %v9930 = vmul.f32 %v9609, %v7559
  %v9931 = vmul.f32 %v9614, %v7564
  %v9932 = vmul.f32 %v9619, %v7569
  %v9933 = vmul.f32 %v9624, %v7574
  %v9934 = vmul.f32 %v9629, %v7579
  %v9935 = vmul.f32 %v9634, %v7584
  %v9936 = vmul.f32 %v9639, %v7589
  %v9937 = vmul.f32 %v9644, %v7594
  %v9938 = vmul.f32 %v9649, %v7599
  %v9939 = vmul.f32 %v9654, %v7604
  %v9940 = vmul.f32 %v9659, %v7609
  %v9941 = vmul.f32 %v9664, %v7614
  %v9942 = vmul.f32 %v9669, %v7619
  %v9943 = vmul.f32 %v9674, %v7624
  %v9944 = vmul.f32 %v9679, %v7629
  %v9945 = vmul.f32 %v9684, %v7634
  %v9946 = vmul.f32 %v9689, %v7639
  %v9947 = vmul.f32 %v9694, %v7644
  %v9948 = vmul.f32 %v9699, %v7649
  %v9949 = vmul.f32 %v9704, %v7654
  %v9950 = vmul.f32 %v9709, %v7659
  %v9951 = vmul.f32 %v9714, %v7664
  %v9952 = vmul.f32 %v9719, %v7669
  %v9953 = vmul.f32 %v9724, %v7674
  %v9954 = vmul.f32 %v9729, %v7679
  %v9955 = vmul.f32 %v9734, %v7684
  %v9956 = vmul.f32 %v9739, %v7689
  %v9957 = vmul.f32 %v9744, %v7694
  %v9958 = vmul.f32 %v9749, %v7699
  %v9959 = vmul.f32 %v9754, %v7704
  %v9960 = vmul.f32 %v9759, %v7709
  %v9961 = vmul.f32 %v9764, %v7714
  %v9962 = vmul.f32 %v9769, %v7719
  %v9963 = vmul.f32 %v9774, %v7724
  %v9964 = vmul.f32 %v9779, %v7729
  %v9965 = vmul.f32 %v9784, %v7734
  %v9966 = vmul.f32 %v9789, %v7739
  %v9967 = vmul.f32 %v9794, %v7744
  %v9968 = vmul.f32 %v9799, %v7749
  %v9969 = vmul.f32 %v9804, %v7754
  %v9970 = vmul.f32 %v9809, %v7759
  %v9971 = vsel %vm112, %v9811, 0.0
  %v9972 = vsel %vm112, %v9819, 0.0
  %v9973 = vadd.f32 %v9971, %v9972
  %v9974 = vsel %vm112, %v9827, 0.0
  %v9975 = vadd.f32 %v9973, %v9974
  %v9976 = vsel %vm112, %v9835, 0.0
  %v9977 = vadd.f32 %v9975, %v9976
  %v9978 = vsel %vm112, %v9843, 0.0
  %v9979 = vadd.f32 %v9977, %v9978
  %v9980 = vsel %vm112, %v9812, 0.0
  %v9981 = vsel %vm112, %v9820, 0.0
  %v9982 = vadd.f32 %v9980, %v9981
  %v9983 = vsel %vm112, %v9828, 0.0
  %v9984 = vadd.f32 %v9982, %v9983
  %v9985 = vsel %vm112, %v9836, 0.0
  %v9986 = vadd.f32 %v9984, %v9985
  %v9987 = vsel %vm112, %v9844, 0.0
  %v9988 = vadd.f32 %v9986, %v9987
  %v9989 = vsel %vm112, %v9813, 0.0
  %v9990 = vsel %vm112, %v9821, 0.0
  %v9991 = vadd.f32 %v9989, %v9990
  %v9992 = vsel %vm112, %v9829, 0.0
  %v9993 = vadd.f32 %v9991, %v9992
  %v9994 = vsel %vm112, %v9837, 0.0
  %v9995 = vadd.f32 %v9993, %v9994
  %v9996 = vsel %vm112, %v9845, 0.0
  %v9997 = vadd.f32 %v9995, %v9996
  %v9998 = vsel %vm112, %v9814, 0.0
  %v9999 = vsel %vm112, %v9822, 0.0
  %v10000 = vadd.f32 %v9998, %v9999
  %v10001 = vsel %vm112, %v9830, 0.0
  %v10002 = vadd.f32 %v10000, %v10001
  %v10003 = vsel %vm112, %v9838, 0.0
  %v10004 = vadd.f32 %v10002, %v10003
  %v10005 = vsel %vm112, %v9846, 0.0
  %v10006 = vadd.f32 %v10004, %v10005
  %v10007 = vsel %vm112, %v9815, 0.0
  %v10008 = vsel %vm112, %v9823, 0.0
  %v10009 = vadd.f32 %v10007, %v10008
  %v10010 = vsel %vm112, %v9831, 0.0
  %v10011 = vadd.f32 %v10009, %v10010
  %v10012 = vsel %vm112, %v9839, 0.0
  %v10013 = vadd.f32 %v10011, %v10012
  %v10014 = vsel %vm112, %v9847, 0.0
  %v10015 = vadd.f32 %v10013, %v10014
  %v10016 = vsel %vm112, %v9816, 0.0
  %v10017 = vsel %vm112, %v9824, 0.0
  %v10018 = vadd.f32 %v10016, %v10017
  %v10019 = vsel %vm112, %v9832, 0.0
  %v10020 = vadd.f32 %v10018, %v10019
  %v10021 = vsel %vm112, %v9840, 0.0
  %v10022 = vadd.f32 %v10020, %v10021
  %v10023 = vsel %vm112, %v9848, 0.0
  %v10024 = vadd.f32 %v10022, %v10023
  %v10025 = vsel %vm112, %v9817, 0.0
  %v10026 = vsel %vm112, %v9825, 0.0
  %v10027 = vadd.f32 %v10025, %v10026
  %v10028 = vsel %vm112, %v9833, 0.0
  %v10029 = vadd.f32 %v10027, %v10028
  %v10030 = vsel %vm112, %v9841, 0.0
  %v10031 = vadd.f32 %v10029, %v10030
  %v10032 = vsel %vm112, %v9849, 0.0
  %v10033 = vadd.f32 %v10031, %v10032
  %v10034 = vsel %vm112, %v9818, 0.0
  %v10035 = vsel %vm112, %v9826, 0.0
  %v10036 = vadd.f32 %v10034, %v10035
  %v10037 = vsel %vm112, %v9834, 0.0
  %v10038 = vadd.f32 %v10036, %v10037
  %v10039 = vsel %vm112, %v9842, 0.0
  %v10040 = vadd.f32 %v10038, %v10039
  %v10041 = vsel %vm112, %v9850, 0.0
  %v10042 = vadd.f32 %v10040, %v10041
  %v10043 = vsel %vm112, %v9851, 0.0
  %v10044 = vsel %vm112, %v9859, 0.0
  %v10045 = vadd.f32 %v10043, %v10044
  %v10046 = vsel %vm112, %v9867, 0.0
  %v10047 = vadd.f32 %v10045, %v10046
  %v10048 = vsel %vm112, %v9875, 0.0
  %v10049 = vadd.f32 %v10047, %v10048
  %v10050 = vsel %vm112, %v9883, 0.0
  %v10051 = vadd.f32 %v10049, %v10050
  %v10052 = vsel %vm112, %v9852, 0.0
  %v10053 = vsel %vm112, %v9860, 0.0
  %v10054 = vadd.f32 %v10052, %v10053
  %v10055 = vsel %vm112, %v9868, 0.0
  %v10056 = vadd.f32 %v10054, %v10055
  %v10057 = vsel %vm112, %v9876, 0.0
  %v10058 = vadd.f32 %v10056, %v10057
  %v10059 = vsel %vm112, %v9884, 0.0
  %v10060 = vadd.f32 %v10058, %v10059
  %v10061 = vsel %vm112, %v9853, 0.0
  %v10062 = vsel %vm112, %v9861, 0.0
  %v10063 = vadd.f32 %v10061, %v10062
  %v10064 = vsel %vm112, %v9869, 0.0
  %v10065 = vadd.f32 %v10063, %v10064
  %v10066 = vsel %vm112, %v9877, 0.0
  %v10067 = vadd.f32 %v10065, %v10066
  %v10068 = vsel %vm112, %v9885, 0.0
  %v10069 = vadd.f32 %v10067, %v10068
  %v10070 = vsel %vm112, %v9854, 0.0
  %v10071 = vsel %vm112, %v9862, 0.0
  %v10072 = vadd.f32 %v10070, %v10071
  %v10073 = vsel %vm112, %v9870, 0.0
  %v10074 = vadd.f32 %v10072, %v10073
  %v10075 = vsel %vm112, %v9878, 0.0
  %v10076 = vadd.f32 %v10074, %v10075
  %v10077 = vsel %vm112, %v9886, 0.0
  %v10078 = vadd.f32 %v10076, %v10077
  %v10079 = vsel %vm112, %v9855, 0.0
  %v10080 = vsel %vm112, %v9863, 0.0
  %v10081 = vadd.f32 %v10079, %v10080
  %v10082 = vsel %vm112, %v9871, 0.0
  %v10083 = vadd.f32 %v10081, %v10082
  %v10084 = vsel %vm112, %v9879, 0.0
  %v10085 = vadd.f32 %v10083, %v10084
  %v10086 = vsel %vm112, %v9887, 0.0
  %v10087 = vadd.f32 %v10085, %v10086
  %v10088 = vsel %vm112, %v9856, 0.0
  %v10089 = vsel %vm112, %v9864, 0.0
  %v10090 = vadd.f32 %v10088, %v10089
  %v10091 = vsel %vm112, %v9872, 0.0
  %v10092 = vadd.f32 %v10090, %v10091
  %v10093 = vsel %vm112, %v9880, 0.0
  %v10094 = vadd.f32 %v10092, %v10093
  %v10095 = vsel %vm112, %v9888, 0.0
  %v10096 = vadd.f32 %v10094, %v10095
  %v10097 = vsel %vm112, %v9857, 0.0
  %v10098 = vsel %vm112, %v9865, 0.0
  %v10099 = vadd.f32 %v10097, %v10098
  %v10100 = vsel %vm112, %v9873, 0.0
  %v10101 = vadd.f32 %v10099, %v10100
  %v10102 = vsel %vm112, %v9881, 0.0
  %v10103 = vadd.f32 %v10101, %v10102
  %v10104 = vsel %vm112, %v9889, 0.0
  %v10105 = vadd.f32 %v10103, %v10104
  %v10106 = vsel %vm112, %v9858, 0.0
  %v10107 = vsel %vm112, %v9866, 0.0
  %v10108 = vadd.f32 %v10106, %v10107
  %v10109 = vsel %vm112, %v9874, 0.0
  %v10110 = vadd.f32 %v10108, %v10109
  %v10111 = vsel %vm112, %v9882, 0.0
  %v10112 = vadd.f32 %v10110, %v10111
  %v10113 = vsel %vm112, %v9890, 0.0
  %v10114 = vadd.f32 %v10112, %v10113
  %v10115 = vsel %vm112, %v9891, 0.0
  %v10116 = vsel %vm112, %v9899, 0.0
  %v10117 = vadd.f32 %v10115, %v10116
  %v10118 = vsel %vm112, %v9907, 0.0
  %v10119 = vadd.f32 %v10117, %v10118
  %v10120 = vsel %vm112, %v9915, 0.0
  %v10121 = vadd.f32 %v10119, %v10120
  %v10122 = vsel %vm112, %v9923, 0.0
  %v10123 = vadd.f32 %v10121, %v10122
  %v10124 = vsel %vm112, %v9892, 0.0
  %v10125 = vsel %vm112, %v9900, 0.0
  %v10126 = vadd.f32 %v10124, %v10125
  %v10127 = vsel %vm112, %v9908, 0.0
  %v10128 = vadd.f32 %v10126, %v10127
  %v10129 = vsel %vm112, %v9916, 0.0
  %v10130 = vadd.f32 %v10128, %v10129
  %v10131 = vsel %vm112, %v9924, 0.0
  %v10132 = vadd.f32 %v10130, %v10131
  %v10133 = vsel %vm112, %v9893, 0.0
  %v10134 = vsel %vm112, %v9901, 0.0
  %v10135 = vadd.f32 %v10133, %v10134
  %v10136 = vsel %vm112, %v9909, 0.0
  %v10137 = vadd.f32 %v10135, %v10136
  %v10138 = vsel %vm112, %v9917, 0.0
  %v10139 = vadd.f32 %v10137, %v10138
  %v10140 = vsel %vm112, %v9925, 0.0
  %v10141 = vadd.f32 %v10139, %v10140
  %v10142 = vsel %vm112, %v9894, 0.0
  %v10143 = vsel %vm112, %v9902, 0.0
  %v10144 = vadd.f32 %v10142, %v10143
  %v10145 = vsel %vm112, %v9910, 0.0
  %v10146 = vadd.f32 %v10144, %v10145
  %v10147 = vsel %vm112, %v9918, 0.0
  %v10148 = vadd.f32 %v10146, %v10147
  %v10149 = vsel %vm112, %v9926, 0.0
  %v10150 = vadd.f32 %v10148, %v10149
  %v10151 = vsel %vm112, %v9895, 0.0
  %v10152 = vsel %vm112, %v9903, 0.0
  %v10153 = vadd.f32 %v10151, %v10152
  %v10154 = vsel %vm112, %v9911, 0.0
  %v10155 = vadd.f32 %v10153, %v10154
  %v10156 = vsel %vm112, %v9919, 0.0
  %v10157 = vadd.f32 %v10155, %v10156
  %v10158 = vsel %vm112, %v9927, 0.0
  %v10159 = vadd.f32 %v10157, %v10158
  %v10160 = vsel %vm112, %v9896, 0.0
  %v10161 = vsel %vm112, %v9904, 0.0
  %v10162 = vadd.f32 %v10160, %v10161
  %v10163 = vsel %vm112, %v9912, 0.0
  %v10164 = vadd.f32 %v10162, %v10163
  %v10165 = vsel %vm112, %v9920, 0.0
  %v10166 = vadd.f32 %v10164, %v10165
  %v10167 = vsel %vm112, %v9928, 0.0
  %v10168 = vadd.f32 %v10166, %v10167
  %v10169 = vsel %vm112, %v9897, 0.0
  %v10170 = vsel %vm112, %v9905, 0.0
  %v10171 = vadd.f32 %v10169, %v10170
  %v10172 = vsel %vm112, %v9913, 0.0
  %v10173 = vadd.f32 %v10171, %v10172
  %v10174 = vsel %vm112, %v9921, 0.0
  %v10175 = vadd.f32 %v10173, %v10174
  %v10176 = vsel %vm112, %v9929, 0.0
  %v10177 = vadd.f32 %v10175, %v10176
  %v10178 = vsel %vm112, %v9898, 0.0
  %v10179 = vsel %vm112, %v9906, 0.0
  %v10180 = vadd.f32 %v10178, %v10179
  %v10181 = vsel %vm112, %v9914, 0.0
  %v10182 = vadd.f32 %v10180, %v10181
  %v10183 = vsel %vm112, %v9922, 0.0
  %v10184 = vadd.f32 %v10182, %v10183
  %v10185 = vsel %vm112, %v9930, 0.0
  %v10186 = vadd.f32 %v10184, %v10185
  %v10187 = vsel %vm112, %v9931, 0.0
  %v10188 = vsel %vm112, %v9939, 0.0
  %v10189 = vadd.f32 %v10187, %v10188
  %v10190 = vsel %vm112, %v9947, 0.0
  %v10191 = vadd.f32 %v10189, %v10190
  %v10192 = vsel %vm112, %v9955, 0.0
  %v10193 = vadd.f32 %v10191, %v10192
  %v10194 = vsel %vm112, %v9963, 0.0
  %v10195 = vadd.f32 %v10193, %v10194
  %v10196 = vsel %vm112, %v9932, 0.0
  %v10197 = vsel %vm112, %v9940, 0.0
  %v10198 = vadd.f32 %v10196, %v10197
  %v10199 = vsel %vm112, %v9948, 0.0
  %v10200 = vadd.f32 %v10198, %v10199
  %v10201 = vsel %vm112, %v9956, 0.0
  %v10202 = vadd.f32 %v10200, %v10201
  %v10203 = vsel %vm112, %v9964, 0.0
  %v10204 = vadd.f32 %v10202, %v10203
  %v10205 = vsel %vm112, %v9933, 0.0
  %v10206 = vsel %vm112, %v9941, 0.0
  %v10207 = vadd.f32 %v10205, %v10206
  %v10208 = vsel %vm112, %v9949, 0.0
  %v10209 = vadd.f32 %v10207, %v10208
  %v10210 = vsel %vm112, %v9957, 0.0
  %v10211 = vadd.f32 %v10209, %v10210
  %v10212 = vsel %vm112, %v9965, 0.0
  %v10213 = vadd.f32 %v10211, %v10212
  %v10214 = vsel %vm112, %v9934, 0.0
  %v10215 = vsel %vm112, %v9942, 0.0
  %v10216 = vadd.f32 %v10214, %v10215
  %v10217 = vsel %vm112, %v9950, 0.0
  %v10218 = vadd.f32 %v10216, %v10217
  %v10219 = vsel %vm112, %v9958, 0.0
  %v10220 = vadd.f32 %v10218, %v10219
  %v10221 = vsel %vm112, %v9966, 0.0
  %v10222 = vadd.f32 %v10220, %v10221
  %v10223 = vsel %vm112, %v9935, 0.0
  %v10224 = vsel %vm112, %v9943, 0.0
  %v10225 = vadd.f32 %v10223, %v10224
  %v10226 = vsel %vm112, %v9951, 0.0
  %v10227 = vadd.f32 %v10225, %v10226
  %v10228 = vsel %vm112, %v9959, 0.0
  %v10229 = vadd.f32 %v10227, %v10228
  %v10230 = vsel %vm112, %v9967, 0.0
  %v10231 = vadd.f32 %v10229, %v10230
  %v10232 = vsel %vm112, %v9936, 0.0
  %v10233 = vsel %vm112, %v9944, 0.0
  %v10234 = vadd.f32 %v10232, %v10233
  %v10235 = vsel %vm112, %v9952, 0.0
  %v10236 = vadd.f32 %v10234, %v10235
  %v10237 = vsel %vm112, %v9960, 0.0
  %v10238 = vadd.f32 %v10236, %v10237
  %v10239 = vsel %vm112, %v9968, 0.0
  %v10240 = vadd.f32 %v10238, %v10239
  %v10241 = vsel %vm112, %v9937, 0.0
  %v10242 = vsel %vm112, %v9945, 0.0
  %v10243 = vadd.f32 %v10241, %v10242
  %v10244 = vsel %vm112, %v9953, 0.0
  %v10245 = vadd.f32 %v10243, %v10244
  %v10246 = vsel %vm112, %v9961, 0.0
  %v10247 = vadd.f32 %v10245, %v10246
  %v10248 = vsel %vm112, %v9969, 0.0
  %v10249 = vadd.f32 %v10247, %v10248
  %v10250 = vsel %vm112, %v9938, 0.0
  %v10251 = vsel %vm112, %v9946, 0.0
  %v10252 = vadd.f32 %v10250, %v10251
  %v10253 = vsel %vm112, %v9954, 0.0
  %v10254 = vadd.f32 %v10252, %v10253
  %v10255 = vsel %vm112, %v9962, 0.0
  %v10256 = vadd.f32 %v10254, %v10255
  %v10257 = vsel %vm112, %v9970, 0.0
  %v10258 = vadd.f32 %v10256, %v10257
  %v10259 = vsel %vm112, %v9979, 0.0
  %10260 = vadd.xlane.f32.xlu0 %v10259
  %v10261 = vpop.xlane.xlu0 %10260
  %v10262 = vsel %vm112, %v9988, 0.0
  %10263 = vadd.xlane.f32.xlu0 %v10262
  %v10264 = vpop.xlane.xlu0 %10263
  %v10265 = vsel %vm112, %v9997, 0.0
  %10266 = vadd.xlane.f32.xlu0 %v10265
  %v10267 = vpop.xlane.xlu0 %10266
  %v10268 = vsel %vm112, %v10006, 0.0
  %10269 = vadd.xlane.f32.xlu0 %v10268
  %v10270 = vpop.xlane.xlu0 %10269
  %v10271 = vsel %vm112, %v10015, 0.0
  %10272 = vadd.xlane.f32.xlu0 %v10271
  %v10273 = vpop.xlane.xlu0 %10272
  %v10274 = vsel %vm112, %v10024, 0.0
  %10275 = vadd.xlane.f32.xlu0 %v10274
  %v10276 = vpop.xlane.xlu0 %10275
  %v10277 = vsel %vm112, %v10033, 0.0
  %10278 = vadd.xlane.f32.xlu0 %v10277
  %v10279 = vpop.xlane.xlu0 %10278
  %v10280 = vsel %vm112, %v10042, 0.0
  %10281 = vadd.xlane.f32.xlu0 %v10280
  %v10282 = vpop.xlane.xlu0 %10281
  %v10283 = vsel %vm112, %v10051, 0.0
  %10284 = vadd.xlane.f32.xlu0 %v10283
  %v10285 = vpop.xlane.xlu0 %10284
  %v10286 = vsel %vm112, %v10060, 0.0
  %10287 = vadd.xlane.f32.xlu0 %v10286
  %v10288 = vpop.xlane.xlu0 %10287
  %v10289 = vsel %vm112, %v10069, 0.0
  %10290 = vadd.xlane.f32.xlu0 %v10289
  %v10291 = vpop.xlane.xlu0 %10290
  %v10292 = vsel %vm112, %v10078, 0.0
  %10293 = vadd.xlane.f32.xlu0 %v10292
  %v10294 = vpop.xlane.xlu0 %10293
  %v10295 = vsel %vm112, %v10087, 0.0
  %10296 = vadd.xlane.f32.xlu0 %v10295
  %v10297 = vpop.xlane.xlu0 %10296
  %v10298 = vsel %vm112, %v10096, 0.0
  %10299 = vadd.xlane.f32.xlu0 %v10298
  %v10300 = vpop.xlane.xlu0 %10299
  %v10301 = vsel %vm112, %v10105, 0.0
  %10302 = vadd.xlane.f32.xlu0 %v10301
  %v10303 = vpop.xlane.xlu0 %10302
  %v10304 = vsel %vm112, %v10114, 0.0
  %10305 = vadd.xlane.f32.xlu0 %v10304
  %v10306 = vpop.xlane.xlu0 %10305
  %v10307 = vsel %vm112, %v10123, 0.0
  %10308 = vadd.xlane.f32.xlu0 %v10307
  %v10309 = vpop.xlane.xlu0 %10308
  %v10310 = vsel %vm112, %v10132, 0.0
  %10311 = vadd.xlane.f32.xlu0 %v10310
  %v10312 = vpop.xlane.xlu0 %10311
  %v10313 = vsel %vm112, %v10141, 0.0
  %10314 = vadd.xlane.f32.xlu0 %v10313
  %v10315 = vpop.xlane.xlu0 %10314
  %v10316 = vsel %vm112, %v10150, 0.0
  %10317 = vadd.xlane.f32.xlu0 %v10316
  %v10318 = vpop.xlane.xlu0 %10317
  %v10319 = vsel %vm112, %v10159, 0.0
  %10320 = vadd.xlane.f32.xlu0 %v10319
  %v10321 = vpop.xlane.xlu0 %10320
  %v10322 = vsel %vm112, %v10168, 0.0
  %10323 = vadd.xlane.f32.xlu0 %v10322
  %v10324 = vpop.xlane.xlu0 %10323
  %v10325 = vsel %vm112, %v10177, 0.0
  %10326 = vadd.xlane.f32.xlu0 %v10325
  %v10327 = vpop.xlane.xlu0 %10326
  %v10328 = vsel %vm112, %v10186, 0.0
  %10329 = vadd.xlane.f32.xlu0 %v10328
  %v10330 = vpop.xlane.xlu0 %10329
  %v10331 = vsel %vm112, %v10195, 0.0
  %10332 = vadd.xlane.f32.xlu0 %v10331
  %v10333 = vpop.xlane.xlu0 %10332
  %v10334 = vsel %vm112, %v10204, 0.0
  %10335 = vadd.xlane.f32.xlu0 %v10334
  %v10336 = vpop.xlane.xlu0 %10335
  %v10337 = vsel %vm112, %v10213, 0.0
  %10338 = vadd.xlane.f32.xlu0 %v10337
  %v10339 = vpop.xlane.xlu0 %10338
  %v10340 = vsel %vm112, %v10222, 0.0
  %10341 = vadd.xlane.f32.xlu0 %v10340
  %v10342 = vpop.xlane.xlu0 %10341
  %v10343 = vsel %vm112, %v10231, 0.0
  %10344 = vadd.xlane.f32.xlu0 %v10343
  %v10345 = vpop.xlane.xlu0 %10344
  %v10346 = vsel %vm112, %v10240, 0.0
  %10347 = vadd.xlane.f32.xlu0 %v10346
  %v10348 = vpop.xlane.xlu0 %10347
  %v10349 = vsel %vm112, %v10249, 0.0
  %10350 = vadd.xlane.f32.xlu0 %v10349
  %v10351 = vpop.xlane.xlu0 %10350
  %v10352 = vsel %vm112, %v10258, 0.0
  %10353 = vadd.xlane.f32.xlu0 %v10352
  %v10354 = vpop.xlane.xlu0 %10353
  %v10355 = vmul.f32 %v10261, %v209
  %v10356 = vmul.f32 %v10264, %v209
  %v10357 = vmul.f32 %v10267, %v209
  %v10358 = vmul.f32 %v10270, %v209
  %v10359 = vmul.f32 %v10273, %v209
  %v10360 = vmul.f32 %v10276, %v209
  %v10361 = vmul.f32 %v10279, %v209
  %v10362 = vmul.f32 %v10282, %v209
  %v10363 = vmul.f32 %v10285, %v209
  %v10364 = vmul.f32 %v10288, %v209
  %v10365 = vmul.f32 %v10291, %v209
  %v10366 = vmul.f32 %v10294, %v209
  %v10367 = vmul.f32 %v10297, %v209
  %v10368 = vmul.f32 %v10300, %v209
  %v10369 = vmul.f32 %v10303, %v209
  %v10370 = vmul.f32 %v10306, %v209
  %v10371 = vmul.f32 %v10309, %v209
  %v10372 = vmul.f32 %v10312, %v209
  %v10373 = vmul.f32 %v10315, %v209
  %v10374 = vmul.f32 %v10318, %v209
  %v10375 = vmul.f32 %v10321, %v209
  %v10376 = vmul.f32 %v10324, %v209
  %v10377 = vmul.f32 %v10327, %v209
  %v10378 = vmul.f32 %v10330, %v209
  %v10379 = vmul.f32 %v10333, %v209
  %v10380 = vmul.f32 %v10336, %v209
  %v10381 = vmul.f32 %v10339, %v209
  %v10382 = vmul.f32 %v10342, %v209
  %v10383 = vmul.f32 %v10345, %v209
  %v10384 = vmul.f32 %v10348, %v209
  %v10385 = vmul.f32 %v10351, %v209
  %v10386 = vmul.f32 %v10354, %v209
  %v10387 = vsub.f32 %v9979, %v10355
  %v10388 = vsub.f32 %v9988, %v10356
  %v10389 = vsub.f32 %v9997, %v10357
  %v10390 = vsub.f32 %v10006, %v10358
  %v10391 = vsub.f32 %v10015, %v10359
  %v10392 = vsub.f32 %v10024, %v10360
  %v10393 = vsub.f32 %v10033, %v10361
  %v10394 = vsub.f32 %v10042, %v10362
  %v10395 = vsub.f32 %v10051, %v10363
  %v10396 = vsub.f32 %v10060, %v10364
  %v10397 = vsub.f32 %v10069, %v10365
  %v10398 = vsub.f32 %v10078, %v10366
  %v10399 = vsub.f32 %v10087, %v10367
  %v10400 = vsub.f32 %v10096, %v10368
  %v10401 = vsub.f32 %v10105, %v10369
  %v10402 = vsub.f32 %v10114, %v10370
  %v10403 = vsub.f32 %v10123, %v10371
  %v10404 = vsub.f32 %v10132, %v10372
  %v10405 = vsub.f32 %v10141, %v10373
  %v10406 = vsub.f32 %v10150, %v10374
  %v10407 = vsub.f32 %v10159, %v10375
  %v10408 = vsub.f32 %v10168, %v10376
  %v10409 = vsub.f32 %v10177, %v10377
  %v10410 = vsub.f32 %v10186, %v10378
  %v10411 = vsub.f32 %v10195, %v10379
  %v10412 = vsub.f32 %v10204, %v10380
  %v10413 = vsub.f32 %v10213, %v10381
  %v10414 = vsub.f32 %v10222, %v10382
  %v10415 = vsub.f32 %v10231, %v10383
  %v10416 = vsub.f32 %v10240, %v10384
  %v10417 = vsub.f32 %v10249, %v10385
  %v10418 = vsub.f32 %v10258, %v10386
  %v10419 = vmul.f32 %v10387, %v10387
  %v10420 = vmul.f32 %v10388, %v10388
  %v10421 = vmul.f32 %v10389, %v10389
  %v10422 = vmul.f32 %v10390, %v10390
  %v10423 = vmul.f32 %v10391, %v10391
  %v10424 = vmul.f32 %v10392, %v10392
  %v10425 = vmul.f32 %v10393, %v10393
  %v10426 = vmul.f32 %v10394, %v10394
  %v10427 = vmul.f32 %v10395, %v10395
  %v10428 = vmul.f32 %v10396, %v10396
  %v10429 = vmul.f32 %v10397, %v10397
  %v10430 = vmul.f32 %v10398, %v10398
  %v10431 = vmul.f32 %v10399, %v10399
  %v10432 = vmul.f32 %v10400, %v10400
  %v10433 = vmul.f32 %v10401, %v10401
  %v10434 = vmul.f32 %v10402, %v10402
  %v10435 = vmul.f32 %v10403, %v10403
  %v10436 = vmul.f32 %v10404, %v10404
  %v10437 = vmul.f32 %v10405, %v10405
  %v10438 = vmul.f32 %v10406, %v10406
  %v10439 = vmul.f32 %v10407, %v10407
  %v10440 = vmul.f32 %v10408, %v10408
  %v10441 = vmul.f32 %v10409, %v10409
  %v10442 = vmul.f32 %v10410, %v10410
  %v10443 = vmul.f32 %v10411, %v10411
  %v10444 = vmul.f32 %v10412, %v10412
  %v10445 = vmul.f32 %v10413, %v10413
  %v10446 = vmul.f32 %v10414, %v10414
  %v10447 = vmul.f32 %v10415, %v10415
  %v10448 = vmul.f32 %v10416, %v10416
  %v10449 = vmul.f32 %v10417, %v10417
  %v10450 = vmul.f32 %v10418, %v10418
  %v10451 = vsel %vm112, %v10419, 0.0
  %10452 = vadd.xlane.f32.xlu0 %v10451
  %v10453 = vpop.xlane.xlu0 %10452
  %v10454 = vsel %vm112, %v10420, 0.0
  %10455 = vadd.xlane.f32.xlu0 %v10454
  %v10456 = vpop.xlane.xlu0 %10455
  %v10457 = vsel %vm112, %v10421, 0.0
  %10458 = vadd.xlane.f32.xlu0 %v10457
  %v10459 = vpop.xlane.xlu0 %10458
  %v10460 = vsel %vm112, %v10422, 0.0
  %10461 = vadd.xlane.f32.xlu0 %v10460
  %v10462 = vpop.xlane.xlu0 %10461
  %v10463 = vsel %vm112, %v10423, 0.0
  %10464 = vadd.xlane.f32.xlu0 %v10463
  %v10465 = vpop.xlane.xlu0 %10464
  %v10466 = vsel %vm112, %v10424, 0.0
  %10467 = vadd.xlane.f32.xlu0 %v10466
  %v10468 = vpop.xlane.xlu0 %10467
  %v10469 = vsel %vm112, %v10425, 0.0
  %10470 = vadd.xlane.f32.xlu0 %v10469
  %v10471 = vpop.xlane.xlu0 %10470
  %v10472 = vsel %vm112, %v10426, 0.0
  %10473 = vadd.xlane.f32.xlu0 %v10472
  %v10474 = vpop.xlane.xlu0 %10473
  %v10475 = vsel %vm112, %v10427, 0.0
  %10476 = vadd.xlane.f32.xlu0 %v10475
  %v10477 = vpop.xlane.xlu0 %10476
  %v10478 = vsel %vm112, %v10428, 0.0
  %10479 = vadd.xlane.f32.xlu0 %v10478
  %v10480 = vpop.xlane.xlu0 %10479
  %v10481 = vsel %vm112, %v10429, 0.0
  %10482 = vadd.xlane.f32.xlu0 %v10481
  %v10483 = vpop.xlane.xlu0 %10482
  %v10484 = vsel %vm112, %v10430, 0.0
  %10485 = vadd.xlane.f32.xlu0 %v10484
  %v10486 = vpop.xlane.xlu0 %10485
  %v10487 = vsel %vm112, %v10431, 0.0
  %10488 = vadd.xlane.f32.xlu0 %v10487
  %v10489 = vpop.xlane.xlu0 %10488
  %v10490 = vsel %vm112, %v10432, 0.0
  %10491 = vadd.xlane.f32.xlu0 %v10490
  %v10492 = vpop.xlane.xlu0 %10491
  %v10493 = vsel %vm112, %v10433, 0.0
  %10494 = vadd.xlane.f32.xlu0 %v10493
  %v10495 = vpop.xlane.xlu0 %10494
  %v10496 = vsel %vm112, %v10434, 0.0
  %10497 = vadd.xlane.f32.xlu0 %v10496
  %v10498 = vpop.xlane.xlu0 %10497
  %v10499 = vsel %vm112, %v10435, 0.0
  %10500 = vadd.xlane.f32.xlu0 %v10499
  %v10501 = vpop.xlane.xlu0 %10500
  %v10502 = vsel %vm112, %v10436, 0.0
  %10503 = vadd.xlane.f32.xlu0 %v10502
  %v10504 = vpop.xlane.xlu0 %10503
  %v10505 = vsel %vm112, %v10437, 0.0
  %10506 = vadd.xlane.f32.xlu0 %v10505
  %v10507 = vpop.xlane.xlu0 %10506
  %v10508 = vsel %vm112, %v10438, 0.0
  %10509 = vadd.xlane.f32.xlu0 %v10508
  %v10510 = vpop.xlane.xlu0 %10509
  %v10511 = vsel %vm112, %v10439, 0.0
  %10512 = vadd.xlane.f32.xlu0 %v10511
  %v10513 = vpop.xlane.xlu0 %10512
  %v10514 = vsel %vm112, %v10440, 0.0
  %10515 = vadd.xlane.f32.xlu0 %v10514
  %v10516 = vpop.xlane.xlu0 %10515
  %v10517 = vsel %vm112, %v10441, 0.0
  %10518 = vadd.xlane.f32.xlu0 %v10517
  %v10519 = vpop.xlane.xlu0 %10518
  %v10520 = vsel %vm112, %v10442, 0.0
  %10521 = vadd.xlane.f32.xlu0 %v10520
  %v10522 = vpop.xlane.xlu0 %10521
  %v10523 = vsel %vm112, %v10443, 0.0
  %10524 = vadd.xlane.f32.xlu0 %v10523
  %v10525 = vpop.xlane.xlu0 %10524
  %v10526 = vsel %vm112, %v10444, 0.0
  %10527 = vadd.xlane.f32.xlu0 %v10526
  %v10528 = vpop.xlane.xlu0 %10527
  %v10529 = vsel %vm112, %v10445, 0.0
  %10530 = vadd.xlane.f32.xlu0 %v10529
  %v10531 = vpop.xlane.xlu0 %10530
  %v10532 = vsel %vm112, %v10446, 0.0
  %10533 = vadd.xlane.f32.xlu0 %v10532
  %v10534 = vpop.xlane.xlu0 %10533
  %v10535 = vsel %vm112, %v10447, 0.0
  %10536 = vadd.xlane.f32.xlu0 %v10535
  %v10537 = vpop.xlane.xlu0 %10536
  %v10538 = vsel %vm112, %v10448, 0.0
  %10539 = vadd.xlane.f32.xlu0 %v10538
  %v10540 = vpop.xlane.xlu0 %10539
  %v10541 = vsel %vm112, %v10449, 0.0
  %10542 = vadd.xlane.f32.xlu0 %v10541
  %v10543 = vpop.xlane.xlu0 %10542
  %v10544 = vsel %vm112, %v10450, 0.0
  %10545 = vadd.xlane.f32.xlu0 %v10544
  %v10546 = vpop.xlane.xlu0 %10545
  %v10547 = vmul.f32 %v10453, %v209
  %v10548 = vmul.f32 %v10456, %v209
  %v10549 = vmul.f32 %v10459, %v209
  %v10550 = vmul.f32 %v10462, %v209
  %v10551 = vmul.f32 %v10465, %v209
  %v10552 = vmul.f32 %v10468, %v209
  %v10553 = vmul.f32 %v10471, %v209
  %v10554 = vmul.f32 %v10474, %v209
  %v10555 = vmul.f32 %v10477, %v209
  %v10556 = vmul.f32 %v10480, %v209
  %v10557 = vmul.f32 %v10483, %v209
  %v10558 = vmul.f32 %v10486, %v209
  %v10559 = vmul.f32 %v10489, %v209
  %v10560 = vmul.f32 %v10492, %v209
  %v10561 = vmul.f32 %v10495, %v209
  %v10562 = vmul.f32 %v10498, %v209
  %v10563 = vmul.f32 %v10501, %v209
  %v10564 = vmul.f32 %v10504, %v209
  %v10565 = vmul.f32 %v10507, %v209
  %v10566 = vmul.f32 %v10510, %v209
  %v10567 = vmul.f32 %v10513, %v209
  %v10568 = vmul.f32 %v10516, %v209
  %v10569 = vmul.f32 %v10519, %v209
  %v10570 = vmul.f32 %v10522, %v209
  %v10571 = vmul.f32 %v10525, %v209
  %v10572 = vmul.f32 %v10528, %v209
  %v10573 = vmul.f32 %v10531, %v209
  %v10574 = vmul.f32 %v10534, %v209
  %v10575 = vmul.f32 %v10537, %v209
  %v10576 = vmul.f32 %v10540, %v209
  %v10577 = vmul.f32 %v10543, %v209
  %v10578 = vmul.f32 %v10546, %v209
  %v10579 = vadd.f32 %v10547, 1e-05
  %v10580 = vadd.f32 %v10548, 1e-05
  %v10581 = vadd.f32 %v10549, 1e-05
  %v10582 = vadd.f32 %v10550, 1e-05
  %v10583 = vadd.f32 %v10551, 1e-05
  %v10584 = vadd.f32 %v10552, 1e-05
  %v10585 = vadd.f32 %v10553, 1e-05
  %v10586 = vadd.f32 %v10554, 1e-05
  %v10587 = vadd.f32 %v10555, 1e-05
  %v10588 = vadd.f32 %v10556, 1e-05
  %v10589 = vadd.f32 %v10557, 1e-05
  %v10590 = vadd.f32 %v10558, 1e-05
  %v10591 = vadd.f32 %v10559, 1e-05
  %v10592 = vadd.f32 %v10560, 1e-05
  %v10593 = vadd.f32 %v10561, 1e-05
  %v10594 = vadd.f32 %v10562, 1e-05
  %v10595 = vadd.f32 %v10563, 1e-05
  %v10596 = vadd.f32 %v10564, 1e-05
  %v10597 = vadd.f32 %v10565, 1e-05
  %v10598 = vadd.f32 %v10566, 1e-05
  %v10599 = vadd.f32 %v10567, 1e-05
  %v10600 = vadd.f32 %v10568, 1e-05
  %v10601 = vadd.f32 %v10569, 1e-05
  %v10602 = vadd.f32 %v10570, 1e-05
  %v10603 = vadd.f32 %v10571, 1e-05
  %v10604 = vadd.f32 %v10572, 1e-05
  %v10605 = vadd.f32 %v10573, 1e-05
  %v10606 = vadd.f32 %v10574, 1e-05
  %v10607 = vadd.f32 %v10575, 1e-05
  %v10608 = vadd.f32 %v10576, 1e-05
  %v10609 = vadd.f32 %v10577, 1e-05
  %v10610 = vadd.f32 %v10578, 1e-05
  %v10611 = vrsqrt.pop %v10579
  %v10612 = vrsqrt.pop %v10580
  %v10613 = vrsqrt.pop %v10581
  %v10614 = vrsqrt.pop %v10582
  %v10615 = vrsqrt.pop %v10583
  %v10616 = vrsqrt.pop %v10584
  %v10617 = vrsqrt.pop %v10585
  %v10618 = vrsqrt.pop %v10586
  %v10619 = vrsqrt.pop %v10587
  %v10620 = vrsqrt.pop %v10588
  %v10621 = vrsqrt.pop %v10589
  %v10622 = vrsqrt.pop %v10590
  %v10623 = vrsqrt.pop %v10591
  %v10624 = vrsqrt.pop %v10592
  %v10625 = vrsqrt.pop %v10593
  %v10626 = vrsqrt.pop %v10594
  %v10627 = vrsqrt.pop %v10595
  %v10628 = vrsqrt.pop %v10596
  %v10629 = vrsqrt.pop %v10597
  %v10630 = vrsqrt.pop %v10598
  %v10631 = vrsqrt.pop %v10599
  %v10632 = vrsqrt.pop %v10600
  %v10633 = vrsqrt.pop %v10601
  %v10634 = vrsqrt.pop %v10602
  %v10635 = vrsqrt.pop %v10603
  %v10636 = vrsqrt.pop %v10604
  %v10637 = vrsqrt.pop %v10605
  %v10638 = vrsqrt.pop %v10606
  %v10639 = vrsqrt.pop %v10607
  %v10640 = vrsqrt.pop %v10608
  %v10641 = vrsqrt.pop %v10609
  %v10642 = vrsqrt.pop %v10610
  %v10643 = vmul.f32 %v10387, %v10611
  %v10644 = vmul.f32 %v10388, %v10612
  %v10645 = vmul.f32 %v10389, %v10613
  %v10646 = vmul.f32 %v10390, %v10614
  %v10647 = vmul.f32 %v10391, %v10615
  %v10648 = vmul.f32 %v10392, %v10616
  %v10649 = vmul.f32 %v10393, %v10617
  %v10650 = vmul.f32 %v10394, %v10618
  %v10651 = vmul.f32 %v10395, %v10619
  %v10652 = vmul.f32 %v10396, %v10620
  %v10653 = vmul.f32 %v10397, %v10621
  %v10654 = vmul.f32 %v10398, %v10622
  %v10655 = vmul.f32 %v10399, %v10623
  %v10656 = vmul.f32 %v10400, %v10624
  %v10657 = vmul.f32 %v10401, %v10625
  %v10658 = vmul.f32 %v10402, %v10626
  %v10659 = vmul.f32 %v10403, %v10627
  %v10660 = vmul.f32 %v10404, %v10628
  %v10661 = vmul.f32 %v10405, %v10629
  %v10662 = vmul.f32 %v10406, %v10630
  %v10663 = vmul.f32 %v10407, %v10631
  %v10664 = vmul.f32 %v10408, %v10632
  %v10665 = vmul.f32 %v10409, %v10633
  %v10666 = vmul.f32 %v10410, %v10634
  %v10667 = vmul.f32 %v10411, %v10635
  %v10668 = vmul.f32 %v10412, %v10636
  %v10669 = vmul.f32 %v10413, %v10637
  %v10670 = vmul.f32 %v10414, %v10638
  %v10671 = vmul.f32 %v10415, %v10639
  %v10672 = vmul.f32 %v10416, %v10640
  %v10673 = vmul.f32 %v10417, %v10641
  %v10674 = vmul.f32 %v10418, %v10642
  %v10675 = vlaneseq
  %v10676 = vshrl.u32 %v10675, 7
  %v10677 = vsub.s32 0, %v10676
  %v10678 = vrot.slane %v78, %v10677
  %v10679 = vmul.f32 %v10643, %v10678
  %v10680 = vmul.f32 %v10644, %v10678
  %v10681 = vmul.f32 %v10645, %v10678
  %v10682 = vmul.f32 %v10646, %v10678
  %v10683 = vmul.f32 %v10647, %v10678
  %v10684 = vmul.f32 %v10648, %v10678
  %v10685 = vmul.f32 %v10649, %v10678
  %v10686 = vmul.f32 %v10650, %v10678
  %v10687 = vmul.f32 %v10651, %v10678
  %v10688 = vmul.f32 %v10652, %v10678
  %v10689 = vmul.f32 %v10653, %v10678
  %v10690 = vmul.f32 %v10654, %v10678
  %v10691 = vmul.f32 %v10655, %v10678
  %v10692 = vmul.f32 %v10656, %v10678
  %v10693 = vmul.f32 %v10657, %v10678
  %v10694 = vmul.f32 %v10658, %v10678
  %v10695 = vmul.f32 %v10659, %v10678
  %v10696 = vmul.f32 %v10660, %v10678
  %v10697 = vmul.f32 %v10661, %v10678
  %v10698 = vmul.f32 %v10662, %v10678
  %v10699 = vmul.f32 %v10663, %v10678
  %v10700 = vmul.f32 %v10664, %v10678
  %v10701 = vmul.f32 %v10665, %v10678
  %v10702 = vmul.f32 %v10666, %v10678
  %v10703 = vmul.f32 %v10667, %v10678
  %v10704 = vmul.f32 %v10668, %v10678
  %v10705 = vmul.f32 %v10669, %v10678
  %v10706 = vmul.f32 %v10670, %v10678
  %v10707 = vmul.f32 %v10671, %v10678
  %v10708 = vmul.f32 %v10672, %v10678
  %v10709 = vmul.f32 %v10673, %v10678
  %v10710 = vmul.f32 %v10674, %v10678
  %v10711 = vlaneseq
  %v10712 = vshrl.u32 %v10711, 7
  %v10713 = vsub.s32 0, %v10712
  %v10714 = vrot.slane %v79, %v10713
  %v10715 = vadd.f32 %v10679, %v10714
  %v10716 = vadd.f32 %v10680, %v10714
  %v10717 = vadd.f32 %v10681, %v10714
  %v10718 = vadd.f32 %v10682, %v10714
  %v10719 = vadd.f32 %v10683, %v10714
  %v10720 = vadd.f32 %v10684, %v10714
  %v10721 = vadd.f32 %v10685, %v10714
  %v10722 = vadd.f32 %v10686, %v10714
  %v10723 = vadd.f32 %v10687, %v10714
  %v10724 = vadd.f32 %v10688, %v10714
  %v10725 = vadd.f32 %v10689, %v10714
  %v10726 = vadd.f32 %v10690, %v10714
  %v10727 = vadd.f32 %v10691, %v10714
  %v10728 = vadd.f32 %v10692, %v10714
  %v10729 = vadd.f32 %v10693, %v10714
  %v10730 = vadd.f32 %v10694, %v10714
  %v10731 = vadd.f32 %v10695, %v10714
  %v10732 = vadd.f32 %v10696, %v10714
  %v10733 = vadd.f32 %v10697, %v10714
  %v10734 = vadd.f32 %v10698, %v10714
  %v10735 = vadd.f32 %v10699, %v10714
  %v10736 = vadd.f32 %v10700, %v10714
  %v10737 = vadd.f32 %v10701, %v10714
  %v10738 = vadd.f32 %v10702, %v10714
  %v10739 = vadd.f32 %v10703, %v10714
  %v10740 = vadd.f32 %v10704, %v10714
  %v10741 = vadd.f32 %v10705, %v10714
  %v10742 = vadd.f32 %v10706, %v10714
  %v10743 = vadd.f32 %v10707, %v10714
  %v10744 = vadd.f32 %v10708, %v10714
  %v10745 = vadd.f32 %v10709, %v10714
  %v10746 = vadd.f32 %v10710, %v10714
  %v10747 = vld [vmem:[%s0] sm:$0xff]
  %v10748 = vld [vmem:[%s0 + $0x8] sm:$0xff]
  %v10749 = vld [vmem:[%s0 + $0x10] sm:$0xff]
  %v10750 = vld [vmem:[%s0 + $0x18] sm:$0xff]
  %v10751 = vld [vmem:[%s0 + $0x20] sm:$0xff]
  %v10752 = vld [vmem:[%s0 + $0x28] sm:$0xff]
  %v10753 = vld [vmem:[%s0 + $0x30] sm:$0xff]
  %v10754 = vld [vmem:[%s0 + $0x38] sm:$0xff]
  %v10755 = vld [vmem:[%s0 + $0x40] sm:$0xff]
  %v10756 = vld [vmem:[%s0 + $0x48] sm:$0xff]
  %v10757 = vld [vmem:[%s0 + $0x50] sm:$0xff]
  %v10758 = vld [vmem:[%s0 + $0x58] sm:$0xff]
  %v10759 = vld [vmem:[%s0 + $0x60] sm:$0xff]
  %v10760 = vld [vmem:[%s0 + $0x68] sm:$0xff]
  %v10761 = vld [vmem:[%s0 + $0x70] sm:$0xff]
  %v10762 = vld [vmem:[%s0 + $0x78] sm:$0xff]
  %v10763 = vld [vmem:[%s0 + $0x80] sm:$0xff]
  %v10764 = vld [vmem:[%s0 + $0x88] sm:$0xff]
  %v10765 = vld [vmem:[%s0 + $0x90] sm:$0xff]
  %v10766 = vld [vmem:[%s0 + $0x98] sm:$0xff]
  %v10767 = vld [vmem:[%s0 + $0xa0] sm:$0xff]
  %v10768 = vld [vmem:[%s0 + $0xa8] sm:$0xff]
  %v10769 = vld [vmem:[%s0 + $0xb0] sm:$0xff]
  %v10770 = vld [vmem:[%s0 + $0xb8] sm:$0xff]
  %v10771 = vld [vmem:[%s0 + $0xc0] sm:$0xff]
  %v10772 = vld [vmem:[%s0 + $0xc8] sm:$0xff]
  %v10773 = vld [vmem:[%s0 + $0xd0] sm:$0xff]
  %v10774 = vld [vmem:[%s0 + $0xd8] sm:$0xff]
  %v10775 = vld [vmem:[%s0 + $0xe0] sm:$0xff]
  %v10776 = vld [vmem:[%s0 + $0xe8] sm:$0xff]
  %v10777 = vld [vmem:[%s0 + $0xf0] sm:$0xff]
  %v10778 = vld [vmem:[%s0 + $0xf8] sm:$0xff]
  %v10779 = vsub.f32 %v10715, %v10747
  %v10780 = vsub.f32 %v10716, %v10748
  %v10781 = vsub.f32 %v10717, %v10749
  %v10782 = vsub.f32 %v10718, %v10750
  %v10783 = vsub.f32 %v10719, %v10751
  %v10784 = vsub.f32 %v10720, %v10752
  %v10785 = vsub.f32 %v10721, %v10753
  %v10786 = vsub.f32 %v10722, %v10754
  %v10787 = vsub.f32 %v10723, %v10755
  %v10788 = vsub.f32 %v10724, %v10756
  %v10789 = vsub.f32 %v10725, %v10757
  %v10790 = vsub.f32 %v10726, %v10758
  %v10791 = vsub.f32 %v10727, %v10759
  %v10792 = vsub.f32 %v10728, %v10760
  %v10793 = vsub.f32 %v10729, %v10761
  %v10794 = vsub.f32 %v10730, %v10762
  %v10795 = vsub.f32 %v10731, %v10763
  %v10796 = vsub.f32 %v10732, %v10764
  %v10797 = vsub.f32 %v10733, %v10765
  %v10798 = vsub.f32 %v10734, %v10766
  %v10799 = vsub.f32 %v10735, %v10767
  %v10800 = vsub.f32 %v10736, %v10768
  %v10801 = vsub.f32 %v10737, %v10769
  %v10802 = vsub.f32 %v10738, %v10770
  %v10803 = vsub.f32 %v10739, %v10771
  %v10804 = vsub.f32 %v10740, %v10772
  %v10805 = vsub.f32 %v10741, %v10773
  %v10806 = vsub.f32 %v10742, %v10774
  %v10807 = vsub.f32 %v10743, %v10775
  %v10808 = vsub.f32 %v10744, %v10776
  %v10809 = vsub.f32 %v10745, %v10777
  %v10810 = vsub.f32 %v10746, %v10778
  %v10811 = vmul.f32 %v10779, %v10779
  %v10812 = vmul.f32 %v10780, %v10780
  %v10813 = vmul.f32 %v10781, %v10781
  %v10814 = vmul.f32 %v10782, %v10782
  %v10815 = vmul.f32 %v10783, %v10783
  %v10816 = vmul.f32 %v10784, %v10784
  %v10817 = vmul.f32 %v10785, %v10785
  %v10818 = vmul.f32 %v10786, %v10786
  %v10819 = vmul.f32 %v10787, %v10787
  %v10820 = vmul.f32 %v10788, %v10788
  %v10821 = vmul.f32 %v10789, %v10789
  %v10822 = vmul.f32 %v10790, %v10790
  %v10823 = vmul.f32 %v10791, %v10791
  %v10824 = vmul.f32 %v10792, %v10792
  %v10825 = vmul.f32 %v10793, %v10793
  %v10826 = vmul.f32 %v10794, %v10794
  %v10827 = vmul.f32 %v10795, %v10795
  %v10828 = vmul.f32 %v10796, %v10796
  %v10829 = vmul.f32 %v10797, %v10797
  %v10830 = vmul.f32 %v10798, %v10798
  %v10831 = vmul.f32 %v10799, %v10799
  %v10832 = vmul.f32 %v10800, %v10800
  %v10833 = vmul.f32 %v10801, %v10801
  %v10834 = vmul.f32 %v10802, %v10802
  %v10835 = vmul.f32 %v10803, %v10803
  %v10836 = vmul.f32 %v10804, %v10804
  %v10837 = vmul.f32 %v10805, %v10805
  %v10838 = vmul.f32 %v10806, %v10806
  %v10839 = vmul.f32 %v10807, %v10807
  %v10840 = vmul.f32 %v10808, %v10808
  %v10841 = vmul.f32 %v10809, %v10809
  %v10842 = vmul.f32 %v10810, %v10810
  %v10843 = vsel %vm112, %v10811, 0.0
  %v10844 = vsel %vm112, %v10812, 0.0
  %v10845 = vadd.f32 %v10843, %v10844
  %v10846 = vsel %vm112, %v10813, 0.0
  %v10847 = vadd.f32 %v10845, %v10846
  %v10848 = vsel %vm112, %v10814, 0.0
  %v10849 = vadd.f32 %v10847, %v10848
  %v10850 = vsel %vm112, %v10815, 0.0
  %v10851 = vadd.f32 %v10849, %v10850
  %v10852 = vsel %vm112, %v10816, 0.0
  %v10853 = vadd.f32 %v10851, %v10852
  %v10854 = vsel %vm112, %v10817, 0.0
  %v10855 = vadd.f32 %v10853, %v10854
  %v10856 = vsel %vm112, %v10818, 0.0
  %v10857 = vadd.f32 %v10855, %v10856
  %v10858 = vrot.slane %v10857, 4
  %v10859 = vadd.f32 %v10857, %v10858
  %v10860 = vrot.slane %v10859, 2
  %v10861 = vadd.f32 %v10859, %v10860
  %v10862 = vrot.slane %v10861, 1
  %v10863 = vadd.f32 %v10861, %v10862
  %v10864 = vsel %vm112, %v10819, 0.0
  %v10865 = vsel %vm112, %v10820, 0.0
  %v10866 = vadd.f32 %v10864, %v10865
  %v10867 = vsel %vm112, %v10821, 0.0
  %v10868 = vadd.f32 %v10866, %v10867
  %v10869 = vsel %vm112, %v10822, 0.0
  %v10870 = vadd.f32 %v10868, %v10869
  %v10871 = vsel %vm112, %v10823, 0.0
  %v10872 = vadd.f32 %v10870, %v10871
  %v10873 = vsel %vm112, %v10824, 0.0
  %v10874 = vadd.f32 %v10872, %v10873
  %v10875 = vsel %vm112, %v10825, 0.0
  %v10876 = vadd.f32 %v10874, %v10875
  %v10877 = vsel %vm112, %v10826, 0.0
  %v10878 = vadd.f32 %v10876, %v10877
  %v10879 = vrot.slane %v10878, 4
  %v10880 = vadd.f32 %v10878, %v10879
  %v10881 = vrot.slane %v10880, 2
  %v10882 = vadd.f32 %v10880, %v10881
  %v10883 = vrot.slane %v10882, 1
  %v10884 = vadd.f32 %v10882, %v10883
  %v10885 = vsel %vm112, %v10827, 0.0
  %v10886 = vsel %vm112, %v10828, 0.0
  %v10887 = vadd.f32 %v10885, %v10886
  %v10888 = vsel %vm112, %v10829, 0.0
  %v10889 = vadd.f32 %v10887, %v10888
  %v10890 = vsel %vm112, %v10830, 0.0
  %v10891 = vadd.f32 %v10889, %v10890
  %v10892 = vsel %vm112, %v10831, 0.0
  %v10893 = vadd.f32 %v10891, %v10892
  %v10894 = vsel %vm112, %v10832, 0.0
  %v10895 = vadd.f32 %v10893, %v10894
  %v10896 = vsel %vm112, %v10833, 0.0
  %v10897 = vadd.f32 %v10895, %v10896
  %v10898 = vsel %vm112, %v10834, 0.0
  %v10899 = vadd.f32 %v10897, %v10898
  %v10900 = vrot.slane %v10899, 4
  %v10901 = vadd.f32 %v10899, %v10900
  %v10902 = vrot.slane %v10901, 2
  %v10903 = vadd.f32 %v10901, %v10902
  %v10904 = vrot.slane %v10903, 1
  %v10905 = vadd.f32 %v10903, %v10904
  %v10906 = vsel %vm112, %v10835, 0.0
  %v10907 = vsel %vm112, %v10836, 0.0
  %v10908 = vadd.f32 %v10906, %v10907
  %v10909 = vsel %vm112, %v10837, 0.0
  %v10910 = vadd.f32 %v10908, %v10909
  %v10911 = vsel %vm112, %v10838, 0.0
  %v10912 = vadd.f32 %v10910, %v10911
  %v10913 = vsel %vm112, %v10839, 0.0
  %v10914 = vadd.f32 %v10912, %v10913
  %v10915 = vsel %vm112, %v10840, 0.0
  %v10916 = vadd.f32 %v10914, %v10915
  %v10917 = vsel %vm112, %v10841, 0.0
  %v10918 = vadd.f32 %v10916, %v10917
  %v10919 = vsel %vm112, %v10842, 0.0
  %v10920 = vadd.f32 %v10918, %v10919
  %v10921 = vrot.slane %v10920, 4
  %v10922 = vadd.f32 %v10920, %v10921
  %v10923 = vrot.slane %v10922, 2
  %v10924 = vadd.f32 %v10922, %v10923
  %v10925 = vrot.slane %v10924, 1
  %v10926 = vadd.f32 %v10924, %v10925
  %v10927 = vld [vmem:[%s0 + $0x100] sm:$0xff]
  %v10928 = vld [vmem:[%s0 + $0x108] sm:$0xff]
  %v10929 = vld [vmem:[%s0 + $0x110] sm:$0xff]
  %v10930 = vld [vmem:[%s0 + $0x118] sm:$0xff]
  %v10931 = vld [vmem:[%s0 + $0x120] sm:$0xff]
  %v10932 = vld [vmem:[%s0 + $0x128] sm:$0xff]
  %v10933 = vld [vmem:[%s0 + $0x130] sm:$0xff]
  %v10934 = vld [vmem:[%s0 + $0x138] sm:$0xff]
  %v10935 = vld [vmem:[%s0 + $0x140] sm:$0xff]
  %v10936 = vld [vmem:[%s0 + $0x148] sm:$0xff]
  %v10937 = vld [vmem:[%s0 + $0x150] sm:$0xff]
  %v10938 = vld [vmem:[%s0 + $0x158] sm:$0xff]
  %v10939 = vld [vmem:[%s0 + $0x160] sm:$0xff]
  %v10940 = vld [vmem:[%s0 + $0x168] sm:$0xff]
  %v10941 = vld [vmem:[%s0 + $0x170] sm:$0xff]
  %v10942 = vld [vmem:[%s0 + $0x178] sm:$0xff]
  %v10943 = vsub.f32 %v10715, %v10763
  %v10944 = vsub.f32 %v10716, %v10764
  %v10945 = vsub.f32 %v10717, %v10765
  %v10946 = vsub.f32 %v10718, %v10766
  %v10947 = vsub.f32 %v10719, %v10767
  %v10948 = vsub.f32 %v10720, %v10768
  %v10949 = vsub.f32 %v10721, %v10769
  %v10950 = vsub.f32 %v10722, %v10770
  %v10951 = vsub.f32 %v10723, %v10771
  %v10952 = vsub.f32 %v10724, %v10772
  %v10953 = vsub.f32 %v10725, %v10773
  %v10954 = vsub.f32 %v10726, %v10774
  %v10955 = vsub.f32 %v10727, %v10775
  %v10956 = vsub.f32 %v10728, %v10776
  %v10957 = vsub.f32 %v10729, %v10777
  %v10958 = vsub.f32 %v10730, %v10778
  %v10959 = vsub.f32 %v10731, %v10927
  %v10960 = vsub.f32 %v10732, %v10928
  %v10961 = vsub.f32 %v10733, %v10929
  %v10962 = vsub.f32 %v10734, %v10930
  %v10963 = vsub.f32 %v10735, %v10931
  %v10964 = vsub.f32 %v10736, %v10932
  %v10965 = vsub.f32 %v10737, %v10933
  %v10966 = vsub.f32 %v10738, %v10934
  %v10967 = vsub.f32 %v10739, %v10935
  %v10968 = vsub.f32 %v10740, %v10936
  %v10969 = vsub.f32 %v10741, %v10937
  %v10970 = vsub.f32 %v10742, %v10938
  %v10971 = vsub.f32 %v10743, %v10939
  %v10972 = vsub.f32 %v10744, %v10940
  %v10973 = vsub.f32 %v10745, %v10941
  %v10974 = vsub.f32 %v10746, %v10942
  %v10975 = vmul.f32 %v10943, %v10943
  %v10976 = vmul.f32 %v10944, %v10944
  %v10977 = vmul.f32 %v10945, %v10945
  %v10978 = vmul.f32 %v10946, %v10946
  %v10979 = vmul.f32 %v10947, %v10947
  %v10980 = vmul.f32 %v10948, %v10948
  %v10981 = vmul.f32 %v10949, %v10949
  %v10982 = vmul.f32 %v10950, %v10950
  %v10983 = vmul.f32 %v10951, %v10951
  %v10984 = vmul.f32 %v10952, %v10952
  %v10985 = vmul.f32 %v10953, %v10953
  %v10986 = vmul.f32 %v10954, %v10954
  %v10987 = vmul.f32 %v10955, %v10955
  %v10988 = vmul.f32 %v10956, %v10956
  %v10989 = vmul.f32 %v10957, %v10957
  %v10990 = vmul.f32 %v10958, %v10958
  %v10991 = vmul.f32 %v10959, %v10959
  %v10992 = vmul.f32 %v10960, %v10960
  %v10993 = vmul.f32 %v10961, %v10961
  %v10994 = vmul.f32 %v10962, %v10962
  %v10995 = vmul.f32 %v10963, %v10963
  %v10996 = vmul.f32 %v10964, %v10964
  %v10997 = vmul.f32 %v10965, %v10965
  %v10998 = vmul.f32 %v10966, %v10966
  %v10999 = vmul.f32 %v10967, %v10967
  %v11000 = vmul.f32 %v10968, %v10968
  %v11001 = vmul.f32 %v10969, %v10969
  %v11002 = vmul.f32 %v10970, %v10970
  %v11003 = vmul.f32 %v10971, %v10971
  %v11004 = vmul.f32 %v10972, %v10972
  %v11005 = vmul.f32 %v10973, %v10973
  %v11006 = vmul.f32 %v10974, %v10974
  %v11007 = vsel %vm112, %v10975, 0.0
  %v11008 = vsel %vm112, %v10976, 0.0
  %v11009 = vadd.f32 %v11007, %v11008
  %v11010 = vsel %vm112, %v10977, 0.0
  %v11011 = vadd.f32 %v11009, %v11010
  %v11012 = vsel %vm112, %v10978, 0.0
  %v11013 = vadd.f32 %v11011, %v11012
  %v11014 = vsel %vm112, %v10979, 0.0
  %v11015 = vadd.f32 %v11013, %v11014
  %v11016 = vsel %vm112, %v10980, 0.0
  %v11017 = vadd.f32 %v11015, %v11016
  %v11018 = vsel %vm112, %v10981, 0.0
  %v11019 = vadd.f32 %v11017, %v11018
  %v11020 = vsel %vm112, %v10982, 0.0
  %v11021 = vadd.f32 %v11019, %v11020
  %v11022 = vrot.slane %v11021, 4
  %v11023 = vadd.f32 %v11021, %v11022
  %v11024 = vrot.slane %v11023, 2
  %v11025 = vadd.f32 %v11023, %v11024
  %v11026 = vrot.slane %v11025, 1
  %v11027 = vadd.f32 %v11025, %v11026
  %v11028 = vsel %vm112, %v10983, 0.0
  %v11029 = vsel %vm112, %v10984, 0.0
  %v11030 = vadd.f32 %v11028, %v11029
  %v11031 = vsel %vm112, %v10985, 0.0
  %v11032 = vadd.f32 %v11030, %v11031
  %v11033 = vsel %vm112, %v10986, 0.0
  %v11034 = vadd.f32 %v11032, %v11033
  %v11035 = vsel %vm112, %v10987, 0.0
  %v11036 = vadd.f32 %v11034, %v11035
  %v11037 = vsel %vm112, %v10988, 0.0
  %v11038 = vadd.f32 %v11036, %v11037
  %v11039 = vsel %vm112, %v10989, 0.0
  %v11040 = vadd.f32 %v11038, %v11039
  %v11041 = vsel %vm112, %v10990, 0.0
  %v11042 = vadd.f32 %v11040, %v11041
  %v11043 = vrot.slane %v11042, 4
  %v11044 = vadd.f32 %v11042, %v11043
  %v11045 = vrot.slane %v11044, 2
  %v11046 = vadd.f32 %v11044, %v11045
  %v11047 = vrot.slane %v11046, 1
  %v11048 = vadd.f32 %v11046, %v11047
  %v11049 = vsel %vm112, %v10991, 0.0
  %v11050 = vsel %vm112, %v10992, 0.0
  %v11051 = vadd.f32 %v11049, %v11050
  %v11052 = vsel %vm112, %v10993, 0.0
  %v11053 = vadd.f32 %v11051, %v11052
  %v11054 = vsel %vm112, %v10994, 0.0
  %v11055 = vadd.f32 %v11053, %v11054
  %v11056 = vsel %vm112, %v10995, 0.0
  %v11057 = vadd.f32 %v11055, %v11056
  %v11058 = vsel %vm112, %v10996, 0.0
  %v11059 = vadd.f32 %v11057, %v11058
  %v11060 = vsel %vm112, %v10997, 0.0
  %v11061 = vadd.f32 %v11059, %v11060
  %v11062 = vsel %vm112, %v10998, 0.0
  %v11063 = vadd.f32 %v11061, %v11062
  %v11064 = vrot.slane %v11063, 4
  %v11065 = vadd.f32 %v11063, %v11064
  %v11066 = vrot.slane %v11065, 2
  %v11067 = vadd.f32 %v11065, %v11066
  %v11068 = vrot.slane %v11067, 1
  %v11069 = vadd.f32 %v11067, %v11068
  %v11070 = vsel %vm112, %v10999, 0.0
  %v11071 = vsel %vm112, %v11000, 0.0
  %v11072 = vadd.f32 %v11070, %v11071
  %v11073 = vsel %vm112, %v11001, 0.0
  %v11074 = vadd.f32 %v11072, %v11073
  %v11075 = vsel %vm112, %v11002, 0.0
  %v11076 = vadd.f32 %v11074, %v11075
  %v11077 = vsel %vm112, %v11003, 0.0
  %v11078 = vadd.f32 %v11076, %v11077
  %v11079 = vsel %vm112, %v11004, 0.0
  %v11080 = vadd.f32 %v11078, %v11079
  %v11081 = vsel %vm112, %v11005, 0.0
  %v11082 = vadd.f32 %v11080, %v11081
  %v11083 = vsel %vm112, %v11006, 0.0
  %v11084 = vadd.f32 %v11082, %v11083
  %v11085 = vrot.slane %v11084, 4
  %v11086 = vadd.f32 %v11084, %v11085
  %v11087 = vrot.slane %v11086, 2
  %v11088 = vadd.f32 %v11086, %v11087
  %v11089 = vrot.slane %v11088, 1
  %v11090 = vadd.f32 %v11088, %v11089
  %v11091 = vld [vmem:[%s0 + $0x180] sm:$0xff]
  %v11092 = vld [vmem:[%s0 + $0x188] sm:$0xff]
  %v11093 = vld [vmem:[%s0 + $0x190] sm:$0xff]
  %v11094 = vld [vmem:[%s0 + $0x198] sm:$0xff]
  %v11095 = vld [vmem:[%s0 + $0x1a0] sm:$0xff]
  %v11096 = vld [vmem:[%s0 + $0x1a8] sm:$0xff]
  %v11097 = vld [vmem:[%s0 + $0x1b0] sm:$0xff]
  %v11098 = vld [vmem:[%s0 + $0x1b8] sm:$0xff]
  %v11099 = vld [vmem:[%s0 + $0x1c0] sm:$0xff]
  %v11100 = vld [vmem:[%s0 + $0x1c8] sm:$0xff]
  %v11101 = vld [vmem:[%s0 + $0x1d0] sm:$0xff]
  %v11102 = vld [vmem:[%s0 + $0x1d8] sm:$0xff]
  %v11103 = vld [vmem:[%s0 + $0x1e0] sm:$0xff]
  %v11104 = vld [vmem:[%s0 + $0x1e8] sm:$0xff]
  %v11105 = vld [vmem:[%s0 + $0x1f0] sm:$0xff]
  %v11106 = vld [vmem:[%s0 + $0x1f8] sm:$0xff]
  %v11107 = vsub.f32 %v10715, %v10927
  %v11108 = vsub.f32 %v10716, %v10928
  %v11109 = vsub.f32 %v10717, %v10929
  %v11110 = vsub.f32 %v10718, %v10930
  %v11111 = vsub.f32 %v10719, %v10931
  %v11112 = vsub.f32 %v10720, %v10932
  %v11113 = vsub.f32 %v10721, %v10933
  %v11114 = vsub.f32 %v10722, %v10934
  %v11115 = vsub.f32 %v10723, %v10935
  %v11116 = vsub.f32 %v10724, %v10936
  %v11117 = vsub.f32 %v10725, %v10937
  %v11118 = vsub.f32 %v10726, %v10938
  %v11119 = vsub.f32 %v10727, %v10939
  %v11120 = vsub.f32 %v10728, %v10940
  %v11121 = vsub.f32 %v10729, %v10941
  %v11122 = vsub.f32 %v10730, %v10942
  %v11123 = vsub.f32 %v10731, %v11091
  %v11124 = vsub.f32 %v10732, %v11092
  %v11125 = vsub.f32 %v10733, %v11093
  %v11126 = vsub.f32 %v10734, %v11094
  %v11127 = vsub.f32 %v10735, %v11095
  %v11128 = vsub.f32 %v10736, %v11096
  %v11129 = vsub.f32 %v10737, %v11097
  %v11130 = vsub.f32 %v10738, %v11098
  %v11131 = vsub.f32 %v10739, %v11099
  %v11132 = vsub.f32 %v10740, %v11100
  %v11133 = vsub.f32 %v10741, %v11101
  %v11134 = vsub.f32 %v10742, %v11102
  %v11135 = vsub.f32 %v10743, %v11103
  %v11136 = vsub.f32 %v10744, %v11104
  %v11137 = vsub.f32 %v10745, %v11105
  %v11138 = vsub.f32 %v10746, %v11106
  %v11139 = vmul.f32 %v11107, %v11107
  %v11140 = vmul.f32 %v11108, %v11108
  %v11141 = vmul.f32 %v11109, %v11109
  %v11142 = vmul.f32 %v11110, %v11110
  %v11143 = vmul.f32 %v11111, %v11111
  %v11144 = vmul.f32 %v11112, %v11112
  %v11145 = vmul.f32 %v11113, %v11113
  %v11146 = vmul.f32 %v11114, %v11114
  %v11147 = vmul.f32 %v11115, %v11115
  %v11148 = vmul.f32 %v11116, %v11116
  %v11149 = vmul.f32 %v11117, %v11117
  %v11150 = vmul.f32 %v11118, %v11118
  %v11151 = vmul.f32 %v11119, %v11119
  %v11152 = vmul.f32 %v11120, %v11120
  %v11153 = vmul.f32 %v11121, %v11121
  %v11154 = vmul.f32 %v11122, %v11122
  %v11155 = vmul.f32 %v11123, %v11123
  %v11156 = vmul.f32 %v11124, %v11124
  %v11157 = vmul.f32 %v11125, %v11125
  %v11158 = vmul.f32 %v11126, %v11126
  %v11159 = vmul.f32 %v11127, %v11127
  %v11160 = vmul.f32 %v11128, %v11128
  %v11161 = vmul.f32 %v11129, %v11129
  %v11162 = vmul.f32 %v11130, %v11130
  %v11163 = vmul.f32 %v11131, %v11131
  %v11164 = vmul.f32 %v11132, %v11132
  %v11165 = vmul.f32 %v11133, %v11133
  %v11166 = vmul.f32 %v11134, %v11134
  %v11167 = vmul.f32 %v11135, %v11135
  %v11168 = vmul.f32 %v11136, %v11136
  %v11169 = vmul.f32 %v11137, %v11137
  %v11170 = vmul.f32 %v11138, %v11138
  %v11171 = vsel %vm112, %v11139, 0.0
  %v11172 = vsel %vm112, %v11140, 0.0
  %v11173 = vadd.f32 %v11171, %v11172
  %v11174 = vsel %vm112, %v11141, 0.0
  %v11175 = vadd.f32 %v11173, %v11174
  %v11176 = vsel %vm112, %v11142, 0.0
  %v11177 = vadd.f32 %v11175, %v11176
  %v11178 = vsel %vm112, %v11143, 0.0
  %v11179 = vadd.f32 %v11177, %v11178
  %v11180 = vsel %vm112, %v11144, 0.0
  %v11181 = vadd.f32 %v11179, %v11180
  %v11182 = vsel %vm112, %v11145, 0.0
  %v11183 = vadd.f32 %v11181, %v11182
  %v11184 = vsel %vm112, %v11146, 0.0
  %v11185 = vadd.f32 %v11183, %v11184
  %v11186 = vrot.slane %v11185, 4
  %v11187 = vadd.f32 %v11185, %v11186
  %v11188 = vrot.slane %v11187, 2
  %v11189 = vadd.f32 %v11187, %v11188
  %v11190 = vrot.slane %v11189, 1
  %v11191 = vadd.f32 %v11189, %v11190
  %v11192 = vsel %vm112, %v11147, 0.0
  %v11193 = vsel %vm112, %v11148, 0.0
  %v11194 = vadd.f32 %v11192, %v11193
  %v11195 = vsel %vm112, %v11149, 0.0
  %v11196 = vadd.f32 %v11194, %v11195
  %v11197 = vsel %vm112, %v11150, 0.0
  %v11198 = vadd.f32 %v11196, %v11197
  %v11199 = vsel %vm112, %v11151, 0.0
  %v11200 = vadd.f32 %v11198, %v11199
  %v11201 = vsel %vm112, %v11152, 0.0
  %v11202 = vadd.f32 %v11200, %v11201
  %v11203 = vsel %vm112, %v11153, 0.0
  %v11204 = vadd.f32 %v11202, %v11203
  %v11205 = vsel %vm112, %v11154, 0.0
  %v11206 = vadd.f32 %v11204, %v11205
  %v11207 = vrot.slane %v11206, 4
  %v11208 = vadd.f32 %v11206, %v11207
  %v11209 = vrot.slane %v11208, 2
  %v11210 = vadd.f32 %v11208, %v11209
  %v11211 = vrot.slane %v11210, 1
  %v11212 = vadd.f32 %v11210, %v11211
  %v11213 = vsel %vm112, %v11155, 0.0
  %v11214 = vsel %vm112, %v11156, 0.0
  %v11215 = vadd.f32 %v11213, %v11214
  %v11216 = vsel %vm112, %v11157, 0.0
  %v11217 = vadd.f32 %v11215, %v11216
  %v11218 = vsel %vm112, %v11158, 0.0
  %v11219 = vadd.f32 %v11217, %v11218
  %v11220 = vsel %vm112, %v11159, 0.0
  %v11221 = vadd.f32 %v11219, %v11220
  %v11222 = vsel %vm112, %v11160, 0.0
  %v11223 = vadd.f32 %v11221, %v11222
  %v11224 = vsel %vm112, %v11161, 0.0
  %v11225 = vadd.f32 %v11223, %v11224
  %v11226 = vsel %vm112, %v11162, 0.0
  %v11227 = vadd.f32 %v11225, %v11226
  %v11228 = vrot.slane %v11227, 4
  %v11229 = vadd.f32 %v11227, %v11228
  %v11230 = vrot.slane %v11229, 2
  %v11231 = vadd.f32 %v11229, %v11230
  %v11232 = vrot.slane %v11231, 1
  %v11233 = vadd.f32 %v11231, %v11232
  %v11234 = vsel %vm112, %v11163, 0.0
  %v11235 = vsel %vm112, %v11164, 0.0
  %v11236 = vadd.f32 %v11234, %v11235
  %v11237 = vsel %vm112, %v11165, 0.0
  %v11238 = vadd.f32 %v11236, %v11237
  %v11239 = vsel %vm112, %v11166, 0.0
  %v11240 = vadd.f32 %v11238, %v11239
  %v11241 = vsel %vm112, %v11167, 0.0
  %v11242 = vadd.f32 %v11240, %v11241
  %v11243 = vsel %vm112, %v11168, 0.0
  %v11244 = vadd.f32 %v11242, %v11243
  %v11245 = vsel %vm112, %v11169, 0.0
  %v11246 = vadd.f32 %v11244, %v11245
  %v11247 = vsel %vm112, %v11170, 0.0
  %v11248 = vadd.f32 %v11246, %v11247
  %v11249 = vrot.slane %v11248, 4
  %v11250 = vadd.f32 %v11248, %v11249
  %v11251 = vrot.slane %v11250, 2
  %v11252 = vadd.f32 %v11250, %v11251
  %v11253 = vrot.slane %v11252, 1
  %v11254 = vadd.f32 %v11252, %v11253
  %vm11259 = vcmask 1041409
  %v11260 = vsel %vm11259, %v10884, %v10863
  %vm11261 = vcmask 1042434
  %v11262 = vsel %vm11261, %v10905, %v11260
  %vm11263 = vcmask 1043459
  %v11264 = vsel %vm11263, %v10926, %v11262
  %vm11270 = vcmask 1045509
  %v11271 = vsel %vm11270, %v11048, %v11027
  %vm11272 = vcmask 1046534
  %v11273 = vsel %vm11272, %v11069, %v11271
  %vm11274 = vcmask 1047559
  %v11275 = vsel %vm11274, %v11090, %v11273
  %v11281 = vsel %vm11259, %v11212, %v11191
  %v11282 = vsel %vm11261, %v11233, %v11281
  %v11283 = vsel %vm11263, %v11254, %v11282
  %v11285 = vsel %vm1402, %v11264, %v11275
  %11286 = vst.msk [vmem:[%s4] sm:$0xff] %vm112, %v11285
  %11287 = vst.msk [vmem:[%s4 + $0x8] sm:$0xf] %vm1061, %v11283
  // Predicated region
  $region14: #{slot_trainer_forward.1} parent=0 // pred_check
    _
  $region15: #{slot_trainer_forward.1} parent=0 // pred_check_branch
    %11289 = sbr.rel (0) target = $region17
  $region16: #{slot_trainer_forward.1} parent=0 // pred_region
    _
  $region17: #{slot_trainer_forward.1} parent=0 // pred_fallthru
    _
  // Predicated region
  $region18: #{slot_trainer_forward.1} parent=0 // pred_check
    _
  $region19: #{slot_trainer_forward.1} parent=0 // pred_check_branch
    %11291 = sbr.rel (0) target = $region21
  $region20: #{slot_trainer_forward.1} parent=0 // pred_region
    _
  $region21: #{slot_trainer_forward.1} parent=0 // pred_fallthru
    _
  // Predicated region
  $region22: #{slot_trainer_forward.1} parent=0 // pred_check
    _
  $region23: #{slot_trainer_forward.1} parent=0 // pred_check_branch
    %11293 = sbr.rel (0) target = $region25
  $region24: #{slot_trainer_forward.1} parent=0 // pred_region
    _
  $region25: #{slot_trainer_forward.1} parent=0 // pred_fallthru
    _
  // Predicated region
  $region26: #{slot_trainer_forward.1} parent=0 // pred_check
    _
  $region27: #{slot_trainer_forward.1} parent=0 // pred_check_branch
    %11295 = sbr.rel (0) target = $region29
  $region28: #{slot_trainer_forward.1} parent=0 // pred_region
    _
  $region29: #{slot_trainer_forward.1} parent=0 // pred_fallthru
    _

</llo_original>
